<compile_context>
chip_gen: v7x
topology: tpu7x:2x2x1
jax: 0.10.0
libtpu: 0.0.40
codegen_flags: <defaults>
</compile_context>

<pallas_src>
import functools
import math

import jax
import jax.numpy as jnp
from jax.experimental import pallas as pl
from jax.experimental.pallas import tpu as pltpu

_EPS = 1e-5
_REF_PREC = jax.lax.Precision.HIGHEST


# ----------------------------- Pallas kernel ------------------------------- #
def _bn2d(y, gamma, beta, *, relu):
    """Training-mode BN over rows of an (M, C) f32 tensor.

    [y | y*y] are packed along lanes (2C <= 128 here) so a single axis-0
    reduction tree yields both sum and sum-of-squares; var is clamped at 0.
    """
    m_rows, c = y.shape
    packed = jnp.concatenate([y, y * y], axis=-1)                 # (M, 2C)
    sums = jnp.sum(packed, axis=0, keepdims=True) * (1.0 / m_rows)
    mean, mean_sq = sums[:, :c], sums[:, c:]
    var = jnp.maximum(mean_sq - mean * mean, 0.0)
    out = (y - mean) * jax.lax.rsqrt(var + _EPS) * gamma + beta
    if relu:
        out = jnp.maximum(out, 0.0)
    return out


def _block_kernel(*refs, stride, residual):
    if residual:
        x_ref, w1_ref, w2f_ref, w3_ref, gb_ref, out_ref = refs
        ws_ref = None
    else:
        x_ref, w1_ref, w2f_ref, w3_ref, ws_ref, gb_ref, out_ref = refs

    N, H, W, Cin = x_ref.shape
    Cmid = w2f_ref.shape[1]
    Cout = w3_ref.shape[1]
    Ho = (H + 2 - 3) // stride + 1
    Wo = (W + 2 - 3) // stride + 1
    Mo = N * Ho * Wo

    # Packed BN affine params: rows (g1,b1,g2,b2,g3,b3,gs,bs), lane-padded.
    g1 = gb_ref[0:1, :Cmid]; b1 = gb_ref[1:2, :Cmid]
    g2 = gb_ref[2:3, :Cmid]; b2 = gb_ref[3:4, :Cmid]
    g3 = gb_ref[4:5, :Cout]; b3 = gb_ref[5:6, :Cout]

    x = x_ref[...]                                   # f32 (residual) or bf16
    x2d = x.reshape(N * H * W, Cin)
    xb = x2d.astype(jnp.bfloat16)                    # no-op if already bf16

    # ---- stage 1: 1x1 conv -> BN -> ReLU ----
    h1 = jnp.dot(xb, w1_ref[...], preferred_element_type=jnp.float32)
    h1 = _bn2d(h1, g1, b1, relu=True).astype(jnp.bfloat16)   # bf16 from here on

    # ---- stage 2: 3x3 conv (pad=1, stride) as one im2col matmul, all bf16 ----
    h1_4d = h1.reshape(N, H, W, Cmid)
    zh = jnp.zeros((N, 1, W, Cmid), jnp.bfloat16)
    hp = jnp.concatenate([zh, h1_4d, zh], axis=1)             # pad H by 1
    zw = jnp.zeros((N, H + 2, 1, Cmid), jnp.bfloat16)
    hp = jnp.concatenate([zw, hp, zw], axis=2)                # pad W by 1
    # TODO(synk): a single jax.lax.pad would drop one copy pass over h1; two
    # concats kept for guaranteed Mosaic lowering.
    if stride == 1:
        taps = [hp[:, kh:kh + Ho, kw:kw + Wo, :]
                for kh in range(3) for kw in range(3)]
    else:
        # Subsample once: 4 parity slices cover all 9 taps.
        # TODO(synk): stride-2 path implemented but not exercised by the demo.
        par = [[hp[:, a::2, b::2, :] for b in range(2)] for a in range(2)]
        taps = [par[kh % 2][kw % 2][:, kh // 2:kh // 2 + Ho,
                                    kw // 2:kw // 2 + Wo, :]
                for kh in range(3) for kw in range(3)]
    im2col = jnp.concatenate(taps, axis=-1).reshape(Mo, 9 * Cmid)   # bf16
    h2 = jnp.dot(im2col, w2f_ref[...], preferred_element_type=jnp.float32)
    h2 = _bn2d(h2, g2, b2, relu=True)

    # ---- stage 3: 1x1 conv -> BN (no ReLU) ----
    h3 = jnp.dot(h2.astype(jnp.bfloat16), w3_ref[...],
                 preferred_element_type=jnp.float32)
    h3 = _bn2d(h3, g3, b3, relu=False)

    # ---- shortcut ----
    if residual:
        sc = x2d.astype(jnp.float32)          # identity (stride==1, Cin==Cout)
    else:
        gs = gb_ref[6:7, :Cout]; bs = gb_ref[7:8, :Cout]
        if stride == 1:
            xs2d = xb
        else:
            xs = x[:, ::stride, ::stride, :][:, :Ho, :Wo, :]
            xs2d = xs.reshape(Mo, Cin).astype(jnp.bfloat16)
        sc = jnp.dot(xs2d, ws_ref[...], preferred_element_type=jnp.float32)
        sc = _bn2d(sc, gs, bs, relu=False)

    res = jnp.maximum(h3 + sc, 0.0)                            # (Mo, Cout) f32

    # ---- lane-dense store: (Mo, Cout) -> (N*Ho, Wo*Cout) ----
    # Same row-major layout (wrapper NHWC reshape is free), but the minor dim
    # becomes a multiple of 128 -> unmasked vst instead of per-row vst.msk.
    # Built from a leading-dim reshape + lane concat (minor dim never reshaped).
    res3d = res.reshape(N * Ho, Wo, Cout)
    cols = [res3d[:, w:w + 1, :].reshape(N * Ho, Cout) for w in range(Wo)]
    out_ref[...] = jnp.concatenate(cols, axis=-1).astype(out_ref.dtype)


def block_forward(x, params, *, stride, residual):
    """x: (N, H, W, Cin) float32, NHWC.  Returns (N, Ho, Wo, Cout) float32."""
    assert stride in (1, 2)
    N, H, W, Cin = x.shape
    Cmid = params["w1"].shape[1]
    Cout = params["w3"].shape[1]
    if residual:
        assert stride == 1 and Cin == Cout, \
            "identity residual requires stride==1 and Cin==Cout"
    Ho = (H + 2 - 3) // stride + 1
    Wo = (W + 2 - 3) // stride + 1

    w1 = params["w1"].astype(jnp.bfloat16)
    w2f = params["w2"].astype(jnp.bfloat16).reshape(9 * Cmid, Cmid)  # (kh,kw,ci)
    w3 = params["w3"].astype(jnp.bfloat16)

    # Pack the eight (1,C) BN gamma/beta vectors into one (8, Cmax) input:
    # one DMA / one VMEM tile instead of eight padded (8,128) tiles.
    cmax = max(Cmid, Cout)

    def _row(v, fill):
        v = v.reshape(-1).astype(jnp.float32)
        pad = cmax - v.shape[0]
        return jnp.pad(v, (0, pad), constant_values=fill) if pad else v

    gb = jnp.stack([
        _row(params["g1"], 1.0), _row(params["b1"], 0.0),
        _row(params["g2"], 1.0), _row(params["b2"], 0.0),
        _row(params["g3"], 1.0), _row(params["b3"], 0.0),
        _row(params["gs"], 1.0), _row(params["bs"], 0.0)])       # (8, cmax)

    if residual:
        x_in = x                               # f32: needed for identity add
        args = (x_in, w1, w2f, w3, gb)
    else:
        # x only feeds MXU matmuls on this path -> ship it in bf16.
        x_in = x.astype(jnp.bfloat16)
        ws = params["ws"].astype(jnp.bfloat16)
        args = (x_in, w1, w2f, w3, ws, gb)

    def full_spec(a):
        nd = a.ndim
        return pl.BlockSpec(a.shape, lambda i, nd=nd: (0,) * nd)

    out_rows, out_cols = N * Ho, Wo * Cout     # lane-dense 2D output
    grid_spec = pltpu.PrefetchScalarGridSpec(
        num_scalar_prefetch=0,
        grid=(1,),
        in_specs=[full_spec(a) for a in args],
        out_specs=pl.BlockSpec((out_rows, out_cols), lambda i: (0, 0)),
    )
    kernel = functools.partial(_block_kernel, stride=stride, residual=residual)
    out2d = pl.pallas_call(
        kernel,
        out_shape=jax.ShapeDtypeStruct((out_rows, out_cols), jnp.float32),
        grid_spec=grid_spec,
        compiler_params=pltpu.CompilerParams(
            dimension_semantics=("arbitrary",),
            vmem_limit_bytes=32 * 1024 * 1024),   # fits v7x 64 MiB w/ headroom
    )(*args)
    # (N*Ho, Wo*Cout) has the same row-major HBM layout as NHWC: free reshape.
    return out2d.reshape(N, Ho, Wo, Cout)


# ------------------------ deterministic parameters ------------------------- #
def init_block_params(key, inp, outp):
    midp = outp // 4  # bottleneck width, as in the PyTorch module
    ks = jax.random.split(key, 12)

    def conv_w(k, shape, fan_in):
        return jax.random.normal(k, shape, jnp.float32) / math.sqrt(fan_in)

    def bn_gb(kg, kb, c):
        g = 1.0 + 0.1 * jax.random.normal(kg, (1, c), jnp.float32)
        b = 0.1 * jax.random.normal(kb, (1, c), jnp.float32)
        return g, b

    w1 = conv_w(ks[0], (inp, midp), inp)
    g1, b1 = bn_gb(ks[1], ks[2], midp)
    w2 = conv_w(ks[3], (3, 3, midp, midp), 9 * midp)
    g2, b2 = bn_gb(ks[4], ks[5], midp)
    w3 = conv_w(ks[6], (midp, outp), midp)
    g3, b3 = bn_gb(ks[7], ks[8], outp)
    ws = conv_w(ks[9], (inp, outp), inp)          # projection shortcut
    gs, bs = bn_gb(ks[10], ks[11], outp)
    return dict(w1=w1, g1=g1, b1=b1, w2=w2, g2=g2, b2=b2,
                w3=w3, g3=g3, b3=b3, ws=ws, gs=gs, bs=bs)


# --------------------------- pure-JAX reference ----------------------------- #
def block_ref(x, params, *, stride, residual, matmul_dtype=jnp.float32):
    """Reference.  matmul_dtype=bfloat16 mirrors the kernel's MXU precision
    policy (bf16 inputs, f32 accumulation) while keeping BN in f32."""
    cast = lambda a: a.astype(matmul_dtype)

    def bn(y, gamma, beta):
        mean = y.mean(axis=(0, 1, 2), keepdims=True)
        var = ((y - mean) ** 2).mean(axis=(0, 1, 2), keepdims=True)
        return ((y - mean) * jax.lax.rsqrt(var + _EPS)
                * gamma.reshape(1, 1, 1, -1) + beta.reshape(1, 1, 1, -1))

    h = jnp.einsum("nhwc,cd->nhwd", cast(x), cast(params["w1"]),
                   precision=_REF_PREC, preferred_element_type=jnp.float32)
    h = jax.nn.relu(bn(h, params["g1"], params["b1"]))
    h = jax.lax.conv_general_dilated(
        cast(h), cast(params["w2"]), (stride, stride), ((1, 1), (1, 1)),
        dimension_numbers=("NHWC", "HWIO", "NHWC"),
        precision=_REF_PREC, preferred_element_type=jnp.float32)
    h = jax.nn.relu(bn(h, params["g2"], params["b2"]))
    h = jnp.einsum("nhwc,cd->nhwd", cast(h), cast(params["w3"]),
                   precision=_REF_PREC, preferred_element_type=jnp.float32)
    h = bn(h, params["g3"], params["b3"])
    if residual:
        sc = x
    else:
        xs = x[:, ::stride, ::stride, :]
        sc = jnp.einsum("nhwc,cd->nhwd", cast(xs), cast(params["ws"]),
                        precision=_REF_PREC, preferred_element_type=jnp.float32)
        sc = bn(sc, params["gs"], params["bs"])
    return jax.nn.relu(h + sc)


def _check(y, x, p, *, stride, residual):
    # Tight check vs. a precision-matched reference (bf16 MXU inputs, f32 acc).
    r_bf16 = block_ref(x, p, stride=stride, residual=residual,
                       matmul_dtype=jnp.bfloat16)
    assert bool(jnp.allclose(y, r_bf16, atol=5e-3, rtol=5e-3)), \
        float(jnp.max(jnp.abs(y - r_bf16)))
    # Loose sanity check vs. the full-f32 reference (bf16 rounding only).
    r_f32 = block_ref(x, p, stride=stride, residual=residual)
    assert bool(jnp.allclose(y, r_f32, atol=1e-1, rtol=2e-2)), \
        float(jnp.max(jnp.abs(y - r_f32)))


# ----------------------------------- main ----------------------------------- #
if __name__ == "__main__":
    key = jax.random.PRNGKey(0)
    kx1, kp1, kx2, kp2 = jax.random.split(key, 4)

    # Case 1: Block(inp=8, outp=16, stride=1) -> projection-shortcut path.
    x1 = jax.random.normal(kx1, (2, 16, 16, 8), jnp.float32)   # NHWC
    p1 = init_block_params(kp1, 8, 16)
    y1 = block_forward(x1, p1, stride=1, residual=False)
    jax.block_until_ready(y1)
    assert y1.shape == (2, 16, 16, 16)
    _check(y1, x1, p1, stride=1, residual=False)

    # Case 2: Block(inp=16, outp=16, stride=1) -> identity residual path.
    x2 = jax.random.normal(kx2, (2, 16, 16, 16), jnp.float32)  # NHWC
    p2 = init_block_params(kp2, 16, 16)
    y2 = block_forward(x2, p2, stride=1, residual=True)
    jax.block_until_ready(y2)
    assert y2.shape == (2, 16, 16, 16)
    _check(y2, x2, p2, stride=1, residual=True)

    print("KERNEL_OK")
</pallas_src>

<mosaic_0001>
module attributes {stable_mosaic.version = 11 : i64} {
  func.func @_block_kernel(%arg0: i32, %arg1: memref<2x16x16x8xbf16, #tpu.memory_space<vmem>>, %arg2: memref<8x4xbf16, #tpu.memory_space<vmem>>, %arg3: memref<36x4xbf16, #tpu.memory_space<vmem>>, %arg4: memref<4x16xbf16, #tpu.memory_space<vmem>>, %arg5: memref<8x16xbf16, #tpu.memory_space<vmem>>, %arg6: memref<8x16xf32, #tpu.memory_space<vmem>>, %arg7: memref<32x256xf32, #tpu.memory_space<vmem>>) attributes {dimension_semantics = [#tpu.dimension_semantics<arbitrary>], iteration_bounds = array<i64: 1>, scalar_prefetch = 0 : i64, scratch_operands = 0 : i64, tpu.core_type = #tpu.core_type<tc>, window_params = [{pipeline_mode = #tpu.pipeline_mode<synchronous>, transform_indices = @transform_0, window_bounds = array<i64: 2, 16, 16, 8>}, {pipeline_mode = #tpu.pipeline_mode<synchronous>, transform_indices = @transform_1, window_bounds = array<i64: 8, 4>}, {pipeline_mode = #tpu.pipeline_mode<synchronous>, transform_indices = @transform_2, window_bounds = array<i64: 36, 4>}, {pipeline_mode = #tpu.pipeline_mode<synchronous>, transform_indices = @transform_3, window_bounds = array<i64: 4, 16>}, {pipeline_mode = #tpu.pipeline_mode<synchronous>, transform_indices = @transform_4, window_bounds = array<i64: 8, 16>}, {pipeline_mode = #tpu.pipeline_mode<synchronous>, transform_indices = @transform_5, window_bounds = array<i64: 8, 16>}, {pipeline_mode = #tpu.pipeline_mode<synchronous>, transform_indices = @transform_6, window_bounds = array<i64: 32, 256>}]} {
    %c0 = arith.constant 0 : index
    %c0_0 = arith.constant 0 : index
    %0 = vector.load %arg6[%c0, %c0_0] : memref<8x16xf32, #tpu.memory_space<vmem>>, vector<1x4xf32>
    %c1 = arith.constant 1 : index
    %c0_1 = arith.constant 0 : index
    %1 = vector.load %arg6[%c1, %c0_1] : memref<8x16xf32, #tpu.memory_space<vmem>>, vector<1x4xf32>
    %c2 = arith.constant 2 : index
    %c0_2 = arith.constant 0 : index
    %2 = vector.load %arg6[%c2, %c0_2] : memref<8x16xf32, #tpu.memory_space<vmem>>, vector<1x4xf32>
    %c3 = arith.constant 3 : index
    %c0_3 = arith.constant 0 : index
    %3 = vector.load %arg6[%c3, %c0_3] : memref<8x16xf32, #tpu.memory_space<vmem>>, vector<1x4xf32>
    %c4 = arith.constant 4 : index
    %c0_4 = arith.constant 0 : index
    %4 = vector.load %arg6[%c4, %c0_4] : memref<8x16xf32, #tpu.memory_space<vmem>>, vector<1x16xf32>
    %c5 = arith.constant 5 : index
    %c0_5 = arith.constant 0 : index
    %5 = vector.load %arg6[%c5, %c0_5] : memref<8x16xf32, #tpu.memory_space<vmem>>, vector<1x16xf32>
    %c0_6 = arith.constant 0 : index
    %c0_7 = arith.constant 0 : index
    %c0_8 = arith.constant 0 : index
    %c0_9 = arith.constant 0 : index
    %6 = vector.load %arg1[%c0_6, %c0_7, %c0_8, %c0_9] : memref<2x16x16x8xbf16, #tpu.memory_space<vmem>>, vector<2x16x16x8xbf16>
    %7 = vector.shape_cast %6 : vector<2x16x16x8xbf16> to vector<512x8xbf16>
    %c0_10 = arith.constant 0 : index
    %c0_11 = arith.constant 0 : index
    %8 = vector.load %arg2[%c0_10, %c0_11] : memref<8x4xbf16, #tpu.memory_space<vmem>>, vector<8x4xbf16>
    %cst = arith.constant dense<0.000000e+00> : vector<512x4xf32>
    %9 = tpu.matmul %7, %8, %cst {dimension_numbers = #tpu.dot_dimension_numbers<[1], [0], [0], [1], [0, 0, 1, 1], [], []>} : vector<512x8xbf16>, vector<8x4xbf16>, vector<512x4xf32> -> vector<512x4xf32>
    %10 = arith.mulf %9, %9 : vector<512x4xf32>
    %11 = tpu.concatenate %9, %10 in 1 : vector<512x4xf32>, vector<512x4xf32> -> vector<512x8xf32>
    %cst_12 = arith.constant dense<0.000000e+00> : vector<8xf32>
    %12 = vector.multi_reduction <add>, %11, %cst_12 [0] : vector<512x8xf32> to vector<8xf32>
    %13 = vector.shape_cast %12 : vector<8xf32> to vector<1x8xf32>
    %cst_13 = arith.constant 0.001953125 : f32
    %14 = vector.broadcast %cst_13 : f32 to vector<1x8xf32>
    %15 = arith.mulf %13, %14 : vector<1x8xf32>
    %16 = vector.extract_strided_slice %15 {offsets = [0, 0], sizes = [1, 4], strides = [1, 1]} : vector<1x8xf32> to vector<1x4xf32>
    %17 = vector.extract_strided_slice %15 {offsets = [0, 4], sizes = [1, 4], strides = [1, 1]} : vector<1x8xf32> to vector<1x4xf32>
    %18 = arith.mulf %16, %16 : vector<1x4xf32>
    %19 = arith.subf %17, %18 : vector<1x4xf32>
    %cst_14 = arith.constant 0.000000e+00 : f32
    %20 = vector.broadcast %cst_14 : f32 to vector<1x4xf32>
    %21 = arith.maximumf %19, %20 : vector<1x4xf32>
    %22 = vector.broadcast %16 : vector<1x4xf32> to vector<512x4xf32>
    %23 = arith.subf %9, %22 : vector<512x4xf32>
    %cst_15 = arith.constant 9.99999974E-6 : f32
    %24 = vector.broadcast %cst_15 : f32 to vector<1x4xf32>
    %25 = arith.addf %21, %24 : vector<1x4xf32>
    %26 = math.rsqrt %25 : vector<1x4xf32>
    %27 = vector.broadcast %26 : vector<1x4xf32> to vector<512x4xf32>
    %28 = arith.mulf %23, %27 : vector<512x4xf32>
    %29 = vector.broadcast %0 : vector<1x4xf32> to vector<512x4xf32>
    %30 = arith.mulf %28, %29 : vector<512x4xf32>
    %31 = vector.broadcast %1 : vector<1x4xf32> to vector<512x4xf32>
    %32 = arith.addf %30, %31 : vector<512x4xf32>
    %cst_16 = arith.constant 0.000000e+00 : f32
    %33 = vector.broadcast %cst_16 : f32 to vector<512x4xf32>
    %34 = arith.maximumf %32, %33 : vector<512x4xf32>
    %35 = arith.truncf %34 : vector<512x4xf32> to vector<512x4xbf16>
    %36 = vector.shape_cast %35 : vector<512x4xbf16> to vector<2x16x16x4xbf16>
    %cst_17 = arith.constant 0.000000e+00 : bf16
    %37 = vector.broadcast %cst_17 : bf16 to vector<2x1x16x4xbf16>
    %38 = tpu.concatenate %37, %36, %37 in 1 : vector<2x1x16x4xbf16>, vector<2x16x16x4xbf16>, vector<2x1x16x4xbf16> -> vector<2x18x16x4xbf16>
    %cst_18 = arith.constant 0.000000e+00 : bf16
    %39 = vector.broadcast %cst_18 : bf16 to vector<2x18x1x4xbf16>
    %40 = tpu.concatenate %39, %38, %39 in 2 : vector<2x18x1x4xbf16>, vector<2x18x16x4xbf16>, vector<2x18x1x4xbf16> -> vector<2x18x18x4xbf16>
    %41 = vector.extract_strided_slice %40 {offsets = [0, 0, 0, 0], sizes = [2, 16, 16, 4], strides = [1, 1, 1, 1]} : vector<2x18x18x4xbf16> to vector<2x16x16x4xbf16>
    %42 = vector.extract_strided_slice %40 {offsets = [0, 0, 1, 0], sizes = [2, 16, 16, 4], strides = [1, 1, 1, 1]} : vector<2x18x18x4xbf16> to vector<2x16x16x4xbf16>
    %43 = vector.extract_strided_slice %40 {offsets = [0, 0, 2, 0], sizes = [2, 16, 16, 4], strides = [1, 1, 1, 1]} : vector<2x18x18x4xbf16> to vector<2x16x16x4xbf16>
    %44 = vector.extract_strided_slice %40 {offsets = [0, 1, 0, 0], sizes = [2, 16, 16, 4], strides = [1, 1, 1, 1]} : vector<2x18x18x4xbf16> to vector<2x16x16x4xbf16>
    %45 = vector.extract_strided_slice %40 {offsets = [0, 1, 1, 0], sizes = [2, 16, 16, 4], strides = [1, 1, 1, 1]} : vector<2x18x18x4xbf16> to vector<2x16x16x4xbf16>
    %46 = vector.extract_strided_slice %40 {offsets = [0, 1, 2, 0], sizes = [2, 16, 16, 4], strides = [1, 1, 1, 1]} : vector<2x18x18x4xbf16> to vector<2x16x16x4xbf16>
    %47 = vector.extract_strided_slice %40 {offsets = [0, 2, 0, 0], sizes = [2, 16, 16, 4], strides = [1, 1, 1, 1]} : vector<2x18x18x4xbf16> to vector<2x16x16x4xbf16>
    %48 = vector.extract_strided_slice %40 {offsets = [0, 2, 1, 0], sizes = [2, 16, 16, 4], strides = [1, 1, 1, 1]} : vector<2x18x18x4xbf16> to vector<2x16x16x4xbf16>
    %49 = vector.extract_strided_slice %40 {offsets = [0, 2, 2, 0], sizes = [2, 16, 16, 4], strides = [1, 1, 1, 1]} : vector<2x18x18x4xbf16> to vector<2x16x16x4xbf16>
    %50 = tpu.concatenate %41, %42, %43, %44, %45, %46, %47, %48, %49 in 3 : vector<2x16x16x4xbf16>, vector<2x16x16x4xbf16>, vector<2x16x16x4xbf16>, vector<2x16x16x4xbf16>, vector<2x16x16x4xbf16>, vector<2x16x16x4xbf16>, vector<2x16x16x4xbf16>, vector<2x16x16x4xbf16>, vector<2x16x16x4xbf16> -> vector<2x16x16x36xbf16>
    %51 = vector.shape_cast %50 : vector<2x16x16x36xbf16> to vector<512x36xbf16>
    %c0_19 = arith.constant 0 : index
    %c0_20 = arith.constant 0 : index
    %52 = vector.load %arg3[%c0_19, %c0_20] : memref<36x4xbf16, #tpu.memory_space<vmem>>, vector<36x4xbf16>
    %cst_21 = arith.constant dense<0.000000e+00> : vector<512x4xf32>
    %53 = tpu.matmul %51, %52, %cst_21 {dimension_numbers = #tpu.dot_dimension_numbers<[1], [0], [0], [1], [0, 0, 1, 1], [], []>} : vector<512x36xbf16>, vector<36x4xbf16>, vector<512x4xf32> -> vector<512x4xf32>
    %54 = arith.mulf %53, %53 : vector<512x4xf32>
    %55 = tpu.concatenate %53, %54 in 1 : vector<512x4xf32>, vector<512x4xf32> -> vector<512x8xf32>
    %cst_22 = arith.constant dense<0.000000e+00> : vector<8xf32>
    %56 = vector.multi_reduction <add>, %55, %cst_22 [0] : vector<512x8xf32> to vector<8xf32>
    %57 = vector.shape_cast %56 : vector<8xf32> to vector<1x8xf32>
    %cst_23 = arith.constant 0.001953125 : f32
    %58 = vector.broadcast %cst_23 : f32 to vector<1x8xf32>
    %59 = arith.mulf %57, %58 : vector<1x8xf32>
    %60 = vector.extract_strided_slice %59 {offsets = [0, 0], sizes = [1, 4], strides = [1, 1]} : vector<1x8xf32> to vector<1x4xf32>
    %61 = vector.extract_strided_slice %59 {offsets = [0, 4], sizes = [1, 4], strides = [1, 1]} : vector<1x8xf32> to vector<1x4xf32>
    %62 = arith.mulf %60, %60 : vector<1x4xf32>
    %63 = arith.subf %61, %62 : vector<1x4xf32>
    %cst_24 = arith.constant 0.000000e+00 : f32
    %64 = vector.broadcast %cst_24 : f32 to vector<1x4xf32>
    %65 = arith.maximumf %63, %64 : vector<1x4xf32>
    %66 = vector.broadcast %60 : vector<1x4xf32> to vector<512x4xf32>
    %67 = arith.subf %53, %66 : vector<512x4xf32>
    %cst_25 = arith.constant 9.99999974E-6 : f32
    %68 = vector.broadcast %cst_25 : f32 to vector<1x4xf32>
    %69 = arith.addf %65, %68 : vector<1x4xf32>
    %70 = math.rsqrt %69 : vector<1x4xf32>
    %71 = vector.broadcast %70 : vector<1x4xf32> to vector<512x4xf32>
    %72 = arith.mulf %67, %71 : vector<512x4xf32>
    %73 = vector.broadcast %2 : vector<1x4xf32> to vector<512x4xf32>
    %74 = arith.mulf %72, %73 : vector<512x4xf32>
    %75 = vector.broadcast %3 : vector<1x4xf32> to vector<512x4xf32>
    %76 = arith.addf %74, %75 : vector<512x4xf32>
    %cst_26 = arith.constant 0.000000e+00 : f32
    %77 = vector.broadcast %cst_26 : f32 to vector<512x4xf32>
    %78 = arith.maximumf %76, %77 : vector<512x4xf32>
    %79 = arith.truncf %78 : vector<512x4xf32> to vector<512x4xbf16>
    %c0_27 = arith.constant 0 : index
    %c0_28 = arith.constant 0 : index
    %80 = vector.load %arg4[%c0_27, %c0_28] : memref<4x16xbf16, #tpu.memory_space<vmem>>, vector<4x16xbf16>
    %cst_29 = arith.constant dense<0.000000e+00> : vector<512x16xf32>
    %81 = tpu.matmul %79, %80, %cst_29 {dimension_numbers = #tpu.dot_dimension_numbers<[1], [0], [0], [1], [0, 0, 1, 1], [], []>} : vector<512x4xbf16>, vector<4x16xbf16>, vector<512x16xf32> -> vector<512x16xf32>
    %82 = arith.mulf %81, %81 : vector<512x16xf32>
    %83 = tpu.concatenate %81, %82 in 1 : vector<512x16xf32>, vector<512x16xf32> -> vector<512x32xf32>
    %cst_30 = arith.constant dense<0.000000e+00> : vector<32xf32>
    %84 = vector.multi_reduction <add>, %83, %cst_30 [0] : vector<512x32xf32> to vector<32xf32>
    %85 = vector.shape_cast %84 : vector<32xf32> to vector<1x32xf32>
    %cst_31 = arith.constant 0.001953125 : f32
    %86 = vector.broadcast %cst_31 : f32 to vector<1x32xf32>
    %87 = arith.mulf %85, %86 : vector<1x32xf32>
    %88 = vector.extract_strided_slice %87 {offsets = [0, 0], sizes = [1, 16], strides = [1, 1]} : vector<1x32xf32> to vector<1x16xf32>
    %89 = vector.extract_strided_slice %87 {offsets = [0, 16], sizes = [1, 16], strides = [1, 1]} : vector<1x32xf32> to vector<1x16xf32>
    %90 = arith.mulf %88, %88 : vector<1x16xf32>
    %91 = arith.subf %89, %90 : vector<1x16xf32>
    %cst_32 = arith.constant 0.000000e+00 : f32
    %92 = vector.broadcast %cst_32 : f32 to vector<1x16xf32>
    %93 = arith.maximumf %91, %92 : vector<1x16xf32>
    %94 = vector.broadcast %88 : vector<1x16xf32> to vector<512x16xf32>
    %95 = arith.subf %81, %94 : vector<512x16xf32>
    %cst_33 = arith.constant 9.99999974E-6 : f32
    %96 = vector.broadcast %cst_33 : f32 to vector<1x16xf32>
    %97 = arith.addf %93, %96 : vector<1x16xf32>
    %98 = math.rsqrt %97 : vector<1x16xf32>
    %99 = vector.broadcast %98 : vector<1x16xf32> to vector<512x16xf32>
    %100 = arith.mulf %95, %99 : vector<512x16xf32>
    %101 = vector.broadcast %4 : vector<1x16xf32> to vector<512x16xf32>
    %102 = arith.mulf %100, %101 : vector<512x16xf32>
    %103 = vector.broadcast %5 : vector<1x16xf32> to vector<512x16xf32>
    %104 = arith.addf %102, %103 : vector<512x16xf32>
    %c6 = arith.constant 6 : index
    %c0_34 = arith.constant 0 : index
    %105 = vector.load %arg6[%c6, %c0_34] : memref<8x16xf32, #tpu.memory_space<vmem>>, vector<1x16xf32>
    %c7 = arith.constant 7 : index
    %c0_35 = arith.constant 0 : index
    %106 = vector.load %arg6[%c7, %c0_35] : memref<8x16xf32, #tpu.memory_space<vmem>>, vector<1x16xf32>
    %c0_36 = arith.constant 0 : index
    %c0_37 = arith.constant 0 : index
    %107 = vector.load %arg5[%c0_36, %c0_37] : memref<8x16xbf16, #tpu.memory_space<vmem>>, vector<8x16xbf16>
    %cst_38 = arith.constant dense<0.000000e+00> : vector<512x16xf32>
    %108 = tpu.matmul %7, %107, %cst_38 {dimension_numbers = #tpu.dot_dimension_numbers<[1], [0], [0], [1], [0, 0, 1, 1], [], []>} : vector<512x8xbf16>, vector<8x16xbf16>, vector<512x16xf32> -> vector<512x16xf32>
    %109 = arith.mulf %108, %108 : vector<512x16xf32>
    %110 = tpu.concatenate %108, %109 in 1 : vector<512x16xf32>, vector<512x16xf32> -> vector<512x32xf32>
    %cst_39 = arith.constant dense<0.000000e+00> : vector<32xf32>
    %111 = vector.multi_reduction <add>, %110, %cst_39 [0] : vector<512x32xf32> to vector<32xf32>
    %112 = vector.shape_cast %111 : vector<32xf32> to vector<1x32xf32>
    %cst_40 = arith.constant 0.001953125 : f32
    %113 = vector.broadcast %cst_40 : f32 to vector<1x32xf32>
    %114 = arith.mulf %112, %113 : vector<1x32xf32>
    %115 = vector.extract_strided_slice %114 {offsets = [0, 0], sizes = [1, 16], strides = [1, 1]} : vector<1x32xf32> to vector<1x16xf32>
    %116 = vector.extract_strided_slice %114 {offsets = [0, 16], sizes = [1, 16], strides = [1, 1]} : vector<1x32xf32> to vector<1x16xf32>
    %117 = arith.mulf %115, %115 : vector<1x16xf32>
    %118 = arith.subf %116, %117 : vector<1x16xf32>
    %cst_41 = arith.constant 0.000000e+00 : f32
    %119 = vector.broadcast %cst_41 : f32 to vector<1x16xf32>
    %120 = arith.maximumf %118, %119 : vector<1x16xf32>
    %121 = vector.broadcast %115 : vector<1x16xf32> to vector<512x16xf32>
    %122 = arith.subf %108, %121 : vector<512x16xf32>
    %cst_42 = arith.constant 9.99999974E-6 : f32
    %123 = vector.broadcast %cst_42 : f32 to vector<1x16xf32>
    %124 = arith.addf %120, %123 : vector<1x16xf32>
    %125 = math.rsqrt %124 : vector<1x16xf32>
    %126 = vector.broadcast %125 : vector<1x16xf32> to vector<512x16xf32>
    %127 = arith.mulf %122, %126 : vector<512x16xf32>
    %128 = vector.broadcast %105 : vector<1x16xf32> to vector<512x16xf32>
    %129 = arith.mulf %127, %128 : vector<512x16xf32>
    %130 = vector.broadcast %106 : vector<1x16xf32> to vector<512x16xf32>
    %131 = arith.addf %129, %130 : vector<512x16xf32>
    %132 = arith.addf %104, %131 : vector<512x16xf32>
    %cst_43 = arith.constant 0.000000e+00 : f32
    %133 = vector.broadcast %cst_43 : f32 to vector<512x16xf32>
    %134 = arith.maximumf %132, %133 : vector<512x16xf32>
    %135 = vector.shape_cast %134 : vector<512x16xf32> to vector<32x16x16xf32>
    %136 = vector.extract_strided_slice %135 {offsets = [0, 0, 0], sizes = [32, 1, 16], strides = [1, 1, 1]} : vector<32x16x16xf32> to vector<32x1x16xf32>
    %137 = vector.shape_cast %136 : vector<32x1x16xf32> to vector<32x16xf32>
    %138 = vector.extract_strided_slice %135 {offsets = [0, 1, 0], sizes = [32, 1, 16], strides = [1, 1, 1]} : vector<32x16x16xf32> to vector<32x1x16xf32>
    %139 = vector.shape_cast %138 : vector<32x1x16xf32> to vector<32x16xf32>
    %140 = vector.extract_strided_slice %135 {offsets = [0, 2, 0], sizes = [32, 1, 16], strides = [1, 1, 1]} : vector<32x16x16xf32> to vector<32x1x16xf32>
    %141 = vector.shape_cast %140 : vector<32x1x16xf32> to vector<32x16xf32>
    %142 = vector.extract_strided_slice %135 {offsets = [0, 3, 0], sizes = [32, 1, 16], strides = [1, 1, 1]} : vector<32x16x16xf32> to vector<32x1x16xf32>
    %143 = vector.shape_cast %142 : vector<32x1x16xf32> to vector<32x16xf32>
    %144 = vector.extract_strided_slice %135 {offsets = [0, 4, 0], sizes = [32, 1, 16], strides = [1, 1, 1]} : vector<32x16x16xf32> to vector<32x1x16xf32>
    %145 = vector.shape_cast %144 : vector<32x1x16xf32> to vector<32x16xf32>
    %146 = vector.extract_strided_slice %135 {offsets = [0, 5, 0], sizes = [32, 1, 16], strides = [1, 1, 1]} : vector<32x16x16xf32> to vector<32x1x16xf32>
    %147 = vector.shape_cast %146 : vector<32x1x16xf32> to vector<32x16xf32>
    %148 = vector.extract_strided_slice %135 {offsets = [0, 6, 0], sizes = [32, 1, 16], strides = [1, 1, 1]} : vector<32x16x16xf32> to vector<32x1x16xf32>
    %149 = vector.shape_cast %148 : vector<32x1x16xf32> to vector<32x16xf32>
    %150 = vector.extract_strided_slice %135 {offsets = [0, 7, 0], sizes = [32, 1, 16], strides = [1, 1, 1]} : vector<32x16x16xf32> to vector<32x1x16xf32>
    %151 = vector.shape_cast %150 : vector<32x1x16xf32> to vector<32x16xf32>
    %152 = vector.extract_strided_slice %135 {offsets = [0, 8, 0], sizes = [32, 1, 16], strides = [1, 1, 1]} : vector<32x16x16xf32> to vector<32x1x16xf32>
    %153 = vector.shape_cast %152 : vector<32x1x16xf32> to vector<32x16xf32>
    %154 = vector.extract_strided_slice %135 {offsets = [0, 9, 0], sizes = [32, 1, 16], strides = [1, 1, 1]} : vector<32x16x16xf32> to vector<32x1x16xf32>
    %155 = vector.shape_cast %154 : vector<32x1x16xf32> to vector<32x16xf32>
    %156 = vector.extract_strided_slice %135 {offsets = [0, 10, 0], sizes = [32, 1, 16], strides = [1, 1, 1]} : vector<32x16x16xf32> to vector<32x1x16xf32>
    %157 = vector.shape_cast %156 : vector<32x1x16xf32> to vector<32x16xf32>
    %158 = vector.extract_strided_slice %135 {offsets = [0, 11, 0], sizes = [32, 1, 16], strides = [1, 1, 1]} : vector<32x16x16xf32> to vector<32x1x16xf32>
    %159 = vector.shape_cast %158 : vector<32x1x16xf32> to vector<32x16xf32>
    %160 = vector.extract_strided_slice %135 {offsets = [0, 12, 0], sizes = [32, 1, 16], strides = [1, 1, 1]} : vector<32x16x16xf32> to vector<32x1x16xf32>
    %161 = vector.shape_cast %160 : vector<32x1x16xf32> to vector<32x16xf32>
    %162 = vector.extract_strided_slice %135 {offsets = [0, 13, 0], sizes = [32, 1, 16], strides = [1, 1, 1]} : vector<32x16x16xf32> to vector<32x1x16xf32>
    %163 = vector.shape_cast %162 : vector<32x1x16xf32> to vector<32x16xf32>
    %164 = vector.extract_strided_slice %135 {offsets = [0, 14, 0], sizes = [32, 1, 16], strides = [1, 1, 1]} : vector<32x16x16xf32> to vector<32x1x16xf32>
    %165 = vector.shape_cast %164 : vector<32x1x16xf32> to vector<32x16xf32>
    %166 = vector.extract_strided_slice %135 {offsets = [0, 15, 0], sizes = [32, 1, 16], strides = [1, 1, 1]} : vector<32x16x16xf32> to vector<32x1x16xf32>
    %167 = vector.shape_cast %166 : vector<32x1x16xf32> to vector<32x16xf32>
    %168 = tpu.concatenate %137, %139, %141, %143, %145, %147, %149, %151, %153, %155, %157, %159, %161, %163, %165, %167 in 1 : vector<32x16xf32>, vector<32x16xf32>, vector<32x16xf32>, vector<32x16xf32>, vector<32x16xf32>, vector<32x16xf32>, vector<32x16xf32>, vector<32x16xf32>, vector<32x16xf32>, vector<32x16xf32>, vector<32x16xf32>, vector<32x16xf32>, vector<32x16xf32>, vector<32x16xf32>, vector<32x16xf32>, vector<32x16xf32> -> vector<32x256xf32>
    %c0_44 = arith.constant 0 : index
    %c0_45 = arith.constant 0 : index
    %169 = vector.load %arg7[%c0_44, %c0_45] : memref<32x256xf32, #tpu.memory_space<vmem>>, vector<32x256xf32>
    tpu.vector_store %arg7[%c0_44, %c0_45], %168 {strides = array<i32>} : memref<32x256xf32, #tpu.memory_space<vmem>>, vector<32x256xf32>,
    return
  }
  func.func @transform_0(%arg0: i32) -> (i32, i32, i32, i32) {
    %c0_i32 = arith.constant 0 : i32
    %c0_i32_0 = arith.constant 0 : i32
    %c0_i32_1 = arith.constant 0 : i32
    %c0_i32_2 = arith.constant 0 : i32
    %c0_i32_3 = arith.constant 0 : i32
    return %c0_i32, %c0_i32_0, %c0_i32_1, %c0_i32_2 : i32, i32, i32, i32
  }
  func.func @transform_1(%arg0: i32) -> (i32, i32) {
    %c0_i32 = arith.constant 0 : i32
    %c0_i32_0 = arith.constant 0 : i32
    %c0_i32_1 = arith.constant 0 : i32
    return %c0_i32, %c0_i32_0 : i32, i32
  }
  func.func @transform_2(%arg0: i32) -> (i32, i32) {
    %c0_i32 = arith.constant 0 : i32
    %c0_i32_0 = arith.constant 0 : i32
    %c0_i32_1 = arith.constant 0 : i32
    return %c0_i32, %c0_i32_0 : i32, i32
  }
  func.func @transform_3(%arg0: i32) -> (i32, i32) {
    %c0_i32 = arith.constant 0 : i32
    %c0_i32_0 = arith.constant 0 : i32
    %c0_i32_1 = arith.constant 0 : i32
    return %c0_i32, %c0_i32_0 : i32, i32
  }
  func.func @transform_4(%arg0: i32) -> (i32, i32) {
    %c0_i32 = arith.constant 0 : i32
    %c0_i32_0 = arith.constant 0 : i32
    %c0_i32_1 = arith.constant 0 : i32
    return %c0_i32, %c0_i32_0 : i32, i32
  }
  func.func @transform_5(%arg0: i32) -> (i32, i32) {
    %c0_i32 = arith.constant 0 : i32
    %c0_i32_0 = arith.constant 0 : i32
    %c0_i32_1 = arith.constant 0 : i32
    return %c0_i32, %c0_i32_0 : i32, i32
  }
  func.func @transform_6(%arg0: i32) -> (i32, i32) {
    %c0_i32 = arith.constant 0 : i32
    %c0_i32_0 = arith.constant 0 : i32
    %c0_i32_1 = arith.constant 0 : i32
    return %c0_i32, %c0_i32_0 : i32, i32
  }
}

</mosaic_0001>

<llo_original>
// kernel: tpu_custom_call.1
$region0: #{tpu_custom_call.1}
  #allocation0 [shape = 'u32[]', space=smem, size = 0x4, offset = 0x4, fixed_abs, tag = 'smem constant byte address 0x4 - core index']
  #allocation1 [shape = 'u32[144,128]{1,0:T(1,128)}', space=vmem, size = 0x12000, scoped, tag = 'internal scratch']
  %s0 = inlined_call_operand.vmem [shape: bf16[2,16,16,8], index: 0, kind: input, shape index: {}]
  %s1 = inlined_call_operand.vmem [shape: bf16[8,4], index: 1, kind: input, shape index: {}]
  %s2 = inlined_call_operand.vmem [shape: bf16[36,4], index: 2, kind: input, shape index: {}]
  %s3 = inlined_call_operand.vmem [shape: bf16[4,16], index: 3, kind: input, shape index: {}]
  %s4 = inlined_call_operand.vmem [shape: bf16[8,16], index: 4, kind: input, shape index: {}]
  %s5 = inlined_call_operand.vmem [shape: f32[8,16], index: 5, kind: input, shape index: {}]
  %s6 = inlined_call_operand.hbm [shape: f32[32,256], index: 6, kind: output, shape index: {}]
  %s7 = sld [smem:[#allocation0]]
  $region34: #{tpu_custom_call.1} parent=0
    _
  %s9 = ssub.s32 1, %s7
  %s10 = scalar_select 0, %s9, %s7
  $region1: #{tpu_custom_call.1} parent=0
    #allocation2 [shape = 'u8[32768]{0}', space=vmem, size = 0x8000, scoped, tag = 'output window, operand 0, single buffered']
    #allocation3 [shape = 's32[1]{0}', space=sflag, size = 0x4, scoped, tag = 'scoped memory for tpu_custom_call.1']
    %11 = vsyncpa [#allocation3], 0
    // Predicated region
    $region2: #{tpu_custom_call.1} parent=1 // pred_check
      _
    $region3: #{tpu_custom_call.1} parent=1 // pred_check_branch
      %13 = sbr.rel (0) target = $region5
    $region4: #{tpu_custom_call.1} parent=1 // pred_region
      _
    $region5: #{tpu_custom_call.1} parent=1 // pred_fallthru
      _
    // Predicated region
    $region6: #{tpu_custom_call.1} parent=1 // pred_check
      _
    $region7: #{tpu_custom_call.1} parent=1 // pred_check_branch
      %15 = sbr.rel (0) target = $region9
    $region8: #{tpu_custom_call.1} parent=1 // pred_region
      _
    $region9: #{tpu_custom_call.1} parent=1 // pred_fallthru
      _
    // Predicated region
    $region10: #{tpu_custom_call.1} parent=1 // pred_check
      _
    $region11: #{tpu_custom_call.1} parent=1 // pred_check_branch
      %17 = sbr.rel (0) target = $region13
    $region12: #{tpu_custom_call.1} parent=1 // pred_region
      _
    $region13: #{tpu_custom_call.1} parent=1 // pred_fallthru
      _
    // Predicated region
    $region14: #{tpu_custom_call.1} parent=1 // pred_check
      _
    $region15: #{tpu_custom_call.1} parent=1 // pred_check_branch
      %19 = sbr.rel (0) target = $region17
    $region16: #{tpu_custom_call.1} parent=1 // pred_region
      _
    $region17: #{tpu_custom_call.1} parent=1 // pred_fallthru
      _
    // Predicated region
    $region18: #{tpu_custom_call.1} parent=1 // pred_check
      _
    $region19: #{tpu_custom_call.1} parent=1 // pred_check_branch
      %21 = sbr.rel (0) target = $region21
    $region20: #{tpu_custom_call.1} parent=1 // pred_region
      _
    $region21: #{tpu_custom_call.1} parent=1 // pred_fallthru
      _
    // Predicated region
    $region22: #{tpu_custom_call.1} parent=1 // pred_check
      _
    $region23: #{tpu_custom_call.1} parent=1 // pred_check_branch
      %23 = sbr.rel (0) target = $region25
    $region24: #{tpu_custom_call.1} parent=1 // pred_region
      _
    $region25: #{tpu_custom_call.1} parent=1 // pred_fallthru
      _
    %v25 = vld [vmem:[%s5] sm:$0x1]
    %v26 = vld [vmem:[%s5 + $0x1] sm:$0x1]
    %v27 = vld [vmem:[%s5 + $0x2] sm:$0x1]
    %v28 = vld [vmem:[%s5 + $0x3] sm:$0x1]
    %v29 = vld [vmem:[%s5 + $0x4] sm:$0x1]
    %v30 = vld [vmem:[%s5 + $0x5] sm:$0x1]
    %v31 = vld [vmem:[%s0] sm:$0xf]
    %v32 = vld [vmem:[%s0 + $0x4] sm:$0xf]
    %v33 = vld [vmem:[%s0 + $0x8] sm:$0xf]
    %v34 = vld [vmem:[%s0 + $0xc] sm:$0xf]
    %v35 = vld [vmem:[%s0 + $0x10] sm:$0xf]
    %v36 = vld [vmem:[%s0 + $0x14] sm:$0xf]
    %v37 = vld [vmem:[%s0 + $0x18] sm:$0xf]
    %v38 = vld [vmem:[%s0 + $0x1c] sm:$0xf]
    %v39 = vld [vmem:[%s0 + $0x20] sm:$0xf]
    %v40 = vld [vmem:[%s0 + $0x24] sm:$0xf]
    %v41 = vld [vmem:[%s0 + $0x28] sm:$0xf]
    %v42 = vld [vmem:[%s0 + $0x2c] sm:$0xf]
    %v43 = vld [vmem:[%s0 + $0x30] sm:$0xf]
    %v44 = vld [vmem:[%s0 + $0x34] sm:$0xf]
    %v45 = vld [vmem:[%s0 + $0x38] sm:$0xf]
    %v46 = vld [vmem:[%s0 + $0x3c] sm:$0xf]
    %v47 = vld [vmem:[%s0 + $0x40] sm:$0xf]
    %v48 = vld [vmem:[%s0 + $0x44] sm:$0xf]
    %v49 = vld [vmem:[%s0 + $0x48] sm:$0xf]
    %v50 = vld [vmem:[%s0 + $0x4c] sm:$0xf]
    %v51 = vld [vmem:[%s0 + $0x50] sm:$0xf]
    %v52 = vld [vmem:[%s0 + $0x54] sm:$0xf]
    %v53 = vld [vmem:[%s0 + $0x58] sm:$0xf]
    %v54 = vld [vmem:[%s0 + $0x5c] sm:$0xf]
    %v55 = vld [vmem:[%s0 + $0x60] sm:$0xf]
    %v56 = vld [vmem:[%s0 + $0x64] sm:$0xf]
    %v57 = vld [vmem:[%s0 + $0x68] sm:$0xf]
    %v58 = vld [vmem:[%s0 + $0x6c] sm:$0xf]
    %v59 = vld [vmem:[%s0 + $0x70] sm:$0xf]
    %v60 = vld [vmem:[%s0 + $0x74] sm:$0xf]
    %v61 = vld [vmem:[%s0 + $0x78] sm:$0xf]
    %v62 = vld [vmem:[%s0 + $0x7c] sm:$0xf]
    %v63 = vld [vmem:[%s0 + $0x80] sm:$0xf]
    %v64 = vld [vmem:[%s0 + $0x84] sm:$0xf]
    %v65 = vld [vmem:[%s0 + $0x88] sm:$0xf]
    %v66 = vld [vmem:[%s0 + $0x8c] sm:$0xf]
    %v67 = vld [vmem:[%s0 + $0x90] sm:$0xf]
    %v68 = vld [vmem:[%s0 + $0x94] sm:$0xf]
    %v69 = vld [vmem:[%s0 + $0x98] sm:$0xf]
    %v70 = vld [vmem:[%s0 + $0x9c] sm:$0xf]
    %v71 = vld [vmem:[%s0 + $0xa0] sm:$0xf]
    %v72 = vld [vmem:[%s0 + $0xa4] sm:$0xf]
    %v73 = vld [vmem:[%s0 + $0xa8] sm:$0xf]
    %v74 = vld [vmem:[%s0 + $0xac] sm:$0xf]
    %v75 = vld [vmem:[%s0 + $0xb0] sm:$0xf]
    %v76 = vld [vmem:[%s0 + $0xb4] sm:$0xf]
    %v77 = vld [vmem:[%s0 + $0xb8] sm:$0xf]
    %v78 = vld [vmem:[%s0 + $0xbc] sm:$0xf]
    %v79 = vld [vmem:[%s0 + $0xc0] sm:$0xf]
    %v80 = vld [vmem:[%s0 + $0xc4] sm:$0xf]
    %v81 = vld [vmem:[%s0 + $0xc8] sm:$0xf]
    %v82 = vld [vmem:[%s0 + $0xcc] sm:$0xf]
    %v83 = vld [vmem:[%s0 + $0xd0] sm:$0xf]
    %v84 = vld [vmem:[%s0 + $0xd4] sm:$0xf]
    %v85 = vld [vmem:[%s0 + $0xd8] sm:$0xf]
    %v86 = vld [vmem:[%s0 + $0xdc] sm:$0xf]
    %v87 = vld [vmem:[%s0 + $0xe0] sm:$0xf]
    %v88 = vld [vmem:[%s0 + $0xe4] sm:$0xf]
    %v89 = vld [vmem:[%s0 + $0xe8] sm:$0xf]
    %v90 = vld [vmem:[%s0 + $0xec] sm:$0xf]
    %v91 = vld [vmem:[%s0 + $0xf0] sm:$0xf]
    %v92 = vld [vmem:[%s0 + $0xf4] sm:$0xf]
    %v93 = vld [vmem:[%s0 + $0xf8] sm:$0xf]
    %v94 = vld [vmem:[%s0 + $0xfc] sm:$0xf]
    %v95 = vld [vmem:[%s1] sm:$0xf]
    %v160 = vunpack.c.l.b16 %v31
    %v161 = vunpack.c.l.b16 %v32
    %v162 = vunpack.c.l.b16 %v33
    %v163 = vunpack.c.l.b16 %v34
    %v164 = vunpack.c.l.b16 %v35
    %v165 = vunpack.c.l.b16 %v36
    %v166 = vunpack.c.l.b16 %v37
    %v167 = vunpack.c.l.b16 %v38
    %v168 = vunpack.c.l.b16 %v39
    %v169 = vunpack.c.l.b16 %v40
    %v170 = vunpack.c.l.b16 %v41
    %v171 = vunpack.c.l.b16 %v42
    %v172 = vunpack.c.l.b16 %v43
    %v173 = vunpack.c.l.b16 %v44
    %v174 = vunpack.c.l.b16 %v45
    %v175 = vunpack.c.l.b16 %v46
    %v176 = vunpack.c.l.b16 %v47
    %v177 = vunpack.c.l.b16 %v48
    %v178 = vunpack.c.l.b16 %v49
    %v179 = vunpack.c.l.b16 %v50
    %v180 = vunpack.c.l.b16 %v51
    %v181 = vunpack.c.l.b16 %v52
    %v182 = vunpack.c.l.b16 %v53
    %v183 = vunpack.c.l.b16 %v54
    %v184 = vunpack.c.l.b16 %v55
    %v185 = vunpack.c.l.b16 %v56
    %v186 = vunpack.c.l.b16 %v57
    %v187 = vunpack.c.l.b16 %v58
    %v188 = vunpack.c.l.b16 %v59
    %v189 = vunpack.c.l.b16 %v60
    %v190 = vunpack.c.l.b16 %v61
    %v191 = vunpack.c.l.b16 %v62
    %v192 = vunpack.c.l.b16 %v63
    %v193 = vunpack.c.l.b16 %v64
    %v194 = vunpack.c.l.b16 %v65
    %v195 = vunpack.c.l.b16 %v66
    %v196 = vunpack.c.l.b16 %v67
    %v197 = vunpack.c.l.b16 %v68
    %v198 = vunpack.c.l.b16 %v69
    %v199 = vunpack.c.l.b16 %v70
    %v200 = vunpack.c.l.b16 %v71
    %v201 = vunpack.c.l.b16 %v72
    %v202 = vunpack.c.l.b16 %v73
    %v203 = vunpack.c.l.b16 %v74
    %v204 = vunpack.c.l.b16 %v75
    %v205 = vunpack.c.l.b16 %v76
    %v206 = vunpack.c.l.b16 %v77
    %v207 = vunpack.c.l.b16 %v78
    %v208 = vunpack.c.l.b16 %v79
    %v209 = vunpack.c.l.b16 %v80
    %v210 = vunpack.c.l.b16 %v81
    %v211 = vunpack.c.l.b16 %v82
    %v212 = vunpack.c.l.b16 %v83
    %v213 = vunpack.c.l.b16 %v84
    %v214 = vunpack.c.l.b16 %v85
    %v215 = vunpack.c.l.b16 %v86
    %v216 = vunpack.c.l.b16 %v87
    %v217 = vunpack.c.l.b16 %v88
    %v218 = vunpack.c.l.b16 %v89
    %v219 = vunpack.c.l.b16 %v90
    %v220 = vunpack.c.l.b16 %v91
    %v221 = vunpack.c.l.b16 %v92
    %v222 = vunpack.c.l.b16 %v93
    %v223 = vunpack.c.l.b16 %v94
    %v224 = vpack.c.b16 %v161, %v160
    %v225 = vpack.c.b16 %v163, %v162
    %v226 = vpack.c.b16 %v165, %v164
    %v227 = vpack.c.b16 %v167, %v166
    %v228 = vpack.c.b16 %v169, %v168
    %v229 = vpack.c.b16 %v171, %v170
    %v230 = vpack.c.b16 %v173, %v172
    %v231 = vpack.c.b16 %v175, %v174
    %v232 = vpack.c.b16 %v177, %v176
    %v233 = vpack.c.b16 %v179, %v178
    %v234 = vpack.c.b16 %v181, %v180
    %v235 = vpack.c.b16 %v183, %v182
    %v236 = vpack.c.b16 %v185, %v184
    %v237 = vpack.c.b16 %v187, %v186
    %v238 = vpack.c.b16 %v189, %v188
    %v239 = vpack.c.b16 %v191, %v190
    %v240 = vpack.c.b16 %v193, %v192
    %v241 = vpack.c.b16 %v195, %v194
    %v242 = vpack.c.b16 %v197, %v196
    %v243 = vpack.c.b16 %v199, %v198
    %v244 = vpack.c.b16 %v201, %v200
    %v245 = vpack.c.b16 %v203, %v202
    %v246 = vpack.c.b16 %v205, %v204
    %v247 = vpack.c.b16 %v207, %v206
    %v248 = vpack.c.b16 %v209, %v208
    %v249 = vpack.c.b16 %v211, %v210
    %v250 = vpack.c.b16 %v213, %v212
    %v251 = vpack.c.b16 %v215, %v214
    %v252 = vpack.c.b16 %v217, %v216
    %v253 = vpack.c.b16 %v219, %v218
    %v254 = vpack.c.b16 %v221, %v220
    %v255 = vpack.c.b16 %v223, %v222
    %vm256 = vcmask 64512
    %v258 = vsel %vm256, %v224, 0
    %v261 = vsel %vm256, %v225, 0
    %v264 = vsel %vm256, %v226, 0
    %v267 = vsel %vm256, %v227, 0
    %v270 = vsel %vm256, %v228, 0
    %v273 = vsel %vm256, %v229, 0
    %v276 = vsel %vm256, %v230, 0
    %v279 = vsel %vm256, %v231, 0
    %v282 = vsel %vm256, %v232, 0
    %v285 = vsel %vm256, %v233, 0
    %v288 = vsel %vm256, %v234, 0
    %v291 = vsel %vm256, %v235, 0
    %v294 = vsel %vm256, %v236, 0
    %v297 = vsel %vm256, %v237, 0
    %v300 = vsel %vm256, %v238, 0
    %v303 = vsel %vm256, %v239, 0
    %v306 = vsel %vm256, %v240, 0
    %v309 = vsel %vm256, %v241, 0
    %v312 = vsel %vm256, %v242, 0
    %v315 = vsel %vm256, %v243, 0
    %v318 = vsel %vm256, %v244, 0
    %v321 = vsel %vm256, %v245, 0
    %v324 = vsel %vm256, %v246, 0
    %v327 = vsel %vm256, %v247, 0
    %v330 = vsel %vm256, %v248, 0
    %v333 = vsel %vm256, %v249, 0
    %v336 = vsel %vm256, %v250, 0
    %v339 = vsel %vm256, %v251, 0
    %v342 = vsel %vm256, %v252, 0
    %v345 = vsel %vm256, %v253, 0
    %v348 = vsel %vm256, %v254, 0
    %v351 = vsel %vm256, %v255, 0
    %vm353 = vcmask 1043456
    %v355 = vsel %vm353, %v95, 0
    %357 = vmatprep.subr.bf16.mxu0 0
    %358 = vmatpush1.bf16.msra.mxu0 %v355
    %359 = vmatprep.subr.bf16.mxu0 0
    %360 = vmatpush1.bf16.msra.mxu0 0
    %361 = vmatprep.subr.bf16.mxu0 0
    %362 = vmatpush1.bf16.msra.mxu0 0
    %363 = vmatprep.subr.bf16.mxu0 0
    %364 = vmatpush1.bf16.msra.mxu0 0
    %365 = vmatprep.subr.bf16.mxu0 0
    %366 = vmatpush1.bf16.msra.mxu0 0
    %367 = vmatprep.subr.bf16.mxu0 0
    %368 = vmatpush1.bf16.msra.mxu0 0
    %369 = vmatprep.subr.bf16.mxu0 0
    %370 = vmatpush1.bf16.msra.mxu0 0
    %371 = vmatprep.subr.bf16.mxu0 0
    %372 = vmatpush1.bf16.msra.mxu0 0
    %373 = vmatprep.subr.bf16.mxu0 0
    %374 = vmatpush1.bf16.msra.mxu0 0
    %375 = vmatprep.subr.bf16.mxu0 0
    %376 = vmatpush1.bf16.msra.mxu0 0
    %377 = vmatprep.subr.bf16.mxu0 0
    %378 = vmatpush1.bf16.msra.mxu0 0
    %379 = vmatprep.subr.bf16.mxu0 0
    %380 = vmatpush1.bf16.msra.mxu0 0
    %381 = vmatprep.subr.bf16.mxu0 0
    %382 = vmatpush1.bf16.msra.mxu0 0
    %383 = vmatprep.subr.bf16.mxu0 0
    %384 = vmatpush1.bf16.msra.mxu0 0
    %385 = vmatprep.subr.bf16.mxu0 0
    %386 = vmatpush1.bf16.msra.mxu0 0
    %387 = vmatprep.subr.bf16.mxu0 0
    %388 = vmatpush1.bf16.msra.mxu0 0
    %389 = vmatprep.mubr.bf16.mxu0 0
    %390 = vmatmul.mubr.bf16.gmra.mrb[0].mxu0 %v258
    %v391 = vpop.f32.mrb[0].mxu0
    %v392 = vadd.f32 0.0, %v391
    %v393 = vpop.f32.mrb[0].mxu0
    %v394 = vpop.f32.mrb[0].mxu0
    %v395 = vadd.f32 0.0, %v394
    %v396 = vpop.f32.mrb[0].mxu0
    %397 = vmatprep.mubr.bf16.mxu0 0
    %398 = vmatmul.mubr.bf16.gmra.mrb[0].mxu0 %v261
    %v399 = vpop.f32.mrb[0].mxu0
    %v400 = vadd.f32 0.0, %v399
    %v401 = vpop.f32.mrb[0].mxu0
    %v402 = vpop.f32.mrb[0].mxu0
    %v403 = vadd.f32 0.0, %v402
    %v404 = vpop.f32.mrb[0].mxu0
    %405 = vmatprep.mubr.bf16.mxu0 0
    %406 = vmatmul.mubr.bf16.gmra.mrb[0].mxu0 %v264
    %v407 = vpop.f32.mrb[0].mxu0
    %v408 = vadd.f32 0.0, %v407
    %v409 = vpop.f32.mrb[0].mxu0
    %v410 = vpop.f32.mrb[0].mxu0
    %v411 = vadd.f32 0.0, %v410
    %v412 = vpop.f32.mrb[0].mxu0
    %413 = vmatprep.mubr.bf16.mxu0 0
    %414 = vmatmul.mubr.bf16.gmra.mrb[0].mxu0 %v267
    %v415 = vpop.f32.mrb[0].mxu0
    %v416 = vadd.f32 0.0, %v415
    %v417 = vpop.f32.mrb[0].mxu0
    %v418 = vpop.f32.mrb[0].mxu0
    %v419 = vadd.f32 0.0, %v418
    %v420 = vpop.f32.mrb[0].mxu0
    %421 = vmatprep.mubr.bf16.mxu0 0
    %422 = vmatmul.mubr.bf16.gmra.mrb[0].mxu0 %v270
    %v423 = vpop.f32.mrb[0].mxu0
    %v424 = vadd.f32 0.0, %v423
    %v425 = vpop.f32.mrb[0].mxu0
    %v426 = vpop.f32.mrb[0].mxu0
    %v427 = vadd.f32 0.0, %v426
    %v428 = vpop.f32.mrb[0].mxu0
    %429 = vmatprep.mubr.bf16.mxu0 0
    %430 = vmatmul.mubr.bf16.gmra.mrb[0].mxu0 %v273
    %v431 = vpop.f32.mrb[0].mxu0
    %v432 = vadd.f32 0.0, %v431
    %v433 = vpop.f32.mrb[0].mxu0
    %v434 = vpop.f32.mrb[0].mxu0
    %v435 = vadd.f32 0.0, %v434
    %v436 = vpop.f32.mrb[0].mxu0
    %437 = vmatprep.mubr.bf16.mxu0 0
    %438 = vmatmul.mubr.bf16.gmra.mrb[0].mxu0 %v276
    %v439 = vpop.f32.mrb[0].mxu0
    %v440 = vadd.f32 0.0, %v439
    %v441 = vpop.f32.mrb[0].mxu0
    %v442 = vpop.f32.mrb[0].mxu0
    %v443 = vadd.f32 0.0, %v442
    %v444 = vpop.f32.mrb[0].mxu0
    %445 = vmatprep.mubr.bf16.mxu0 0
    %446 = vmatmul.mubr.bf16.gmra.mrb[0].mxu0 %v279
    %v447 = vpop.f32.mrb[0].mxu0
    %v448 = vadd.f32 0.0, %v447
    %v449 = vpop.f32.mrb[0].mxu0
    %v450 = vpop.f32.mrb[0].mxu0
    %v451 = vadd.f32 0.0, %v450
    %v452 = vpop.f32.mrb[0].mxu0
    %453 = vmatprep.mubr.bf16.mxu0 0
    %454 = vmatmul.mubr.bf16.gmra.mrb[0].mxu0 %v282
    %v455 = vpop.f32.mrb[0].mxu0
    %v456 = vadd.f32 0.0, %v455
    %v457 = vpop.f32.mrb[0].mxu0
    %v458 = vpop.f32.mrb[0].mxu0
    %v459 = vadd.f32 0.0, %v458
    %v460 = vpop.f32.mrb[0].mxu0
    %461 = vmatprep.mubr.bf16.mxu0 0
    %462 = vmatmul.mubr.bf16.gmra.mrb[0].mxu0 %v285
    %v463 = vpop.f32.mrb[0].mxu0
    %v464 = vadd.f32 0.0, %v463
    %v465 = vpop.f32.mrb[0].mxu0
    %v466 = vpop.f32.mrb[0].mxu0
    %v467 = vadd.f32 0.0, %v466
    %v468 = vpop.f32.mrb[0].mxu0
    %469 = vmatprep.mubr.bf16.mxu0 0
    %470 = vmatmul.mubr.bf16.gmra.mrb[0].mxu0 %v288
    %v471 = vpop.f32.mrb[0].mxu0
    %v472 = vadd.f32 0.0, %v471
    %v473 = vpop.f32.mrb[0].mxu0
    %v474 = vpop.f32.mrb[0].mxu0
    %v475 = vadd.f32 0.0, %v474
    %v476 = vpop.f32.mrb[0].mxu0
    %477 = vmatprep.mubr.bf16.mxu0 0
    %478 = vmatmul.mubr.bf16.gmra.mrb[0].mxu0 %v291
    %v479 = vpop.f32.mrb[0].mxu0
    %v480 = vadd.f32 0.0, %v479
    %v481 = vpop.f32.mrb[0].mxu0
    %v482 = vpop.f32.mrb[0].mxu0
    %v483 = vadd.f32 0.0, %v482
    %v484 = vpop.f32.mrb[0].mxu0
    %485 = vmatprep.mubr.bf16.mxu0 0
    %486 = vmatmul.mubr.bf16.gmra.mrb[0].mxu0 %v294
    %v487 = vpop.f32.mrb[0].mxu0
    %v488 = vadd.f32 0.0, %v487
    %v489 = vpop.f32.mrb[0].mxu0
    %v490 = vpop.f32.mrb[0].mxu0
    %v491 = vadd.f32 0.0, %v490
    %v492 = vpop.f32.mrb[0].mxu0
    %493 = vmatprep.mubr.bf16.mxu0 0
    %494 = vmatmul.mubr.bf16.gmra.mrb[0].mxu0 %v297
    %v495 = vpop.f32.mrb[0].mxu0
    %v496 = vadd.f32 0.0, %v495
    %v497 = vpop.f32.mrb[0].mxu0
    %v498 = vpop.f32.mrb[0].mxu0
    %v499 = vadd.f32 0.0, %v498
    %v500 = vpop.f32.mrb[0].mxu0
    %501 = vmatprep.mubr.bf16.mxu0 0
    %502 = vmatmul.mubr.bf16.gmra.mrb[0].mxu0 %v300
    %v503 = vpop.f32.mrb[0].mxu0
    %v504 = vadd.f32 0.0, %v503
    %v505 = vpop.f32.mrb[0].mxu0
    %v506 = vpop.f32.mrb[0].mxu0
    %v507 = vadd.f32 0.0, %v506
    %v508 = vpop.f32.mrb[0].mxu0
    %509 = vmatprep.mubr.bf16.mxu0 0
    %510 = vmatmul.mubr.bf16.gmra.mrb[0].mxu0 %v303
    %v511 = vpop.f32.mrb[0].mxu0
    %v512 = vadd.f32 0.0, %v511
    %v513 = vpop.f32.mrb[0].mxu0
    %v514 = vpop.f32.mrb[0].mxu0
    %v515 = vadd.f32 0.0, %v514
    %v516 = vpop.f32.mrb[0].mxu0
    %517 = vmatprep.mubr.bf16.mxu0 0
    %518 = vmatmul.mubr.bf16.gmra.mrb[0].mxu0 %v306
    %v519 = vpop.f32.mrb[0].mxu0
    %v520 = vadd.f32 0.0, %v519
    %v521 = vpop.f32.mrb[0].mxu0
    %v522 = vpop.f32.mrb[0].mxu0
    %v523 = vadd.f32 0.0, %v522
    %v524 = vpop.f32.mrb[0].mxu0
    %525 = vmatprep.mubr.bf16.mxu0 0
    %526 = vmatmul.mubr.bf16.gmra.mrb[0].mxu0 %v309
    %v527 = vpop.f32.mrb[0].mxu0
    %v528 = vadd.f32 0.0, %v527
    %v529 = vpop.f32.mrb[0].mxu0
    %v530 = vpop.f32.mrb[0].mxu0
    %v531 = vadd.f32 0.0, %v530
    %v532 = vpop.f32.mrb[0].mxu0
    %533 = vmatprep.mubr.bf16.mxu0 0
    %534 = vmatmul.mubr.bf16.gmra.mrb[0].mxu0 %v312
    %v535 = vpop.f32.mrb[0].mxu0
    %v536 = vadd.f32 0.0, %v535
    %v537 = vpop.f32.mrb[0].mxu0
    %v538 = vpop.f32.mrb[0].mxu0
    %v539 = vadd.f32 0.0, %v538
    %v540 = vpop.f32.mrb[0].mxu0
    %541 = vmatprep.mubr.bf16.mxu0 0
    %542 = vmatmul.mubr.bf16.gmra.mrb[0].mxu0 %v315
    %v543 = vpop.f32.mrb[0].mxu0
    %v544 = vadd.f32 0.0, %v543
    %v545 = vpop.f32.mrb[0].mxu0
    %v546 = vpop.f32.mrb[0].mxu0
    %v547 = vadd.f32 0.0, %v546
    %v548 = vpop.f32.mrb[0].mxu0
    %549 = vmatprep.mubr.bf16.mxu0 0
    %550 = vmatmul.mubr.bf16.gmra.mrb[0].mxu0 %v318
    %v551 = vpop.f32.mrb[0].mxu0
    %v552 = vadd.f32 0.0, %v551
    %v553 = vpop.f32.mrb[0].mxu0
    %v554 = vpop.f32.mrb[0].mxu0
    %v555 = vadd.f32 0.0, %v554
    %v556 = vpop.f32.mrb[0].mxu0
    %557 = vmatprep.mubr.bf16.mxu0 0
    %558 = vmatmul.mubr.bf16.gmra.mrb[0].mxu0 %v321
    %v559 = vpop.f32.mrb[0].mxu0
    %v560 = vadd.f32 0.0, %v559
    %v561 = vpop.f32.mrb[0].mxu0
    %v562 = vpop.f32.mrb[0].mxu0
    %v563 = vadd.f32 0.0, %v562
    %v564 = vpop.f32.mrb[0].mxu0
    %565 = vmatprep.mubr.bf16.mxu0 0
    %566 = vmatmul.mubr.bf16.gmra.mrb[0].mxu0 %v324
    %v567 = vpop.f32.mrb[0].mxu0
    %v568 = vadd.f32 0.0, %v567
    %v569 = vpop.f32.mrb[0].mxu0
    %v570 = vpop.f32.mrb[0].mxu0
    %v571 = vadd.f32 0.0, %v570
    %v572 = vpop.f32.mrb[0].mxu0
    %573 = vmatprep.mubr.bf16.mxu0 0
    %574 = vmatmul.mubr.bf16.gmra.mrb[0].mxu0 %v327
    %v575 = vpop.f32.mrb[0].mxu0
    %v576 = vadd.f32 0.0, %v575
    %v577 = vpop.f32.mrb[0].mxu0
    %v578 = vpop.f32.mrb[0].mxu0
    %v579 = vadd.f32 0.0, %v578
    %v580 = vpop.f32.mrb[0].mxu0
    %581 = vmatprep.mubr.bf16.mxu0 0
    %582 = vmatmul.mubr.bf16.gmra.mrb[0].mxu0 %v330
    %v583 = vpop.f32.mrb[0].mxu0
    %v584 = vadd.f32 0.0, %v583
    %v585 = vpop.f32.mrb[0].mxu0
    %v586 = vpop.f32.mrb[0].mxu0
    %v587 = vadd.f32 0.0, %v586
    %v588 = vpop.f32.mrb[0].mxu0
    %589 = vmatprep.mubr.bf16.mxu0 0
    %590 = vmatmul.mubr.bf16.gmra.mrb[0].mxu0 %v333
    %v591 = vpop.f32.mrb[0].mxu0
    %v592 = vadd.f32 0.0, %v591
    %v593 = vpop.f32.mrb[0].mxu0
    %v594 = vpop.f32.mrb[0].mxu0
    %v595 = vadd.f32 0.0, %v594
    %v596 = vpop.f32.mrb[0].mxu0
    %597 = vmatprep.mubr.bf16.mxu0 0
    %598 = vmatmul.mubr.bf16.gmra.mrb[0].mxu0 %v336
    %v599 = vpop.f32.mrb[0].mxu0
    %v600 = vadd.f32 0.0, %v599
    %v601 = vpop.f32.mrb[0].mxu0
    %v602 = vpop.f32.mrb[0].mxu0
    %v603 = vadd.f32 0.0, %v602
    %v604 = vpop.f32.mrb[0].mxu0
    %605 = vmatprep.mubr.bf16.mxu0 0
    %606 = vmatmul.mubr.bf16.gmra.mrb[0].mxu0 %v339
    %v607 = vpop.f32.mrb[0].mxu0
    %v608 = vadd.f32 0.0, %v607
    %v609 = vpop.f32.mrb[0].mxu0
    %v610 = vpop.f32.mrb[0].mxu0
    %v611 = vadd.f32 0.0, %v610
    %v612 = vpop.f32.mrb[0].mxu0
    %613 = vmatprep.mubr.bf16.mxu0 0
    %614 = vmatmul.mubr.bf16.gmra.mrb[0].mxu0 %v342
    %v615 = vpop.f32.mrb[0].mxu0
    %v616 = vadd.f32 0.0, %v615
    %v617 = vpop.f32.mrb[0].mxu0
    %v618 = vpop.f32.mrb[0].mxu0
    %v619 = vadd.f32 0.0, %v618
    %v620 = vpop.f32.mrb[0].mxu0
    %621 = vmatprep.mubr.bf16.mxu0 0
    %622 = vmatmul.mubr.bf16.gmra.mrb[0].mxu0 %v345
    %v623 = vpop.f32.mrb[0].mxu0
    %v624 = vadd.f32 0.0, %v623
    %v625 = vpop.f32.mrb[0].mxu0
    %v626 = vpop.f32.mrb[0].mxu0
    %v627 = vadd.f32 0.0, %v626
    %v628 = vpop.f32.mrb[0].mxu0
    %629 = vmatprep.mubr.bf16.mxu0 0
    %630 = vmatmul.mubr.bf16.gmra.mrb[0].mxu0 %v348
    %v631 = vpop.f32.mrb[0].mxu0
    %v632 = vadd.f32 0.0, %v631
    %v633 = vpop.f32.mrb[0].mxu0
    %v634 = vpop.f32.mrb[0].mxu0
    %v635 = vadd.f32 0.0, %v634
    %v636 = vpop.f32.mrb[0].mxu0
    %637 = vmatprep.mubr.bf16.mxu0 0
    %638 = vmatmul.mubr.bf16.gmra.mrb[0].mxu0 %v351
    %v639 = vpop.f32.mrb[0].mxu0
    %v640 = vadd.f32 0.0, %v639
    %v641 = vpop.f32.mrb[0].mxu0
    %v642 = vpop.f32.mrb[0].mxu0
    %v643 = vadd.f32 0.0, %v642
    %v644 = vpop.f32.mrb[0].mxu0
    %645 = vdwg.mxu0
    %v646 = vmul.f32 %v392, %v392
    %v647 = vmul.f32 %v395, %v395
    %v648 = vmul.f32 %v400, %v400
    %v649 = vmul.f32 %v403, %v403
    %v650 = vmul.f32 %v408, %v408
    %v651 = vmul.f32 %v411, %v411
    %v652 = vmul.f32 %v416, %v416
    %v653 = vmul.f32 %v419, %v419
    %v654 = vmul.f32 %v424, %v424
    %v655 = vmul.f32 %v427, %v427
    %v656 = vmul.f32 %v432, %v432
    %v657 = vmul.f32 %v435, %v435
    %v658 = vmul.f32 %v440, %v440
    %v659 = vmul.f32 %v443, %v443
    %v660 = vmul.f32 %v448, %v448
    %v661 = vmul.f32 %v451, %v451
    %v662 = vmul.f32 %v456, %v456
    %v663 = vmul.f32 %v459, %v459
    %v664 = vmul.f32 %v464, %v464
    %v665 = vmul.f32 %v467, %v467
    %v666 = vmul.f32 %v472, %v472
    %v667 = vmul.f32 %v475, %v475
    %v668 = vmul.f32 %v480, %v480
    %v669 = vmul.f32 %v483, %v483
    %v670 = vmul.f32 %v488, %v488
    %v671 = vmul.f32 %v491, %v491
    %v672 = vmul.f32 %v496, %v496
    %v673 = vmul.f32 %v499, %v499
    %v674 = vmul.f32 %v504, %v504
    %v675 = vmul.f32 %v507, %v507
    %v676 = vmul.f32 %v512, %v512
    %v677 = vmul.f32 %v515, %v515
    %v678 = vmul.f32 %v520, %v520
    %v679 = vmul.f32 %v523, %v523
    %v680 = vmul.f32 %v528, %v528
    %v681 = vmul.f32 %v531, %v531
    %v682 = vmul.f32 %v536, %v536
    %v683 = vmul.f32 %v539, %v539
    %v684 = vmul.f32 %v544, %v544
    %v685 = vmul.f32 %v547, %v547
    %v686 = vmul.f32 %v552, %v552
    %v687 = vmul.f32 %v555, %v555
    %v688 = vmul.f32 %v560, %v560
    %v689 = vmul.f32 %v563, %v563
    %v690 = vmul.f32 %v568, %v568
    %v691 = vmul.f32 %v571, %v571
    %v692 = vmul.f32 %v576, %v576
    %v693 = vmul.f32 %v579, %v579
    %v694 = vmul.f32 %v584, %v584
    %v695 = vmul.f32 %v587, %v587
    %v696 = vmul.f32 %v592, %v592
    %v697 = vmul.f32 %v595, %v595
    %v698 = vmul.f32 %v600, %v600
    %v699 = vmul.f32 %v603, %v603
    %v700 = vmul.f32 %v608, %v608
    %v701 = vmul.f32 %v611, %v611
    %v702 = vmul.f32 %v616, %v616
    %v703 = vmul.f32 %v619, %v619
    %v704 = vmul.f32 %v624, %v624
    %v705 = vmul.f32 %v627, %v627
    %v706 = vmul.f32 %v632, %v632
    %v707 = vmul.f32 %v635, %v635
    %v708 = vmul.f32 %v640, %v640
    %v709 = vmul.f32 %v643, %v643
    %774 = vrot.lane.b32.xlu0 %v646, 4
    %v775 = vpop.permute.xlu0 %774
    %776 = vrot.lane.b32.xlu0 %v647, 4
    %v777 = vpop.permute.xlu0 %776
    %778 = vrot.lane.b32.xlu0 %v648, 4
    %v779 = vpop.permute.xlu0 %778
    %780 = vrot.lane.b32.xlu0 %v649, 4
    %v781 = vpop.permute.xlu0 %780
    %782 = vrot.lane.b32.xlu0 %v650, 4
    %v783 = vpop.permute.xlu0 %782
    %784 = vrot.lane.b32.xlu0 %v651, 4
    %v785 = vpop.permute.xlu0 %784
    %786 = vrot.lane.b32.xlu0 %v652, 4
    %v787 = vpop.permute.xlu0 %786
    %788 = vrot.lane.b32.xlu0 %v653, 4
    %v789 = vpop.permute.xlu0 %788
    %790 = vrot.lane.b32.xlu0 %v654, 4
    %v791 = vpop.permute.xlu0 %790
    %792 = vrot.lane.b32.xlu0 %v655, 4
    %v793 = vpop.permute.xlu0 %792
    %794 = vrot.lane.b32.xlu0 %v656, 4
    %v795 = vpop.permute.xlu0 %794
    %796 = vrot.lane.b32.xlu0 %v657, 4
    %v797 = vpop.permute.xlu0 %796
    %798 = vrot.lane.b32.xlu0 %v658, 4
    %v799 = vpop.permute.xlu0 %798
    %800 = vrot.lane.b32.xlu0 %v659, 4
    %v801 = vpop.permute.xlu0 %800
    %802 = vrot.lane.b32.xlu0 %v660, 4
    %v803 = vpop.permute.xlu0 %802
    %804 = vrot.lane.b32.xlu0 %v661, 4
    %v805 = vpop.permute.xlu0 %804
    %806 = vrot.lane.b32.xlu0 %v662, 4
    %v807 = vpop.permute.xlu0 %806
    %808 = vrot.lane.b32.xlu0 %v663, 4
    %v809 = vpop.permute.xlu0 %808
    %810 = vrot.lane.b32.xlu0 %v664, 4
    %v811 = vpop.permute.xlu0 %810
    %812 = vrot.lane.b32.xlu0 %v665, 4
    %v813 = vpop.permute.xlu0 %812
    %814 = vrot.lane.b32.xlu0 %v666, 4
    %v815 = vpop.permute.xlu0 %814
    %816 = vrot.lane.b32.xlu0 %v667, 4
    %v817 = vpop.permute.xlu0 %816
    %818 = vrot.lane.b32.xlu0 %v668, 4
    %v819 = vpop.permute.xlu0 %818
    %820 = vrot.lane.b32.xlu0 %v669, 4
    %v821 = vpop.permute.xlu0 %820
    %822 = vrot.lane.b32.xlu0 %v670, 4
    %v823 = vpop.permute.xlu0 %822
    %824 = vrot.lane.b32.xlu0 %v671, 4
    %v825 = vpop.permute.xlu0 %824
    %826 = vrot.lane.b32.xlu0 %v672, 4
    %v827 = vpop.permute.xlu0 %826
    %828 = vrot.lane.b32.xlu0 %v673, 4
    %v829 = vpop.permute.xlu0 %828
    %830 = vrot.lane.b32.xlu0 %v674, 4
    %v831 = vpop.permute.xlu0 %830
    %832 = vrot.lane.b32.xlu0 %v675, 4
    %v833 = vpop.permute.xlu0 %832
    %834 = vrot.lane.b32.xlu0 %v676, 4
    %v835 = vpop.permute.xlu0 %834
    %836 = vrot.lane.b32.xlu0 %v677, 4
    %v837 = vpop.permute.xlu0 %836
    %838 = vrot.lane.b32.xlu0 %v678, 4
    %v839 = vpop.permute.xlu0 %838
    %840 = vrot.lane.b32.xlu0 %v679, 4
    %v841 = vpop.permute.xlu0 %840
    %842 = vrot.lane.b32.xlu0 %v680, 4
    %v843 = vpop.permute.xlu0 %842
    %844 = vrot.lane.b32.xlu0 %v681, 4
    %v845 = vpop.permute.xlu0 %844
    %846 = vrot.lane.b32.xlu0 %v682, 4
    %v847 = vpop.permute.xlu0 %846
    %848 = vrot.lane.b32.xlu0 %v683, 4
    %v849 = vpop.permute.xlu0 %848
    %850 = vrot.lane.b32.xlu0 %v684, 4
    %v851 = vpop.permute.xlu0 %850
    %852 = vrot.lane.b32.xlu0 %v685, 4
    %v853 = vpop.permute.xlu0 %852
    %854 = vrot.lane.b32.xlu0 %v686, 4
    %v855 = vpop.permute.xlu0 %854
    %856 = vrot.lane.b32.xlu0 %v687, 4
    %v857 = vpop.permute.xlu0 %856
    %858 = vrot.lane.b32.xlu0 %v688, 4
    %v859 = vpop.permute.xlu0 %858
    %860 = vrot.lane.b32.xlu0 %v689, 4
    %v861 = vpop.permute.xlu0 %860
    %862 = vrot.lane.b32.xlu0 %v690, 4
    %v863 = vpop.permute.xlu0 %862
    %864 = vrot.lane.b32.xlu0 %v691, 4
    %v865 = vpop.permute.xlu0 %864
    %866 = vrot.lane.b32.xlu0 %v692, 4
    %v867 = vpop.permute.xlu0 %866
    %868 = vrot.lane.b32.xlu0 %v693, 4
    %v869 = vpop.permute.xlu0 %868
    %870 = vrot.lane.b32.xlu0 %v694, 4
    %v871 = vpop.permute.xlu0 %870
    %872 = vrot.lane.b32.xlu0 %v695, 4
    %v873 = vpop.permute.xlu0 %872
    %874 = vrot.lane.b32.xlu0 %v696, 4
    %v875 = vpop.permute.xlu0 %874
    %876 = vrot.lane.b32.xlu0 %v697, 4
    %v877 = vpop.permute.xlu0 %876
    %878 = vrot.lane.b32.xlu0 %v698, 4
    %v879 = vpop.permute.xlu0 %878
    %880 = vrot.lane.b32.xlu0 %v699, 4
    %v881 = vpop.permute.xlu0 %880
    %882 = vrot.lane.b32.xlu0 %v700, 4
    %v883 = vpop.permute.xlu0 %882
    %884 = vrot.lane.b32.xlu0 %v701, 4
    %v885 = vpop.permute.xlu0 %884
    %886 = vrot.lane.b32.xlu0 %v702, 4
    %v887 = vpop.permute.xlu0 %886
    %888 = vrot.lane.b32.xlu0 %v703, 4
    %v889 = vpop.permute.xlu0 %888
    %890 = vrot.lane.b32.xlu0 %v704, 4
    %v891 = vpop.permute.xlu0 %890
    %892 = vrot.lane.b32.xlu0 %v705, 4
    %v893 = vpop.permute.xlu0 %892
    %894 = vrot.lane.b32.xlu0 %v706, 4
    %v895 = vpop.permute.xlu0 %894
    %896 = vrot.lane.b32.xlu0 %v707, 4
    %v897 = vpop.permute.xlu0 %896
    %898 = vrot.lane.b32.xlu0 %v708, 4
    %v899 = vpop.permute.xlu0 %898
    %900 = vrot.lane.b32.xlu0 %v709, 4
    %v901 = vpop.permute.xlu0 %900
    %vm966 = vcmask 31744
    %v967 = vsel %vm966, %v392, %v775
    %v968 = vsel %vm966, %v395, %v777
    %v969 = vsel %vm966, %v400, %v779
    %v970 = vsel %vm966, %v403, %v781
    %v971 = vsel %vm966, %v408, %v783
    %v972 = vsel %vm966, %v411, %v785
    %v973 = vsel %vm966, %v416, %v787
    %v974 = vsel %vm966, %v419, %v789
    %v975 = vsel %vm966, %v424, %v791
    %v976 = vsel %vm966, %v427, %v793
    %v977 = vsel %vm966, %v432, %v795
    %v978 = vsel %vm966, %v435, %v797
    %v979 = vsel %vm966, %v440, %v799
    %v980 = vsel %vm966, %v443, %v801
    %v981 = vsel %vm966, %v448, %v803
    %v982 = vsel %vm966, %v451, %v805
    %v983 = vsel %vm966, %v456, %v807
    %v984 = vsel %vm966, %v459, %v809
    %v985 = vsel %vm966, %v464, %v811
    %v986 = vsel %vm966, %v467, %v813
    %v987 = vsel %vm966, %v472, %v815
    %v988 = vsel %vm966, %v475, %v817
    %v989 = vsel %vm966, %v480, %v819
    %v990 = vsel %vm966, %v483, %v821
    %v991 = vsel %vm966, %v488, %v823
    %v992 = vsel %vm966, %v491, %v825
    %v993 = vsel %vm966, %v496, %v827
    %v994 = vsel %vm966, %v499, %v829
    %v995 = vsel %vm966, %v504, %v831
    %v996 = vsel %vm966, %v507, %v833
    %v997 = vsel %vm966, %v512, %v835
    %v998 = vsel %vm966, %v515, %v837
    %v999 = vsel %vm966, %v520, %v839
    %v1000 = vsel %vm966, %v523, %v841
    %v1001 = vsel %vm966, %v528, %v843
    %v1002 = vsel %vm966, %v531, %v845
    %v1003 = vsel %vm966, %v536, %v847
    %v1004 = vsel %vm966, %v539, %v849
    %v1005 = vsel %vm966, %v544, %v851
    %v1006 = vsel %vm966, %v547, %v853
    %v1007 = vsel %vm966, %v552, %v855
    %v1008 = vsel %vm966, %v555, %v857
    %v1009 = vsel %vm966, %v560, %v859
    %v1010 = vsel %vm966, %v563, %v861
    %v1011 = vsel %vm966, %v568, %v863
    %v1012 = vsel %vm966, %v571, %v865
    %v1013 = vsel %vm966, %v576, %v867
    %v1014 = vsel %vm966, %v579, %v869
    %v1015 = vsel %vm966, %v584, %v871
    %v1016 = vsel %vm966, %v587, %v873
    %v1017 = vsel %vm966, %v592, %v875
    %v1018 = vsel %vm966, %v595, %v877
    %v1019 = vsel %vm966, %v600, %v879
    %v1020 = vsel %vm966, %v603, %v881
    %v1021 = vsel %vm966, %v608, %v883
    %v1022 = vsel %vm966, %v611, %v885
    %v1023 = vsel %vm966, %v616, %v887
    %v1024 = vsel %vm966, %v619, %v889
    %v1025 = vsel %vm966, %v624, %v891
    %v1026 = vsel %vm966, %v627, %v893
    %v1027 = vsel %vm966, %v632, %v895
    %v1028 = vsel %vm966, %v635, %v897
    %v1029 = vsel %vm966, %v640, %v899
    %v1030 = vsel %vm966, %v643, %v901
    %v1031 = vsel %vm256, %v967, 0.0
    %v1032 = vsel %vm256, %v968, 0.0
    %v1033 = vadd.f32 %v1031, %v1032
    %v1034 = vsel %vm256, %v969, 0.0
    %v1035 = vadd.f32 %v1033, %v1034
    %v1036 = vsel %vm256, %v970, 0.0
    %v1037 = vadd.f32 %v1035, %v1036
    %v1038 = vsel %vm256, %v971, 0.0
    %v1039 = vadd.f32 %v1037, %v1038
    %v1040 = vsel %vm256, %v972, 0.0
    %v1041 = vadd.f32 %v1039, %v1040
    %v1042 = vsel %vm256, %v973, 0.0
    %v1043 = vadd.f32 %v1041, %v1042
    %v1044 = vsel %vm256, %v974, 0.0
    %v1045 = vadd.f32 %v1043, %v1044
    %v1046 = vsel %vm256, %v975, 0.0
    %v1047 = vadd.f32 %v1045, %v1046
    %v1048 = vsel %vm256, %v976, 0.0
    %v1049 = vadd.f32 %v1047, %v1048
    %v1050 = vsel %vm256, %v977, 0.0
    %v1051 = vadd.f32 %v1049, %v1050
    %v1052 = vsel %vm256, %v978, 0.0
    %v1053 = vadd.f32 %v1051, %v1052
    %v1054 = vsel %vm256, %v979, 0.0
    %v1055 = vadd.f32 %v1053, %v1054
    %v1056 = vsel %vm256, %v980, 0.0
    %v1057 = vadd.f32 %v1055, %v1056
    %v1058 = vsel %vm256, %v981, 0.0
    %v1059 = vadd.f32 %v1057, %v1058
    %v1060 = vsel %vm256, %v982, 0.0
    %v1061 = vadd.f32 %v1059, %v1060
    %v1062 = vsel %vm256, %v983, 0.0
    %v1063 = vadd.f32 %v1061, %v1062
    %v1064 = vsel %vm256, %v984, 0.0
    %v1065 = vadd.f32 %v1063, %v1064
    %v1066 = vsel %vm256, %v985, 0.0
    %v1067 = vadd.f32 %v1065, %v1066
    %v1068 = vsel %vm256, %v986, 0.0
    %v1069 = vadd.f32 %v1067, %v1068
    %v1070 = vsel %vm256, %v987, 0.0
    %v1071 = vadd.f32 %v1069, %v1070
    %v1072 = vsel %vm256, %v988, 0.0
    %v1073 = vadd.f32 %v1071, %v1072
    %v1074 = vsel %vm256, %v989, 0.0
    %v1075 = vadd.f32 %v1073, %v1074
    %v1076 = vsel %vm256, %v990, 0.0
    %v1077 = vadd.f32 %v1075, %v1076
    %v1078 = vsel %vm256, %v991, 0.0
    %v1079 = vadd.f32 %v1077, %v1078
    %v1080 = vsel %vm256, %v992, 0.0
    %v1081 = vadd.f32 %v1079, %v1080
    %v1082 = vsel %vm256, %v993, 0.0
    %v1083 = vadd.f32 %v1081, %v1082
    %v1084 = vsel %vm256, %v994, 0.0
    %v1085 = vadd.f32 %v1083, %v1084
    %v1086 = vsel %vm256, %v995, 0.0
    %v1087 = vadd.f32 %v1085, %v1086
    %v1088 = vsel %vm256, %v996, 0.0
    %v1089 = vadd.f32 %v1087, %v1088
    %v1090 = vsel %vm256, %v997, 0.0
    %v1091 = vadd.f32 %v1089, %v1090
    %v1092 = vsel %vm256, %v998, 0.0
    %v1093 = vadd.f32 %v1091, %v1092
    %v1094 = vsel %vm256, %v999, 0.0
    %v1095 = vadd.f32 %v1093, %v1094
    %v1096 = vsel %vm256, %v1000, 0.0
    %v1097 = vadd.f32 %v1095, %v1096
    %v1098 = vsel %vm256, %v1001, 0.0
    %v1099 = vadd.f32 %v1097, %v1098
    %v1100 = vsel %vm256, %v1002, 0.0
    %v1101 = vadd.f32 %v1099, %v1100
    %v1102 = vsel %vm256, %v1003, 0.0
    %v1103 = vadd.f32 %v1101, %v1102
    %v1104 = vsel %vm256, %v1004, 0.0
    %v1105 = vadd.f32 %v1103, %v1104
    %v1106 = vsel %vm256, %v1005, 0.0
    %v1107 = vadd.f32 %v1105, %v1106
    %v1108 = vsel %vm256, %v1006, 0.0
    %v1109 = vadd.f32 %v1107, %v1108
    %v1110 = vsel %vm256, %v1007, 0.0
    %v1111 = vadd.f32 %v1109, %v1110
    %v1112 = vsel %vm256, %v1008, 0.0
    %v1113 = vadd.f32 %v1111, %v1112
    %v1114 = vsel %vm256, %v1009, 0.0
    %v1115 = vadd.f32 %v1113, %v1114
    %v1116 = vsel %vm256, %v1010, 0.0
    %v1117 = vadd.f32 %v1115, %v1116
    %v1118 = vsel %vm256, %v1011, 0.0
    %v1119 = vadd.f32 %v1117, %v1118
    %v1120 = vsel %vm256, %v1012, 0.0
    %v1121 = vadd.f32 %v1119, %v1120
    %v1122 = vsel %vm256, %v1013, 0.0
    %v1123 = vadd.f32 %v1121, %v1122
    %v1124 = vsel %vm256, %v1014, 0.0
    %v1125 = vadd.f32 %v1123, %v1124
    %v1126 = vsel %vm256, %v1015, 0.0
    %v1127 = vadd.f32 %v1125, %v1126
    %v1128 = vsel %vm256, %v1016, 0.0
    %v1129 = vadd.f32 %v1127, %v1128
    %v1130 = vsel %vm256, %v1017, 0.0
    %v1131 = vadd.f32 %v1129, %v1130
    %v1132 = vsel %vm256, %v1018, 0.0
    %v1133 = vadd.f32 %v1131, %v1132
    %v1134 = vsel %vm256, %v1019, 0.0
    %v1135 = vadd.f32 %v1133, %v1134
    %v1136 = vsel %vm256, %v1020, 0.0
    %v1137 = vadd.f32 %v1135, %v1136
    %v1138 = vsel %vm256, %v1021, 0.0
    %v1139 = vadd.f32 %v1137, %v1138
    %v1140 = vsel %vm256, %v1022, 0.0
    %v1141 = vadd.f32 %v1139, %v1140
    %v1142 = vsel %vm256, %v1023, 0.0
    %v1143 = vadd.f32 %v1141, %v1142
    %v1144 = vsel %vm256, %v1024, 0.0
    %v1145 = vadd.f32 %v1143, %v1144
    %v1146 = vsel %vm256, %v1025, 0.0
    %v1147 = vadd.f32 %v1145, %v1146
    %v1148 = vsel %vm256, %v1026, 0.0
    %v1149 = vadd.f32 %v1147, %v1148
    %v1150 = vsel %vm256, %v1027, 0.0
    %v1151 = vadd.f32 %v1149, %v1150
    %v1152 = vsel %vm256, %v1028, 0.0
    %v1153 = vadd.f32 %v1151, %v1152
    %v1154 = vsel %vm256, %v1029, 0.0
    %v1155 = vadd.f32 %v1153, %v1154
    %v1156 = vsel %vm256, %v1030, 0.0
    %v1157 = vadd.f32 %v1155, %v1156
    %v1158 = vrot.slane %v1157, 4
    %v1159 = vadd.f32 %v1157, %v1158
    %v1160 = vrot.slane %v1159, 2
    %v1161 = vadd.f32 %v1159, %v1160
    %v1162 = vrot.slane %v1161, 1
    %v1163 = vadd.f32 %v1161, %v1162
    %v1164 = vmul.f32 %v1163, 0.001953125
    %v1165 = vmul.f32 %v1164, %v1164
    %1167 = vrot.lane.b32.xlu0 %v1165, 4
    %v1168 = vpop.permute.xlu0 %1167
    %v1170 = vsub.f32 %v1164, %v1168
    %v1171 = vmax.f32 %v1170, 0.0
    %v1172 = vsub.f32 %v392, %v1164
    %v1173 = vsub.f32 %v395, %v1164
    %v1174 = vsub.f32 %v400, %v1164
    %v1175 = vsub.f32 %v403, %v1164
    %v1176 = vsub.f32 %v408, %v1164
    %v1177 = vsub.f32 %v411, %v1164
    %v1178 = vsub.f32 %v416, %v1164
    %v1179 = vsub.f32 %v419, %v1164
    %v1180 = vsub.f32 %v424, %v1164
    %v1181 = vsub.f32 %v427, %v1164
    %v1182 = vsub.f32 %v432, %v1164
    %v1183 = vsub.f32 %v435, %v1164
    %v1184 = vsub.f32 %v440, %v1164
    %v1185 = vsub.f32 %v443, %v1164
    %v1186 = vsub.f32 %v448, %v1164
    %v1187 = vsub.f32 %v451, %v1164
    %v1188 = vsub.f32 %v456, %v1164
    %v1189 = vsub.f32 %v459, %v1164
    %v1190 = vsub.f32 %v464, %v1164
    %v1191 = vsub.f32 %v467, %v1164
    %v1192 = vsub.f32 %v472, %v1164
    %v1193 = vsub.f32 %v475, %v1164
    %v1194 = vsub.f32 %v480, %v1164
    %v1195 = vsub.f32 %v483, %v1164
    %v1196 = vsub.f32 %v488, %v1164
    %v1197 = vsub.f32 %v491, %v1164
    %v1198 = vsub.f32 %v496, %v1164
    %v1199 = vsub.f32 %v499, %v1164
    %v1200 = vsub.f32 %v504, %v1164
    %v1201 = vsub.f32 %v507, %v1164
    %v1202 = vsub.f32 %v512, %v1164
    %v1203 = vsub.f32 %v515, %v1164
    %v1204 = vsub.f32 %v520, %v1164
    %v1205 = vsub.f32 %v523, %v1164
    %v1206 = vsub.f32 %v528, %v1164
    %v1207 = vsub.f32 %v531, %v1164
    %v1208 = vsub.f32 %v536, %v1164
    %v1209 = vsub.f32 %v539, %v1164
    %v1210 = vsub.f32 %v544, %v1164
    %v1211 = vsub.f32 %v547, %v1164
    %v1212 = vsub.f32 %v552, %v1164
    %v1213 = vsub.f32 %v555, %v1164
    %v1214 = vsub.f32 %v560, %v1164
    %v1215 = vsub.f32 %v563, %v1164
    %v1216 = vsub.f32 %v568, %v1164
    %v1217 = vsub.f32 %v571, %v1164
    %v1218 = vsub.f32 %v576, %v1164
    %v1219 = vsub.f32 %v579, %v1164
    %v1220 = vsub.f32 %v584, %v1164
    %v1221 = vsub.f32 %v587, %v1164
    %v1222 = vsub.f32 %v592, %v1164
    %v1223 = vsub.f32 %v595, %v1164
    %v1224 = vsub.f32 %v600, %v1164
    %v1225 = vsub.f32 %v603, %v1164
    %v1226 = vsub.f32 %v608, %v1164
    %v1227 = vsub.f32 %v611, %v1164
    %v1228 = vsub.f32 %v616, %v1164
    %v1229 = vsub.f32 %v619, %v1164
    %v1230 = vsub.f32 %v624, %v1164
    %v1231 = vsub.f32 %v627, %v1164
    %v1232 = vsub.f32 %v632, %v1164
    %v1233 = vsub.f32 %v635, %v1164
    %v1234 = vsub.f32 %v640, %v1164
    %v1235 = vsub.f32 %v643, %v1164
    %v1236 = vadd.f32 %v1171, 1e-05
    %v1237 = vrsqrt.pop %v1236
    %v1238 = vlaneseq
    %v1239 = vshrl.u32 %v1238, 7
    %v1240 = vsub.s32 0, %v1239
    %v1241 = vrot.slane %v1237, %v1240
    %1243 = vrot.lane.b32.xlu0 %v1241, 124
    %v1244 = vpop.permute.xlu0 %1243
    %v1246 = vmul.f32 %v1172, %v1244
    %v1247 = vmul.f32 %v1173, %v1244
    %v1248 = vmul.f32 %v1174, %v1244
    %v1249 = vmul.f32 %v1175, %v1244
    %v1250 = vmul.f32 %v1176, %v1244
    %v1251 = vmul.f32 %v1177, %v1244
    %v1252 = vmul.f32 %v1178, %v1244
    %v1253 = vmul.f32 %v1179, %v1244
    %v1254 = vmul.f32 %v1180, %v1244
    %v1255 = vmul.f32 %v1181, %v1244
    %v1256 = vmul.f32 %v1182, %v1244
    %v1257 = vmul.f32 %v1183, %v1244
    %v1258 = vmul.f32 %v1184, %v1244
    %v1259 = vmul.f32 %v1185, %v1244
    %v1260 = vmul.f32 %v1186, %v1244
    %v1261 = vmul.f32 %v1187, %v1244
    %v1262 = vmul.f32 %v1188, %v1244
    %v1263 = vmul.f32 %v1189, %v1244
    %v1264 = vmul.f32 %v1190, %v1244
    %v1265 = vmul.f32 %v1191, %v1244
    %v1266 = vmul.f32 %v1192, %v1244
    %v1267 = vmul.f32 %v1193, %v1244
    %v1268 = vmul.f32 %v1194, %v1244
    %v1269 = vmul.f32 %v1195, %v1244
    %v1270 = vmul.f32 %v1196, %v1244
    %v1271 = vmul.f32 %v1197, %v1244
    %v1272 = vmul.f32 %v1198, %v1244
    %v1273 = vmul.f32 %v1199, %v1244
    %v1274 = vmul.f32 %v1200, %v1244
    %v1275 = vmul.f32 %v1201, %v1244
    %v1276 = vmul.f32 %v1202, %v1244
    %v1277 = vmul.f32 %v1203, %v1244
    %v1278 = vmul.f32 %v1204, %v1244
    %v1279 = vmul.f32 %v1205, %v1244
    %v1280 = vmul.f32 %v1206, %v1244
    %v1281 = vmul.f32 %v1207, %v1244
    %v1282 = vmul.f32 %v1208, %v1244
    %v1283 = vmul.f32 %v1209, %v1244
    %v1284 = vmul.f32 %v1210, %v1244
    %v1285 = vmul.f32 %v1211, %v1244
    %v1286 = vmul.f32 %v1212, %v1244
    %v1287 = vmul.f32 %v1213, %v1244
    %v1288 = vmul.f32 %v1214, %v1244
    %v1289 = vmul.f32 %v1215, %v1244
    %v1290 = vmul.f32 %v1216, %v1244
    %v1291 = vmul.f32 %v1217, %v1244
    %v1292 = vmul.f32 %v1218, %v1244
    %v1293 = vmul.f32 %v1219, %v1244
    %v1294 = vmul.f32 %v1220, %v1244
    %v1295 = vmul.f32 %v1221, %v1244
    %v1296 = vmul.f32 %v1222, %v1244
    %v1297 = vmul.f32 %v1223, %v1244
    %v1298 = vmul.f32 %v1224, %v1244
    %v1299 = vmul.f32 %v1225, %v1244
    %v1300 = vmul.f32 %v1226, %v1244
    %v1301 = vmul.f32 %v1227, %v1244
    %v1302 = vmul.f32 %v1228, %v1244
    %v1303 = vmul.f32 %v1229, %v1244
    %v1304 = vmul.f32 %v1230, %v1244
    %v1305 = vmul.f32 %v1231, %v1244
    %v1306 = vmul.f32 %v1232, %v1244
    %v1307 = vmul.f32 %v1233, %v1244
    %v1308 = vmul.f32 %v1234, %v1244
    %v1309 = vmul.f32 %v1235, %v1244
    %v1310 = vlaneseq
    %v1311 = vshrl.u32 %v1310, 7
    %v1312 = vsub.s32 0, %v1311
    %v1313 = vrot.slane %v25, %v1312
    %v1314 = vmul.f32 %v1246, %v1313
    %v1315 = vmul.f32 %v1247, %v1313
    %v1316 = vmul.f32 %v1248, %v1313
    %v1317 = vmul.f32 %v1249, %v1313
    %v1318 = vmul.f32 %v1250, %v1313
    %v1319 = vmul.f32 %v1251, %v1313
    %v1320 = vmul.f32 %v1252, %v1313
    %v1321 = vmul.f32 %v1253, %v1313
    %v1322 = vmul.f32 %v1254, %v1313
    %v1323 = vmul.f32 %v1255, %v1313
    %v1324 = vmul.f32 %v1256, %v1313
    %v1325 = vmul.f32 %v1257, %v1313
    %v1326 = vmul.f32 %v1258, %v1313
    %v1327 = vmul.f32 %v1259, %v1313
    %v1328 = vmul.f32 %v1260, %v1313
    %v1329 = vmul.f32 %v1261, %v1313
    %v1330 = vmul.f32 %v1262, %v1313
    %v1331 = vmul.f32 %v1263, %v1313
    %v1332 = vmul.f32 %v1264, %v1313
    %v1333 = vmul.f32 %v1265, %v1313
    %v1334 = vmul.f32 %v1266, %v1313
    %v1335 = vmul.f32 %v1267, %v1313
    %v1336 = vmul.f32 %v1268, %v1313
    %v1337 = vmul.f32 %v1269, %v1313
    %v1338 = vmul.f32 %v1270, %v1313
    %v1339 = vmul.f32 %v1271, %v1313
    %v1340 = vmul.f32 %v1272, %v1313
    %v1341 = vmul.f32 %v1273, %v1313
    %v1342 = vmul.f32 %v1274, %v1313
    %v1343 = vmul.f32 %v1275, %v1313
    %v1344 = vmul.f32 %v1276, %v1313
    %v1345 = vmul.f32 %v1277, %v1313
    %v1346 = vmul.f32 %v1278, %v1313
    %v1347 = vmul.f32 %v1279, %v1313
    %v1348 = vmul.f32 %v1280, %v1313
    %v1349 = vmul.f32 %v1281, %v1313
    %v1350 = vmul.f32 %v1282, %v1313
    %v1351 = vmul.f32 %v1283, %v1313
    %v1352 = vmul.f32 %v1284, %v1313
    %v1353 = vmul.f32 %v1285, %v1313
    %v1354 = vmul.f32 %v1286, %v1313
    %v1355 = vmul.f32 %v1287, %v1313
    %v1356 = vmul.f32 %v1288, %v1313
    %v1357 = vmul.f32 %v1289, %v1313
    %v1358 = vmul.f32 %v1290, %v1313
    %v1359 = vmul.f32 %v1291, %v1313
    %v1360 = vmul.f32 %v1292, %v1313
    %v1361 = vmul.f32 %v1293, %v1313
    %v1362 = vmul.f32 %v1294, %v1313
    %v1363 = vmul.f32 %v1295, %v1313
    %v1364 = vmul.f32 %v1296, %v1313
    %v1365 = vmul.f32 %v1297, %v1313
    %v1366 = vmul.f32 %v1298, %v1313
    %v1367 = vmul.f32 %v1299, %v1313
    %v1368 = vmul.f32 %v1300, %v1313
    %v1369 = vmul.f32 %v1301, %v1313
    %v1370 = vmul.f32 %v1302, %v1313
    %v1371 = vmul.f32 %v1303, %v1313
    %v1372 = vmul.f32 %v1304, %v1313
    %v1373 = vmul.f32 %v1305, %v1313
    %v1374 = vmul.f32 %v1306, %v1313
    %v1375 = vmul.f32 %v1307, %v1313
    %v1376 = vmul.f32 %v1308, %v1313
    %v1377 = vmul.f32 %v1309, %v1313
    %v1378 = vlaneseq
    %v1379 = vshrl.u32 %v1378, 7
    %v1380 = vsub.s32 0, %v1379
    %v1381 = vrot.slane %v26, %v1380
    %v1382 = vadd.f32 %v1314, %v1381
    %v1383 = vadd.f32 %v1315, %v1381
    %v1384 = vadd.f32 %v1316, %v1381
    %v1385 = vadd.f32 %v1317, %v1381
    %v1386 = vadd.f32 %v1318, %v1381
    %v1387 = vadd.f32 %v1319, %v1381
    %v1388 = vadd.f32 %v1320, %v1381
    %v1389 = vadd.f32 %v1321, %v1381
    %v1390 = vadd.f32 %v1322, %v1381
    %v1391 = vadd.f32 %v1323, %v1381
    %v1392 = vadd.f32 %v1324, %v1381
    %v1393 = vadd.f32 %v1325, %v1381
    %v1394 = vadd.f32 %v1326, %v1381
    %v1395 = vadd.f32 %v1327, %v1381
    %v1396 = vadd.f32 %v1328, %v1381
    %v1397 = vadd.f32 %v1329, %v1381
    %v1398 = vadd.f32 %v1330, %v1381
    %v1399 = vadd.f32 %v1331, %v1381
    %v1400 = vadd.f32 %v1332, %v1381
    %v1401 = vadd.f32 %v1333, %v1381
    %v1402 = vadd.f32 %v1334, %v1381
    %v1403 = vadd.f32 %v1335, %v1381
    %v1404 = vadd.f32 %v1336, %v1381
    %v1405 = vadd.f32 %v1337, %v1381
    %v1406 = vadd.f32 %v1338, %v1381
    %v1407 = vadd.f32 %v1339, %v1381
    %v1408 = vadd.f32 %v1340, %v1381
    %v1409 = vadd.f32 %v1341, %v1381
    %v1410 = vadd.f32 %v1342, %v1381
    %v1411 = vadd.f32 %v1343, %v1381
    %v1412 = vadd.f32 %v1344, %v1381
    %v1413 = vadd.f32 %v1345, %v1381
    %v1414 = vadd.f32 %v1346, %v1381
    %v1415 = vadd.f32 %v1347, %v1381
    %v1416 = vadd.f32 %v1348, %v1381
    %v1417 = vadd.f32 %v1349, %v1381
    %v1418 = vadd.f32 %v1350, %v1381
    %v1419 = vadd.f32 %v1351, %v1381
    %v1420 = vadd.f32 %v1352, %v1381
    %v1421 = vadd.f32 %v1353, %v1381
    %v1422 = vadd.f32 %v1354, %v1381
    %v1423 = vadd.f32 %v1355, %v1381
    %v1424 = vadd.f32 %v1356, %v1381
    %v1425 = vadd.f32 %v1357, %v1381
    %v1426 = vadd.f32 %v1358, %v1381
    %v1427 = vadd.f32 %v1359, %v1381
    %v1428 = vadd.f32 %v1360, %v1381
    %v1429 = vadd.f32 %v1361, %v1381
    %v1430 = vadd.f32 %v1362, %v1381
    %v1431 = vadd.f32 %v1363, %v1381
    %v1432 = vadd.f32 %v1364, %v1381
    %v1433 = vadd.f32 %v1365, %v1381
    %v1434 = vadd.f32 %v1366, %v1381
    %v1435 = vadd.f32 %v1367, %v1381
    %v1436 = vadd.f32 %v1368, %v1381
    %v1437 = vadd.f32 %v1369, %v1381
    %v1438 = vadd.f32 %v1370, %v1381
    %v1439 = vadd.f32 %v1371, %v1381
    %v1440 = vadd.f32 %v1372, %v1381
    %v1441 = vadd.f32 %v1373, %v1381
    %v1442 = vadd.f32 %v1374, %v1381
    %v1443 = vadd.f32 %v1375, %v1381
    %v1444 = vadd.f32 %v1376, %v1381
    %v1445 = vadd.f32 %v1377, %v1381
    %v1446 = vmax.f32 %v1382, 0.0
    %v1447 = vmax.f32 %v1383, 0.0
    %v1448 = vmax.f32 %v1384, 0.0
    %v1449 = vmax.f32 %v1385, 0.0
    %v1450 = vmax.f32 %v1386, 0.0
    %v1451 = vmax.f32 %v1387, 0.0
    %v1452 = vmax.f32 %v1388, 0.0
    %v1453 = vmax.f32 %v1389, 0.0
    %v1454 = vmax.f32 %v1390, 0.0
    %v1455 = vmax.f32 %v1391, 0.0
    %v1456 = vmax.f32 %v1392, 0.0
    %v1457 = vmax.f32 %v1393, 0.0
    %v1458 = vmax.f32 %v1394, 0.0
    %v1459 = vmax.f32 %v1395, 0.0
    %v1460 = vmax.f32 %v1396, 0.0
    %v1461 = vmax.f32 %v1397, 0.0
    %v1462 = vmax.f32 %v1398, 0.0
    %v1463 = vmax.f32 %v1399, 0.0
    %v1464 = vmax.f32 %v1400, 0.0
    %v1465 = vmax.f32 %v1401, 0.0
    %v1466 = vmax.f32 %v1402, 0.0
    %v1467 = vmax.f32 %v1403, 0.0
    %v1468 = vmax.f32 %v1404, 0.0
    %v1469 = vmax.f32 %v1405, 0.0
    %v1470 = vmax.f32 %v1406, 0.0
    %v1471 = vmax.f32 %v1407, 0.0
    %v1472 = vmax.f32 %v1408, 0.0
    %v1473 = vmax.f32 %v1409, 0.0
    %v1474 = vmax.f32 %v1410, 0.0
    %v1475 = vmax.f32 %v1411, 0.0
    %v1476 = vmax.f32 %v1412, 0.0
    %v1477 = vmax.f32 %v1413, 0.0
    %v1478 = vmax.f32 %v1414, 0.0
    %v1479 = vmax.f32 %v1415, 0.0
    %v1480 = vmax.f32 %v1416, 0.0
    %v1481 = vmax.f32 %v1417, 0.0
    %v1482 = vmax.f32 %v1418, 0.0
    %v1483 = vmax.f32 %v1419, 0.0
    %v1484 = vmax.f32 %v1420, 0.0
    %v1485 = vmax.f32 %v1421, 0.0
    %v1486 = vmax.f32 %v1422, 0.0
    %v1487 = vmax.f32 %v1423, 0.0
    %v1488 = vmax.f32 %v1424, 0.0
    %v1489 = vmax.f32 %v1425, 0.0
    %v1490 = vmax.f32 %v1426, 0.0
    %v1491 = vmax.f32 %v1427, 0.0
    %v1492 = vmax.f32 %v1428, 0.0
    %v1493 = vmax.f32 %v1429, 0.0
    %v1494 = vmax.f32 %v1430, 0.0
    %v1495 = vmax.f32 %v1431, 0.0
    %v1496 = vmax.f32 %v1432, 0.0
    %v1497 = vmax.f32 %v1433, 0.0
    %v1498 = vmax.f32 %v1434, 0.0
    %v1499 = vmax.f32 %v1435, 0.0
    %v1500 = vmax.f32 %v1436, 0.0
    %v1501 = vmax.f32 %v1437, 0.0
    %v1502 = vmax.f32 %v1438, 0.0
    %v1503 = vmax.f32 %v1439, 0.0
    %v1504 = vmax.f32 %v1440, 0.0
    %v1505 = vmax.f32 %v1441, 0.0
    %v1506 = vmax.f32 %v1442, 0.0
    %v1507 = vmax.f32 %v1443, 0.0
    %v1508 = vmax.f32 %v1444, 0.0
    %v1509 = vmax.f32 %v1445, 0.0
    %v1510 = vpack.c.bf16 %v1447, %v1446
    %v1511 = vpack.c.bf16 %v1449, %v1448
    %v1512 = vpack.c.bf16 %v1451, %v1450
    %v1513 = vpack.c.bf16 %v1453, %v1452
    %v1514 = vpack.c.bf16 %v1455, %v1454
    %v1515 = vpack.c.bf16 %v1457, %v1456
    %v1516 = vpack.c.bf16 %v1459, %v1458
    %v1517 = vpack.c.bf16 %v1461, %v1460
    %v1518 = vpack.c.bf16 %v1463, %v1462
    %v1519 = vpack.c.bf16 %v1465, %v1464
    %v1520 = vpack.c.bf16 %v1467, %v1466
    %v1521 = vpack.c.bf16 %v1469, %v1468
    %v1522 = vpack.c.bf16 %v1471, %v1470
    %v1523 = vpack.c.bf16 %v1473, %v1472
    %v1524 = vpack.c.bf16 %v1475, %v1474
    %v1525 = vpack.c.bf16 %v1477, %v1476
    %v1526 = vpack.c.bf16 %v1479, %v1478
    %v1527 = vpack.c.bf16 %v1481, %v1480
    %v1528 = vpack.c.bf16 %v1483, %v1482
    %v1529 = vpack.c.bf16 %v1485, %v1484
    %v1530 = vpack.c.bf16 %v1487, %v1486
    %v1531 = vpack.c.bf16 %v1489, %v1488
    %v1532 = vpack.c.bf16 %v1491, %v1490
    %v1533 = vpack.c.bf16 %v1493, %v1492
    %v1534 = vpack.c.bf16 %v1495, %v1494
    %v1535 = vpack.c.bf16 %v1497, %v1496
    %v1536 = vpack.c.bf16 %v1499, %v1498
    %v1537 = vpack.c.bf16 %v1501, %v1500
    %v1538 = vpack.c.bf16 %v1503, %v1502
    %v1539 = vpack.c.bf16 %v1505, %v1504
    %v1540 = vpack.c.bf16 %v1507, %v1506
    %v1541 = vpack.c.bf16 %v1509, %v1508
    %v1543 = vshrl.u32 0, 16
    %v1545 = vrot.slane %v1543, 7
    %v1546 = vshll.u32 0, 16
    %v1548 = vor.u32 %v1545, %v1546
    %v1550 = vshrl.u32 %v1510, 16
    %v1552 = vrot.slane %v1550, 7
    %v1553 = vshll.u32 %v1510, 16
    %v1555 = vor.u32 %v1552, %v1553
    %v1557 = vshrl.u32 %v1511, 16
    %v1559 = vrot.slane %v1557, 7
    %v1560 = vshll.u32 %v1511, 16
    %v1562 = vor.u32 %v1559, %v1560
    %v1564 = vshrl.u32 %v1512, 16
    %v1566 = vrot.slane %v1564, 7
    %v1567 = vshll.u32 %v1512, 16
    %v1569 = vor.u32 %v1566, %v1567
    %v1571 = vshrl.u32 %v1513, 16
    %v1573 = vrot.slane %v1571, 7
    %v1574 = vshll.u32 %v1513, 16
    %v1576 = vor.u32 %v1573, %v1574
    %v1578 = vshrl.u32 %v1514, 16
    %v1580 = vrot.slane %v1578, 7
    %v1581 = vshll.u32 %v1514, 16
    %v1583 = vor.u32 %v1580, %v1581
    %v1585 = vshrl.u32 %v1515, 16
    %v1587 = vrot.slane %v1585, 7
    %v1588 = vshll.u32 %v1515, 16
    %v1590 = vor.u32 %v1587, %v1588
    %v1592 = vshrl.u32 %v1516, 16
    %v1594 = vrot.slane %v1592, 7
    %v1595 = vshll.u32 %v1516, 16
    %v1597 = vor.u32 %v1594, %v1595
    %v1599 = vshrl.u32 %v1517, 16
    %v1601 = vrot.slane %v1599, 7
    %v1602 = vshll.u32 %v1517, 16
    %v1604 = vor.u32 %v1601, %v1602
    %v1606 = vshrl.u32 %v1518, 16
    %v1608 = vrot.slane %v1606, 7
    %v1609 = vshll.u32 %v1518, 16
    %v1611 = vor.u32 %v1608, %v1609
    %v1613 = vshrl.u32 %v1519, 16
    %v1615 = vrot.slane %v1613, 7
    %v1616 = vshll.u32 %v1519, 16
    %v1618 = vor.u32 %v1615, %v1616
    %v1620 = vshrl.u32 %v1520, 16
    %v1622 = vrot.slane %v1620, 7
    %v1623 = vshll.u32 %v1520, 16
    %v1625 = vor.u32 %v1622, %v1623
    %v1627 = vshrl.u32 %v1521, 16
    %v1629 = vrot.slane %v1627, 7
    %v1630 = vshll.u32 %v1521, 16
    %v1632 = vor.u32 %v1629, %v1630
    %v1634 = vshrl.u32 %v1522, 16
    %v1636 = vrot.slane %v1634, 7
    %v1637 = vshll.u32 %v1522, 16
    %v1639 = vor.u32 %v1636, %v1637
    %v1641 = vshrl.u32 %v1523, 16
    %v1643 = vrot.slane %v1641, 7
    %v1644 = vshll.u32 %v1523, 16
    %v1646 = vor.u32 %v1643, %v1644
    %v1648 = vshrl.u32 %v1524, 16
    %v1650 = vrot.slane %v1648, 7
    %v1651 = vshll.u32 %v1524, 16
    %v1653 = vor.u32 %v1650, %v1651
    %v1655 = vshrl.u32 %v1525, 16
    %v1657 = vrot.slane %v1655, 7
    %v1658 = vshll.u32 %v1525, 16
    %v1660 = vor.u32 %v1657, %v1658
    %v1662 = vshrl.u32 %v1526, 16
    %v1664 = vrot.slane %v1662, 7
    %v1665 = vshll.u32 %v1526, 16
    %v1667 = vor.u32 %v1664, %v1665
    %v1669 = vshrl.u32 %v1527, 16
    %v1671 = vrot.slane %v1669, 7
    %v1672 = vshll.u32 %v1527, 16
    %v1674 = vor.u32 %v1671, %v1672
    %v1676 = vshrl.u32 %v1528, 16
    %v1678 = vrot.slane %v1676, 7
    %v1679 = vshll.u32 %v1528, 16
    %v1681 = vor.u32 %v1678, %v1679
    %v1683 = vshrl.u32 %v1529, 16
    %v1685 = vrot.slane %v1683, 7
    %v1686 = vshll.u32 %v1529, 16
    %v1688 = vor.u32 %v1685, %v1686
    %v1690 = vshrl.u32 %v1530, 16
    %v1692 = vrot.slane %v1690, 7
    %v1693 = vshll.u32 %v1530, 16
    %v1695 = vor.u32 %v1692, %v1693
    %v1697 = vshrl.u32 %v1531, 16
    %v1699 = vrot.slane %v1697, 7
    %v1700 = vshll.u32 %v1531, 16
    %v1702 = vor.u32 %v1699, %v1700
    %v1704 = vshrl.u32 %v1532, 16
    %v1706 = vrot.slane %v1704, 7
    %v1707 = vshll.u32 %v1532, 16
    %v1709 = vor.u32 %v1706, %v1707
    %v1711 = vshrl.u32 %v1533, 16
    %v1713 = vrot.slane %v1711, 7
    %v1714 = vshll.u32 %v1533, 16
    %v1716 = vor.u32 %v1713, %v1714
    %v1718 = vshrl.u32 %v1534, 16
    %v1720 = vrot.slane %v1718, 7
    %v1721 = vshll.u32 %v1534, 16
    %v1723 = vor.u32 %v1720, %v1721
    %v1725 = vshrl.u32 %v1535, 16
    %v1727 = vrot.slane %v1725, 7
    %v1728 = vshll.u32 %v1535, 16
    %v1730 = vor.u32 %v1727, %v1728
    %v1732 = vshrl.u32 %v1536, 16
    %v1734 = vrot.slane %v1732, 7
    %v1735 = vshll.u32 %v1536, 16
    %v1737 = vor.u32 %v1734, %v1735
    %v1739 = vshrl.u32 %v1537, 16
    %v1741 = vrot.slane %v1739, 7
    %v1742 = vshll.u32 %v1537, 16
    %v1744 = vor.u32 %v1741, %v1742
    %v1746 = vshrl.u32 %v1538, 16
    %v1748 = vrot.slane %v1746, 7
    %v1749 = vshll.u32 %v1538, 16
    %v1751 = vor.u32 %v1748, %v1749
    %v1753 = vshrl.u32 %v1539, 16
    %v1755 = vrot.slane %v1753, 7
    %v1756 = vshll.u32 %v1539, 16
    %v1758 = vor.u32 %v1755, %v1756
    %v1760 = vshrl.u32 %v1540, 16
    %v1762 = vrot.slane %v1760, 7
    %v1763 = vshll.u32 %v1540, 16
    %v1765 = vor.u32 %v1762, %v1763
    %v1767 = vshrl.u32 %v1541, 16
    %v1769 = vrot.slane %v1767, 7
    %v1770 = vshll.u32 %v1541, 16
    %v1772 = vor.u32 %v1769, %v1770
    %vm1839 = vcmask 1040384
    %vm1840 = vsmask.f32 256
    %vm1841 = vmand %vm1839, %vm1840
    %v1842 = vsel %vm1841, 0, %v1548
    %v1843 = vsel %vm1841, 0, %v1555
    %v1844 = vsel %vm1841, 0, %v1562
    %v1845 = vsel %vm1841, 0, %v1569
    %v1846 = vsel %vm1841, 0, %v1576
    %v1847 = vsel %vm1841, 0, %v1583
    %v1848 = vsel %vm1841, 0, %v1590
    %v1849 = vsel %vm1841, 0, %v1597
    %v1850 = vsel %vm1841, 0, %v1604
    %v1851 = vsel %vm1841, 0, %v1611
    %v1852 = vsel %vm1841, 0, %v1618
    %v1853 = vsel %vm1841, 0, %v1625
    %v1854 = vsel %vm1841, 0, %v1632
    %v1855 = vsel %vm1841, 0, %v1639
    %v1856 = vsel %vm1841, 0, %v1646
    %v1857 = vsel %vm1841, 0, %v1653
    %v1858 = vsel %vm1841, 0, %v1660
    %v1859 = vsel %vm1841, 0, %v1667
    %v1860 = vsel %vm1841, 0, %v1674
    %v1861 = vsel %vm1841, 0, %v1681
    %v1862 = vsel %vm1841, 0, %v1688
    %v1863 = vsel %vm1841, 0, %v1695
    %v1864 = vsel %vm1841, 0, %v1702
    %v1865 = vsel %vm1841, 0, %v1709
    %v1866 = vsel %vm1841, 0, %v1716
    %v1867 = vsel %vm1841, 0, %v1723
    %v1868 = vsel %vm1841, 0, %v1730
    %v1869 = vsel %vm1841, 0, %v1737
    %v1870 = vsel %vm1841, 0, %v1744
    %v1871 = vsel %vm1841, 0, %v1751
    %v1872 = vsel %vm1841, 0, %v1758
    %v1873 = vsel %vm1841, 0, %v1765
    %v1874 = vsel %vm1841, 0, %v1772
    %v1875 = vsel %vm1841, %v1545, 0
    %v1876 = vsel %vm1841, %v1552, 0
    %v1877 = vsel %vm1841, %v1559, 0
    %v1878 = vsel %vm1841, %v1566, 0
    %v1879 = vsel %vm1841, %v1573, 0
    %v1880 = vsel %vm1841, %v1580, 0
    %v1881 = vsel %vm1841, %v1587, 0
    %v1882 = vsel %vm1841, %v1594, 0
    %v1883 = vsel %vm1841, %v1601, 0
    %v1884 = vsel %vm1841, %v1608, 0
    %v1885 = vsel %vm1841, %v1615, 0
    %v1886 = vsel %vm1841, %v1622, 0
    %v1887 = vsel %vm1841, %v1629, 0
    %v1888 = vsel %vm1841, %v1636, 0
    %v1889 = vsel %vm1841, %v1643, 0
    %v1890 = vsel %vm1841, %v1650, 0
    %v1891 = vsel %vm1841, %v1657, 0
    %v1892 = vsel %vm1841, %v1664, 0
    %v1893 = vsel %vm1841, %v1671, 0
    %v1894 = vsel %vm1841, %v1678, 0
    %v1895 = vsel %vm1841, %v1685, 0
    %v1896 = vsel %vm1841, %v1692, 0
    %v1897 = vsel %vm1841, %v1699, 0
    %v1898 = vsel %vm1841, %v1706, 0
    %v1899 = vsel %vm1841, %v1713, 0
    %v1900 = vsel %vm1841, %v1720, 0
    %v1901 = vsel %vm1841, %v1727, 0
    %v1902 = vsel %vm1841, %v1734, 0
    %v1903 = vsel %vm1841, %v1741, 0
    %v1904 = vsel %vm1841, %v1748, 0
    %v1905 = vsel %vm1841, %v1755, 0
    %v1906 = vsel %vm1841, %v1762, 0
    %v1907 = vsel %vm1841, %v1769, 0
    %vm1908 = vsmask.f32 7424
    %v1910 = vshrl.u32 %v1842, 16
    %v1912 = vshll.u32 %v1842, 16
    %v1914 = vrot.slane %v1912, 1
    %v1915 = vor.u32 %v1910, %v1914
    %v1917 = vshll.u32 %v1875, 16
    %v1919 = vrot.slane %v1917, 1
    %v1920 = vsel %vm1908, %v1915, %v1919
    %v1922 = vshrl.u32 %v1843, 16
    %v1924 = vshll.u32 %v1843, 16
    %v1926 = vrot.slane %v1924, 1
    %v1927 = vor.u32 %v1922, %v1926
    %v1929 = vshll.u32 %v1876, 16
    %v1931 = vrot.slane %v1929, 1
    %v1932 = vsel %vm1908, %v1927, %v1931
    %v1934 = vshrl.u32 %v1844, 16
    %v1936 = vshll.u32 %v1844, 16
    %v1938 = vrot.slane %v1936, 1
    %v1939 = vor.u32 %v1934, %v1938
    %v1941 = vshll.u32 %v1877, 16
    %v1943 = vrot.slane %v1941, 1
    %v1944 = vsel %vm1908, %v1939, %v1943
    %v1946 = vshrl.u32 %v1845, 16
    %v1948 = vshll.u32 %v1845, 16
    %v1950 = vrot.slane %v1948, 1
    %v1951 = vor.u32 %v1946, %v1950
    %v1953 = vshll.u32 %v1878, 16
    %v1955 = vrot.slane %v1953, 1
    %v1956 = vsel %vm1908, %v1951, %v1955
    %v1958 = vshrl.u32 %v1846, 16
    %v1960 = vshll.u32 %v1846, 16
    %v1962 = vrot.slane %v1960, 1
    %v1963 = vor.u32 %v1958, %v1962
    %v1965 = vshll.u32 %v1879, 16
    %v1967 = vrot.slane %v1965, 1
    %v1968 = vsel %vm1908, %v1963, %v1967
    %v1970 = vshrl.u32 %v1847, 16
    %v1972 = vshll.u32 %v1847, 16
    %v1974 = vrot.slane %v1972, 1
    %v1975 = vor.u32 %v1970, %v1974
    %v1977 = vshll.u32 %v1880, 16
    %v1979 = vrot.slane %v1977, 1
    %v1980 = vsel %vm1908, %v1975, %v1979
    %v1982 = vshrl.u32 %v1848, 16
    %v1984 = vshll.u32 %v1848, 16
    %v1986 = vrot.slane %v1984, 1
    %v1987 = vor.u32 %v1982, %v1986
    %v1989 = vshll.u32 %v1881, 16
    %v1991 = vrot.slane %v1989, 1
    %v1992 = vsel %vm1908, %v1987, %v1991
    %v1994 = vshrl.u32 %v1849, 16
    %v1996 = vshll.u32 %v1849, 16
    %v1998 = vrot.slane %v1996, 1
    %v1999 = vor.u32 %v1994, %v1998
    %v2001 = vshll.u32 %v1882, 16
    %v2003 = vrot.slane %v2001, 1
    %v2004 = vsel %vm1908, %v1999, %v2003
    %v2006 = vshrl.u32 %v1850, 16
    %v2008 = vshll.u32 %v1850, 16
    %v2010 = vrot.slane %v2008, 1
    %v2011 = vor.u32 %v2006, %v2010
    %v2013 = vshll.u32 %v1883, 16
    %v2015 = vrot.slane %v2013, 1
    %v2016 = vsel %vm1908, %v2011, %v2015
    %v2018 = vshrl.u32 %v1851, 16
    %v2020 = vshll.u32 %v1851, 16
    %v2022 = vrot.slane %v2020, 1
    %v2023 = vor.u32 %v2018, %v2022
    %v2025 = vshll.u32 %v1884, 16
    %v2027 = vrot.slane %v2025, 1
    %v2028 = vsel %vm1908, %v2023, %v2027
    %v2030 = vshrl.u32 %v1852, 16
    %v2032 = vshll.u32 %v1852, 16
    %v2034 = vrot.slane %v2032, 1
    %v2035 = vor.u32 %v2030, %v2034
    %v2037 = vshll.u32 %v1885, 16
    %v2039 = vrot.slane %v2037, 1
    %v2040 = vsel %vm1908, %v2035, %v2039
    %v2042 = vshrl.u32 %v1853, 16
    %v2044 = vshll.u32 %v1853, 16
    %v2046 = vrot.slane %v2044, 1
    %v2047 = vor.u32 %v2042, %v2046
    %v2049 = vshll.u32 %v1886, 16
    %v2051 = vrot.slane %v2049, 1
    %v2052 = vsel %vm1908, %v2047, %v2051
    %v2054 = vshrl.u32 %v1854, 16
    %v2056 = vshll.u32 %v1854, 16
    %v2058 = vrot.slane %v2056, 1
    %v2059 = vor.u32 %v2054, %v2058
    %v2061 = vshll.u32 %v1887, 16
    %v2063 = vrot.slane %v2061, 1
    %v2064 = vsel %vm1908, %v2059, %v2063
    %v2066 = vshrl.u32 %v1855, 16
    %v2068 = vshll.u32 %v1855, 16
    %v2070 = vrot.slane %v2068, 1
    %v2071 = vor.u32 %v2066, %v2070
    %v2073 = vshll.u32 %v1888, 16
    %v2075 = vrot.slane %v2073, 1
    %v2076 = vsel %vm1908, %v2071, %v2075
    %v2078 = vshrl.u32 %v1856, 16
    %v2080 = vshll.u32 %v1856, 16
    %v2082 = vrot.slane %v2080, 1
    %v2083 = vor.u32 %v2078, %v2082
    %v2085 = vshll.u32 %v1889, 16
    %v2087 = vrot.slane %v2085, 1
    %v2088 = vsel %vm1908, %v2083, %v2087
    %v2090 = vshrl.u32 %v1857, 16
    %v2092 = vshll.u32 %v1857, 16
    %v2094 = vrot.slane %v2092, 1
    %v2095 = vor.u32 %v2090, %v2094
    %v2097 = vshll.u32 %v1890, 16
    %v2099 = vrot.slane %v2097, 1
    %v2100 = vsel %vm1908, %v2095, %v2099
    %v2102 = vshrl.u32 %v1859, 16
    %v2104 = vshll.u32 %v1859, 16
    %v2106 = vrot.slane %v2104, 1
    %v2107 = vor.u32 %v2102, %v2106
    %v2109 = vshll.u32 %v1892, 16
    %v2111 = vrot.slane %v2109, 1
    %v2112 = vsel %vm1908, %v2107, %v2111
    %v2114 = vshrl.u32 %v1860, 16
    %v2116 = vshll.u32 %v1860, 16
    %v2118 = vrot.slane %v2116, 1
    %v2119 = vor.u32 %v2114, %v2118
    %v2121 = vshll.u32 %v1893, 16
    %v2123 = vrot.slane %v2121, 1
    %v2124 = vsel %vm1908, %v2119, %v2123
    %v2126 = vshrl.u32 %v1861, 16
    %v2128 = vshll.u32 %v1861, 16
    %v2130 = vrot.slane %v2128, 1
    %v2131 = vor.u32 %v2126, %v2130
    %v2133 = vshll.u32 %v1894, 16
    %v2135 = vrot.slane %v2133, 1
    %v2136 = vsel %vm1908, %v2131, %v2135
    %v2138 = vshrl.u32 %v1862, 16
    %v2140 = vshll.u32 %v1862, 16
    %v2142 = vrot.slane %v2140, 1
    %v2143 = vor.u32 %v2138, %v2142
    %v2145 = vshll.u32 %v1895, 16
    %v2147 = vrot.slane %v2145, 1
    %v2148 = vsel %vm1908, %v2143, %v2147
    %v2150 = vshrl.u32 %v1863, 16
    %v2152 = vshll.u32 %v1863, 16
    %v2154 = vrot.slane %v2152, 1
    %v2155 = vor.u32 %v2150, %v2154
    %v2157 = vshll.u32 %v1896, 16
    %v2159 = vrot.slane %v2157, 1
    %v2160 = vsel %vm1908, %v2155, %v2159
    %v2162 = vshrl.u32 %v1864, 16
    %v2164 = vshll.u32 %v1864, 16
    %v2166 = vrot.slane %v2164, 1
    %v2167 = vor.u32 %v2162, %v2166
    %v2169 = vshll.u32 %v1897, 16
    %v2171 = vrot.slane %v2169, 1
    %v2172 = vsel %vm1908, %v2167, %v2171
    %v2174 = vshrl.u32 %v1865, 16
    %v2176 = vshll.u32 %v1865, 16
    %v2178 = vrot.slane %v2176, 1
    %v2179 = vor.u32 %v2174, %v2178
    %v2181 = vshll.u32 %v1898, 16
    %v2183 = vrot.slane %v2181, 1
    %v2184 = vsel %vm1908, %v2179, %v2183
    %v2186 = vshrl.u32 %v1866, 16
    %v2188 = vshll.u32 %v1866, 16
    %v2190 = vrot.slane %v2188, 1
    %v2191 = vor.u32 %v2186, %v2190
    %v2193 = vshll.u32 %v1899, 16
    %v2195 = vrot.slane %v2193, 1
    %v2196 = vsel %vm1908, %v2191, %v2195
    %v2198 = vshrl.u32 %v1867, 16
    %v2200 = vshll.u32 %v1867, 16
    %v2202 = vrot.slane %v2200, 1
    %v2203 = vor.u32 %v2198, %v2202
    %v2205 = vshll.u32 %v1900, 16
    %v2207 = vrot.slane %v2205, 1
    %v2208 = vsel %vm1908, %v2203, %v2207
    %v2210 = vshrl.u32 %v1868, 16
    %v2212 = vshll.u32 %v1868, 16
    %v2214 = vrot.slane %v2212, 1
    %v2215 = vor.u32 %v2210, %v2214
    %v2217 = vshll.u32 %v1901, 16
    %v2219 = vrot.slane %v2217, 1
    %v2220 = vsel %vm1908, %v2215, %v2219
    %v2222 = vshrl.u32 %v1869, 16
    %v2224 = vshll.u32 %v1869, 16
    %v2226 = vrot.slane %v2224, 1
    %v2227 = vor.u32 %v2222, %v2226
    %v2229 = vshll.u32 %v1902, 16
    %v2231 = vrot.slane %v2229, 1
    %v2232 = vsel %vm1908, %v2227, %v2231
    %v2234 = vshrl.u32 %v1870, 16
    %v2236 = vshll.u32 %v1870, 16
    %v2238 = vrot.slane %v2236, 1
    %v2239 = vor.u32 %v2234, %v2238
    %v2241 = vshll.u32 %v1903, 16
    %v2243 = vrot.slane %v2241, 1
    %v2244 = vsel %vm1908, %v2239, %v2243
    %v2246 = vshrl.u32 %v1871, 16
    %v2248 = vshll.u32 %v1871, 16
    %v2250 = vrot.slane %v2248, 1
    %v2251 = vor.u32 %v2246, %v2250
    %v2253 = vshll.u32 %v1904, 16
    %v2255 = vrot.slane %v2253, 1
    %v2256 = vsel %vm1908, %v2251, %v2255
    %v2258 = vshrl.u32 %v1872, 16
    %v2260 = vshll.u32 %v1872, 16
    %v2262 = vrot.slane %v2260, 1
    %v2263 = vor.u32 %v2258, %v2262
    %v2265 = vshll.u32 %v1905, 16
    %v2267 = vrot.slane %v2265, 1
    %v2268 = vsel %vm1908, %v2263, %v2267
    %v2270 = vshrl.u32 %v1873, 16
    %v2272 = vshll.u32 %v1873, 16
    %v2274 = vrot.slane %v2272, 1
    %v2275 = vor.u32 %v2270, %v2274
    %v2277 = vshll.u32 %v1906, 16
    %v2279 = vrot.slane %v2277, 1
    %v2280 = vsel %vm1908, %v2275, %v2279
    %2281 = vrot.lane.b32.xlu0 %v1920, 4
    %v2282 = vpop.permute.xlu0 %2281
    %2283 = vrot.lane.b32.xlu0 %v1932, 4
    %v2284 = vpop.permute.xlu0 %2283
    %2285 = vrot.lane.b32.xlu0 %v1944, 4
    %v2286 = vpop.permute.xlu0 %2285
    %2287 = vrot.lane.b32.xlu0 %v1956, 4
    %v2288 = vpop.permute.xlu0 %2287
    %2289 = vrot.lane.b32.xlu0 %v1968, 4
    %v2290 = vpop.permute.xlu0 %2289
    %2291 = vrot.lane.b32.xlu0 %v1980, 4
    %v2292 = vpop.permute.xlu0 %2291
    %2293 = vrot.lane.b32.xlu0 %v1992, 4
    %v2294 = vpop.permute.xlu0 %2293
    %2295 = vrot.lane.b32.xlu0 %v2004, 4
    %v2296 = vpop.permute.xlu0 %2295
    %2297 = vrot.lane.b32.xlu0 %v2016, 4
    %v2298 = vpop.permute.xlu0 %2297
    %2299 = vrot.lane.b32.xlu0 %v2028, 4
    %v2300 = vpop.permute.xlu0 %2299
    %2301 = vrot.lane.b32.xlu0 %v2040, 4
    %v2302 = vpop.permute.xlu0 %2301
    %2303 = vrot.lane.b32.xlu0 %v2052, 4
    %v2304 = vpop.permute.xlu0 %2303
    %2305 = vrot.lane.b32.xlu0 %v2064, 4
    %v2306 = vpop.permute.xlu0 %2305
    %2307 = vrot.lane.b32.xlu0 %v2076, 4
    %v2308 = vpop.permute.xlu0 %2307
    %2309 = vrot.lane.b32.xlu0 %v2088, 4
    %v2310 = vpop.permute.xlu0 %2309
    %2311 = vrot.lane.b32.xlu0 %v2100, 4
    %v2312 = vpop.permute.xlu0 %2311
    %2313 = vrot.lane.b32.xlu0 %v2112, 4
    %v2314 = vpop.permute.xlu0 %2313
    %2315 = vrot.lane.b32.xlu0 %v2124, 4
    %v2316 = vpop.permute.xlu0 %2315
    %2317 = vrot.lane.b32.xlu0 %v2136, 4
    %v2318 = vpop.permute.xlu0 %2317
    %2319 = vrot.lane.b32.xlu0 %v2148, 4
    %v2320 = vpop.permute.xlu0 %2319
    %2321 = vrot.lane.b32.xlu0 %v2160, 4
    %v2322 = vpop.permute.xlu0 %2321
    %2323 = vrot.lane.b32.xlu0 %v2172, 4
    %v2324 = vpop.permute.xlu0 %2323
    %2325 = vrot.lane.b32.xlu0 %v2184, 4
    %v2326 = vpop.permute.xlu0 %2325
    %2327 = vrot.lane.b32.xlu0 %v2196, 4
    %v2328 = vpop.permute.xlu0 %2327
    %2329 = vrot.lane.b32.xlu0 %v2208, 4
    %v2330 = vpop.permute.xlu0 %2329
    %2331 = vrot.lane.b32.xlu0 %v2220, 4
    %v2332 = vpop.permute.xlu0 %2331
    %2333 = vrot.lane.b32.xlu0 %v2232, 4
    %v2334 = vpop.permute.xlu0 %2333
    %2335 = vrot.lane.b32.xlu0 %v2244, 4
    %v2336 = vpop.permute.xlu0 %2335
    %2337 = vrot.lane.b32.xlu0 %v2256, 4
    %v2338 = vpop.permute.xlu0 %2337
    %2339 = vrot.lane.b32.xlu0 %v2268, 4
    %v2340 = vpop.permute.xlu0 %2339
    %2341 = vrot.lane.b32.xlu0 %v2280, 4
    %v2342 = vpop.permute.xlu0 %2341
    %vm2405 = vcmask 1046528
    %v2406 = vrot.slane %v1842, 1
    %v2407 = vrot.slane %v1875, 1
    %v2408 = vsel %vm2405, %v2406, %v2407
    %v2409 = vrot.slane %v1843, 1
    %v2410 = vrot.slane %v1876, 1
    %v2411 = vsel %vm2405, %v2409, %v2410
    %v2412 = vrot.slane %v1844, 1
    %v2413 = vrot.slane %v1877, 1
    %v2414 = vsel %vm2405, %v2412, %v2413
    %v2415 = vrot.slane %v1845, 1
    %v2416 = vrot.slane %v1878, 1
    %v2417 = vsel %vm2405, %v2415, %v2416
    %v2418 = vrot.slane %v1846, 1
    %v2419 = vrot.slane %v1879, 1
    %v2420 = vsel %vm2405, %v2418, %v2419
    %v2421 = vrot.slane %v1847, 1
    %v2422 = vrot.slane %v1880, 1
    %v2423 = vsel %vm2405, %v2421, %v2422
    %v2424 = vrot.slane %v1848, 1
    %v2425 = vrot.slane %v1881, 1
    %v2426 = vsel %vm2405, %v2424, %v2425
    %v2427 = vrot.slane %v1849, 1
    %v2428 = vrot.slane %v1882, 1
    %v2429 = vsel %vm2405, %v2427, %v2428
    %v2430 = vrot.slane %v1850, 1
    %v2431 = vrot.slane %v1883, 1
    %v2432 = vsel %vm2405, %v2430, %v2431
    %v2433 = vrot.slane %v1851, 1
    %v2434 = vrot.slane %v1884, 1
    %v2435 = vsel %vm2405, %v2433, %v2434
    %v2436 = vrot.slane %v1852, 1
    %v2437 = vrot.slane %v1885, 1
    %v2438 = vsel %vm2405, %v2436, %v2437
    %v2439 = vrot.slane %v1853, 1
    %v2440 = vrot.slane %v1886, 1
    %v2441 = vsel %vm2405, %v2439, %v2440
    %v2442 = vrot.slane %v1854, 1
    %v2443 = vrot.slane %v1887, 1
    %v2444 = vsel %vm2405, %v2442, %v2443
    %v2445 = vrot.slane %v1855, 1
    %v2446 = vrot.slane %v1888, 1
    %v2447 = vsel %vm2405, %v2445, %v2446
    %v2448 = vrot.slane %v1856, 1
    %v2449 = vrot.slane %v1889, 1
    %v2450 = vsel %vm2405, %v2448, %v2449
    %v2451 = vrot.slane %v1857, 1
    %v2452 = vrot.slane %v1890, 1
    %v2453 = vsel %vm2405, %v2451, %v2452
    %v2454 = vrot.slane %v1859, 1
    %v2455 = vrot.slane %v1892, 1
    %v2456 = vsel %vm2405, %v2454, %v2455
    %v2457 = vrot.slane %v1860, 1
    %v2458 = vrot.slane %v1893, 1
    %v2459 = vsel %vm2405, %v2457, %v2458
    %v2460 = vrot.slane %v1861, 1
    %v2461 = vrot.slane %v1894, 1
    %v2462 = vsel %vm2405, %v2460, %v2461
    %v2463 = vrot.slane %v1862, 1
    %v2464 = vrot.slane %v1895, 1
    %v2465 = vsel %vm2405, %v2463, %v2464
    %v2466 = vrot.slane %v1863, 1
    %v2467 = vrot.slane %v1896, 1
    %v2468 = vsel %vm2405, %v2466, %v2467
    %v2469 = vrot.slane %v1864, 1
    %v2470 = vrot.slane %v1897, 1
    %v2471 = vsel %vm2405, %v2469, %v2470
    %v2472 = vrot.slane %v1865, 1
    %v2473 = vrot.slane %v1898, 1
    %v2474 = vsel %vm2405, %v2472, %v2473
    %v2475 = vrot.slane %v1866, 1
    %v2476 = vrot.slane %v1899, 1
    %v2477 = vsel %vm2405, %v2475, %v2476
    %v2478 = vrot.slane %v1867, 1
    %v2479 = vrot.slane %v1900, 1
    %v2480 = vsel %vm2405, %v2478, %v2479
    %v2481 = vrot.slane %v1868, 1
    %v2482 = vrot.slane %v1901, 1
    %v2483 = vsel %vm2405, %v2481, %v2482
    %v2484 = vrot.slane %v1869, 1
    %v2485 = vrot.slane %v1902, 1
    %v2486 = vsel %vm2405, %v2484, %v2485
    %v2487 = vrot.slane %v1870, 1
    %v2488 = vrot.slane %v1903, 1
    %v2489 = vsel %vm2405, %v2487, %v2488
    %v2490 = vrot.slane %v1871, 1
    %v2491 = vrot.slane %v1904, 1
    %v2492 = vsel %vm2405, %v2490, %v2491
    %v2493 = vrot.slane %v1872, 1
    %v2494 = vrot.slane %v1905, 1
    %v2495 = vsel %vm2405, %v2493, %v2494
    %v2496 = vrot.slane %v1873, 1
    %v2497 = vrot.slane %v1906, 1
    %v2498 = vsel %vm2405, %v2496, %v2497
    %2499 = vrot.lane.b32.xlu0 %v2408, 8
    %v2500 = vpop.permute.xlu0 %2499
    %2501 = vrot.lane.b32.xlu0 %v2411, 8
    %v2502 = vpop.permute.xlu0 %2501
    %2503 = vrot.lane.b32.xlu0 %v2414, 8
    %v2504 = vpop.permute.xlu0 %2503
    %2505 = vrot.lane.b32.xlu0 %v2417, 8
    %v2506 = vpop.permute.xlu0 %2505
    %2507 = vrot.lane.b32.xlu0 %v2420, 8
    %v2508 = vpop.permute.xlu0 %2507
    %2509 = vrot.lane.b32.xlu0 %v2423, 8
    %v2510 = vpop.permute.xlu0 %2509
    %2511 = vrot.lane.b32.xlu0 %v2426, 8
    %v2512 = vpop.permute.xlu0 %2511
    %2513 = vrot.lane.b32.xlu0 %v2429, 8
    %v2514 = vpop.permute.xlu0 %2513
    %2515 = vrot.lane.b32.xlu0 %v2432, 8
    %v2516 = vpop.permute.xlu0 %2515
    %2517 = vrot.lane.b32.xlu0 %v2435, 8
    %v2518 = vpop.permute.xlu0 %2517
    %2519 = vrot.lane.b32.xlu0 %v2438, 8
    %v2520 = vpop.permute.xlu0 %2519
    %2521 = vrot.lane.b32.xlu0 %v2441, 8
    %v2522 = vpop.permute.xlu0 %2521
    %2523 = vrot.lane.b32.xlu0 %v2444, 8
    %v2524 = vpop.permute.xlu0 %2523
    %2525 = vrot.lane.b32.xlu0 %v2447, 8
    %v2526 = vpop.permute.xlu0 %2525
    %2527 = vrot.lane.b32.xlu0 %v2450, 8
    %v2528 = vpop.permute.xlu0 %2527
    %2529 = vrot.lane.b32.xlu0 %v2453, 8
    %v2530 = vpop.permute.xlu0 %2529
    %2531 = vrot.lane.b32.xlu0 %v2456, 8
    %v2532 = vpop.permute.xlu0 %2531
    %2533 = vrot.lane.b32.xlu0 %v2459, 8
    %v2534 = vpop.permute.xlu0 %2533
    %2535 = vrot.lane.b32.xlu0 %v2462, 8
    %v2536 = vpop.permute.xlu0 %2535
    %2537 = vrot.lane.b32.xlu0 %v2465, 8
    %v2538 = vpop.permute.xlu0 %2537
    %2539 = vrot.lane.b32.xlu0 %v2468, 8
    %v2540 = vpop.permute.xlu0 %2539
    %2541 = vrot.lane.b32.xlu0 %v2471, 8
    %v2542 = vpop.permute.xlu0 %2541
    %2543 = vrot.lane.b32.xlu0 %v2474, 8
    %v2544 = vpop.permute.xlu0 %2543
    %2545 = vrot.lane.b32.xlu0 %v2477, 8
    %v2546 = vpop.permute.xlu0 %2545
    %2547 = vrot.lane.b32.xlu0 %v2480, 8
    %v2548 = vpop.permute.xlu0 %2547
    %2549 = vrot.lane.b32.xlu0 %v2483, 8
    %v2550 = vpop.permute.xlu0 %2549
    %2551 = vrot.lane.b32.xlu0 %v2486, 8
    %v2552 = vpop.permute.xlu0 %2551
    %2553 = vrot.lane.b32.xlu0 %v2489, 8
    %v2554 = vpop.permute.xlu0 %2553
    %2555 = vrot.lane.b32.xlu0 %v2492, 8
    %v2556 = vpop.permute.xlu0 %2555
    %2557 = vrot.lane.b32.xlu0 %v2495, 8
    %v2558 = vpop.permute.xlu0 %2557
    %2559 = vrot.lane.b32.xlu0 %v2498, 8
    %v2560 = vpop.permute.xlu0 %2559
    %2563 = vrot.lane.b32.xlu0 %v1843, 12
    %v2564 = vpop.permute.xlu0 %2563
    %2565 = vrot.lane.b32.xlu0 %v1844, 12
    %v2566 = vpop.permute.xlu0 %2565
    %2567 = vrot.lane.b32.xlu0 %v1845, 12
    %v2568 = vpop.permute.xlu0 %2567
    %2569 = vrot.lane.b32.xlu0 %v1846, 12
    %v2570 = vpop.permute.xlu0 %2569
    %2571 = vrot.lane.b32.xlu0 %v1847, 12
    %v2572 = vpop.permute.xlu0 %2571
    %2573 = vrot.lane.b32.xlu0 %v1848, 12
    %v2574 = vpop.permute.xlu0 %2573
    %2575 = vrot.lane.b32.xlu0 %v1849, 12
    %v2576 = vpop.permute.xlu0 %2575
    %2577 = vrot.lane.b32.xlu0 %v1850, 12
    %v2578 = vpop.permute.xlu0 %2577
    %2579 = vrot.lane.b32.xlu0 %v1851, 12
    %v2580 = vpop.permute.xlu0 %2579
    %2581 = vrot.lane.b32.xlu0 %v1852, 12
    %v2582 = vpop.permute.xlu0 %2581
    %2583 = vrot.lane.b32.xlu0 %v1853, 12
    %v2584 = vpop.permute.xlu0 %2583
    %2585 = vrot.lane.b32.xlu0 %v1854, 12
    %v2586 = vpop.permute.xlu0 %2585
    %2587 = vrot.lane.b32.xlu0 %v1855, 12
    %v2588 = vpop.permute.xlu0 %2587
    %2589 = vrot.lane.b32.xlu0 %v1856, 12
    %v2590 = vpop.permute.xlu0 %2589
    %2591 = vrot.lane.b32.xlu0 %v1857, 12
    %v2592 = vpop.permute.xlu0 %2591
    %2593 = vrot.lane.b32.xlu0 %v1858, 12
    %v2594 = vpop.permute.xlu0 %2593
    %2595 = vrot.lane.b32.xlu0 %v1859, 12
    %v2596 = vpop.permute.xlu0 %2595
    %2597 = vrot.lane.b32.xlu0 %v1860, 12
    %v2598 = vpop.permute.xlu0 %2597
    %2599 = vrot.lane.b32.xlu0 %v1861, 12
    %v2600 = vpop.permute.xlu0 %2599
    %2601 = vrot.lane.b32.xlu0 %v1862, 12
    %v2602 = vpop.permute.xlu0 %2601
    %2603 = vrot.lane.b32.xlu0 %v1863, 12
    %v2604 = vpop.permute.xlu0 %2603
    %2605 = vrot.lane.b32.xlu0 %v1864, 12
    %v2606 = vpop.permute.xlu0 %2605
    %2607 = vrot.lane.b32.xlu0 %v1865, 12
    %v2608 = vpop.permute.xlu0 %2607
    %2609 = vrot.lane.b32.xlu0 %v1866, 12
    %v2610 = vpop.permute.xlu0 %2609
    %2611 = vrot.lane.b32.xlu0 %v1867, 12
    %v2612 = vpop.permute.xlu0 %2611
    %2613 = vrot.lane.b32.xlu0 %v1868, 12
    %v2614 = vpop.permute.xlu0 %2613
    %2615 = vrot.lane.b32.xlu0 %v1869, 12
    %v2616 = vpop.permute.xlu0 %2615
    %2617 = vrot.lane.b32.xlu0 %v1870, 12
    %v2618 = vpop.permute.xlu0 %2617
    %2619 = vrot.lane.b32.xlu0 %v1871, 12
    %v2620 = vpop.permute.xlu0 %2619
    %2621 = vrot.lane.b32.xlu0 %v1872, 12
    %v2622 = vpop.permute.xlu0 %2621
    %2623 = vrot.lane.b32.xlu0 %v1873, 12
    %v2624 = vpop.permute.xlu0 %2623
    %2625 = vrot.lane.b32.xlu0 %v1874, 12
    %v2626 = vpop.permute.xlu0 %2625
    %v2628 = vshrl.u32 %v1858, 16
    %v2630 = vshll.u32 %v1858, 16
    %v2632 = vrot.slane %v2630, 1
    %v2633 = vor.u32 %v2628, %v2632
    %v2635 = vshll.u32 %v1891, 16
    %v2637 = vrot.slane %v2635, 1
    %v2638 = vsel %vm1908, %v2633, %v2637
    %v2640 = vshrl.u32 %v1874, 16
    %v2642 = vshll.u32 %v1874, 16
    %v2644 = vrot.slane %v2642, 1
    %v2645 = vor.u32 %v2640, %v2644
    %v2647 = vshll.u32 %v1907, 16
    %v2649 = vrot.slane %v2647, 1
    %v2650 = vsel %vm1908, %v2645, %v2649
    %2651 = vrot.lane.b32.xlu0 %v1932, 16
    %v2652 = vpop.permute.xlu0 %2651
    %2653 = vrot.lane.b32.xlu0 %v1944, 16
    %v2654 = vpop.permute.xlu0 %2653
    %2655 = vrot.lane.b32.xlu0 %v1956, 16
    %v2656 = vpop.permute.xlu0 %2655
    %2657 = vrot.lane.b32.xlu0 %v1968, 16
    %v2658 = vpop.permute.xlu0 %2657
    %2659 = vrot.lane.b32.xlu0 %v1980, 16
    %v2660 = vpop.permute.xlu0 %2659
    %2661 = vrot.lane.b32.xlu0 %v1992, 16
    %v2662 = vpop.permute.xlu0 %2661
    %2663 = vrot.lane.b32.xlu0 %v2004, 16
    %v2664 = vpop.permute.xlu0 %2663
    %2665 = vrot.lane.b32.xlu0 %v2016, 16
    %v2666 = vpop.permute.xlu0 %2665
    %2667 = vrot.lane.b32.xlu0 %v2028, 16
    %v2668 = vpop.permute.xlu0 %2667
    %2669 = vrot.lane.b32.xlu0 %v2040, 16
    %v2670 = vpop.permute.xlu0 %2669
    %2671 = vrot.lane.b32.xlu0 %v2052, 16
    %v2672 = vpop.permute.xlu0 %2671
    %2673 = vrot.lane.b32.xlu0 %v2064, 16
    %v2674 = vpop.permute.xlu0 %2673
    %2675 = vrot.lane.b32.xlu0 %v2076, 16
    %v2676 = vpop.permute.xlu0 %2675
    %2677 = vrot.lane.b32.xlu0 %v2088, 16
    %v2678 = vpop.permute.xlu0 %2677
    %2679 = vrot.lane.b32.xlu0 %v2100, 16
    %v2680 = vpop.permute.xlu0 %2679
    %2681 = vrot.lane.b32.xlu0 %v2638, 16
    %v2682 = vpop.permute.xlu0 %2681
    %2683 = vrot.lane.b32.xlu0 %v2112, 16
    %v2684 = vpop.permute.xlu0 %2683
    %2685 = vrot.lane.b32.xlu0 %v2124, 16
    %v2686 = vpop.permute.xlu0 %2685
    %2687 = vrot.lane.b32.xlu0 %v2136, 16
    %v2688 = vpop.permute.xlu0 %2687
    %2689 = vrot.lane.b32.xlu0 %v2148, 16
    %v2690 = vpop.permute.xlu0 %2689
    %2691 = vrot.lane.b32.xlu0 %v2160, 16
    %v2692 = vpop.permute.xlu0 %2691
    %2693 = vrot.lane.b32.xlu0 %v2172, 16
    %v2694 = vpop.permute.xlu0 %2693
    %2695 = vrot.lane.b32.xlu0 %v2184, 16
    %v2696 = vpop.permute.xlu0 %2695
    %2697 = vrot.lane.b32.xlu0 %v2196, 16
    %v2698 = vpop.permute.xlu0 %2697
    %2699 = vrot.lane.b32.xlu0 %v2208, 16
    %v2700 = vpop.permute.xlu0 %2699
    %2701 = vrot.lane.b32.xlu0 %v2220, 16
    %v2702 = vpop.permute.xlu0 %2701
    %2703 = vrot.lane.b32.xlu0 %v2232, 16
    %v2704 = vpop.permute.xlu0 %2703
    %2705 = vrot.lane.b32.xlu0 %v2244, 16
    %v2706 = vpop.permute.xlu0 %2705
    %2707 = vrot.lane.b32.xlu0 %v2256, 16
    %v2708 = vpop.permute.xlu0 %2707
    %2709 = vrot.lane.b32.xlu0 %v2268, 16
    %v2710 = vpop.permute.xlu0 %2709
    %2711 = vrot.lane.b32.xlu0 %v2280, 16
    %v2712 = vpop.permute.xlu0 %2711
    %2713 = vrot.lane.b32.xlu0 %v2650, 16
    %v2714 = vpop.permute.xlu0 %2713
    %v2717 = vrot.slane %v1858, 1
    %v2718 = vrot.slane %v1891, 1
    %v2719 = vsel %vm2405, %v2717, %v2718
    %v2720 = vrot.slane %v1874, 1
    %v2721 = vrot.slane %v1907, 1
    %v2722 = vsel %vm2405, %v2720, %v2721
    %2723 = vrot.lane.b32.xlu0 %v2411, 20
    %v2724 = vpop.permute.xlu0 %2723
    %2725 = vrot.lane.b32.xlu0 %v2414, 20
    %v2726 = vpop.permute.xlu0 %2725
    %2727 = vrot.lane.b32.xlu0 %v2417, 20
    %v2728 = vpop.permute.xlu0 %2727
    %2729 = vrot.lane.b32.xlu0 %v2420, 20
    %v2730 = vpop.permute.xlu0 %2729
    %2731 = vrot.lane.b32.xlu0 %v2423, 20
    %v2732 = vpop.permute.xlu0 %2731
    %2733 = vrot.lane.b32.xlu0 %v2426, 20
    %v2734 = vpop.permute.xlu0 %2733
    %2735 = vrot.lane.b32.xlu0 %v2429, 20
    %v2736 = vpop.permute.xlu0 %2735
    %2737 = vrot.lane.b32.xlu0 %v2432, 20
    %v2738 = vpop.permute.xlu0 %2737
    %2739 = vrot.lane.b32.xlu0 %v2435, 20
    %v2740 = vpop.permute.xlu0 %2739
    %2741 = vrot.lane.b32.xlu0 %v2438, 20
    %v2742 = vpop.permute.xlu0 %2741
    %2743 = vrot.lane.b32.xlu0 %v2441, 20
    %v2744 = vpop.permute.xlu0 %2743
    %2745 = vrot.lane.b32.xlu0 %v2444, 20
    %v2746 = vpop.permute.xlu0 %2745
    %2747 = vrot.lane.b32.xlu0 %v2447, 20
    %v2748 = vpop.permute.xlu0 %2747
    %2749 = vrot.lane.b32.xlu0 %v2450, 20
    %v2750 = vpop.permute.xlu0 %2749
    %2751 = vrot.lane.b32.xlu0 %v2453, 20
    %v2752 = vpop.permute.xlu0 %2751
    %2753 = vrot.lane.b32.xlu0 %v2719, 20
    %v2754 = vpop.permute.xlu0 %2753
    %2755 = vrot.lane.b32.xlu0 %v2456, 20
    %v2756 = vpop.permute.xlu0 %2755
    %2757 = vrot.lane.b32.xlu0 %v2459, 20
    %v2758 = vpop.permute.xlu0 %2757
    %2759 = vrot.lane.b32.xlu0 %v2462, 20
    %v2760 = vpop.permute.xlu0 %2759
    %2761 = vrot.lane.b32.xlu0 %v2465, 20
    %v2762 = vpop.permute.xlu0 %2761
    %2763 = vrot.lane.b32.xlu0 %v2468, 20
    %v2764 = vpop.permute.xlu0 %2763
    %2765 = vrot.lane.b32.xlu0 %v2471, 20
    %v2766 = vpop.permute.xlu0 %2765
    %2767 = vrot.lane.b32.xlu0 %v2474, 20
    %v2768 = vpop.permute.xlu0 %2767
    %2769 = vrot.lane.b32.xlu0 %v2477, 20
    %v2770 = vpop.permute.xlu0 %2769
    %2771 = vrot.lane.b32.xlu0 %v2480, 20
    %v2772 = vpop.permute.xlu0 %2771
    %2773 = vrot.lane.b32.xlu0 %v2483, 20
    %v2774 = vpop.permute.xlu0 %2773
    %2775 = vrot.lane.b32.xlu0 %v2486, 20
    %v2776 = vpop.permute.xlu0 %2775
    %2777 = vrot.lane.b32.xlu0 %v2489, 20
    %v2778 = vpop.permute.xlu0 %2777
    %2779 = vrot.lane.b32.xlu0 %v2492, 20
    %v2780 = vpop.permute.xlu0 %2779
    %2781 = vrot.lane.b32.xlu0 %v2495, 20
    %v2782 = vpop.permute.xlu0 %2781
    %2783 = vrot.lane.b32.xlu0 %v2498, 20
    %v2784 = vpop.permute.xlu0 %2783
    %2785 = vrot.lane.b32.xlu0 %v2722, 20
    %v2786 = vpop.permute.xlu0 %2785
    %2787 = vrot.lane.b32.xlu0 %v1844, 24
    %v2788 = vpop.permute.xlu0 %2787
    %2789 = vrot.lane.b32.xlu0 %v1845, 24
    %v2790 = vpop.permute.xlu0 %2789
    %2791 = vrot.lane.b32.xlu0 %v1846, 24
    %v2792 = vpop.permute.xlu0 %2791
    %2793 = vrot.lane.b32.xlu0 %v1847, 24
    %v2794 = vpop.permute.xlu0 %2793
    %2795 = vrot.lane.b32.xlu0 %v1848, 24
    %v2796 = vpop.permute.xlu0 %2795
    %2797 = vrot.lane.b32.xlu0 %v1849, 24
    %v2798 = vpop.permute.xlu0 %2797
    %2799 = vrot.lane.b32.xlu0 %v1850, 24
    %v2800 = vpop.permute.xlu0 %2799
    %2801 = vrot.lane.b32.xlu0 %v1851, 24
    %v2802 = vpop.permute.xlu0 %2801
    %2803 = vrot.lane.b32.xlu0 %v1852, 24
    %v2804 = vpop.permute.xlu0 %2803
    %2805 = vrot.lane.b32.xlu0 %v1853, 24
    %v2806 = vpop.permute.xlu0 %2805
    %2807 = vrot.lane.b32.xlu0 %v1854, 24
    %v2808 = vpop.permute.xlu0 %2807
    %2809 = vrot.lane.b32.xlu0 %v1855, 24
    %v2810 = vpop.permute.xlu0 %2809
    %2811 = vrot.lane.b32.xlu0 %v1856, 24
    %v2812 = vpop.permute.xlu0 %2811
    %2813 = vrot.lane.b32.xlu0 %v1857, 24
    %v2814 = vpop.permute.xlu0 %2813
    %2815 = vrot.lane.b32.xlu0 %v1858, 24
    %v2816 = vpop.permute.xlu0 %2815
    %2817 = vrot.lane.b32.xlu0 %v1842, 24
    %v2818 = vpop.permute.xlu0 %2817
    %2819 = vrot.lane.b32.xlu0 %v1860, 24
    %v2820 = vpop.permute.xlu0 %2819
    %2821 = vrot.lane.b32.xlu0 %v1861, 24
    %v2822 = vpop.permute.xlu0 %2821
    %2823 = vrot.lane.b32.xlu0 %v1862, 24
    %v2824 = vpop.permute.xlu0 %2823
    %2825 = vrot.lane.b32.xlu0 %v1863, 24
    %v2826 = vpop.permute.xlu0 %2825
    %2827 = vrot.lane.b32.xlu0 %v1864, 24
    %v2828 = vpop.permute.xlu0 %2827
    %2829 = vrot.lane.b32.xlu0 %v1865, 24
    %v2830 = vpop.permute.xlu0 %2829
    %2831 = vrot.lane.b32.xlu0 %v1866, 24
    %v2832 = vpop.permute.xlu0 %2831
    %2833 = vrot.lane.b32.xlu0 %v1867, 24
    %v2834 = vpop.permute.xlu0 %2833
    %2835 = vrot.lane.b32.xlu0 %v1868, 24
    %v2836 = vpop.permute.xlu0 %2835
    %2837 = vrot.lane.b32.xlu0 %v1869, 24
    %v2838 = vpop.permute.xlu0 %2837
    %2839 = vrot.lane.b32.xlu0 %v1870, 24
    %v2840 = vpop.permute.xlu0 %2839
    %2841 = vrot.lane.b32.xlu0 %v1871, 24
    %v2842 = vpop.permute.xlu0 %2841
    %2843 = vrot.lane.b32.xlu0 %v1872, 24
    %v2844 = vpop.permute.xlu0 %2843
    %2845 = vrot.lane.b32.xlu0 %v1873, 24
    %v2846 = vpop.permute.xlu0 %2845
    %2847 = vrot.lane.b32.xlu0 %v1874, 24
    %v2848 = vpop.permute.xlu0 %2847
    %2849 = vrot.lane.b32.xlu0 %v1944, 28
    %v2850 = vpop.permute.xlu0 %2849
    %2851 = vrot.lane.b32.xlu0 %v1956, 28
    %v2852 = vpop.permute.xlu0 %2851
    %2853 = vrot.lane.b32.xlu0 %v1968, 28
    %v2854 = vpop.permute.xlu0 %2853
    %2855 = vrot.lane.b32.xlu0 %v1980, 28
    %v2856 = vpop.permute.xlu0 %2855
    %2857 = vrot.lane.b32.xlu0 %v1992, 28
    %v2858 = vpop.permute.xlu0 %2857
    %2859 = vrot.lane.b32.xlu0 %v2004, 28
    %v2860 = vpop.permute.xlu0 %2859
    %2861 = vrot.lane.b32.xlu0 %v2016, 28
    %v2862 = vpop.permute.xlu0 %2861
    %2863 = vrot.lane.b32.xlu0 %v2028, 28
    %v2864 = vpop.permute.xlu0 %2863
    %2865 = vrot.lane.b32.xlu0 %v2040, 28
    %v2866 = vpop.permute.xlu0 %2865
    %2867 = vrot.lane.b32.xlu0 %v2052, 28
    %v2868 = vpop.permute.xlu0 %2867
    %2869 = vrot.lane.b32.xlu0 %v2064, 28
    %v2870 = vpop.permute.xlu0 %2869
    %2871 = vrot.lane.b32.xlu0 %v2076, 28
    %v2872 = vpop.permute.xlu0 %2871
    %2873 = vrot.lane.b32.xlu0 %v2088, 28
    %v2874 = vpop.permute.xlu0 %2873
    %2875 = vrot.lane.b32.xlu0 %v2100, 28
    %v2876 = vpop.permute.xlu0 %2875
    %2877 = vrot.lane.b32.xlu0 %v2638, 28
    %v2878 = vpop.permute.xlu0 %2877
    %2879 = vrot.lane.b32.xlu0 %v1920, 28
    %v2880 = vpop.permute.xlu0 %2879
    %2881 = vrot.lane.b32.xlu0 %v2124, 28
    %v2882 = vpop.permute.xlu0 %2881
    %2883 = vrot.lane.b32.xlu0 %v2136, 28
    %v2884 = vpop.permute.xlu0 %2883
    %2885 = vrot.lane.b32.xlu0 %v2148, 28
    %v2886 = vpop.permute.xlu0 %2885
    %2887 = vrot.lane.b32.xlu0 %v2160, 28
    %v2888 = vpop.permute.xlu0 %2887
    %2889 = vrot.lane.b32.xlu0 %v2172, 28
    %v2890 = vpop.permute.xlu0 %2889
    %2891 = vrot.lane.b32.xlu0 %v2184, 28
    %v2892 = vpop.permute.xlu0 %2891
    %2893 = vrot.lane.b32.xlu0 %v2196, 28
    %v2894 = vpop.permute.xlu0 %2893
    %2895 = vrot.lane.b32.xlu0 %v2208, 28
    %v2896 = vpop.permute.xlu0 %2895
    %2897 = vrot.lane.b32.xlu0 %v2220, 28
    %v2898 = vpop.permute.xlu0 %2897
    %2899 = vrot.lane.b32.xlu0 %v2232, 28
    %v2900 = vpop.permute.xlu0 %2899
    %2901 = vrot.lane.b32.xlu0 %v2244, 28
    %v2902 = vpop.permute.xlu0 %2901
    %2903 = vrot.lane.b32.xlu0 %v2256, 28
    %v2904 = vpop.permute.xlu0 %2903
    %2905 = vrot.lane.b32.xlu0 %v2268, 28
    %v2906 = vpop.permute.xlu0 %2905
    %2907 = vrot.lane.b32.xlu0 %v2280, 28
    %v2908 = vpop.permute.xlu0 %2907
    %2909 = vrot.lane.b32.xlu0 %v2650, 28
    %v2910 = vpop.permute.xlu0 %2909
    %2911 = vrot.lane.b32.xlu0 %v2414, 32
    %v2912 = vpop.permute.xlu0 %2911
    %2913 = vrot.lane.b32.xlu0 %v2417, 32
    %v2914 = vpop.permute.xlu0 %2913
    %2915 = vrot.lane.b32.xlu0 %v2420, 32
    %v2916 = vpop.permute.xlu0 %2915
    %2917 = vrot.lane.b32.xlu0 %v2423, 32
    %v2918 = vpop.permute.xlu0 %2917
    %2919 = vrot.lane.b32.xlu0 %v2426, 32
    %v2920 = vpop.permute.xlu0 %2919
    %2921 = vrot.lane.b32.xlu0 %v2429, 32
    %v2922 = vpop.permute.xlu0 %2921
    %2923 = vrot.lane.b32.xlu0 %v2432, 32
    %v2924 = vpop.permute.xlu0 %2923
    %2925 = vrot.lane.b32.xlu0 %v2435, 32
    %v2926 = vpop.permute.xlu0 %2925
    %2927 = vrot.lane.b32.xlu0 %v2438, 32
    %v2928 = vpop.permute.xlu0 %2927
    %2929 = vrot.lane.b32.xlu0 %v2441, 32
    %v2930 = vpop.permute.xlu0 %2929
    %2931 = vrot.lane.b32.xlu0 %v2444, 32
    %v2932 = vpop.permute.xlu0 %2931
    %2933 = vrot.lane.b32.xlu0 %v2447, 32
    %v2934 = vpop.permute.xlu0 %2933
    %2935 = vrot.lane.b32.xlu0 %v2450, 32
    %v2936 = vpop.permute.xlu0 %2935
    %2937 = vrot.lane.b32.xlu0 %v2453, 32
    %v2938 = vpop.permute.xlu0 %2937
    %2939 = vrot.lane.b32.xlu0 %v2719, 32
    %v2940 = vpop.permute.xlu0 %2939
    %2941 = vrot.lane.b32.xlu0 %v2408, 32
    %v2942 = vpop.permute.xlu0 %2941
    %2943 = vrot.lane.b32.xlu0 %v2459, 32
    %v2944 = vpop.permute.xlu0 %2943
    %2945 = vrot.lane.b32.xlu0 %v2462, 32
    %v2946 = vpop.permute.xlu0 %2945
    %2947 = vrot.lane.b32.xlu0 %v2465, 32
    %v2948 = vpop.permute.xlu0 %2947
    %2949 = vrot.lane.b32.xlu0 %v2468, 32
    %v2950 = vpop.permute.xlu0 %2949
    %2951 = vrot.lane.b32.xlu0 %v2471, 32
    %v2952 = vpop.permute.xlu0 %2951
    %2953 = vrot.lane.b32.xlu0 %v2474, 32
    %v2954 = vpop.permute.xlu0 %2953
    %2955 = vrot.lane.b32.xlu0 %v2477, 32
    %v2956 = vpop.permute.xlu0 %2955
    %2957 = vrot.lane.b32.xlu0 %v2480, 32
    %v2958 = vpop.permute.xlu0 %2957
    %2959 = vrot.lane.b32.xlu0 %v2483, 32
    %v2960 = vpop.permute.xlu0 %2959
    %2961 = vrot.lane.b32.xlu0 %v2486, 32
    %v2962 = vpop.permute.xlu0 %2961
    %2963 = vrot.lane.b32.xlu0 %v2489, 32
    %v2964 = vpop.permute.xlu0 %2963
    %2965 = vrot.lane.b32.xlu0 %v2492, 32
    %v2966 = vpop.permute.xlu0 %2965
    %2967 = vrot.lane.b32.xlu0 %v2495, 32
    %v2968 = vpop.permute.xlu0 %2967
    %2969 = vrot.lane.b32.xlu0 %v2498, 32
    %v2970 = vpop.permute.xlu0 %2969
    %2971 = vrot.lane.b32.xlu0 %v2722, 32
    %v2972 = vpop.permute.xlu0 %2971
    %v2974 = vsel %vm966, %v1842, %v2282
    %v2976 = vsel %vm966, %v1843, %v2284
    %v2978 = vsel %vm966, %v1844, %v2286
    %v2980 = vsel %vm966, %v1845, %v2288
    %v2982 = vsel %vm966, %v1846, %v2290
    %v2984 = vsel %vm966, %v1847, %v2292
    %v2986 = vsel %vm966, %v1848, %v2294
    %v2988 = vsel %vm966, %v1849, %v2296
    %v2990 = vsel %vm966, %v1850, %v2298
    %v2992 = vsel %vm966, %v1851, %v2300
    %v2994 = vsel %vm966, %v1852, %v2302
    %v2996 = vsel %vm966, %v1853, %v2304
    %v2998 = vsel %vm966, %v1854, %v2306
    %v3000 = vsel %vm966, %v1855, %v2308
    %v3002 = vsel %vm966, %v1856, %v2310
    %v3004 = vsel %vm966, %v1857, %v2312
    %v3006 = vsel %vm966, %v1859, %v2314
    %v3008 = vsel %vm966, %v1860, %v2316
    %v3010 = vsel %vm966, %v1861, %v2318
    %v3012 = vsel %vm966, %v1862, %v2320
    %v3014 = vsel %vm966, %v1863, %v2322
    %v3016 = vsel %vm966, %v1864, %v2324
    %v3018 = vsel %vm966, %v1865, %v2326
    %v3020 = vsel %vm966, %v1866, %v2328
    %v3022 = vsel %vm966, %v1867, %v2330
    %v3024 = vsel %vm966, %v1868, %v2332
    %v3026 = vsel %vm966, %v1869, %v2334
    %v3028 = vsel %vm966, %v1870, %v2336
    %v3030 = vsel %vm966, %v1871, %v2338
    %v3032 = vsel %vm966, %v1872, %v2340
    %v3034 = vsel %vm966, %v1873, %v2342
    %v3036 = vsel %vm256, %v2974, %v2500
    %v3038 = vsel %vm256, %v2976, %v2502
    %v3040 = vsel %vm256, %v2978, %v2504
    %v3042 = vsel %vm256, %v2980, %v2506
    %v3044 = vsel %vm256, %v2982, %v2508
    %v3046 = vsel %vm256, %v2984, %v2510
    %v3048 = vsel %vm256, %v2986, %v2512
    %v3050 = vsel %vm256, %v2988, %v2514
    %v3052 = vsel %vm256, %v2990, %v2516
    %v3054 = vsel %vm256, %v2992, %v2518
    %v3056 = vsel %vm256, %v2994, %v2520
    %v3058 = vsel %vm256, %v2996, %v2522
    %v3060 = vsel %vm256, %v2998, %v2524
    %v3062 = vsel %vm256, %v3000, %v2526
    %v3064 = vsel %vm256, %v3002, %v2528
    %v3066 = vsel %vm256, %v3004, %v2530
    %v3068 = vsel %vm256, %v3006, %v2532
    %v3070 = vsel %vm256, %v3008, %v2534
    %v3072 = vsel %vm256, %v3010, %v2536
    %v3074 = vsel %vm256, %v3012, %v2538
    %v3076 = vsel %vm256, %v3014, %v2540
    %v3078 = vsel %vm256, %v3016, %v2542
    %v3080 = vsel %vm256, %v3018, %v2544
    %v3082 = vsel %vm256, %v3020, %v2546
    %v3084 = vsel %vm256, %v3022, %v2548
    %v3086 = vsel %vm256, %v3024, %v2550
    %v3088 = vsel %vm256, %v3026, %v2552
    %v3090 = vsel %vm256, %v3028, %v2554
    %v3092 = vsel %vm256, %v3030, %v2556
    %v3094 = vsel %vm256, %v3032, %v2558
    %v3096 = vsel %vm256, %v3034, %v2560
    %vm3097 = vcmask 97280
    %v3099 = vsel %vm3097, %v3036, %v2564
    %v3101 = vsel %vm3097, %v3038, %v2566
    %v3103 = vsel %vm3097, %v3040, %v2568
    %v3105 = vsel %vm3097, %v3042, %v2570
    %v3107 = vsel %vm3097, %v3044, %v2572
    %v3109 = vsel %vm3097, %v3046, %v2574
    %v3111 = vsel %vm3097, %v3048, %v2576
    %v3113 = vsel %vm3097, %v3050, %v2578
    %v3115 = vsel %vm3097, %v3052, %v2580
    %v3117 = vsel %vm3097, %v3054, %v2582
    %v3119 = vsel %vm3097, %v3056, %v2584
    %v3121 = vsel %vm3097, %v3058, %v2586
    %v3123 = vsel %vm3097, %v3060, %v2588
    %v3125 = vsel %vm3097, %v3062, %v2590
    %v3127 = vsel %vm3097, %v3064, %v2592
    %v3129 = vsel %vm3097, %v3066, %v2594
    %v3131 = vsel %vm3097, %v3036, %v2596
    %v3133 = vsel %vm3097, %v3068, %v2598
    %v3135 = vsel %vm3097, %v3070, %v2600
    %v3137 = vsel %vm3097, %v3072, %v2602
    %v3139 = vsel %vm3097, %v3074, %v2604
    %v3141 = vsel %vm3097, %v3076, %v2606
    %v3143 = vsel %vm3097, %v3078, %v2608
    %v3145 = vsel %vm3097, %v3080, %v2610
    %v3147 = vsel %vm3097, %v3082, %v2612
    %v3149 = vsel %vm3097, %v3084, %v2614
    %v3151 = vsel %vm3097, %v3086, %v2616
    %v3153 = vsel %vm3097, %v3088, %v2618
    %v3155 = vsel %vm3097, %v3090, %v2620
    %v3157 = vsel %vm3097, %v3092, %v2622
    %v3159 = vsel %vm3097, %v3094, %v2624
    %v3161 = vsel %vm3097, %v3096, %v2626
    %vm3162 = vcmask 130048
    %v3164 = vsel %vm3162, %v3099, %v2652
    %v3166 = vsel %vm3162, %v3101, %v2654
    %v3168 = vsel %vm3162, %v3103, %v2656
    %v3170 = vsel %vm3162, %v3105, %v2658
    %v3172 = vsel %vm3162, %v3107, %v2660
    %v3174 = vsel %vm3162, %v3109, %v2662
    %v3176 = vsel %vm3162, %v3111, %v2664
    %v3178 = vsel %vm3162, %v3113, %v2666
    %v3180 = vsel %vm3162, %v3115, %v2668
    %v3182 = vsel %vm3162, %v3117, %v2670
    %v3184 = vsel %vm3162, %v3119, %v2672
    %v3186 = vsel %vm3162, %v3121, %v2674
    %v3188 = vsel %vm3162, %v3123, %v2676
    %v3190 = vsel %vm3162, %v3125, %v2678
    %v3192 = vsel %vm3162, %v3127, %v2680
    %v3194 = vsel %vm3162, %v3129, %v2682
    %v3196 = vsel %vm3162, %v3131, %v2684
    %v3198 = vsel %vm3162, %v3133, %v2686
    %v3200 = vsel %vm3162, %v3135, %v2688
    %v3202 = vsel %vm3162, %v3137, %v2690
    %v3204 = vsel %vm3162, %v3139, %v2692
    %v3206 = vsel %vm3162, %v3141, %v2694
    %v3208 = vsel %vm3162, %v3143, %v2696
    %v3210 = vsel %vm3162, %v3145, %v2698
    %v3212 = vsel %vm3162, %v3147, %v2700
    %v3214 = vsel %vm3162, %v3149, %v2702
    %v3216 = vsel %vm3162, %v3151, %v2704
    %v3218 = vsel %vm3162, %v3153, %v2706
    %v3220 = vsel %vm3162, %v3155, %v2708
    %v3222 = vsel %vm3162, %v3157, %v2710
    %v3224 = vsel %vm3162, %v3159, %v2712
    %v3226 = vsel %vm3162, %v3161, %v2714
    %vm3227 = vcmask 162816
    %v3229 = vsel %vm3227, %v3164, %v2724
    %v3231 = vsel %vm3227, %v3166, %v2726
    %v3233 = vsel %vm3227, %v3168, %v2728
    %v3235 = vsel %vm3227, %v3170, %v2730
    %v3237 = vsel %vm3227, %v3172, %v2732
    %v3239 = vsel %vm3227, %v3174, %v2734
    %v3241 = vsel %vm3227, %v3176, %v2736
    %v3243 = vsel %vm3227, %v3178, %v2738
    %v3245 = vsel %vm3227, %v3180, %v2740
    %v3247 = vsel %vm3227, %v3182, %v2742
    %v3249 = vsel %vm3227, %v3184, %v2744
    %v3251 = vsel %vm3227, %v3186, %v2746
    %v3253 = vsel %vm3227, %v3188, %v2748
    %v3255 = vsel %vm3227, %v3190, %v2750
    %v3257 = vsel %vm3227, %v3192, %v2752
    %v3259 = vsel %vm3227, %v3194, %v2754
    %v3261 = vsel %vm3227, %v3196, %v2756
    %v3263 = vsel %vm3227, %v3198, %v2758
    %v3265 = vsel %vm3227, %v3200, %v2760
    %v3267 = vsel %vm3227, %v3202, %v2762
    %v3269 = vsel %vm3227, %v3204, %v2764
    %v3271 = vsel %vm3227, %v3206, %v2766
    %v3273 = vsel %vm3227, %v3208, %v2768
    %v3275 = vsel %vm3227, %v3210, %v2770
    %v3277 = vsel %vm3227, %v3212, %v2772
    %v3279 = vsel %vm3227, %v3214, %v2774
    %v3281 = vsel %vm3227, %v3216, %v2776
    %v3283 = vsel %vm3227, %v3218, %v2778
    %v3285 = vsel %vm3227, %v3220, %v2780
    %v3287 = vsel %vm3227, %v3222, %v2782
    %v3289 = vsel %vm3227, %v3224, %v2784
    %v3291 = vsel %vm3227, %v3226, %v2786
    %vm3292 = vcmask 195584
    %v3294 = vsel %vm3292, %v3229, %v2788
    %v3296 = vsel %vm3292, %v3231, %v2790
    %v3298 = vsel %vm3292, %v3233, %v2792
    %v3300 = vsel %vm3292, %v3235, %v2794
    %v3302 = vsel %vm3292, %v3237, %v2796
    %v3304 = vsel %vm3292, %v3239, %v2798
    %v3306 = vsel %vm3292, %v3241, %v2800
    %v3308 = vsel %vm3292, %v3243, %v2802
    %v3310 = vsel %vm3292, %v3245, %v2804
    %v3312 = vsel %vm3292, %v3247, %v2806
    %v3314 = vsel %vm3292, %v3249, %v2808
    %v3316 = vsel %vm3292, %v3251, %v2810
    %v3318 = vsel %vm3292, %v3253, %v2812
    %v3320 = vsel %vm3292, %v3255, %v2814
    %v3322 = vsel %vm3292, %v3257, %v2816
    %v3324 = vsel %vm3292, %v3259, %v2818
    %v3326 = vsel %vm3292, %v3261, %v2820
    %v3328 = vsel %vm3292, %v3263, %v2822
    %v3330 = vsel %vm3292, %v3265, %v2824
    %v3332 = vsel %vm3292, %v3267, %v2826
    %v3334 = vsel %vm3292, %v3269, %v2828
    %v3336 = vsel %vm3292, %v3271, %v2830
    %v3338 = vsel %vm3292, %v3273, %v2832
    %v3340 = vsel %vm3292, %v3275, %v2834
    %v3342 = vsel %vm3292, %v3277, %v2836
    %v3344 = vsel %vm3292, %v3279, %v2838
    %v3346 = vsel %vm3292, %v3281, %v2840
    %v3348 = vsel %vm3292, %v3283, %v2842
    %v3350 = vsel %vm3292, %v3285, %v2844
    %v3352 = vsel %vm3292, %v3287, %v2846
    %v3354 = vsel %vm3292, %v3289, %v2848
    %v3355 = vsel %vm3292, %v3291, %v2818
    %vm3356 = vcmask 228352
    %v3358 = vsel %vm3356, %v3294, %v2850
    %v3360 = vsel %vm3356, %v3296, %v2852
    %v3362 = vsel %vm3356, %v3298, %v2854
    %v3364 = vsel %vm3356, %v3300, %v2856
    %v3366 = vsel %vm3356, %v3302, %v2858
    %v3368 = vsel %vm3356, %v3304, %v2860
    %v3370 = vsel %vm3356, %v3306, %v2862
    %v3372 = vsel %vm3356, %v3308, %v2864
    %v3374 = vsel %vm3356, %v3310, %v2866
    %v3376 = vsel %vm3356, %v3312, %v2868
    %v3378 = vsel %vm3356, %v3314, %v2870
    %v3380 = vsel %vm3356, %v3316, %v2872
    %v3382 = vsel %vm3356, %v3318, %v2874
    %v3384 = vsel %vm3356, %v3320, %v2876
    %v3386 = vsel %vm3356, %v3322, %v2878
    %v3388 = vsel %vm3356, %v3324, %v2880
    %v3390 = vsel %vm3356, %v3326, %v2882
    %v3392 = vsel %vm3356, %v3328, %v2884
    %v3394 = vsel %vm3356, %v3330, %v2886
    %v3396 = vsel %vm3356, %v3332, %v2888
    %v3398 = vsel %vm3356, %v3334, %v2890
    %v3400 = vsel %vm3356, %v3336, %v2892
    %v3402 = vsel %vm3356, %v3338, %v2894
    %v3404 = vsel %vm3356, %v3340, %v2896
    %v3406 = vsel %vm3356, %v3342, %v2898
    %v3408 = vsel %vm3356, %v3344, %v2900
    %v3410 = vsel %vm3356, %v3346, %v2902
    %v3412 = vsel %vm3356, %v3348, %v2904
    %v3414 = vsel %vm3356, %v3350, %v2906
    %v3416 = vsel %vm3356, %v3352, %v2908
    %v3418 = vsel %vm3356, %v3354, %v2910
    %v3419 = vsel %vm3356, %v3355, %v2880
    %vm3420 = vcmask 261120
    %v3422 = vsel %vm3420, %v3358, %v2912
    %v3424 = vsel %vm3420, %v3360, %v2914
    %v3426 = vsel %vm3420, %v3362, %v2916
    %v3428 = vsel %vm3420, %v3364, %v2918
    %v3430 = vsel %vm3420, %v3366, %v2920
    %v3432 = vsel %vm3420, %v3368, %v2922
    %v3434 = vsel %vm3420, %v3370, %v2924
    %v3436 = vsel %vm3420, %v3372, %v2926
    %v3438 = vsel %vm3420, %v3374, %v2928
    %v3440 = vsel %vm3420, %v3376, %v2930
    %v3442 = vsel %vm3420, %v3378, %v2932
    %v3444 = vsel %vm3420, %v3380, %v2934
    %v3446 = vsel %vm3420, %v3382, %v2936
    %v3448 = vsel %vm3420, %v3384, %v2938
    %v3450 = vsel %vm3420, %v3386, %v2940
    %v3452 = vsel %vm3420, %v3388, %v2942
    %v3454 = vsel %vm3420, %v3390, %v2944
    %v3456 = vsel %vm3420, %v3392, %v2946
    %v3458 = vsel %vm3420, %v3394, %v2948
    %v3460 = vsel %vm3420, %v3396, %v2950
    %v3462 = vsel %vm3420, %v3398, %v2952
    %v3464 = vsel %vm3420, %v3400, %v2954
    %v3466 = vsel %vm3420, %v3402, %v2956
    %v3468 = vsel %vm3420, %v3404, %v2958
    %v3470 = vsel %vm3420, %v3406, %v2960
    %v3472 = vsel %vm3420, %v3408, %v2962
    %v3474 = vsel %vm3420, %v3410, %v2964
    %v3476 = vsel %vm3420, %v3412, %v2966
    %v3478 = vsel %vm3420, %v3414, %v2968
    %v3480 = vsel %vm3420, %v3416, %v2970
    %v3482 = vsel %vm3420, %v3418, %v2972
    %v3483 = vsel %vm3420, %v3419, %v2942
    %v3484 = vld [vmem:[%s2] sm:$0xf]
    %v3485 = vld [vmem:[%s2 + $0x4] sm:$0xf]
    %v3486 = vld [vmem:[%s2 + $0x8] sm:$0xf]
    %v3487 = vld [vmem:[%s2 + $0xc] sm:$0xf]
    %v3488 = vld [vmem:[%s2 + $0x10] sm:$0x3]
    %v3494 = vunpack.c.l.b16 %v3484
    %v3495 = vunpack.c.l.b16 %v3485
    %v3496 = vunpack.c.l.b16 %v3486
    %v3497 = vunpack.c.l.b16 %v3487
    %v3498 = vunpack.c.l.b16 %v3488
    %v3499 = vpack.c.b16 %v3495, %v3494
    %v3500 = vpack.c.b16 %v3497, %v3496
    %v3501 = vpack.c.b16 %v3498, %v3498
    %vm3504 = vcmask 293888
    %v3505 = vsel %vm3504, %v3422, 0
    %v3507 = vsel %vm3504, %v3424, 0
    %v3509 = vsel %vm3504, %v3426, 0
    %v3511 = vsel %vm3504, %v3428, 0
    %v3513 = vsel %vm3504, %v3430, 0
    %v3515 = vsel %vm3504, %v3432, 0
    %v3517 = vsel %vm3504, %v3434, 0
    %v3519 = vsel %vm3504, %v3436, 0
    %v3521 = vsel %vm3504, %v3438, 0
    %v3523 = vsel %vm3504, %v3440, 0
    %v3525 = vsel %vm3504, %v3442, 0
    %v3527 = vsel %vm3504, %v3444, 0
    %v3529 = vsel %vm3504, %v3446, 0
    %v3531 = vsel %vm3504, %v3448, 0
    %v3533 = vsel %vm3504, %v3450, 0
    %v3535 = vsel %vm3504, %v3452, 0
    %v3537 = vsel %vm3504, %v3454, 0
    %v3539 = vsel %vm3504, %v3456, 0
    %v3541 = vsel %vm3504, %v3458, 0
    %v3543 = vsel %vm3504, %v3460, 0
    %v3545 = vsel %vm3504, %v3462, 0
    %v3547 = vsel %vm3504, %v3464, 0
    %v3549 = vsel %vm3504, %v3466, 0
    %v3551 = vsel %vm3504, %v3468, 0
    %v3553 = vsel %vm3504, %v3470, 0
    %v3555 = vsel %vm3504, %v3472, 0
    %v3557 = vsel %vm3504, %v3474, 0
    %v3559 = vsel %vm3504, %v3476, 0
    %v3561 = vsel %vm3504, %v3478, 0
    %v3563 = vsel %vm3504, %v3480, 0
    %v3565 = vsel %vm3504, %v3482, 0
    %v3567 = vsel %vm3504, %v3483, 0
    %vm3569 = vcmask 1041408
    %v3571 = vsel %vm3569, %v3501, 0
    %3573 = vmatprep.subr.bf16.mxu0 0
    %3574 = vmatpush1.bf16.msra.mxu0 %v3499
    %3575 = vmatprep.subr.bf16.mxu0 0
    %3576 = vmatpush1.bf16.msra.mxu0 %v3500
    %3577 = vmatprep.subr.bf16.mxu0 0
    %3578 = vmatpush1.bf16.msra.mxu0 %v3571
    %3579 = vmatprep.subr.bf16.mxu0 0
    %3580 = vmatpush1.bf16.msra.mxu0 0
    %3581 = vmatprep.subr.bf16.mxu0 0
    %3582 = vmatpush1.bf16.msra.mxu0 0
    %3583 = vmatprep.subr.bf16.mxu0 0
    %3584 = vmatpush1.bf16.msra.mxu0 0
    %3585 = vmatprep.subr.bf16.mxu0 0
    %3586 = vmatpush1.bf16.msra.mxu0 0
    %3587 = vmatprep.subr.bf16.mxu0 0
    %3588 = vmatpush1.bf16.msra.mxu0 0
    %3589 = vmatprep.subr.bf16.mxu0 0
    %3590 = vmatpush1.bf16.msra.mxu0 0
    %3591 = vmatprep.subr.bf16.mxu0 0
    %3592 = vmatpush1.bf16.msra.mxu0 0
    %3593 = vmatprep.subr.bf16.mxu0 0
    %3594 = vmatpush1.bf16.msra.mxu0 0
    %3595 = vmatprep.subr.bf16.mxu0 0
    %3596 = vmatpush1.bf16.msra.mxu0 0
    %3597 = vmatprep.subr.bf16.mxu0 0
    %3598 = vmatpush1.bf16.msra.mxu0 0
    %3599 = vmatprep.subr.bf16.mxu0 0
    %3600 = vmatpush1.bf16.msra.mxu0 0
    %3601 = vmatprep.subr.bf16.mxu0 0
    %3602 = vmatpush1.bf16.msra.mxu0 0
    %3603 = vmatprep.subr.bf16.mxu0 0
    %3604 = vmatpush1.bf16.msra.mxu0 0
    %3605 = vmatprep.mubr.bf16.mxu0 0
    %3606 = vmatmul.mubr.bf16.gmra.mrb[0].mxu0 %v3505
    %v3607 = vpop.f32.mrb[0].mxu0
    %v3608 = vadd.f32 0.0, %v3607
    %v3609 = vpop.f32.mrb[0].mxu0
    %v3610 = vpop.f32.mrb[0].mxu0
    %v3611 = vadd.f32 0.0, %v3610
    %v3612 = vpop.f32.mrb[0].mxu0
    %3613 = vmatprep.mubr.bf16.mxu0 0
    %3614 = vmatmul.mubr.bf16.gmra.mrb[0].mxu0 %v3507
    %v3615 = vpop.f32.mrb[0].mxu0
    %v3616 = vadd.f32 0.0, %v3615
    %v3617 = vpop.f32.mrb[0].mxu0
    %v3618 = vpop.f32.mrb[0].mxu0
    %v3619 = vadd.f32 0.0, %v3618
    %v3620 = vpop.f32.mrb[0].mxu0
    %3621 = vmatprep.mubr.bf16.mxu0 0
    %3622 = vmatmul.mubr.bf16.gmra.mrb[0].mxu0 %v3509
    %v3623 = vpop.f32.mrb[0].mxu0
    %v3624 = vadd.f32 0.0, %v3623
    %v3625 = vpop.f32.mrb[0].mxu0
    %v3626 = vpop.f32.mrb[0].mxu0
    %v3627 = vadd.f32 0.0, %v3626
    %v3628 = vpop.f32.mrb[0].mxu0
    %3629 = vmatprep.mubr.bf16.mxu0 0
    %3630 = vmatmul.mubr.bf16.gmra.mrb[0].mxu0 %v3511
    %v3631 = vpop.f32.mrb[0].mxu0
    %v3632 = vadd.f32 0.0, %v3631
    %v3633 = vpop.f32.mrb[0].mxu0
    %v3634 = vpop.f32.mrb[0].mxu0
    %v3635 = vadd.f32 0.0, %v3634
    %v3636 = vpop.f32.mrb[0].mxu0
    %3637 = vmatprep.mubr.bf16.mxu0 0
    %3638 = vmatmul.mubr.bf16.gmra.mrb[0].mxu0 %v3513
    %v3639 = vpop.f32.mrb[0].mxu0
    %v3640 = vadd.f32 0.0, %v3639
    %v3641 = vpop.f32.mrb[0].mxu0
    %v3642 = vpop.f32.mrb[0].mxu0
    %v3643 = vadd.f32 0.0, %v3642
    %v3644 = vpop.f32.mrb[0].mxu0
    %3645 = vmatprep.mubr.bf16.mxu0 0
    %3646 = vmatmul.mubr.bf16.gmra.mrb[0].mxu0 %v3515
    %v3647 = vpop.f32.mrb[0].mxu0
    %v3648 = vadd.f32 0.0, %v3647
    %v3649 = vpop.f32.mrb[0].mxu0
    %v3650 = vpop.f32.mrb[0].mxu0
    %v3651 = vadd.f32 0.0, %v3650
    %v3652 = vpop.f32.mrb[0].mxu0
    %3653 = vmatprep.mubr.bf16.mxu0 0
    %3654 = vmatmul.mubr.bf16.gmra.mrb[0].mxu0 %v3517
    %v3655 = vpop.f32.mrb[0].mxu0
    %v3656 = vadd.f32 0.0, %v3655
    %v3657 = vpop.f32.mrb[0].mxu0
    %v3658 = vpop.f32.mrb[0].mxu0
    %v3659 = vadd.f32 0.0, %v3658
    %v3660 = vpop.f32.mrb[0].mxu0
    %3661 = vmatprep.mubr.bf16.mxu0 0
    %3662 = vmatmul.mubr.bf16.gmra.mrb[0].mxu0 %v3519
    %v3663 = vpop.f32.mrb[0].mxu0
    %v3664 = vadd.f32 0.0, %v3663
    %v3665 = vpop.f32.mrb[0].mxu0
    %v3666 = vpop.f32.mrb[0].mxu0
    %v3667 = vadd.f32 0.0, %v3666
    %v3668 = vpop.f32.mrb[0].mxu0
    %3669 = vmatprep.mubr.bf16.mxu0 0
    %3670 = vmatmul.mubr.bf16.gmra.mrb[0].mxu0 %v3521
    %v3671 = vpop.f32.mrb[0].mxu0
    %v3672 = vadd.f32 0.0, %v3671
    %v3673 = vpop.f32.mrb[0].mxu0
    %v3674 = vpop.f32.mrb[0].mxu0
    %v3675 = vadd.f32 0.0, %v3674
    %v3676 = vpop.f32.mrb[0].mxu0
    %3677 = vmatprep.mubr.bf16.mxu0 0
    %3678 = vmatmul.mubr.bf16.gmra.mrb[0].mxu0 %v3523
    %v3679 = vpop.f32.mrb[0].mxu0
    %v3680 = vadd.f32 0.0, %v3679
    %v3681 = vpop.f32.mrb[0].mxu0
    %v3682 = vpop.f32.mrb[0].mxu0
    %v3683 = vadd.f32 0.0, %v3682
    %v3684 = vpop.f32.mrb[0].mxu0
    %3685 = vmatprep.mubr.bf16.mxu0 0
    %3686 = vmatmul.mubr.bf16.gmra.mrb[0].mxu0 %v3525
    %v3687 = vpop.f32.mrb[0].mxu0
    %v3688 = vadd.f32 0.0, %v3687
    %v3689 = vpop.f32.mrb[0].mxu0
    %v3690 = vpop.f32.mrb[0].mxu0
    %v3691 = vadd.f32 0.0, %v3690
    %v3692 = vpop.f32.mrb[0].mxu0
    %3693 = vmatprep.mubr.bf16.mxu0 0
    %3694 = vmatmul.mubr.bf16.gmra.mrb[0].mxu0 %v3527
    %v3695 = vpop.f32.mrb[0].mxu0
    %v3696 = vadd.f32 0.0, %v3695
    %v3697 = vpop.f32.mrb[0].mxu0
    %v3698 = vpop.f32.mrb[0].mxu0
    %v3699 = vadd.f32 0.0, %v3698
    %v3700 = vpop.f32.mrb[0].mxu0
    %3701 = vmatprep.mubr.bf16.mxu0 0
    %3702 = vmatmul.mubr.bf16.gmra.mrb[0].mxu0 %v3529
    %v3703 = vpop.f32.mrb[0].mxu0
    %v3704 = vadd.f32 0.0, %v3703
    %v3705 = vpop.f32.mrb[0].mxu0
    %v3706 = vpop.f32.mrb[0].mxu0
    %v3707 = vadd.f32 0.0, %v3706
    %v3708 = vpop.f32.mrb[0].mxu0
    %3709 = vmatprep.mubr.bf16.mxu0 0
    %3710 = vmatmul.mubr.bf16.gmra.mrb[0].mxu0 %v3531
    %v3711 = vpop.f32.mrb[0].mxu0
    %v3712 = vadd.f32 0.0, %v3711
    %v3713 = vpop.f32.mrb[0].mxu0
    %v3714 = vpop.f32.mrb[0].mxu0
    %v3715 = vadd.f32 0.0, %v3714
    %v3716 = vpop.f32.mrb[0].mxu0
    %3717 = vmatprep.mubr.bf16.mxu0 0
    %3718 = vmatmul.mubr.bf16.gmra.mrb[0].mxu0 %v3533
    %v3719 = vpop.f32.mrb[0].mxu0
    %v3720 = vadd.f32 0.0, %v3719
    %v3721 = vpop.f32.mrb[0].mxu0
    %v3722 = vpop.f32.mrb[0].mxu0
    %v3723 = vadd.f32 0.0, %v3722
    %v3724 = vpop.f32.mrb[0].mxu0
    %3725 = vmatprep.mubr.bf16.mxu0 0
    %3726 = vmatmul.mubr.bf16.gmra.mrb[0].mxu0 %v3535
    %v3727 = vpop.f32.mrb[0].mxu0
    %v3728 = vadd.f32 0.0, %v3727
    %v3729 = vpop.f32.mrb[0].mxu0
    %v3730 = vpop.f32.mrb[0].mxu0
    %v3731 = vadd.f32 0.0, %v3730
    %v3732 = vpop.f32.mrb[0].mxu0
    %3733 = vmatprep.mubr.bf16.mxu0 0
    %3734 = vmatmul.mubr.bf16.gmra.mrb[0].mxu0 %v3537
    %v3735 = vpop.f32.mrb[0].mxu0
    %v3736 = vadd.f32 0.0, %v3735
    %v3737 = vpop.f32.mrb[0].mxu0
    %v3738 = vpop.f32.mrb[0].mxu0
    %v3739 = vadd.f32 0.0, %v3738
    %v3740 = vpop.f32.mrb[0].mxu0
    %3741 = vmatprep.mubr.bf16.mxu0 0
    %3742 = vmatmul.mubr.bf16.gmra.mrb[0].mxu0 %v3539
    %v3743 = vpop.f32.mrb[0].mxu0
    %v3744 = vadd.f32 0.0, %v3743
    %v3745 = vpop.f32.mrb[0].mxu0
    %v3746 = vpop.f32.mrb[0].mxu0
    %v3747 = vadd.f32 0.0, %v3746
    %v3748 = vpop.f32.mrb[0].mxu0
    %3749 = vmatprep.mubr.bf16.mxu0 0
    %3750 = vmatmul.mubr.bf16.gmra.mrb[0].mxu0 %v3541
    %v3751 = vpop.f32.mrb[0].mxu0
    %v3752 = vadd.f32 0.0, %v3751
    %v3753 = vpop.f32.mrb[0].mxu0
    %v3754 = vpop.f32.mrb[0].mxu0
    %v3755 = vadd.f32 0.0, %v3754
    %v3756 = vpop.f32.mrb[0].mxu0
    %3757 = vmatprep.mubr.bf16.mxu0 0
    %3758 = vmatmul.mubr.bf16.gmra.mrb[0].mxu0 %v3543
    %v3759 = vpop.f32.mrb[0].mxu0
    %v3760 = vadd.f32 0.0, %v3759
    %v3761 = vpop.f32.mrb[0].mxu0
    %v3762 = vpop.f32.mrb[0].mxu0
    %v3763 = vadd.f32 0.0, %v3762
    %v3764 = vpop.f32.mrb[0].mxu0
    %3765 = vmatprep.mubr.bf16.mxu0 0
    %3766 = vmatmul.mubr.bf16.gmra.mrb[0].mxu0 %v3545
    %v3767 = vpop.f32.mrb[0].mxu0
    %v3768 = vadd.f32 0.0, %v3767
    %v3769 = vpop.f32.mrb[0].mxu0
    %v3770 = vpop.f32.mrb[0].mxu0
    %v3771 = vadd.f32 0.0, %v3770
    %v3772 = vpop.f32.mrb[0].mxu0
    %3773 = vmatprep.mubr.bf16.mxu0 0
    %3774 = vmatmul.mubr.bf16.gmra.mrb[0].mxu0 %v3547
    %v3775 = vpop.f32.mrb[0].mxu0
    %v3776 = vadd.f32 0.0, %v3775
    %v3777 = vpop.f32.mrb[0].mxu0
    %v3778 = vpop.f32.mrb[0].mxu0
    %v3779 = vadd.f32 0.0, %v3778
    %v3780 = vpop.f32.mrb[0].mxu0
    %3781 = vmatprep.mubr.bf16.mxu0 0
    %3782 = vmatmul.mubr.bf16.gmra.mrb[0].mxu0 %v3549
    %v3783 = vpop.f32.mrb[0].mxu0
    %v3784 = vadd.f32 0.0, %v3783
    %v3785 = vpop.f32.mrb[0].mxu0
    %v3786 = vpop.f32.mrb[0].mxu0
    %v3787 = vadd.f32 0.0, %v3786
    %v3788 = vpop.f32.mrb[0].mxu0
    %3789 = vmatprep.mubr.bf16.mxu0 0
    %3790 = vmatmul.mubr.bf16.gmra.mrb[0].mxu0 %v3551
    %v3791 = vpop.f32.mrb[0].mxu0
    %v3792 = vadd.f32 0.0, %v3791
    %v3793 = vpop.f32.mrb[0].mxu0
    %v3794 = vpop.f32.mrb[0].mxu0
    %v3795 = vadd.f32 0.0, %v3794
    %v3796 = vpop.f32.mrb[0].mxu0
    %3797 = vmatprep.mubr.bf16.mxu0 0
    %3798 = vmatmul.mubr.bf16.gmra.mrb[0].mxu0 %v3553
    %v3799 = vpop.f32.mrb[0].mxu0
    %v3800 = vadd.f32 0.0, %v3799
    %v3801 = vpop.f32.mrb[0].mxu0
    %v3802 = vpop.f32.mrb[0].mxu0
    %v3803 = vadd.f32 0.0, %v3802
    %v3804 = vpop.f32.mrb[0].mxu0
    %3805 = vmatprep.mubr.bf16.mxu0 0
    %3806 = vmatmul.mubr.bf16.gmra.mrb[0].mxu0 %v3555
    %v3807 = vpop.f32.mrb[0].mxu0
    %v3808 = vadd.f32 0.0, %v3807
    %v3809 = vpop.f32.mrb[0].mxu0
    %v3810 = vpop.f32.mrb[0].mxu0
    %v3811 = vadd.f32 0.0, %v3810
    %v3812 = vpop.f32.mrb[0].mxu0
    %3813 = vmatprep.mubr.bf16.mxu0 0
    %3814 = vmatmul.mubr.bf16.gmra.mrb[0].mxu0 %v3557
    %v3815 = vpop.f32.mrb[0].mxu0
    %v3816 = vadd.f32 0.0, %v3815
    %v3817 = vpop.f32.mrb[0].mxu0
    %v3818 = vpop.f32.mrb[0].mxu0
    %v3819 = vadd.f32 0.0, %v3818
    %v3820 = vpop.f32.mrb[0].mxu0
    %3821 = vmatprep.mubr.bf16.mxu0 0
    %3822 = vmatmul.mubr.bf16.gmra.mrb[0].mxu0 %v3559
    %v3823 = vpop.f32.mrb[0].mxu0
    %v3824 = vadd.f32 0.0, %v3823
    %v3825 = vpop.f32.mrb[0].mxu0
    %v3826 = vpop.f32.mrb[0].mxu0
    %v3827 = vadd.f32 0.0, %v3826
    %v3828 = vpop.f32.mrb[0].mxu0
    %3829 = vmatprep.mubr.bf16.mxu0 0
    %3830 = vmatmul.mubr.bf16.gmra.mrb[0].mxu0 %v3561
    %v3831 = vpop.f32.mrb[0].mxu0
    %v3832 = vadd.f32 0.0, %v3831
    %v3833 = vpop.f32.mrb[0].mxu0
    %v3834 = vpop.f32.mrb[0].mxu0
    %v3835 = vadd.f32 0.0, %v3834
    %v3836 = vpop.f32.mrb[0].mxu0
    %3837 = vmatprep.mubr.bf16.mxu0 0
    %3838 = vmatmul.mubr.bf16.gmra.mrb[0].mxu0 %v3563
    %v3839 = vpop.f32.mrb[0].mxu0
    %v3840 = vadd.f32 0.0, %v3839
    %v3841 = vpop.f32.mrb[0].mxu0
    %v3842 = vpop.f32.mrb[0].mxu0
    %v3843 = vadd.f32 0.0, %v3842
    %v3844 = vpop.f32.mrb[0].mxu0
    %3845 = vmatprep.mubr.bf16.mxu0 0
    %3846 = vmatmul.mubr.bf16.gmra.mrb[0].mxu0 %v3565
    %v3847 = vpop.f32.mrb[0].mxu0
    %v3848 = vadd.f32 0.0, %v3847
    %v3849 = vpop.f32.mrb[0].mxu0
    %v3850 = vpop.f32.mrb[0].mxu0
    %v3851 = vadd.f32 0.0, %v3850
    %v3852 = vpop.f32.mrb[0].mxu0
    %3853 = vmatprep.mubr.bf16.mxu0 0
    %3854 = vmatmul.mubr.bf16.gmra.mrb[0].mxu0 %v3567
    %v3855 = vpop.f32.mrb[0].mxu0
    %v3856 = vadd.f32 0.0, %v3855
    %v3857 = vpop.f32.mrb[0].mxu0
    %v3858 = vpop.f32.mrb[0].mxu0
    %v3859 = vadd.f32 0.0, %v3858
    %v3860 = vpop.f32.mrb[0].mxu0
    %3861 = vdwg.mxu0
    %v3862 = vmul.f32 %v3608, %v3608
    %v3863 = vmul.f32 %v3611, %v3611
    %v3864 = vmul.f32 %v3616, %v3616
    %v3865 = vmul.f32 %v3619, %v3619
    %v3866 = vmul.f32 %v3624, %v3624
    %v3867 = vmul.f32 %v3627, %v3627
    %v3868 = vmul.f32 %v3632, %v3632
    %v3869 = vmul.f32 %v3635, %v3635
    %v3870 = vmul.f32 %v3640, %v3640
    %v3871 = vmul.f32 %v3643, %v3643
    %v3872 = vmul.f32 %v3648, %v3648
    %v3873 = vmul.f32 %v3651, %v3651
    %v3874 = vmul.f32 %v3656, %v3656
    %v3875 = vmul.f32 %v3659, %v3659
    %v3876 = vmul.f32 %v3664, %v3664
    %v3877 = vmul.f32 %v3667, %v3667
    %v3878 = vmul.f32 %v3672, %v3672
    %v3879 = vmul.f32 %v3675, %v3675
    %v3880 = vmul.f32 %v3680, %v3680
    %v3881 = vmul.f32 %v3683, %v3683
    %v3882 = vmul.f32 %v3688, %v3688
    %v3883 = vmul.f32 %v3691, %v3691
    %v3884 = vmul.f32 %v3696, %v3696
    %v3885 = vmul.f32 %v3699, %v3699
    %v3886 = vmul.f32 %v3704, %v3704
    %v3887 = vmul.f32 %v3707, %v3707
    %v3888 = vmul.f32 %v3712, %v3712
    %v3889 = vmul.f32 %v3715, %v3715
    %v3890 = vmul.f32 %v3720, %v3720
    %v3891 = vmul.f32 %v3723, %v3723
    %v3892 = vmul.f32 %v3728, %v3728
    %v3893 = vmul.f32 %v3731, %v3731
    %v3894 = vmul.f32 %v3736, %v3736
    %v3895 = vmul.f32 %v3739, %v3739
    %v3896 = vmul.f32 %v3744, %v3744
    %v3897 = vmul.f32 %v3747, %v3747
    %v3898 = vmul.f32 %v3752, %v3752
    %v3899 = vmul.f32 %v3755, %v3755
    %v3900 = vmul.f32 %v3760, %v3760
    %v3901 = vmul.f32 %v3763, %v3763
    %v3902 = vmul.f32 %v3768, %v3768
    %v3903 = vmul.f32 %v3771, %v3771
    %v3904 = vmul.f32 %v3776, %v3776
    %v3905 = vmul.f32 %v3779, %v3779
    %v3906 = vmul.f32 %v3784, %v3784
    %v3907 = vmul.f32 %v3787, %v3787
    %v3908 = vmul.f32 %v3792, %v3792
    %v3909 = vmul.f32 %v3795, %v3795
    %v3910 = vmul.f32 %v3800, %v3800
    %v3911 = vmul.f32 %v3803, %v3803
    %v3912 = vmul.f32 %v3808, %v3808
    %v3913 = vmul.f32 %v3811, %v3811
    %v3914 = vmul.f32 %v3816, %v3816
    %v3915 = vmul.f32 %v3819, %v3819
    %v3916 = vmul.f32 %v3824, %v3824
    %v3917 = vmul.f32 %v3827, %v3827
    %v3918 = vmul.f32 %v3832, %v3832
    %v3919 = vmul.f32 %v3835, %v3835
    %v3920 = vmul.f32 %v3840, %v3840
    %v3921 = vmul.f32 %v3843, %v3843
    %v3922 = vmul.f32 %v3848, %v3848
    %v3923 = vmul.f32 %v3851, %v3851
    %v3924 = vmul.f32 %v3856, %v3856
    %v3925 = vmul.f32 %v3859, %v3859
    %3990 = vrot.lane.b32.xlu0 %v3862, 4
    %v3991 = vpop.permute.xlu0 %3990
    %3992 = vrot.lane.b32.xlu0 %v3863, 4
    %v3993 = vpop.permute.xlu0 %3992
    %3994 = vrot.lane.b32.xlu0 %v3864, 4
    %v3995 = vpop.permute.xlu0 %3994
    %3996 = vrot.lane.b32.xlu0 %v3865, 4
    %v3997 = vpop.permute.xlu0 %3996
    %3998 = vrot.lane.b32.xlu0 %v3866, 4
    %v3999 = vpop.permute.xlu0 %3998
    %4000 = vrot.lane.b32.xlu0 %v3867, 4
    %v4001 = vpop.permute.xlu0 %4000
    %4002 = vrot.lane.b32.xlu0 %v3868, 4
    %v4003 = vpop.permute.xlu0 %4002
    %4004 = vrot.lane.b32.xlu0 %v3869, 4
    %v4005 = vpop.permute.xlu0 %4004
    %4006 = vrot.lane.b32.xlu0 %v3870, 4
    %v4007 = vpop.permute.xlu0 %4006
    %4008 = vrot.lane.b32.xlu0 %v3871, 4
    %v4009 = vpop.permute.xlu0 %4008
    %4010 = vrot.lane.b32.xlu0 %v3872, 4
    %v4011 = vpop.permute.xlu0 %4010
    %4012 = vrot.lane.b32.xlu0 %v3873, 4
    %v4013 = vpop.permute.xlu0 %4012
    %4014 = vrot.lane.b32.xlu0 %v3874, 4
    %v4015 = vpop.permute.xlu0 %4014
    %4016 = vrot.lane.b32.xlu0 %v3875, 4
    %v4017 = vpop.permute.xlu0 %4016
    %4018 = vrot.lane.b32.xlu0 %v3876, 4
    %v4019 = vpop.permute.xlu0 %4018
    %4020 = vrot.lane.b32.xlu0 %v3877, 4
    %v4021 = vpop.permute.xlu0 %4020
    %4022 = vrot.lane.b32.xlu0 %v3878, 4
    %v4023 = vpop.permute.xlu0 %4022
    %4024 = vrot.lane.b32.xlu0 %v3879, 4
    %v4025 = vpop.permute.xlu0 %4024
    %4026 = vrot.lane.b32.xlu0 %v3880, 4
    %v4027 = vpop.permute.xlu0 %4026
    %4028 = vrot.lane.b32.xlu0 %v3881, 4
    %v4029 = vpop.permute.xlu0 %4028
    %4030 = vrot.lane.b32.xlu0 %v3882, 4
    %v4031 = vpop.permute.xlu0 %4030
    %4032 = vrot.lane.b32.xlu0 %v3883, 4
    %v4033 = vpop.permute.xlu0 %4032
    %4034 = vrot.lane.b32.xlu0 %v3884, 4
    %v4035 = vpop.permute.xlu0 %4034
    %4036 = vrot.lane.b32.xlu0 %v3885, 4
    %v4037 = vpop.permute.xlu0 %4036
    %4038 = vrot.lane.b32.xlu0 %v3886, 4
    %v4039 = vpop.permute.xlu0 %4038
    %4040 = vrot.lane.b32.xlu0 %v3887, 4
    %v4041 = vpop.permute.xlu0 %4040
    %4042 = vrot.lane.b32.xlu0 %v3888, 4
    %v4043 = vpop.permute.xlu0 %4042
    %4044 = vrot.lane.b32.xlu0 %v3889, 4
    %v4045 = vpop.permute.xlu0 %4044
    %4046 = vrot.lane.b32.xlu0 %v3890, 4
    %v4047 = vpop.permute.xlu0 %4046
    %4048 = vrot.lane.b32.xlu0 %v3891, 4
    %v4049 = vpop.permute.xlu0 %4048
    %4050 = vrot.lane.b32.xlu0 %v3892, 4
    %v4051 = vpop.permute.xlu0 %4050
    %4052 = vrot.lane.b32.xlu0 %v3893, 4
    %v4053 = vpop.permute.xlu0 %4052
    %4054 = vrot.lane.b32.xlu0 %v3894, 4
    %v4055 = vpop.permute.xlu0 %4054
    %4056 = vrot.lane.b32.xlu0 %v3895, 4
    %v4057 = vpop.permute.xlu0 %4056
    %4058 = vrot.lane.b32.xlu0 %v3896, 4
    %v4059 = vpop.permute.xlu0 %4058
    %4060 = vrot.lane.b32.xlu0 %v3897, 4
    %v4061 = vpop.permute.xlu0 %4060
    %4062 = vrot.lane.b32.xlu0 %v3898, 4
    %v4063 = vpop.permute.xlu0 %4062
    %4064 = vrot.lane.b32.xlu0 %v3899, 4
    %v4065 = vpop.permute.xlu0 %4064
    %4066 = vrot.lane.b32.xlu0 %v3900, 4
    %v4067 = vpop.permute.xlu0 %4066
    %4068 = vrot.lane.b32.xlu0 %v3901, 4
    %v4069 = vpop.permute.xlu0 %4068
    %4070 = vrot.lane.b32.xlu0 %v3902, 4
    %v4071 = vpop.permute.xlu0 %4070
    %4072 = vrot.lane.b32.xlu0 %v3903, 4
    %v4073 = vpop.permute.xlu0 %4072
    %4074 = vrot.lane.b32.xlu0 %v3904, 4
    %v4075 = vpop.permute.xlu0 %4074
    %4076 = vrot.lane.b32.xlu0 %v3905, 4
    %v4077 = vpop.permute.xlu0 %4076
    %4078 = vrot.lane.b32.xlu0 %v3906, 4
    %v4079 = vpop.permute.xlu0 %4078
    %4080 = vrot.lane.b32.xlu0 %v3907, 4
    %v4081 = vpop.permute.xlu0 %4080
    %4082 = vrot.lane.b32.xlu0 %v3908, 4
    %v4083 = vpop.permute.xlu0 %4082
    %4084 = vrot.lane.b32.xlu0 %v3909, 4
    %v4085 = vpop.permute.xlu0 %4084
    %4086 = vrot.lane.b32.xlu0 %v3910, 4
    %v4087 = vpop.permute.xlu0 %4086
    %4088 = vrot.lane.b32.xlu0 %v3911, 4
    %v4089 = vpop.permute.xlu0 %4088
    %4090 = vrot.lane.b32.xlu0 %v3912, 4
    %v4091 = vpop.permute.xlu0 %4090
    %4092 = vrot.lane.b32.xlu0 %v3913, 4
    %v4093 = vpop.permute.xlu0 %4092
    %4094 = vrot.lane.b32.xlu0 %v3914, 4
    %v4095 = vpop.permute.xlu0 %4094
    %4096 = vrot.lane.b32.xlu0 %v3915, 4
    %v4097 = vpop.permute.xlu0 %4096
    %4098 = vrot.lane.b32.xlu0 %v3916, 4
    %v4099 = vpop.permute.xlu0 %4098
    %4100 = vrot.lane.b32.xlu0 %v3917, 4
    %v4101 = vpop.permute.xlu0 %4100
    %4102 = vrot.lane.b32.xlu0 %v3918, 4
    %v4103 = vpop.permute.xlu0 %4102
    %4104 = vrot.lane.b32.xlu0 %v3919, 4
    %v4105 = vpop.permute.xlu0 %4104
    %4106 = vrot.lane.b32.xlu0 %v3920, 4
    %v4107 = vpop.permute.xlu0 %4106
    %4108 = vrot.lane.b32.xlu0 %v3921, 4
    %v4109 = vpop.permute.xlu0 %4108
    %4110 = vrot.lane.b32.xlu0 %v3922, 4
    %v4111 = vpop.permute.xlu0 %4110
    %4112 = vrot.lane.b32.xlu0 %v3923, 4
    %v4113 = vpop.permute.xlu0 %4112
    %4114 = vrot.lane.b32.xlu0 %v3924, 4
    %v4115 = vpop.permute.xlu0 %4114
    %4116 = vrot.lane.b32.xlu0 %v3925, 4
    %v4117 = vpop.permute.xlu0 %4116
    %v4182 = vsel %vm966, %v3608, %v3991
    %v4183 = vsel %vm966, %v3611, %v3993
    %v4184 = vsel %vm966, %v3616, %v3995
    %v4185 = vsel %vm966, %v3619, %v3997
    %v4186 = vsel %vm966, %v3624, %v3999
    %v4187 = vsel %vm966, %v3627, %v4001
    %v4188 = vsel %vm966, %v3632, %v4003
    %v4189 = vsel %vm966, %v3635, %v4005
    %v4190 = vsel %vm966, %v3640, %v4007
    %v4191 = vsel %vm966, %v3643, %v4009
    %v4192 = vsel %vm966, %v3648, %v4011
    %v4193 = vsel %vm966, %v3651, %v4013
    %v4194 = vsel %vm966, %v3656, %v4015
    %v4195 = vsel %vm966, %v3659, %v4017
    %v4196 = vsel %vm966, %v3664, %v4019
    %v4197 = vsel %vm966, %v3667, %v4021
    %v4198 = vsel %vm966, %v3672, %v4023
    %v4199 = vsel %vm966, %v3675, %v4025
    %v4200 = vsel %vm966, %v3680, %v4027
    %v4201 = vsel %vm966, %v3683, %v4029
    %v4202 = vsel %vm966, %v3688, %v4031
    %v4203 = vsel %vm966, %v3691, %v4033
    %v4204 = vsel %vm966, %v3696, %v4035
    %v4205 = vsel %vm966, %v3699, %v4037
    %v4206 = vsel %vm966, %v3704, %v4039
    %v4207 = vsel %vm966, %v3707, %v4041
    %v4208 = vsel %vm966, %v3712, %v4043
    %v4209 = vsel %vm966, %v3715, %v4045
    %v4210 = vsel %vm966, %v3720, %v4047
    %v4211 = vsel %vm966, %v3723, %v4049
    %v4212 = vsel %vm966, %v3728, %v4051
    %v4213 = vsel %vm966, %v3731, %v4053
    %v4214 = vsel %vm966, %v3736, %v4055
    %v4215 = vsel %vm966, %v3739, %v4057
    %v4216 = vsel %vm966, %v3744, %v4059
    %v4217 = vsel %vm966, %v3747, %v4061
    %v4218 = vsel %vm966, %v3752, %v4063
    %v4219 = vsel %vm966, %v3755, %v4065
    %v4220 = vsel %vm966, %v3760, %v4067
    %v4221 = vsel %vm966, %v3763, %v4069
    %v4222 = vsel %vm966, %v3768, %v4071
    %v4223 = vsel %vm966, %v3771, %v4073
    %v4224 = vsel %vm966, %v3776, %v4075
    %v4225 = vsel %vm966, %v3779, %v4077
    %v4226 = vsel %vm966, %v3784, %v4079
    %v4227 = vsel %vm966, %v3787, %v4081
    %v4228 = vsel %vm966, %v3792, %v4083
    %v4229 = vsel %vm966, %v3795, %v4085
    %v4230 = vsel %vm966, %v3800, %v4087
    %v4231 = vsel %vm966, %v3803, %v4089
    %v4232 = vsel %vm966, %v3808, %v4091
    %v4233 = vsel %vm966, %v3811, %v4093
    %v4234 = vsel %vm966, %v3816, %v4095
    %v4235 = vsel %vm966, %v3819, %v4097
    %v4236 = vsel %vm966, %v3824, %v4099
    %v4237 = vsel %vm966, %v3827, %v4101
    %v4238 = vsel %vm966, %v3832, %v4103
    %v4239 = vsel %vm966, %v3835, %v4105
    %v4240 = vsel %vm966, %v3840, %v4107
    %v4241 = vsel %vm966, %v3843, %v4109
    %v4242 = vsel %vm966, %v3848, %v4111
    %v4243 = vsel %vm966, %v3851, %v4113
    %v4244 = vsel %vm966, %v3856, %v4115
    %v4245 = vsel %vm966, %v3859, %v4117
    %v4246 = vsel %vm256, %v4182, 0.0
    %v4247 = vsel %vm256, %v4183, 0.0
    %v4248 = vadd.f32 %v4246, %v4247
    %v4249 = vsel %vm256, %v4184, 0.0
    %v4250 = vadd.f32 %v4248, %v4249
    %v4251 = vsel %vm256, %v4185, 0.0
    %v4252 = vadd.f32 %v4250, %v4251
    %v4253 = vsel %vm256, %v4186, 0.0
    %v4254 = vadd.f32 %v4252, %v4253
    %v4255 = vsel %vm256, %v4187, 0.0
    %v4256 = vadd.f32 %v4254, %v4255
    %v4257 = vsel %vm256, %v4188, 0.0
    %v4258 = vadd.f32 %v4256, %v4257
    %v4259 = vsel %vm256, %v4189, 0.0
    %v4260 = vadd.f32 %v4258, %v4259
    %v4261 = vsel %vm256, %v4190, 0.0
    %v4262 = vadd.f32 %v4260, %v4261
    %v4263 = vsel %vm256, %v4191, 0.0
    %v4264 = vadd.f32 %v4262, %v4263
    %v4265 = vsel %vm256, %v4192, 0.0
    %v4266 = vadd.f32 %v4264, %v4265
    %v4267 = vsel %vm256, %v4193, 0.0
    %v4268 = vadd.f32 %v4266, %v4267
    %v4269 = vsel %vm256, %v4194, 0.0
    %v4270 = vadd.f32 %v4268, %v4269
    %v4271 = vsel %vm256, %v4195, 0.0
    %v4272 = vadd.f32 %v4270, %v4271
    %v4273 = vsel %vm256, %v4196, 0.0
    %v4274 = vadd.f32 %v4272, %v4273
    %v4275 = vsel %vm256, %v4197, 0.0
    %v4276 = vadd.f32 %v4274, %v4275
    %v4277 = vsel %vm256, %v4198, 0.0
    %v4278 = vadd.f32 %v4276, %v4277
    %v4279 = vsel %vm256, %v4199, 0.0
    %v4280 = vadd.f32 %v4278, %v4279
    %v4281 = vsel %vm256, %v4200, 0.0
    %v4282 = vadd.f32 %v4280, %v4281
    %v4283 = vsel %vm256, %v4201, 0.0
    %v4284 = vadd.f32 %v4282, %v4283
    %v4285 = vsel %vm256, %v4202, 0.0
    %v4286 = vadd.f32 %v4284, %v4285
    %v4287 = vsel %vm256, %v4203, 0.0
    %v4288 = vadd.f32 %v4286, %v4287
    %v4289 = vsel %vm256, %v4204, 0.0
    %v4290 = vadd.f32 %v4288, %v4289
    %v4291 = vsel %vm256, %v4205, 0.0
    %v4292 = vadd.f32 %v4290, %v4291
    %v4293 = vsel %vm256, %v4206, 0.0
    %v4294 = vadd.f32 %v4292, %v4293
    %v4295 = vsel %vm256, %v4207, 0.0
    %v4296 = vadd.f32 %v4294, %v4295
    %v4297 = vsel %vm256, %v4208, 0.0
    %v4298 = vadd.f32 %v4296, %v4297
    %v4299 = vsel %vm256, %v4209, 0.0
    %v4300 = vadd.f32 %v4298, %v4299
    %v4301 = vsel %vm256, %v4210, 0.0
    %v4302 = vadd.f32 %v4300, %v4301
    %v4303 = vsel %vm256, %v4211, 0.0
    %v4304 = vadd.f32 %v4302, %v4303
    %v4305 = vsel %vm256, %v4212, 0.0
    %v4306 = vadd.f32 %v4304, %v4305
    %v4307 = vsel %vm256, %v4213, 0.0
    %v4308 = vadd.f32 %v4306, %v4307
    %v4309 = vsel %vm256, %v4214, 0.0
    %v4310 = vadd.f32 %v4308, %v4309
    %v4311 = vsel %vm256, %v4215, 0.0
    %v4312 = vadd.f32 %v4310, %v4311
    %v4313 = vsel %vm256, %v4216, 0.0
    %v4314 = vadd.f32 %v4312, %v4313
    %v4315 = vsel %vm256, %v4217, 0.0
    %v4316 = vadd.f32 %v4314, %v4315
    %v4317 = vsel %vm256, %v4218, 0.0
    %v4318 = vadd.f32 %v4316, %v4317
    %v4319 = vsel %vm256, %v4219, 0.0
    %v4320 = vadd.f32 %v4318, %v4319
    %v4321 = vsel %vm256, %v4220, 0.0
    %v4322 = vadd.f32 %v4320, %v4321
    %v4323 = vsel %vm256, %v4221, 0.0
    %v4324 = vadd.f32 %v4322, %v4323
    %v4325 = vsel %vm256, %v4222, 0.0
    %v4326 = vadd.f32 %v4324, %v4325
    %v4327 = vsel %vm256, %v4223, 0.0
    %v4328 = vadd.f32 %v4326, %v4327
    %v4329 = vsel %vm256, %v4224, 0.0
    %v4330 = vadd.f32 %v4328, %v4329
    %v4331 = vsel %vm256, %v4225, 0.0
    %v4332 = vadd.f32 %v4330, %v4331
    %v4333 = vsel %vm256, %v4226, 0.0
    %v4334 = vadd.f32 %v4332, %v4333
    %v4335 = vsel %vm256, %v4227, 0.0
    %v4336 = vadd.f32 %v4334, %v4335
    %v4337 = vsel %vm256, %v4228, 0.0
    %v4338 = vadd.f32 %v4336, %v4337
    %v4339 = vsel %vm256, %v4229, 0.0
    %v4340 = vadd.f32 %v4338, %v4339
    %v4341 = vsel %vm256, %v4230, 0.0
    %v4342 = vadd.f32 %v4340, %v4341
    %v4343 = vsel %vm256, %v4231, 0.0
    %v4344 = vadd.f32 %v4342, %v4343
    %v4345 = vsel %vm256, %v4232, 0.0
    %v4346 = vadd.f32 %v4344, %v4345
    %v4347 = vsel %vm256, %v4233, 0.0
    %v4348 = vadd.f32 %v4346, %v4347
    %v4349 = vsel %vm256, %v4234, 0.0
    %v4350 = vadd.f32 %v4348, %v4349
    %v4351 = vsel %vm256, %v4235, 0.0
    %v4352 = vadd.f32 %v4350, %v4351
    %v4353 = vsel %vm256, %v4236, 0.0
    %v4354 = vadd.f32 %v4352, %v4353
    %v4355 = vsel %vm256, %v4237, 0.0
    %v4356 = vadd.f32 %v4354, %v4355
    %v4357 = vsel %vm256, %v4238, 0.0
    %v4358 = vadd.f32 %v4356, %v4357
    %v4359 = vsel %vm256, %v4239, 0.0
    %v4360 = vadd.f32 %v4358, %v4359
    %v4361 = vsel %vm256, %v4240, 0.0
    %v4362 = vadd.f32 %v4360, %v4361
    %v4363 = vsel %vm256, %v4241, 0.0
    %v4364 = vadd.f32 %v4362, %v4363
    %v4365 = vsel %vm256, %v4242, 0.0
    %v4366 = vadd.f32 %v4364, %v4365
    %v4367 = vsel %vm256, %v4243, 0.0
    %v4368 = vadd.f32 %v4366, %v4367
    %v4369 = vsel %vm256, %v4244, 0.0
    %v4370 = vadd.f32 %v4368, %v4369
    %v4371 = vsel %vm256, %v4245, 0.0
    %v4372 = vadd.f32 %v4370, %v4371
    %v4373 = vrot.slane %v4372, 4
    %v4374 = vadd.f32 %v4372, %v4373
    %v4375 = vrot.slane %v4374, 2
    %v4376 = vadd.f32 %v4374, %v4375
    %v4377 = vrot.slane %v4376, 1
    %v4378 = vadd.f32 %v4376, %v4377
    %v4379 = vmul.f32 %v4378, 0.001953125
    %v4380 = vmul.f32 %v4379, %v4379
    %4382 = vrot.lane.b32.xlu0 %v4380, 4
    %v4383 = vpop.permute.xlu0 %4382
    %v4385 = vsub.f32 %v4379, %v4383
    %v4386 = vmax.f32 %v4385, 0.0
    %v4387 = vsub.f32 %v3608, %v4379
    %v4388 = vsub.f32 %v3611, %v4379
    %v4389 = vsub.f32 %v3616, %v4379
    %v4390 = vsub.f32 %v3619, %v4379
    %v4391 = vsub.f32 %v3624, %v4379
    %v4392 = vsub.f32 %v3627, %v4379
    %v4393 = vsub.f32 %v3632, %v4379
    %v4394 = vsub.f32 %v3635, %v4379
    %v4395 = vsub.f32 %v3640, %v4379
    %v4396 = vsub.f32 %v3643, %v4379
    %v4397 = vsub.f32 %v3648, %v4379
    %v4398 = vsub.f32 %v3651, %v4379
    %v4399 = vsub.f32 %v3656, %v4379
    %v4400 = vsub.f32 %v3659, %v4379
    %v4401 = vsub.f32 %v3664, %v4379
    %v4402 = vsub.f32 %v3667, %v4379
    %v4403 = vsub.f32 %v3672, %v4379
    %v4404 = vsub.f32 %v3675, %v4379
    %v4405 = vsub.f32 %v3680, %v4379
    %v4406 = vsub.f32 %v3683, %v4379
    %v4407 = vsub.f32 %v3688, %v4379
    %v4408 = vsub.f32 %v3691, %v4379
    %v4409 = vsub.f32 %v3696, %v4379
    %v4410 = vsub.f32 %v3699, %v4379
    %v4411 = vsub.f32 %v3704, %v4379
    %v4412 = vsub.f32 %v3707, %v4379
    %v4413 = vsub.f32 %v3712, %v4379
    %v4414 = vsub.f32 %v3715, %v4379
    %v4415 = vsub.f32 %v3720, %v4379
    %v4416 = vsub.f32 %v3723, %v4379
    %v4417 = vsub.f32 %v3728, %v4379
    %v4418 = vsub.f32 %v3731, %v4379
    %v4419 = vsub.f32 %v3736, %v4379
    %v4420 = vsub.f32 %v3739, %v4379
    %v4421 = vsub.f32 %v3744, %v4379
    %v4422 = vsub.f32 %v3747, %v4379
    %v4423 = vsub.f32 %v3752, %v4379
    %v4424 = vsub.f32 %v3755, %v4379
    %v4425 = vsub.f32 %v3760, %v4379
    %v4426 = vsub.f32 %v3763, %v4379
    %v4427 = vsub.f32 %v3768, %v4379
    %v4428 = vsub.f32 %v3771, %v4379
    %v4429 = vsub.f32 %v3776, %v4379
    %v4430 = vsub.f32 %v3779, %v4379
    %v4431 = vsub.f32 %v3784, %v4379
    %v4432 = vsub.f32 %v3787, %v4379
    %v4433 = vsub.f32 %v3792, %v4379
    %v4434 = vsub.f32 %v3795, %v4379
    %v4435 = vsub.f32 %v3800, %v4379
    %v4436 = vsub.f32 %v3803, %v4379
    %v4437 = vsub.f32 %v3808, %v4379
    %v4438 = vsub.f32 %v3811, %v4379
    %v4439 = vsub.f32 %v3816, %v4379
    %v4440 = vsub.f32 %v3819, %v4379
    %v4441 = vsub.f32 %v3824, %v4379
    %v4442 = vsub.f32 %v3827, %v4379
    %v4443 = vsub.f32 %v3832, %v4379
    %v4444 = vsub.f32 %v3835, %v4379
    %v4445 = vsub.f32 %v3840, %v4379
    %v4446 = vsub.f32 %v3843, %v4379
    %v4447 = vsub.f32 %v3848, %v4379
    %v4448 = vsub.f32 %v3851, %v4379
    %v4449 = vsub.f32 %v3856, %v4379
    %v4450 = vsub.f32 %v3859, %v4379
    %v4451 = vadd.f32 %v4386, 1e-05
    %v4452 = vrsqrt.pop %v4451
    %v4453 = vlaneseq
    %v4454 = vshrl.u32 %v4453, 7
    %v4455 = vsub.s32 0, %v4454
    %v4456 = vrot.slane %v4452, %v4455
    %4458 = vrot.lane.b32.xlu0 %v4456, 124
    %v4459 = vpop.permute.xlu0 %4458
    %v4461 = vmul.f32 %v4387, %v4459
    %v4462 = vmul.f32 %v4388, %v4459
    %v4463 = vmul.f32 %v4389, %v4459
    %v4464 = vmul.f32 %v4390, %v4459
    %v4465 = vmul.f32 %v4391, %v4459
    %v4466 = vmul.f32 %v4392, %v4459
    %v4467 = vmul.f32 %v4393, %v4459
    %v4468 = vmul.f32 %v4394, %v4459
    %v4469 = vmul.f32 %v4395, %v4459
    %v4470 = vmul.f32 %v4396, %v4459
    %v4471 = vmul.f32 %v4397, %v4459
    %v4472 = vmul.f32 %v4398, %v4459
    %v4473 = vmul.f32 %v4399, %v4459
    %v4474 = vmul.f32 %v4400, %v4459
    %v4475 = vmul.f32 %v4401, %v4459
    %v4476 = vmul.f32 %v4402, %v4459
    %v4477 = vmul.f32 %v4403, %v4459
    %v4478 = vmul.f32 %v4404, %v4459
    %v4479 = vmul.f32 %v4405, %v4459
    %v4480 = vmul.f32 %v4406, %v4459
    %v4481 = vmul.f32 %v4407, %v4459
    %v4482 = vmul.f32 %v4408, %v4459
    %v4483 = vmul.f32 %v4409, %v4459
    %v4484 = vmul.f32 %v4410, %v4459
    %v4485 = vmul.f32 %v4411, %v4459
    %v4486 = vmul.f32 %v4412, %v4459
    %v4487 = vmul.f32 %v4413, %v4459
    %v4488 = vmul.f32 %v4414, %v4459
    %v4489 = vmul.f32 %v4415, %v4459
    %v4490 = vmul.f32 %v4416, %v4459
    %v4491 = vmul.f32 %v4417, %v4459
    %v4492 = vmul.f32 %v4418, %v4459
    %v4493 = vmul.f32 %v4419, %v4459
    %v4494 = vmul.f32 %v4420, %v4459
    %v4495 = vmul.f32 %v4421, %v4459
    %v4496 = vmul.f32 %v4422, %v4459
    %v4497 = vmul.f32 %v4423, %v4459
    %v4498 = vmul.f32 %v4424, %v4459
    %v4499 = vmul.f32 %v4425, %v4459
    %v4500 = vmul.f32 %v4426, %v4459
    %v4501 = vmul.f32 %v4427, %v4459
    %v4502 = vmul.f32 %v4428, %v4459
    %v4503 = vmul.f32 %v4429, %v4459
    %v4504 = vmul.f32 %v4430, %v4459
    %v4505 = vmul.f32 %v4431, %v4459
    %v4506 = vmul.f32 %v4432, %v4459
    %v4507 = vmul.f32 %v4433, %v4459
    %v4508 = vmul.f32 %v4434, %v4459
    %v4509 = vmul.f32 %v4435, %v4459
    %v4510 = vmul.f32 %v4436, %v4459
    %v4511 = vmul.f32 %v4437, %v4459
    %v4512 = vmul.f32 %v4438, %v4459
    %v4513 = vmul.f32 %v4439, %v4459
    %v4514 = vmul.f32 %v4440, %v4459
    %v4515 = vmul.f32 %v4441, %v4459
    %v4516 = vmul.f32 %v4442, %v4459
    %v4517 = vmul.f32 %v4443, %v4459
    %v4518 = vmul.f32 %v4444, %v4459
    %v4519 = vmul.f32 %v4445, %v4459
    %v4520 = vmul.f32 %v4446, %v4459
    %v4521 = vmul.f32 %v4447, %v4459
    %v4522 = vmul.f32 %v4448, %v4459
    %v4523 = vmul.f32 %v4449, %v4459
    %v4524 = vmul.f32 %v4450, %v4459
    %v4525 = vlaneseq
    %v4526 = vshrl.u32 %v4525, 7
    %v4527 = vsub.s32 0, %v4526
    %v4528 = vrot.slane %v27, %v4527
    %v4529 = vmul.f32 %v4461, %v4528
    %v4530 = vmul.f32 %v4462, %v4528
    %v4531 = vmul.f32 %v4463, %v4528
    %v4532 = vmul.f32 %v4464, %v4528
    %v4533 = vmul.f32 %v4465, %v4528
    %v4534 = vmul.f32 %v4466, %v4528
    %v4535 = vmul.f32 %v4467, %v4528
    %v4536 = vmul.f32 %v4468, %v4528
    %v4537 = vmul.f32 %v4469, %v4528
    %v4538 = vmul.f32 %v4470, %v4528
    %v4539 = vmul.f32 %v4471, %v4528
    %v4540 = vmul.f32 %v4472, %v4528
    %v4541 = vmul.f32 %v4473, %v4528
    %v4542 = vmul.f32 %v4474, %v4528
    %v4543 = vmul.f32 %v4475, %v4528
    %v4544 = vmul.f32 %v4476, %v4528
    %v4545 = vmul.f32 %v4477, %v4528
    %v4546 = vmul.f32 %v4478, %v4528
    %v4547 = vmul.f32 %v4479, %v4528
    %v4548 = vmul.f32 %v4480, %v4528
    %v4549 = vmul.f32 %v4481, %v4528
    %v4550 = vmul.f32 %v4482, %v4528
    %v4551 = vmul.f32 %v4483, %v4528
    %v4552 = vmul.f32 %v4484, %v4528
    %v4553 = vmul.f32 %v4485, %v4528
    %v4554 = vmul.f32 %v4486, %v4528
    %v4555 = vmul.f32 %v4487, %v4528
    %v4556 = vmul.f32 %v4488, %v4528
    %v4557 = vmul.f32 %v4489, %v4528
    %v4558 = vmul.f32 %v4490, %v4528
    %v4559 = vmul.f32 %v4491, %v4528
    %v4560 = vmul.f32 %v4492, %v4528
    %v4561 = vmul.f32 %v4493, %v4528
    %v4562 = vmul.f32 %v4494, %v4528
    %v4563 = vmul.f32 %v4495, %v4528
    %v4564 = vmul.f32 %v4496, %v4528
    %v4565 = vmul.f32 %v4497, %v4528
    %v4566 = vmul.f32 %v4498, %v4528
    %v4567 = vmul.f32 %v4499, %v4528
    %v4568 = vmul.f32 %v4500, %v4528
    %v4569 = vmul.f32 %v4501, %v4528
    %v4570 = vmul.f32 %v4502, %v4528
    %v4571 = vmul.f32 %v4503, %v4528
    %v4572 = vmul.f32 %v4504, %v4528
    %v4573 = vmul.f32 %v4505, %v4528
    %v4574 = vmul.f32 %v4506, %v4528
    %v4575 = vmul.f32 %v4507, %v4528
    %v4576 = vmul.f32 %v4508, %v4528
    %v4577 = vmul.f32 %v4509, %v4528
    %v4578 = vmul.f32 %v4510, %v4528
    %v4579 = vmul.f32 %v4511, %v4528
    %v4580 = vmul.f32 %v4512, %v4528
    %v4581 = vmul.f32 %v4513, %v4528
    %v4582 = vmul.f32 %v4514, %v4528
    %v4583 = vmul.f32 %v4515, %v4528
    %v4584 = vmul.f32 %v4516, %v4528
    %v4585 = vmul.f32 %v4517, %v4528
    %v4586 = vmul.f32 %v4518, %v4528
    %v4587 = vmul.f32 %v4519, %v4528
    %v4588 = vmul.f32 %v4520, %v4528
    %v4589 = vmul.f32 %v4521, %v4528
    %v4590 = vmul.f32 %v4522, %v4528
    %v4591 = vmul.f32 %v4523, %v4528
    %v4592 = vmul.f32 %v4524, %v4528
    %v4593 = vlaneseq
    %v4594 = vshrl.u32 %v4593, 7
    %v4595 = vsub.s32 0, %v4594
    %v4596 = vrot.slane %v28, %v4595
    %v4597 = vadd.f32 %v4529, %v4596
    %v4598 = vadd.f32 %v4530, %v4596
    %v4599 = vadd.f32 %v4531, %v4596
    %v4600 = vadd.f32 %v4532, %v4596
    %v4601 = vadd.f32 %v4533, %v4596
    %v4602 = vadd.f32 %v4534, %v4596
    %v4603 = vadd.f32 %v4535, %v4596
    %v4604 = vadd.f32 %v4536, %v4596
    %v4605 = vadd.f32 %v4537, %v4596
    %v4606 = vadd.f32 %v4538, %v4596
    %v4607 = vadd.f32 %v4539, %v4596
    %v4608 = vadd.f32 %v4540, %v4596
    %v4609 = vadd.f32 %v4541, %v4596
    %v4610 = vadd.f32 %v4542, %v4596
    %v4611 = vadd.f32 %v4543, %v4596
    %v4612 = vadd.f32 %v4544, %v4596
    %v4613 = vadd.f32 %v4545, %v4596
    %v4614 = vadd.f32 %v4546, %v4596
    %v4615 = vadd.f32 %v4547, %v4596
    %v4616 = vadd.f32 %v4548, %v4596
    %v4617 = vadd.f32 %v4549, %v4596
    %v4618 = vadd.f32 %v4550, %v4596
    %v4619 = vadd.f32 %v4551, %v4596
    %v4620 = vadd.f32 %v4552, %v4596
    %v4621 = vadd.f32 %v4553, %v4596
    %v4622 = vadd.f32 %v4554, %v4596
    %v4623 = vadd.f32 %v4555, %v4596
    %v4624 = vadd.f32 %v4556, %v4596
    %v4625 = vadd.f32 %v4557, %v4596
    %v4626 = vadd.f32 %v4558, %v4596
    %v4627 = vadd.f32 %v4559, %v4596
    %v4628 = vadd.f32 %v4560, %v4596
    %v4629 = vadd.f32 %v4561, %v4596
    %v4630 = vadd.f32 %v4562, %v4596
    %v4631 = vadd.f32 %v4563, %v4596
    %v4632 = vadd.f32 %v4564, %v4596
    %v4633 = vadd.f32 %v4565, %v4596
    %v4634 = vadd.f32 %v4566, %v4596
    %v4635 = vadd.f32 %v4567, %v4596
    %v4636 = vadd.f32 %v4568, %v4596
    %v4637 = vadd.f32 %v4569, %v4596
    %v4638 = vadd.f32 %v4570, %v4596
    %v4639 = vadd.f32 %v4571, %v4596
    %v4640 = vadd.f32 %v4572, %v4596
    %v4641 = vadd.f32 %v4573, %v4596
    %v4642 = vadd.f32 %v4574, %v4596
    %v4643 = vadd.f32 %v4575, %v4596
    %v4644 = vadd.f32 %v4576, %v4596
    %v4645 = vadd.f32 %v4577, %v4596
    %v4646 = vadd.f32 %v4578, %v4596
    %v4647 = vadd.f32 %v4579, %v4596
    %v4648 = vadd.f32 %v4580, %v4596
    %v4649 = vadd.f32 %v4581, %v4596
    %v4650 = vadd.f32 %v4582, %v4596
    %v4651 = vadd.f32 %v4583, %v4596
    %v4652 = vadd.f32 %v4584, %v4596
    %v4653 = vadd.f32 %v4585, %v4596
    %v4654 = vadd.f32 %v4586, %v4596
    %v4655 = vadd.f32 %v4587, %v4596
    %v4656 = vadd.f32 %v4588, %v4596
    %v4657 = vadd.f32 %v4589, %v4596
    %v4658 = vadd.f32 %v4590, %v4596
    %v4659 = vadd.f32 %v4591, %v4596
    %v4660 = vadd.f32 %v4592, %v4596
    %v4661 = vmax.f32 %v4597, 0.0
    %v4662 = vmax.f32 %v4598, 0.0
    %v4663 = vmax.f32 %v4599, 0.0
    %v4664 = vmax.f32 %v4600, 0.0
    %v4665 = vmax.f32 %v4601, 0.0
    %v4666 = vmax.f32 %v4602, 0.0
    %v4667 = vmax.f32 %v4603, 0.0
    %v4668 = vmax.f32 %v4604, 0.0
    %v4669 = vmax.f32 %v4605, 0.0
    %v4670 = vmax.f32 %v4606, 0.0
    %v4671 = vmax.f32 %v4607, 0.0
    %v4672 = vmax.f32 %v4608, 0.0
    %v4673 = vmax.f32 %v4609, 0.0
    %v4674 = vmax.f32 %v4610, 0.0
    %v4675 = vmax.f32 %v4611, 0.0
    %v4676 = vmax.f32 %v4612, 0.0
    %v4677 = vmax.f32 %v4613, 0.0
    %v4678 = vmax.f32 %v4614, 0.0
    %v4679 = vmax.f32 %v4615, 0.0
    %v4680 = vmax.f32 %v4616, 0.0
    %v4681 = vmax.f32 %v4617, 0.0
    %v4682 = vmax.f32 %v4618, 0.0
    %v4683 = vmax.f32 %v4619, 0.0
    %v4684 = vmax.f32 %v4620, 0.0
    %v4685 = vmax.f32 %v4621, 0.0
    %v4686 = vmax.f32 %v4622, 0.0
    %v4687 = vmax.f32 %v4623, 0.0
    %v4688 = vmax.f32 %v4624, 0.0
    %v4689 = vmax.f32 %v4625, 0.0
    %v4690 = vmax.f32 %v4626, 0.0
    %v4691 = vmax.f32 %v4627, 0.0
    %v4692 = vmax.f32 %v4628, 0.0
    %v4693 = vmax.f32 %v4629, 0.0
    %v4694 = vmax.f32 %v4630, 0.0
    %v4695 = vmax.f32 %v4631, 0.0
    %v4696 = vmax.f32 %v4632, 0.0
    %v4697 = vmax.f32 %v4633, 0.0
    %v4698 = vmax.f32 %v4634, 0.0
    %v4699 = vmax.f32 %v4635, 0.0
    %v4700 = vmax.f32 %v4636, 0.0
    %v4701 = vmax.f32 %v4637, 0.0
    %v4702 = vmax.f32 %v4638, 0.0
    %v4703 = vmax.f32 %v4639, 0.0
    %v4704 = vmax.f32 %v4640, 0.0
    %v4705 = vmax.f32 %v4641, 0.0
    %v4706 = vmax.f32 %v4642, 0.0
    %v4707 = vmax.f32 %v4643, 0.0
    %v4708 = vmax.f32 %v4644, 0.0
    %v4709 = vmax.f32 %v4645, 0.0
    %v4710 = vmax.f32 %v4646, 0.0
    %v4711 = vmax.f32 %v4647, 0.0
    %v4712 = vmax.f32 %v4648, 0.0
    %v4713 = vmax.f32 %v4649, 0.0
    %v4714 = vmax.f32 %v4650, 0.0
    %v4715 = vmax.f32 %v4651, 0.0
    %v4716 = vmax.f32 %v4652, 0.0
    %v4717 = vmax.f32 %v4653, 0.0
    %v4718 = vmax.f32 %v4654, 0.0
    %v4719 = vmax.f32 %v4655, 0.0
    %v4720 = vmax.f32 %v4656, 0.0
    %v4721 = vmax.f32 %v4657, 0.0
    %v4722 = vmax.f32 %v4658, 0.0
    %v4723 = vmax.f32 %v4659, 0.0
    %v4724 = vmax.f32 %v4660, 0.0
    %v4725 = vpack.c.bf16 %v4662, %v4661
    %v4726 = vpack.c.bf16 %v4664, %v4663
    %v4727 = vpack.c.bf16 %v4666, %v4665
    %v4728 = vpack.c.bf16 %v4668, %v4667
    %v4729 = vpack.c.bf16 %v4670, %v4669
    %v4730 = vpack.c.bf16 %v4672, %v4671
    %v4731 = vpack.c.bf16 %v4674, %v4673
    %v4732 = vpack.c.bf16 %v4676, %v4675
    %v4733 = vpack.c.bf16 %v4678, %v4677
    %v4734 = vpack.c.bf16 %v4680, %v4679
    %v4735 = vpack.c.bf16 %v4682, %v4681
    %v4736 = vpack.c.bf16 %v4684, %v4683
    %v4737 = vpack.c.bf16 %v4686, %v4685
    %v4738 = vpack.c.bf16 %v4688, %v4687
    %v4739 = vpack.c.bf16 %v4690, %v4689
    %v4740 = vpack.c.bf16 %v4692, %v4691
    %v4741 = vpack.c.bf16 %v4694, %v4693
    %v4742 = vpack.c.bf16 %v4696, %v4695
    %v4743 = vpack.c.bf16 %v4698, %v4697
    %v4744 = vpack.c.bf16 %v4700, %v4699
    %v4745 = vpack.c.bf16 %v4702, %v4701
    %v4746 = vpack.c.bf16 %v4704, %v4703
    %v4747 = vpack.c.bf16 %v4706, %v4705
    %v4748 = vpack.c.bf16 %v4708, %v4707
    %v4749 = vpack.c.bf16 %v4710, %v4709
    %v4750 = vpack.c.bf16 %v4712, %v4711
    %v4751 = vpack.c.bf16 %v4714, %v4713
    %v4752 = vpack.c.bf16 %v4716, %v4715
    %v4753 = vpack.c.bf16 %v4718, %v4717
    %v4754 = vpack.c.bf16 %v4720, %v4719
    %v4755 = vpack.c.bf16 %v4722, %v4721
    %v4756 = vpack.c.bf16 %v4724, %v4723
    %v4757 = vld [vmem:[%s3] sm:$0x3]
    %v4759 = vsel %vm966, %v4725, 0
    %v4762 = vsel %vm966, %v4726, 0
    %v4765 = vsel %vm966, %v4727, 0
    %v4768 = vsel %vm966, %v4728, 0
    %v4771 = vsel %vm966, %v4729, 0
    %v4774 = vsel %vm966, %v4730, 0
    %v4777 = vsel %vm966, %v4731, 0
    %v4780 = vsel %vm966, %v4732, 0
    %v4783 = vsel %vm966, %v4733, 0
    %v4786 = vsel %vm966, %v4734, 0
    %v4789 = vsel %vm966, %v4735, 0
    %v4792 = vsel %vm966, %v4736, 0
    %v4795 = vsel %vm966, %v4737, 0
    %v4798 = vsel %vm966, %v4738, 0
    %v4801 = vsel %vm966, %v4739, 0
    %v4804 = vsel %vm966, %v4740, 0
    %v4807 = vsel %vm966, %v4741, 0
    %v4810 = vsel %vm966, %v4742, 0
    %v4813 = vsel %vm966, %v4743, 0
    %v4816 = vsel %vm966, %v4744, 0
    %v4819 = vsel %vm966, %v4745, 0
    %v4822 = vsel %vm966, %v4746, 0
    %v4825 = vsel %vm966, %v4747, 0
    %v4828 = vsel %vm966, %v4748, 0
    %v4831 = vsel %vm966, %v4749, 0
    %v4834 = vsel %vm966, %v4750, 0
    %v4837 = vsel %vm966, %v4751, 0
    %v4840 = vsel %vm966, %v4752, 0
    %v4843 = vsel %vm966, %v4753, 0
    %v4846 = vsel %vm966, %v4754, 0
    %v4849 = vsel %vm966, %v4755, 0
    %v4852 = vsel %vm966, %v4756, 0
    %v4855 = vsel %vm3569, %v4757, 0
    %4857 = vmatprep.subr.bf16.mxu0 0
    %4858 = vmatpush1.bf16.msra.mxu0 %v4855
    %4859 = vmatprep.subr.bf16.mxu0 0
    %4860 = vmatpush1.bf16.msra.mxu0 0
    %4861 = vmatprep.subr.bf16.mxu0 0
    %4862 = vmatpush1.bf16.msra.mxu0 0
    %4863 = vmatprep.subr.bf16.mxu0 0
    %4864 = vmatpush1.bf16.msra.mxu0 0
    %4865 = vmatprep.subr.bf16.mxu0 0
    %4866 = vmatpush1.bf16.msra.mxu0 0
    %4867 = vmatprep.subr.bf16.mxu0 0
    %4868 = vmatpush1.bf16.msra.mxu0 0
    %4869 = vmatprep.subr.bf16.mxu0 0
    %4870 = vmatpush1.bf16.msra.mxu0 0
    %4871 = vmatprep.subr.bf16.mxu0 0
    %4872 = vmatpush1.bf16.msra.mxu0 0
    %4873 = vmatprep.subr.bf16.mxu0 0
    %4874 = vmatpush1.bf16.msra.mxu0 0
    %4875 = vmatprep.subr.bf16.mxu0 0
    %4876 = vmatpush1.bf16.msra.mxu0 0
    %4877 = vmatprep.subr.bf16.mxu0 0
    %4878 = vmatpush1.bf16.msra.mxu0 0
    %4879 = vmatprep.subr.bf16.mxu0 0
    %4880 = vmatpush1.bf16.msra.mxu0 0
    %4881 = vmatprep.subr.bf16.mxu0 0
    %4882 = vmatpush1.bf16.msra.mxu0 0
    %4883 = vmatprep.subr.bf16.mxu0 0
    %4884 = vmatpush1.bf16.msra.mxu0 0
    %4885 = vmatprep.subr.bf16.mxu0 0
    %4886 = vmatpush1.bf16.msra.mxu0 0
    %4887 = vmatprep.subr.bf16.mxu0 0
    %4888 = vmatpush1.bf16.msra.mxu0 0
    %4889 = vmatprep.mubr.bf16.mxu0 0
    %4890 = vmatmul.mubr.bf16.gmra.mrb[0].mxu0 %v4759
    %v4891 = vpop.f32.mrb[0].mxu0
    %v4892 = vadd.f32 0.0, %v4891
    %v4893 = vpop.f32.mrb[0].mxu0
    %v4894 = vpop.f32.mrb[0].mxu0
    %v4895 = vadd.f32 0.0, %v4894
    %v4896 = vpop.f32.mrb[0].mxu0
    %4897 = vmatprep.mubr.bf16.mxu0 0
    %4898 = vmatmul.mubr.bf16.gmra.mrb[0].mxu0 %v4762
    %v4899 = vpop.f32.mrb[0].mxu0
    %v4900 = vadd.f32 0.0, %v4899
    %v4901 = vpop.f32.mrb[0].mxu0
    %v4902 = vpop.f32.mrb[0].mxu0
    %v4903 = vadd.f32 0.0, %v4902
    %v4904 = vpop.f32.mrb[0].mxu0
    %4905 = vmatprep.mubr.bf16.mxu0 0
    %4906 = vmatmul.mubr.bf16.gmra.mrb[0].mxu0 %v4765
    %v4907 = vpop.f32.mrb[0].mxu0
    %v4908 = vadd.f32 0.0, %v4907
    %v4909 = vpop.f32.mrb[0].mxu0
    %v4910 = vpop.f32.mrb[0].mxu0
    %v4911 = vadd.f32 0.0, %v4910
    %v4912 = vpop.f32.mrb[0].mxu0
    %4913 = vmatprep.mubr.bf16.mxu0 0
    %4914 = vmatmul.mubr.bf16.gmra.mrb[0].mxu0 %v4768
    %v4915 = vpop.f32.mrb[0].mxu0
    %v4916 = vadd.f32 0.0, %v4915
    %v4917 = vpop.f32.mrb[0].mxu0
    %v4918 = vpop.f32.mrb[0].mxu0
    %v4919 = vadd.f32 0.0, %v4918
    %v4920 = vpop.f32.mrb[0].mxu0
    %4921 = vmatprep.mubr.bf16.mxu0 0
    %4922 = vmatmul.mubr.bf16.gmra.mrb[0].mxu0 %v4771
    %v4923 = vpop.f32.mrb[0].mxu0
    %v4924 = vadd.f32 0.0, %v4923
    %v4925 = vpop.f32.mrb[0].mxu0
    %v4926 = vpop.f32.mrb[0].mxu0
    %v4927 = vadd.f32 0.0, %v4926
    %v4928 = vpop.f32.mrb[0].mxu0
    %4929 = vmatprep.mubr.bf16.mxu0 0
    %4930 = vmatmul.mubr.bf16.gmra.mrb[0].mxu0 %v4774
    %v4931 = vpop.f32.mrb[0].mxu0
    %v4932 = vadd.f32 0.0, %v4931
    %v4933 = vpop.f32.mrb[0].mxu0
    %v4934 = vpop.f32.mrb[0].mxu0
    %v4935 = vadd.f32 0.0, %v4934
    %v4936 = vpop.f32.mrb[0].mxu0
    %4937 = vmatprep.mubr.bf16.mxu0 0
    %4938 = vmatmul.mubr.bf16.gmra.mrb[0].mxu0 %v4777
    %v4939 = vpop.f32.mrb[0].mxu0
    %v4940 = vadd.f32 0.0, %v4939
    %v4941 = vpop.f32.mrb[0].mxu0
    %v4942 = vpop.f32.mrb[0].mxu0
    %v4943 = vadd.f32 0.0, %v4942
    %v4944 = vpop.f32.mrb[0].mxu0
    %4945 = vmatprep.mubr.bf16.mxu0 0
    %4946 = vmatmul.mubr.bf16.gmra.mrb[0].mxu0 %v4780
    %v4947 = vpop.f32.mrb[0].mxu0
    %v4948 = vadd.f32 0.0, %v4947
    %v4949 = vpop.f32.mrb[0].mxu0
    %v4950 = vpop.f32.mrb[0].mxu0
    %v4951 = vadd.f32 0.0, %v4950
    %v4952 = vpop.f32.mrb[0].mxu0
    %4953 = vmatprep.mubr.bf16.mxu0 0
    %4954 = vmatmul.mubr.bf16.gmra.mrb[0].mxu0 %v4783
    %v4955 = vpop.f32.mrb[0].mxu0
    %v4956 = vadd.f32 0.0, %v4955
    %v4957 = vpop.f32.mrb[0].mxu0
    %v4958 = vpop.f32.mrb[0].mxu0
    %v4959 = vadd.f32 0.0, %v4958
    %v4960 = vpop.f32.mrb[0].mxu0
    %4961 = vmatprep.mubr.bf16.mxu0 0
    %4962 = vmatmul.mubr.bf16.gmra.mrb[0].mxu0 %v4786
    %v4963 = vpop.f32.mrb[0].mxu0
    %v4964 = vadd.f32 0.0, %v4963
    %v4965 = vpop.f32.mrb[0].mxu0
    %v4966 = vpop.f32.mrb[0].mxu0
    %v4967 = vadd.f32 0.0, %v4966
    %v4968 = vpop.f32.mrb[0].mxu0
    %4969 = vmatprep.mubr.bf16.mxu0 0
    %4970 = vmatmul.mubr.bf16.gmra.mrb[0].mxu0 %v4789
    %v4971 = vpop.f32.mrb[0].mxu0
    %v4972 = vadd.f32 0.0, %v4971
    %v4973 = vpop.f32.mrb[0].mxu0
    %v4974 = vpop.f32.mrb[0].mxu0
    %v4975 = vadd.f32 0.0, %v4974
    %v4976 = vpop.f32.mrb[0].mxu0
    %4977 = vmatprep.mubr.bf16.mxu0 0
    %4978 = vmatmul.mubr.bf16.gmra.mrb[0].mxu0 %v4792
    %v4979 = vpop.f32.mrb[0].mxu0
    %v4980 = vadd.f32 0.0, %v4979
    %v4981 = vpop.f32.mrb[0].mxu0
    %v4982 = vpop.f32.mrb[0].mxu0
    %v4983 = vadd.f32 0.0, %v4982
    %v4984 = vpop.f32.mrb[0].mxu0
    %4985 = vmatprep.mubr.bf16.mxu0 0
    %4986 = vmatmul.mubr.bf16.gmra.mrb[0].mxu0 %v4795
    %v4987 = vpop.f32.mrb[0].mxu0
    %v4988 = vadd.f32 0.0, %v4987
    %v4989 = vpop.f32.mrb[0].mxu0
    %v4990 = vpop.f32.mrb[0].mxu0
    %v4991 = vadd.f32 0.0, %v4990
    %v4992 = vpop.f32.mrb[0].mxu0
    %4993 = vmatprep.mubr.bf16.mxu0 0
    %4994 = vmatmul.mubr.bf16.gmra.mrb[0].mxu0 %v4798
    %v4995 = vpop.f32.mrb[0].mxu0
    %v4996 = vadd.f32 0.0, %v4995
    %v4997 = vpop.f32.mrb[0].mxu0
    %v4998 = vpop.f32.mrb[0].mxu0
    %v4999 = vadd.f32 0.0, %v4998
    %v5000 = vpop.f32.mrb[0].mxu0
    %5001 = vmatprep.mubr.bf16.mxu0 0
    %5002 = vmatmul.mubr.bf16.gmra.mrb[0].mxu0 %v4801
    %v5003 = vpop.f32.mrb[0].mxu0
    %v5004 = vadd.f32 0.0, %v5003
    %v5005 = vpop.f32.mrb[0].mxu0
    %v5006 = vpop.f32.mrb[0].mxu0
    %v5007 = vadd.f32 0.0, %v5006
    %v5008 = vpop.f32.mrb[0].mxu0
    %5009 = vmatprep.mubr.bf16.mxu0 0
    %5010 = vmatmul.mubr.bf16.gmra.mrb[0].mxu0 %v4804
    %v5011 = vpop.f32.mrb[0].mxu0
    %v5012 = vadd.f32 0.0, %v5011
    %v5013 = vpop.f32.mrb[0].mxu0
    %v5014 = vpop.f32.mrb[0].mxu0
    %v5015 = vadd.f32 0.0, %v5014
    %v5016 = vpop.f32.mrb[0].mxu0
    %5017 = vmatprep.mubr.bf16.mxu0 0
    %5018 = vmatmul.mubr.bf16.gmra.mrb[0].mxu0 %v4807
    %v5019 = vpop.f32.mrb[0].mxu0
    %v5020 = vadd.f32 0.0, %v5019
    %v5021 = vpop.f32.mrb[0].mxu0
    %v5022 = vpop.f32.mrb[0].mxu0
    %v5023 = vadd.f32 0.0, %v5022
    %v5024 = vpop.f32.mrb[0].mxu0
    %5025 = vmatprep.mubr.bf16.mxu0 0
    %5026 = vmatmul.mubr.bf16.gmra.mrb[0].mxu0 %v4810
    %v5027 = vpop.f32.mrb[0].mxu0
    %v5028 = vadd.f32 0.0, %v5027
    %v5029 = vpop.f32.mrb[0].mxu0
    %v5030 = vpop.f32.mrb[0].mxu0
    %v5031 = vadd.f32 0.0, %v5030
    %v5032 = vpop.f32.mrb[0].mxu0
    %5033 = vmatprep.mubr.bf16.mxu0 0
    %5034 = vmatmul.mubr.bf16.gmra.mrb[0].mxu0 %v4813
    %v5035 = vpop.f32.mrb[0].mxu0
    %v5036 = vadd.f32 0.0, %v5035
    %v5037 = vpop.f32.mrb[0].mxu0
    %v5038 = vpop.f32.mrb[0].mxu0
    %v5039 = vadd.f32 0.0, %v5038
    %v5040 = vpop.f32.mrb[0].mxu0
    %5041 = vmatprep.mubr.bf16.mxu0 0
    %5042 = vmatmul.mubr.bf16.gmra.mrb[0].mxu0 %v4816
    %v5043 = vpop.f32.mrb[0].mxu0
    %v5044 = vadd.f32 0.0, %v5043
    %v5045 = vpop.f32.mrb[0].mxu0
    %v5046 = vpop.f32.mrb[0].mxu0
    %v5047 = vadd.f32 0.0, %v5046
    %v5048 = vpop.f32.mrb[0].mxu0
    %5049 = vmatprep.mubr.bf16.mxu0 0
    %5050 = vmatmul.mubr.bf16.gmra.mrb[0].mxu0 %v4819
    %v5051 = vpop.f32.mrb[0].mxu0
    %v5052 = vadd.f32 0.0, %v5051
    %v5053 = vpop.f32.mrb[0].mxu0
    %v5054 = vpop.f32.mrb[0].mxu0
    %v5055 = vadd.f32 0.0, %v5054
    %v5056 = vpop.f32.mrb[0].mxu0
    %5057 = vmatprep.mubr.bf16.mxu0 0
    %5058 = vmatmul.mubr.bf16.gmra.mrb[0].mxu0 %v4822
    %v5059 = vpop.f32.mrb[0].mxu0
    %v5060 = vadd.f32 0.0, %v5059
    %v5061 = vpop.f32.mrb[0].mxu0
    %v5062 = vpop.f32.mrb[0].mxu0
    %v5063 = vadd.f32 0.0, %v5062
    %v5064 = vpop.f32.mrb[0].mxu0
    %5065 = vmatprep.mubr.bf16.mxu0 0
    %5066 = vmatmul.mubr.bf16.gmra.mrb[0].mxu0 %v4825
    %v5067 = vpop.f32.mrb[0].mxu0
    %v5068 = vadd.f32 0.0, %v5067
    %v5069 = vpop.f32.mrb[0].mxu0
    %v5070 = vpop.f32.mrb[0].mxu0
    %v5071 = vadd.f32 0.0, %v5070
    %v5072 = vpop.f32.mrb[0].mxu0
    %5073 = vmatprep.mubr.bf16.mxu0 0
    %5074 = vmatmul.mubr.bf16.gmra.mrb[0].mxu0 %v4828
    %v5075 = vpop.f32.mrb[0].mxu0
    %v5076 = vadd.f32 0.0, %v5075
    %v5077 = vpop.f32.mrb[0].mxu0
    %v5078 = vpop.f32.mrb[0].mxu0
    %v5079 = vadd.f32 0.0, %v5078
    %v5080 = vpop.f32.mrb[0].mxu0
    %5081 = vmatprep.mubr.bf16.mxu0 0
    %5082 = vmatmul.mubr.bf16.gmra.mrb[0].mxu0 %v4831
    %v5083 = vpop.f32.mrb[0].mxu0
    %v5084 = vadd.f32 0.0, %v5083
    %v5085 = vpop.f32.mrb[0].mxu0
    %v5086 = vpop.f32.mrb[0].mxu0
    %v5087 = vadd.f32 0.0, %v5086
    %v5088 = vpop.f32.mrb[0].mxu0
    %5089 = vmatprep.mubr.bf16.mxu0 0
    %5090 = vmatmul.mubr.bf16.gmra.mrb[0].mxu0 %v4834
    %v5091 = vpop.f32.mrb[0].mxu0
    %v5092 = vadd.f32 0.0, %v5091
    %v5093 = vpop.f32.mrb[0].mxu0
    %v5094 = vpop.f32.mrb[0].mxu0
    %v5095 = vadd.f32 0.0, %v5094
    %v5096 = vpop.f32.mrb[0].mxu0
    %5097 = vmatprep.mubr.bf16.mxu0 0
    %5098 = vmatmul.mubr.bf16.gmra.mrb[0].mxu0 %v4837
    %v5099 = vpop.f32.mrb[0].mxu0
    %v5100 = vadd.f32 0.0, %v5099
    %v5101 = vpop.f32.mrb[0].mxu0
    %v5102 = vpop.f32.mrb[0].mxu0
    %v5103 = vadd.f32 0.0, %v5102
    %v5104 = vpop.f32.mrb[0].mxu0
    %5105 = vmatprep.mubr.bf16.mxu0 0
    %5106 = vmatmul.mubr.bf16.gmra.mrb[0].mxu0 %v4840
    %v5107 = vpop.f32.mrb[0].mxu0
    %v5108 = vadd.f32 0.0, %v5107
    %v5109 = vpop.f32.mrb[0].mxu0
    %v5110 = vpop.f32.mrb[0].mxu0
    %v5111 = vadd.f32 0.0, %v5110
    %v5112 = vpop.f32.mrb[0].mxu0
    %5113 = vmatprep.mubr.bf16.mxu0 0
    %5114 = vmatmul.mubr.bf16.gmra.mrb[0].mxu0 %v4843
    %v5115 = vpop.f32.mrb[0].mxu0
    %v5116 = vadd.f32 0.0, %v5115
    %v5117 = vpop.f32.mrb[0].mxu0
    %v5118 = vpop.f32.mrb[0].mxu0
    %v5119 = vadd.f32 0.0, %v5118
    %v5120 = vpop.f32.mrb[0].mxu0
    %5121 = vmatprep.mubr.bf16.mxu0 0
    %5122 = vmatmul.mubr.bf16.gmra.mrb[0].mxu0 %v4846
    %v5123 = vpop.f32.mrb[0].mxu0
    %v5124 = vadd.f32 0.0, %v5123
    %v5125 = vpop.f32.mrb[0].mxu0
    %v5126 = vpop.f32.mrb[0].mxu0
    %v5127 = vadd.f32 0.0, %v5126
    %v5128 = vpop.f32.mrb[0].mxu0
    %5129 = vmatprep.mubr.bf16.mxu0 0
    %5130 = vmatmul.mubr.bf16.gmra.mrb[0].mxu0 %v4849
    %v5131 = vpop.f32.mrb[0].mxu0
    %v5132 = vadd.f32 0.0, %v5131
    %v5133 = vpop.f32.mrb[0].mxu0
    %v5134 = vpop.f32.mrb[0].mxu0
    %v5135 = vadd.f32 0.0, %v5134
    %v5136 = vpop.f32.mrb[0].mxu0
    %5137 = vmatprep.mubr.bf16.mxu0 0
    %5138 = vmatmul.mubr.bf16.gmra.mrb[0].mxu0 %v4852
    %v5139 = vpop.f32.mrb[0].mxu0
    %v5140 = vadd.f32 0.0, %v5139
    %v5141 = vpop.f32.mrb[0].mxu0
    %v5142 = vpop.f32.mrb[0].mxu0
    %v5143 = vadd.f32 0.0, %v5142
    %v5144 = vpop.f32.mrb[0].mxu0
    %5145 = vdwg.mxu0
    %v5146 = vmul.f32 %v4892, %v4892
    %v5147 = vmul.f32 %v4895, %v4895
    %v5148 = vmul.f32 %v4900, %v4900
    %v5149 = vmul.f32 %v4903, %v4903
    %v5150 = vmul.f32 %v4908, %v4908
    %v5151 = vmul.f32 %v4911, %v4911
    %v5152 = vmul.f32 %v4916, %v4916
    %v5153 = vmul.f32 %v4919, %v4919
    %v5154 = vmul.f32 %v4924, %v4924
    %v5155 = vmul.f32 %v4927, %v4927
    %v5156 = vmul.f32 %v4932, %v4932
    %v5157 = vmul.f32 %v4935, %v4935
    %v5158 = vmul.f32 %v4940, %v4940
    %v5159 = vmul.f32 %v4943, %v4943
    %v5160 = vmul.f32 %v4948, %v4948
    %v5161 = vmul.f32 %v4951, %v4951
    %v5162 = vmul.f32 %v4956, %v4956
    %v5163 = vmul.f32 %v4959, %v4959
    %v5164 = vmul.f32 %v4964, %v4964
    %v5165 = vmul.f32 %v4967, %v4967
    %v5166 = vmul.f32 %v4972, %v4972
    %v5167 = vmul.f32 %v4975, %v4975
    %v5168 = vmul.f32 %v4980, %v4980
    %v5169 = vmul.f32 %v4983, %v4983
    %v5170 = vmul.f32 %v4988, %v4988
    %v5171 = vmul.f32 %v4991, %v4991
    %v5172 = vmul.f32 %v4996, %v4996
    %v5173 = vmul.f32 %v4999, %v4999
    %v5174 = vmul.f32 %v5004, %v5004
    %v5175 = vmul.f32 %v5007, %v5007
    %v5176 = vmul.f32 %v5012, %v5012
    %v5177 = vmul.f32 %v5015, %v5015
    %v5178 = vmul.f32 %v5020, %v5020
    %v5179 = vmul.f32 %v5023, %v5023
    %v5180 = vmul.f32 %v5028, %v5028
    %v5181 = vmul.f32 %v5031, %v5031
    %v5182 = vmul.f32 %v5036, %v5036
    %v5183 = vmul.f32 %v5039, %v5039
    %v5184 = vmul.f32 %v5044, %v5044
    %v5185 = vmul.f32 %v5047, %v5047
    %v5186 = vmul.f32 %v5052, %v5052
    %v5187 = vmul.f32 %v5055, %v5055
    %v5188 = vmul.f32 %v5060, %v5060
    %v5189 = vmul.f32 %v5063, %v5063
    %v5190 = vmul.f32 %v5068, %v5068
    %v5191 = vmul.f32 %v5071, %v5071
    %v5192 = vmul.f32 %v5076, %v5076
    %v5193 = vmul.f32 %v5079, %v5079
    %v5194 = vmul.f32 %v5084, %v5084
    %v5195 = vmul.f32 %v5087, %v5087
    %v5196 = vmul.f32 %v5092, %v5092
    %v5197 = vmul.f32 %v5095, %v5095
    %v5198 = vmul.f32 %v5100, %v5100
    %v5199 = vmul.f32 %v5103, %v5103
    %v5200 = vmul.f32 %v5108, %v5108
    %v5201 = vmul.f32 %v5111, %v5111
    %v5202 = vmul.f32 %v5116, %v5116
    %v5203 = vmul.f32 %v5119, %v5119
    %v5204 = vmul.f32 %v5124, %v5124
    %v5205 = vmul.f32 %v5127, %v5127
    %v5206 = vmul.f32 %v5132, %v5132
    %v5207 = vmul.f32 %v5135, %v5135
    %v5208 = vmul.f32 %v5140, %v5140
    %v5209 = vmul.f32 %v5143, %v5143
    %5274 = vrot.lane.b32.xlu0 %v5146, 16
    %v5275 = vpop.permute.xlu0 %5274
    %5276 = vrot.lane.b32.xlu0 %v5147, 16
    %v5277 = vpop.permute.xlu0 %5276
    %5278 = vrot.lane.b32.xlu0 %v5148, 16
    %v5279 = vpop.permute.xlu0 %5278
    %5280 = vrot.lane.b32.xlu0 %v5149, 16
    %v5281 = vpop.permute.xlu0 %5280
    %5282 = vrot.lane.b32.xlu0 %v5150, 16
    %v5283 = vpop.permute.xlu0 %5282
    %5284 = vrot.lane.b32.xlu0 %v5151, 16
    %v5285 = vpop.permute.xlu0 %5284
    %5286 = vrot.lane.b32.xlu0 %v5152, 16
    %v5287 = vpop.permute.xlu0 %5286
    %5288 = vrot.lane.b32.xlu0 %v5153, 16
    %v5289 = vpop.permute.xlu0 %5288
    %5290 = vrot.lane.b32.xlu0 %v5154, 16
    %v5291 = vpop.permute.xlu0 %5290
    %5292 = vrot.lane.b32.xlu0 %v5155, 16
    %v5293 = vpop.permute.xlu0 %5292
    %5294 = vrot.lane.b32.xlu0 %v5156, 16
    %v5295 = vpop.permute.xlu0 %5294
    %5296 = vrot.lane.b32.xlu0 %v5157, 16
    %v5297 = vpop.permute.xlu0 %5296
    %5298 = vrot.lane.b32.xlu0 %v5158, 16
    %v5299 = vpop.permute.xlu0 %5298
    %5300 = vrot.lane.b32.xlu0 %v5159, 16
    %v5301 = vpop.permute.xlu0 %5300
    %5302 = vrot.lane.b32.xlu0 %v5160, 16
    %v5303 = vpop.permute.xlu0 %5302
    %5304 = vrot.lane.b32.xlu0 %v5161, 16
    %v5305 = vpop.permute.xlu0 %5304
    %5306 = vrot.lane.b32.xlu0 %v5162, 16
    %v5307 = vpop.permute.xlu0 %5306
    %5308 = vrot.lane.b32.xlu0 %v5163, 16
    %v5309 = vpop.permute.xlu0 %5308
    %5310 = vrot.lane.b32.xlu0 %v5164, 16
    %v5311 = vpop.permute.xlu0 %5310
    %5312 = vrot.lane.b32.xlu0 %v5165, 16
    %v5313 = vpop.permute.xlu0 %5312
    %5314 = vrot.lane.b32.xlu0 %v5166, 16
    %v5315 = vpop.permute.xlu0 %5314
    %5316 = vrot.lane.b32.xlu0 %v5167, 16
    %v5317 = vpop.permute.xlu0 %5316
    %5318 = vrot.lane.b32.xlu0 %v5168, 16
    %v5319 = vpop.permute.xlu0 %5318
    %5320 = vrot.lane.b32.xlu0 %v5169, 16
    %v5321 = vpop.permute.xlu0 %5320
    %5322 = vrot.lane.b32.xlu0 %v5170, 16
    %v5323 = vpop.permute.xlu0 %5322
    %5324 = vrot.lane.b32.xlu0 %v5171, 16
    %v5325 = vpop.permute.xlu0 %5324
    %5326 = vrot.lane.b32.xlu0 %v5172, 16
    %v5327 = vpop.permute.xlu0 %5326
    %5328 = vrot.lane.b32.xlu0 %v5173, 16
    %v5329 = vpop.permute.xlu0 %5328
    %5330 = vrot.lane.b32.xlu0 %v5174, 16
    %v5331 = vpop.permute.xlu0 %5330
    %5332 = vrot.lane.b32.xlu0 %v5175, 16
    %v5333 = vpop.permute.xlu0 %5332
    %5334 = vrot.lane.b32.xlu0 %v5176, 16
    %v5335 = vpop.permute.xlu0 %5334
    %5336 = vrot.lane.b32.xlu0 %v5177, 16
    %v5337 = vpop.permute.xlu0 %5336
    %5338 = vrot.lane.b32.xlu0 %v5178, 16
    %v5339 = vpop.permute.xlu0 %5338
    %5340 = vrot.lane.b32.xlu0 %v5179, 16
    %v5341 = vpop.permute.xlu0 %5340
    %5342 = vrot.lane.b32.xlu0 %v5180, 16
    %v5343 = vpop.permute.xlu0 %5342
    %5344 = vrot.lane.b32.xlu0 %v5181, 16
    %v5345 = vpop.permute.xlu0 %5344
    %5346 = vrot.lane.b32.xlu0 %v5182, 16
    %v5347 = vpop.permute.xlu0 %5346
    %5348 = vrot.lane.b32.xlu0 %v5183, 16
    %v5349 = vpop.permute.xlu0 %5348
    %5350 = vrot.lane.b32.xlu0 %v5184, 16
    %v5351 = vpop.permute.xlu0 %5350
    %5352 = vrot.lane.b32.xlu0 %v5185, 16
    %v5353 = vpop.permute.xlu0 %5352
    %5354 = vrot.lane.b32.xlu0 %v5186, 16
    %v5355 = vpop.permute.xlu0 %5354
    %5356 = vrot.lane.b32.xlu0 %v5187, 16
    %v5357 = vpop.permute.xlu0 %5356
    %5358 = vrot.lane.b32.xlu0 %v5188, 16
    %v5359 = vpop.permute.xlu0 %5358
    %5360 = vrot.lane.b32.xlu0 %v5189, 16
    %v5361 = vpop.permute.xlu0 %5360
    %5362 = vrot.lane.b32.xlu0 %v5190, 16
    %v5363 = vpop.permute.xlu0 %5362
    %5364 = vrot.lane.b32.xlu0 %v5191, 16
    %v5365 = vpop.permute.xlu0 %5364
    %5366 = vrot.lane.b32.xlu0 %v5192, 16
    %v5367 = vpop.permute.xlu0 %5366
    %5368 = vrot.lane.b32.xlu0 %v5193, 16
    %v5369 = vpop.permute.xlu0 %5368
    %5370 = vrot.lane.b32.xlu0 %v5194, 16
    %v5371 = vpop.permute.xlu0 %5370
    %5372 = vrot.lane.b32.xlu0 %v5195, 16
    %v5373 = vpop.permute.xlu0 %5372
    %5374 = vrot.lane.b32.xlu0 %v5196, 16
    %v5375 = vpop.permute.xlu0 %5374
    %5376 = vrot.lane.b32.xlu0 %v5197, 16
    %v5377 = vpop.permute.xlu0 %5376
    %5378 = vrot.lane.b32.xlu0 %v5198, 16
    %v5379 = vpop.permute.xlu0 %5378
    %5380 = vrot.lane.b32.xlu0 %v5199, 16
    %v5381 = vpop.permute.xlu0 %5380
    %5382 = vrot.lane.b32.xlu0 %v5200, 16
    %v5383 = vpop.permute.xlu0 %5382
    %5384 = vrot.lane.b32.xlu0 %v5201, 16
    %v5385 = vpop.permute.xlu0 %5384
    %5386 = vrot.lane.b32.xlu0 %v5202, 16
    %v5387 = vpop.permute.xlu0 %5386
    %5388 = vrot.lane.b32.xlu0 %v5203, 16
    %v5389 = vpop.permute.xlu0 %5388
    %5390 = vrot.lane.b32.xlu0 %v5204, 16
    %v5391 = vpop.permute.xlu0 %5390
    %5392 = vrot.lane.b32.xlu0 %v5205, 16
    %v5393 = vpop.permute.xlu0 %5392
    %5394 = vrot.lane.b32.xlu0 %v5206, 16
    %v5395 = vpop.permute.xlu0 %5394
    %5396 = vrot.lane.b32.xlu0 %v5207, 16
    %v5397 = vpop.permute.xlu0 %5396
    %5398 = vrot.lane.b32.xlu0 %v5208, 16
    %v5399 = vpop.permute.xlu0 %5398
    %5400 = vrot.lane.b32.xlu0 %v5209, 16
    %v5401 = vpop.permute.xlu0 %5400
    %v5466 = vsel %vm3162, %v4892, %v5275
    %v5467 = vsel %vm3162, %v4895, %v5277
    %v5468 = vsel %vm3162, %v4900, %v5279
    %v5469 = vsel %vm3162, %v4903, %v5281
    %v5470 = vsel %vm3162, %v4908, %v5283
    %v5471 = vsel %vm3162, %v4911, %v5285
    %v5472 = vsel %vm3162, %v4916, %v5287
    %v5473 = vsel %vm3162, %v4919, %v5289
    %v5474 = vsel %vm3162, %v4924, %v5291
    %v5475 = vsel %vm3162, %v4927, %v5293
    %v5476 = vsel %vm3162, %v4932, %v5295
    %v5477 = vsel %vm3162, %v4935, %v5297
    %v5478 = vsel %vm3162, %v4940, %v5299
    %v5479 = vsel %vm3162, %v4943, %v5301
    %v5480 = vsel %vm3162, %v4948, %v5303
    %v5481 = vsel %vm3162, %v4951, %v5305
    %v5482 = vsel %vm3162, %v4956, %v5307
    %v5483 = vsel %vm3162, %v4959, %v5309
    %v5484 = vsel %vm3162, %v4964, %v5311
    %v5485 = vsel %vm3162, %v4967, %v5313
    %v5486 = vsel %vm3162, %v4972, %v5315
    %v5487 = vsel %vm3162, %v4975, %v5317
    %v5488 = vsel %vm3162, %v4980, %v5319
    %v5489 = vsel %vm3162, %v4983, %v5321
    %v5490 = vsel %vm3162, %v4988, %v5323
    %v5491 = vsel %vm3162, %v4991, %v5325
    %v5492 = vsel %vm3162, %v4996, %v5327
    %v5493 = vsel %vm3162, %v4999, %v5329
    %v5494 = vsel %vm3162, %v5004, %v5331
    %v5495 = vsel %vm3162, %v5007, %v5333
    %v5496 = vsel %vm3162, %v5012, %v5335
    %v5497 = vsel %vm3162, %v5015, %v5337
    %v5498 = vsel %vm3162, %v5020, %v5339
    %v5499 = vsel %vm3162, %v5023, %v5341
    %v5500 = vsel %vm3162, %v5028, %v5343
    %v5501 = vsel %vm3162, %v5031, %v5345
    %v5502 = vsel %vm3162, %v5036, %v5347
    %v5503 = vsel %vm3162, %v5039, %v5349
    %v5504 = vsel %vm3162, %v5044, %v5351
    %v5505 = vsel %vm3162, %v5047, %v5353
    %v5506 = vsel %vm3162, %v5052, %v5355
    %v5507 = vsel %vm3162, %v5055, %v5357
    %v5508 = vsel %vm3162, %v5060, %v5359
    %v5509 = vsel %vm3162, %v5063, %v5361
    %v5510 = vsel %vm3162, %v5068, %v5363
    %v5511 = vsel %vm3162, %v5071, %v5365
    %v5512 = vsel %vm3162, %v5076, %v5367
    %v5513 = vsel %vm3162, %v5079, %v5369
    %v5514 = vsel %vm3162, %v5084, %v5371
    %v5515 = vsel %vm3162, %v5087, %v5373
    %v5516 = vsel %vm3162, %v5092, %v5375
    %v5517 = vsel %vm3162, %v5095, %v5377
    %v5518 = vsel %vm3162, %v5100, %v5379
    %v5519 = vsel %vm3162, %v5103, %v5381
    %v5520 = vsel %vm3162, %v5108, %v5383
    %v5521 = vsel %vm3162, %v5111, %v5385
    %v5522 = vsel %vm3162, %v5116, %v5387
    %v5523 = vsel %vm3162, %v5119, %v5389
    %v5524 = vsel %vm3162, %v5124, %v5391
    %v5525 = vsel %vm3162, %v5127, %v5393
    %v5526 = vsel %vm3162, %v5132, %v5395
    %v5527 = vsel %vm3162, %v5135, %v5397
    %v5528 = vsel %vm3162, %v5140, %v5399
    %v5529 = vsel %vm3162, %v5143, %v5401
    %v5530 = vsel %vm3420, %v5466, 0.0
    %v5531 = vsel %vm3420, %v5467, 0.0
    %v5532 = vadd.f32 %v5530, %v5531
    %v5533 = vsel %vm3420, %v5468, 0.0
    %v5534 = vadd.f32 %v5532, %v5533
    %v5535 = vsel %vm3420, %v5469, 0.0
    %v5536 = vadd.f32 %v5534, %v5535
    %v5537 = vsel %vm3420, %v5470, 0.0
    %v5538 = vadd.f32 %v5536, %v5537
    %v5539 = vsel %vm3420, %v5471, 0.0
    %v5540 = vadd.f32 %v5538, %v5539
    %v5541 = vsel %vm3420, %v5472, 0.0
    %v5542 = vadd.f32 %v5540, %v5541
    %v5543 = vsel %vm3420, %v5473, 0.0
    %v5544 = vadd.f32 %v5542, %v5543
    %v5545 = vsel %vm3420, %v5474, 0.0
    %v5546 = vadd.f32 %v5544, %v5545
    %v5547 = vsel %vm3420, %v5475, 0.0
    %v5548 = vadd.f32 %v5546, %v5547
    %v5549 = vsel %vm3420, %v5476, 0.0
    %v5550 = vadd.f32 %v5548, %v5549
    %v5551 = vsel %vm3420, %v5477, 0.0
    %v5552 = vadd.f32 %v5550, %v5551
    %v5553 = vsel %vm3420, %v5478, 0.0
    %v5554 = vadd.f32 %v5552, %v5553
    %v5555 = vsel %vm3420, %v5479, 0.0
    %v5556 = vadd.f32 %v5554, %v5555
    %v5557 = vsel %vm3420, %v5480, 0.0
    %v5558 = vadd.f32 %v5556, %v5557
    %v5559 = vsel %vm3420, %v5481, 0.0
    %v5560 = vadd.f32 %v5558, %v5559
    %v5561 = vsel %vm3420, %v5482, 0.0
    %v5562 = vadd.f32 %v5560, %v5561
    %v5563 = vsel %vm3420, %v5483, 0.0
    %v5564 = vadd.f32 %v5562, %v5563
    %v5565 = vsel %vm3420, %v5484, 0.0
    %v5566 = vadd.f32 %v5564, %v5565
    %v5567 = vsel %vm3420, %v5485, 0.0
    %v5568 = vadd.f32 %v5566, %v5567
    %v5569 = vsel %vm3420, %v5486, 0.0
    %v5570 = vadd.f32 %v5568, %v5569
    %v5571 = vsel %vm3420, %v5487, 0.0
    %v5572 = vadd.f32 %v5570, %v5571
    %v5573 = vsel %vm3420, %v5488, 0.0
    %v5574 = vadd.f32 %v5572, %v5573
    %v5575 = vsel %vm3420, %v5489, 0.0
    %v5576 = vadd.f32 %v5574, %v5575
    %v5577 = vsel %vm3420, %v5490, 0.0
    %v5578 = vadd.f32 %v5576, %v5577
    %v5579 = vsel %vm3420, %v5491, 0.0
    %v5580 = vadd.f32 %v5578, %v5579
    %v5581 = vsel %vm3420, %v5492, 0.0
    %v5582 = vadd.f32 %v5580, %v5581
    %v5583 = vsel %vm3420, %v5493, 0.0
    %v5584 = vadd.f32 %v5582, %v5583
    %v5585 = vsel %vm3420, %v5494, 0.0
    %v5586 = vadd.f32 %v5584, %v5585
    %v5587 = vsel %vm3420, %v5495, 0.0
    %v5588 = vadd.f32 %v5586, %v5587
    %v5589 = vsel %vm3420, %v5496, 0.0
    %v5590 = vadd.f32 %v5588, %v5589
    %v5591 = vsel %vm3420, %v5497, 0.0
    %v5592 = vadd.f32 %v5590, %v5591
    %v5593 = vsel %vm3420, %v5498, 0.0
    %v5594 = vadd.f32 %v5592, %v5593
    %v5595 = vsel %vm3420, %v5499, 0.0
    %v5596 = vadd.f32 %v5594, %v5595
    %v5597 = vsel %vm3420, %v5500, 0.0
    %v5598 = vadd.f32 %v5596, %v5597
    %v5599 = vsel %vm3420, %v5501, 0.0
    %v5600 = vadd.f32 %v5598, %v5599
    %v5601 = vsel %vm3420, %v5502, 0.0
    %v5602 = vadd.f32 %v5600, %v5601
    %v5603 = vsel %vm3420, %v5503, 0.0
    %v5604 = vadd.f32 %v5602, %v5603
    %v5605 = vsel %vm3420, %v5504, 0.0
    %v5606 = vadd.f32 %v5604, %v5605
    %v5607 = vsel %vm3420, %v5505, 0.0
    %v5608 = vadd.f32 %v5606, %v5607
    %v5609 = vsel %vm3420, %v5506, 0.0
    %v5610 = vadd.f32 %v5608, %v5609
    %v5611 = vsel %vm3420, %v5507, 0.0
    %v5612 = vadd.f32 %v5610, %v5611
    %v5613 = vsel %vm3420, %v5508, 0.0
    %v5614 = vadd.f32 %v5612, %v5613
    %v5615 = vsel %vm3420, %v5509, 0.0
    %v5616 = vadd.f32 %v5614, %v5615
    %v5617 = vsel %vm3420, %v5510, 0.0
    %v5618 = vadd.f32 %v5616, %v5617
    %v5619 = vsel %vm3420, %v5511, 0.0
    %v5620 = vadd.f32 %v5618, %v5619
    %v5621 = vsel %vm3420, %v5512, 0.0
    %v5622 = vadd.f32 %v5620, %v5621
    %v5623 = vsel %vm3420, %v5513, 0.0
    %v5624 = vadd.f32 %v5622, %v5623
    %v5625 = vsel %vm3420, %v5514, 0.0
    %v5626 = vadd.f32 %v5624, %v5625
    %v5627 = vsel %vm3420, %v5515, 0.0
    %v5628 = vadd.f32 %v5626, %v5627
    %v5629 = vsel %vm3420, %v5516, 0.0
    %v5630 = vadd.f32 %v5628, %v5629
    %v5631 = vsel %vm3420, %v5517, 0.0
    %v5632 = vadd.f32 %v5630, %v5631
    %v5633 = vsel %vm3420, %v5518, 0.0
    %v5634 = vadd.f32 %v5632, %v5633
    %v5635 = vsel %vm3420, %v5519, 0.0
    %v5636 = vadd.f32 %v5634, %v5635
    %v5637 = vsel %vm3420, %v5520, 0.0
    %v5638 = vadd.f32 %v5636, %v5637
    %v5639 = vsel %vm3420, %v5521, 0.0
    %v5640 = vadd.f32 %v5638, %v5639
    %v5641 = vsel %vm3420, %v5522, 0.0
    %v5642 = vadd.f32 %v5640, %v5641
    %v5643 = vsel %vm3420, %v5523, 0.0
    %v5644 = vadd.f32 %v5642, %v5643
    %v5645 = vsel %vm3420, %v5524, 0.0
    %v5646 = vadd.f32 %v5644, %v5645
    %v5647 = vsel %vm3420, %v5525, 0.0
    %v5648 = vadd.f32 %v5646, %v5647
    %v5649 = vsel %vm3420, %v5526, 0.0
    %v5650 = vadd.f32 %v5648, %v5649
    %v5651 = vsel %vm3420, %v5527, 0.0
    %v5652 = vadd.f32 %v5650, %v5651
    %v5653 = vsel %vm3420, %v5528, 0.0
    %v5654 = vadd.f32 %v5652, %v5653
    %v5655 = vsel %vm3420, %v5529, 0.0
    %v5656 = vadd.f32 %v5654, %v5655
    %v5657 = vrot.slane %v5656, 4
    %v5658 = vadd.f32 %v5656, %v5657
    %v5659 = vrot.slane %v5658, 2
    %v5660 = vadd.f32 %v5658, %v5659
    %v5661 = vrot.slane %v5660, 1
    %v5662 = vadd.f32 %v5660, %v5661
    %v5663 = vmul.f32 %v5662, 0.001953125
    %v5664 = vmul.f32 %v5663, %v5663
    %5666 = vrot.lane.b32.xlu0 %v5664, 16
    %v5667 = vpop.permute.xlu0 %5666
    %v5669 = vsub.f32 %v5663, %v5667
    %v5670 = vmax.f32 %v5669, 0.0
    %v5671 = vsub.f32 %v4892, %v5663
    %v5672 = vsub.f32 %v4895, %v5663
    %v5673 = vsub.f32 %v4900, %v5663
    %v5674 = vsub.f32 %v4903, %v5663
    %v5675 = vsub.f32 %v4908, %v5663
    %v5676 = vsub.f32 %v4911, %v5663
    %v5677 = vsub.f32 %v4916, %v5663
    %v5678 = vsub.f32 %v4919, %v5663
    %v5679 = vsub.f32 %v4924, %v5663
    %v5680 = vsub.f32 %v4927, %v5663
    %v5681 = vsub.f32 %v4932, %v5663
    %v5682 = vsub.f32 %v4935, %v5663
    %v5683 = vsub.f32 %v4940, %v5663
    %v5684 = vsub.f32 %v4943, %v5663
    %v5685 = vsub.f32 %v4948, %v5663
    %v5686 = vsub.f32 %v4951, %v5663
    %v5687 = vsub.f32 %v4956, %v5663
    %v5688 = vsub.f32 %v4959, %v5663
    %v5689 = vsub.f32 %v4964, %v5663
    %v5690 = vsub.f32 %v4967, %v5663
    %v5691 = vsub.f32 %v4972, %v5663
    %v5692 = vsub.f32 %v4975, %v5663
    %v5693 = vsub.f32 %v4980, %v5663
    %v5694 = vsub.f32 %v4983, %v5663
    %v5695 = vsub.f32 %v4988, %v5663
    %v5696 = vsub.f32 %v4991, %v5663
    %v5697 = vsub.f32 %v4996, %v5663
    %v5698 = vsub.f32 %v4999, %v5663
    %v5699 = vsub.f32 %v5004, %v5663
    %v5700 = vsub.f32 %v5007, %v5663
    %v5701 = vsub.f32 %v5012, %v5663
    %v5702 = vsub.f32 %v5015, %v5663
    %v5703 = vsub.f32 %v5020, %v5663
    %v5704 = vsub.f32 %v5023, %v5663
    %v5705 = vsub.f32 %v5028, %v5663
    %v5706 = vsub.f32 %v5031, %v5663
    %v5707 = vsub.f32 %v5036, %v5663
    %v5708 = vsub.f32 %v5039, %v5663
    %v5709 = vsub.f32 %v5044, %v5663
    %v5710 = vsub.f32 %v5047, %v5663
    %v5711 = vsub.f32 %v5052, %v5663
    %v5712 = vsub.f32 %v5055, %v5663
    %v5713 = vsub.f32 %v5060, %v5663
    %v5714 = vsub.f32 %v5063, %v5663
    %v5715 = vsub.f32 %v5068, %v5663
    %v5716 = vsub.f32 %v5071, %v5663
    %v5717 = vsub.f32 %v5076, %v5663
    %v5718 = vsub.f32 %v5079, %v5663
    %v5719 = vsub.f32 %v5084, %v5663
    %v5720 = vsub.f32 %v5087, %v5663
    %v5721 = vsub.f32 %v5092, %v5663
    %v5722 = vsub.f32 %v5095, %v5663
    %v5723 = vsub.f32 %v5100, %v5663
    %v5724 = vsub.f32 %v5103, %v5663
    %v5725 = vsub.f32 %v5108, %v5663
    %v5726 = vsub.f32 %v5111, %v5663
    %v5727 = vsub.f32 %v5116, %v5663
    %v5728 = vsub.f32 %v5119, %v5663
    %v5729 = vsub.f32 %v5124, %v5663
    %v5730 = vsub.f32 %v5127, %v5663
    %v5731 = vsub.f32 %v5132, %v5663
    %v5732 = vsub.f32 %v5135, %v5663
    %v5733 = vsub.f32 %v5140, %v5663
    %v5734 = vsub.f32 %v5143, %v5663
    %v5735 = vadd.f32 %v5670, 1e-05
    %v5736 = vrsqrt.pop %v5735
    %v5737 = vlaneseq
    %v5738 = vshrl.u32 %v5737, 7
    %v5739 = vsub.s32 0, %v5738
    %v5740 = vrot.slane %v5736, %v5739
    %5742 = vrot.lane.b32.xlu0 %v5740, 112
    %v5743 = vpop.permute.xlu0 %5742
    %v5745 = vmul.f32 %v5671, %v5743
    %v5746 = vmul.f32 %v5672, %v5743
    %v5747 = vmul.f32 %v5673, %v5743
    %v5748 = vmul.f32 %v5674, %v5743
    %v5749 = vmul.f32 %v5675, %v5743
    %v5750 = vmul.f32 %v5676, %v5743
    %v5751 = vmul.f32 %v5677, %v5743
    %v5752 = vmul.f32 %v5678, %v5743
    %v5753 = vmul.f32 %v5679, %v5743
    %v5754 = vmul.f32 %v5680, %v5743
    %v5755 = vmul.f32 %v5681, %v5743
    %v5756 = vmul.f32 %v5682, %v5743
    %v5757 = vmul.f32 %v5683, %v5743
    %v5758 = vmul.f32 %v5684, %v5743
    %v5759 = vmul.f32 %v5685, %v5743
    %v5760 = vmul.f32 %v5686, %v5743
    %v5761 = vmul.f32 %v5687, %v5743
    %v5762 = vmul.f32 %v5688, %v5743
    %v5763 = vmul.f32 %v5689, %v5743
    %v5764 = vmul.f32 %v5690, %v5743
    %v5765 = vmul.f32 %v5691, %v5743
    %v5766 = vmul.f32 %v5692, %v5743
    %v5767 = vmul.f32 %v5693, %v5743
    %v5768 = vmul.f32 %v5694, %v5743
    %v5769 = vmul.f32 %v5695, %v5743
    %v5770 = vmul.f32 %v5696, %v5743
    %v5771 = vmul.f32 %v5697, %v5743
    %v5772 = vmul.f32 %v5698, %v5743
    %v5773 = vmul.f32 %v5699, %v5743
    %v5774 = vmul.f32 %v5700, %v5743
    %v5775 = vmul.f32 %v5701, %v5743
    %v5776 = vmul.f32 %v5702, %v5743
    %v5777 = vmul.f32 %v5703, %v5743
    %v5778 = vmul.f32 %v5704, %v5743
    %v5779 = vmul.f32 %v5705, %v5743
    %v5780 = vmul.f32 %v5706, %v5743
    %v5781 = vmul.f32 %v5707, %v5743
    %v5782 = vmul.f32 %v5708, %v5743
    %v5783 = vmul.f32 %v5709, %v5743
    %v5784 = vmul.f32 %v5710, %v5743
    %v5785 = vmul.f32 %v5711, %v5743
    %v5786 = vmul.f32 %v5712, %v5743
    %v5787 = vmul.f32 %v5713, %v5743
    %v5788 = vmul.f32 %v5714, %v5743
    %v5789 = vmul.f32 %v5715, %v5743
    %v5790 = vmul.f32 %v5716, %v5743
    %v5791 = vmul.f32 %v5717, %v5743
    %v5792 = vmul.f32 %v5718, %v5743
    %v5793 = vmul.f32 %v5719, %v5743
    %v5794 = vmul.f32 %v5720, %v5743
    %v5795 = vmul.f32 %v5721, %v5743
    %v5796 = vmul.f32 %v5722, %v5743
    %v5797 = vmul.f32 %v5723, %v5743
    %v5798 = vmul.f32 %v5724, %v5743
    %v5799 = vmul.f32 %v5725, %v5743
    %v5800 = vmul.f32 %v5726, %v5743
    %v5801 = vmul.f32 %v5727, %v5743
    %v5802 = vmul.f32 %v5728, %v5743
    %v5803 = vmul.f32 %v5729, %v5743
    %v5804 = vmul.f32 %v5730, %v5743
    %v5805 = vmul.f32 %v5731, %v5743
    %v5806 = vmul.f32 %v5732, %v5743
    %v5807 = vmul.f32 %v5733, %v5743
    %v5808 = vmul.f32 %v5734, %v5743
    %v5809 = vlaneseq
    %v5810 = vshrl.u32 %v5809, 7
    %v5811 = vsub.s32 0, %v5810
    %v5812 = vrot.slane %v29, %v5811
    %v5813 = vmul.f32 %v5745, %v5812
    %v5814 = vmul.f32 %v5746, %v5812
    %v5815 = vmul.f32 %v5747, %v5812
    %v5816 = vmul.f32 %v5748, %v5812
    %v5817 = vmul.f32 %v5749, %v5812
    %v5818 = vmul.f32 %v5750, %v5812
    %v5819 = vmul.f32 %v5751, %v5812
    %v5820 = vmul.f32 %v5752, %v5812
    %v5821 = vmul.f32 %v5753, %v5812
    %v5822 = vmul.f32 %v5754, %v5812
    %v5823 = vmul.f32 %v5755, %v5812
    %v5824 = vmul.f32 %v5756, %v5812
    %v5825 = vmul.f32 %v5757, %v5812
    %v5826 = vmul.f32 %v5758, %v5812
    %v5827 = vmul.f32 %v5759, %v5812
    %v5828 = vmul.f32 %v5760, %v5812
    %v5829 = vmul.f32 %v5761, %v5812
    %v5830 = vmul.f32 %v5762, %v5812
    %v5831 = vmul.f32 %v5763, %v5812
    %v5832 = vmul.f32 %v5764, %v5812
    %v5833 = vmul.f32 %v5765, %v5812
    %v5834 = vmul.f32 %v5766, %v5812
    %v5835 = vmul.f32 %v5767, %v5812
    %v5836 = vmul.f32 %v5768, %v5812
    %v5837 = vmul.f32 %v5769, %v5812
    %v5838 = vmul.f32 %v5770, %v5812
    %v5839 = vmul.f32 %v5771, %v5812
    %v5840 = vmul.f32 %v5772, %v5812
    %v5841 = vmul.f32 %v5773, %v5812
    %v5842 = vmul.f32 %v5774, %v5812
    %v5843 = vmul.f32 %v5775, %v5812
    %v5844 = vmul.f32 %v5776, %v5812
    %v5845 = vmul.f32 %v5777, %v5812
    %v5846 = vmul.f32 %v5778, %v5812
    %v5847 = vmul.f32 %v5779, %v5812
    %v5848 = vmul.f32 %v5780, %v5812
    %v5849 = vmul.f32 %v5781, %v5812
    %v5850 = vmul.f32 %v5782, %v5812
    %v5851 = vmul.f32 %v5783, %v5812
    %v5852 = vmul.f32 %v5784, %v5812
    %v5853 = vmul.f32 %v5785, %v5812
    %v5854 = vmul.f32 %v5786, %v5812
    %v5855 = vmul.f32 %v5787, %v5812
    %v5856 = vmul.f32 %v5788, %v5812
    %v5857 = vmul.f32 %v5789, %v5812
    %v5858 = vmul.f32 %v5790, %v5812
    %v5859 = vmul.f32 %v5791, %v5812
    %v5860 = vmul.f32 %v5792, %v5812
    %v5861 = vmul.f32 %v5793, %v5812
    %v5862 = vmul.f32 %v5794, %v5812
    %v5863 = vmul.f32 %v5795, %v5812
    %v5864 = vmul.f32 %v5796, %v5812
    %v5865 = vmul.f32 %v5797, %v5812
    %v5866 = vmul.f32 %v5798, %v5812
    %v5867 = vmul.f32 %v5799, %v5812
    %v5868 = vmul.f32 %v5800, %v5812
    %v5869 = vmul.f32 %v5801, %v5812
    %v5870 = vmul.f32 %v5802, %v5812
    %v5871 = vmul.f32 %v5803, %v5812
    %v5872 = vmul.f32 %v5804, %v5812
    %v5873 = vmul.f32 %v5805, %v5812
    %v5874 = vmul.f32 %v5806, %v5812
    %v5875 = vmul.f32 %v5807, %v5812
    %v5876 = vmul.f32 %v5808, %v5812
    %v5877 = vlaneseq
    %v5878 = vshrl.u32 %v5877, 7
    %v5879 = vsub.s32 0, %v5878
    %v5880 = vrot.slane %v30, %v5879
    %v5881 = vadd.f32 %v5813, %v5880
    %v5882 = vadd.f32 %v5814, %v5880
    %v5883 = vadd.f32 %v5815, %v5880
    %v5884 = vadd.f32 %v5816, %v5880
    %v5885 = vadd.f32 %v5817, %v5880
    %v5886 = vadd.f32 %v5818, %v5880
    %v5887 = vadd.f32 %v5819, %v5880
    %v5888 = vadd.f32 %v5820, %v5880
    %v5889 = vadd.f32 %v5821, %v5880
    %v5890 = vadd.f32 %v5822, %v5880
    %v5891 = vadd.f32 %v5823, %v5880
    %v5892 = vadd.f32 %v5824, %v5880
    %v5893 = vadd.f32 %v5825, %v5880
    %v5894 = vadd.f32 %v5826, %v5880
    %v5895 = vadd.f32 %v5827, %v5880
    %v5896 = vadd.f32 %v5828, %v5880
    %v5897 = vadd.f32 %v5829, %v5880
    %v5898 = vadd.f32 %v5830, %v5880
    %v5899 = vadd.f32 %v5831, %v5880
    %v5900 = vadd.f32 %v5832, %v5880
    %v5901 = vadd.f32 %v5833, %v5880
    %v5902 = vadd.f32 %v5834, %v5880
    %v5903 = vadd.f32 %v5835, %v5880
    %v5904 = vadd.f32 %v5836, %v5880
    %v5905 = vadd.f32 %v5837, %v5880
    %v5906 = vadd.f32 %v5838, %v5880
    %v5907 = vadd.f32 %v5839, %v5880
    %v5908 = vadd.f32 %v5840, %v5880
    %v5909 = vadd.f32 %v5841, %v5880
    %v5910 = vadd.f32 %v5842, %v5880
    %v5911 = vadd.f32 %v5843, %v5880
    %v5912 = vadd.f32 %v5844, %v5880
    %v5913 = vadd.f32 %v5845, %v5880
    %v5914 = vadd.f32 %v5846, %v5880
    %v5915 = vadd.f32 %v5847, %v5880
    %v5916 = vadd.f32 %v5848, %v5880
    %v5917 = vadd.f32 %v5849, %v5880
    %v5918 = vadd.f32 %v5850, %v5880
    %v5919 = vadd.f32 %v5851, %v5880
    %v5920 = vadd.f32 %v5852, %v5880
    %v5921 = vadd.f32 %v5853, %v5880
    %v5922 = vadd.f32 %v5854, %v5880
    %v5923 = vadd.f32 %v5855, %v5880
    %v5924 = vadd.f32 %v5856, %v5880
    %v5925 = vadd.f32 %v5857, %v5880
    %v5926 = vadd.f32 %v5858, %v5880
    %v5927 = vadd.f32 %v5859, %v5880
    %v5928 = vadd.f32 %v5860, %v5880
    %v5929 = vadd.f32 %v5861, %v5880
    %v5930 = vadd.f32 %v5862, %v5880
    %v5931 = vadd.f32 %v5863, %v5880
    %v5932 = vadd.f32 %v5864, %v5880
    %v5933 = vadd.f32 %v5865, %v5880
    %v5934 = vadd.f32 %v5866, %v5880
    %v5935 = vadd.f32 %v5867, %v5880
    %v5936 = vadd.f32 %v5868, %v5880
    %v5937 = vadd.f32 %v5869, %v5880
    %v5938 = vadd.f32 %v5870, %v5880
    %v5939 = vadd.f32 %v5871, %v5880
    %v5940 = vadd.f32 %v5872, %v5880
    %v5941 = vadd.f32 %v5873, %v5880
    %v5942 = vadd.f32 %v5874, %v5880
    %v5943 = vadd.f32 %v5875, %v5880
    %v5944 = vadd.f32 %v5876, %v5880
    %v5945 = vld [vmem:[%s5 + $0x6] sm:$0x1]
    %v5946 = vld [vmem:[%s5 + $0x7] sm:$0x1]
    %v5947 = vld [vmem:[%s4] sm:$0xf]
    %v5949 = vsel %vm353, %v5947, 0
    %5951 = vmatprep.subr.bf16.mxu0 0
    %5952 = vmatpush1.bf16.msra.mxu0 %v5949
    %5953 = vmatprep.subr.bf16.mxu0 0
    %5954 = vmatpush1.bf16.msra.mxu0 0
    %5955 = vmatprep.subr.bf16.mxu0 0
    %5956 = vmatpush1.bf16.msra.mxu0 0
    %5957 = vmatprep.subr.bf16.mxu0 0
    %5958 = vmatpush1.bf16.msra.mxu0 0
    %5959 = vmatprep.subr.bf16.mxu0 0
    %5960 = vmatpush1.bf16.msra.mxu0 0
    %5961 = vmatprep.subr.bf16.mxu0 0
    %5962 = vmatpush1.bf16.msra.mxu0 0
    %5963 = vmatprep.subr.bf16.mxu0 0
    %5964 = vmatpush1.bf16.msra.mxu0 0
    %5965 = vmatprep.subr.bf16.mxu0 0
    %5966 = vmatpush1.bf16.msra.mxu0 0
    %5967 = vmatprep.subr.bf16.mxu0 0
    %5968 = vmatpush1.bf16.msra.mxu0 0
    %5969 = vmatprep.subr.bf16.mxu0 0
    %5970 = vmatpush1.bf16.msra.mxu0 0
    %5971 = vmatprep.subr.bf16.mxu0 0
    %5972 = vmatpush1.bf16.msra.mxu0 0
    %5973 = vmatprep.subr.bf16.mxu0 0
    %5974 = vmatpush1.bf16.msra.mxu0 0
    %5975 = vmatprep.subr.bf16.mxu0 0
    %5976 = vmatpush1.bf16.msra.mxu0 0
    %5977 = vmatprep.subr.bf16.mxu0 0
    %5978 = vmatpush1.bf16.msra.mxu0 0
    %5979 = vmatprep.subr.bf16.mxu0 0
    %5980 = vmatpush1.bf16.msra.mxu0 0
    %5981 = vmatprep.subr.bf16.mxu0 0
    %5982 = vmatpush1.bf16.msra.mxu0 0
    %5983 = vmatprep.mubr.bf16.mxu0 0
    %5984 = vmatmul.mubr.bf16.gmra.mrb[0].mxu0 %v258
    %v5985 = vpop.f32.mrb[0].mxu0
    %v5986 = vadd.f32 0.0, %v5985
    %v5987 = vpop.f32.mrb[0].mxu0
    %v5988 = vpop.f32.mrb[0].mxu0
    %v5989 = vadd.f32 0.0, %v5988
    %v5990 = vpop.f32.mrb[0].mxu0
    %5991 = vmatprep.mubr.bf16.mxu0 0
    %5992 = vmatmul.mubr.bf16.gmra.mrb[0].mxu0 %v261
    %v5993 = vpop.f32.mrb[0].mxu0
    %v5994 = vadd.f32 0.0, %v5993
    %v5995 = vpop.f32.mrb[0].mxu0
    %v5996 = vpop.f32.mrb[0].mxu0
    %v5997 = vadd.f32 0.0, %v5996
    %v5998 = vpop.f32.mrb[0].mxu0
    %5999 = vmatprep.mubr.bf16.mxu0 0
    %6000 = vmatmul.mubr.bf16.gmra.mrb[0].mxu0 %v264
    %v6001 = vpop.f32.mrb[0].mxu0
    %v6002 = vadd.f32 0.0, %v6001
    %v6003 = vpop.f32.mrb[0].mxu0
    %v6004 = vpop.f32.mrb[0].mxu0
    %v6005 = vadd.f32 0.0, %v6004
    %v6006 = vpop.f32.mrb[0].mxu0
    %6007 = vmatprep.mubr.bf16.mxu0 0
    %6008 = vmatmul.mubr.bf16.gmra.mrb[0].mxu0 %v267
    %v6009 = vpop.f32.mrb[0].mxu0
    %v6010 = vadd.f32 0.0, %v6009
    %v6011 = vpop.f32.mrb[0].mxu0
    %v6012 = vpop.f32.mrb[0].mxu0
    %v6013 = vadd.f32 0.0, %v6012
    %v6014 = vpop.f32.mrb[0].mxu0
    %6015 = vmatprep.mubr.bf16.mxu0 0
    %6016 = vmatmul.mubr.bf16.gmra.mrb[0].mxu0 %v270
    %v6017 = vpop.f32.mrb[0].mxu0
    %v6018 = vadd.f32 0.0, %v6017
    %v6019 = vpop.f32.mrb[0].mxu0
    %v6020 = vpop.f32.mrb[0].mxu0
    %v6021 = vadd.f32 0.0, %v6020
    %v6022 = vpop.f32.mrb[0].mxu0
    %6023 = vmatprep.mubr.bf16.mxu0 0
    %6024 = vmatmul.mubr.bf16.gmra.mrb[0].mxu0 %v273
    %v6025 = vpop.f32.mrb[0].mxu0
    %v6026 = vadd.f32 0.0, %v6025
    %v6027 = vpop.f32.mrb[0].mxu0
    %v6028 = vpop.f32.mrb[0].mxu0
    %v6029 = vadd.f32 0.0, %v6028
    %v6030 = vpop.f32.mrb[0].mxu0
    %6031 = vmatprep.mubr.bf16.mxu0 0
    %6032 = vmatmul.mubr.bf16.gmra.mrb[0].mxu0 %v276
    %v6033 = vpop.f32.mrb[0].mxu0
    %v6034 = vadd.f32 0.0, %v6033
    %v6035 = vpop.f32.mrb[0].mxu0
    %v6036 = vpop.f32.mrb[0].mxu0
    %v6037 = vadd.f32 0.0, %v6036
    %v6038 = vpop.f32.mrb[0].mxu0
    %6039 = vmatprep.mubr.bf16.mxu0 0
    %6040 = vmatmul.mubr.bf16.gmra.mrb[0].mxu0 %v279
    %v6041 = vpop.f32.mrb[0].mxu0
    %v6042 = vadd.f32 0.0, %v6041
    %v6043 = vpop.f32.mrb[0].mxu0
    %v6044 = vpop.f32.mrb[0].mxu0
    %v6045 = vadd.f32 0.0, %v6044
    %v6046 = vpop.f32.mrb[0].mxu0
    %6047 = vmatprep.mubr.bf16.mxu0 0
    %6048 = vmatmul.mubr.bf16.gmra.mrb[0].mxu0 %v282
    %v6049 = vpop.f32.mrb[0].mxu0
    %v6050 = vadd.f32 0.0, %v6049
    %v6051 = vpop.f32.mrb[0].mxu0
    %v6052 = vpop.f32.mrb[0].mxu0
    %v6053 = vadd.f32 0.0, %v6052
    %v6054 = vpop.f32.mrb[0].mxu0
    %6055 = vmatprep.mubr.bf16.mxu0 0
    %6056 = vmatmul.mubr.bf16.gmra.mrb[0].mxu0 %v285
    %v6057 = vpop.f32.mrb[0].mxu0
    %v6058 = vadd.f32 0.0, %v6057
    %v6059 = vpop.f32.mrb[0].mxu0
    %v6060 = vpop.f32.mrb[0].mxu0
    %v6061 = vadd.f32 0.0, %v6060
    %v6062 = vpop.f32.mrb[0].mxu0
    %6063 = vmatprep.mubr.bf16.mxu0 0
    %6064 = vmatmul.mubr.bf16.gmra.mrb[0].mxu0 %v288
    %v6065 = vpop.f32.mrb[0].mxu0
    %v6066 = vadd.f32 0.0, %v6065
    %v6067 = vpop.f32.mrb[0].mxu0
    %v6068 = vpop.f32.mrb[0].mxu0
    %v6069 = vadd.f32 0.0, %v6068
    %v6070 = vpop.f32.mrb[0].mxu0
    %6071 = vmatprep.mubr.bf16.mxu0 0
    %6072 = vmatmul.mubr.bf16.gmra.mrb[0].mxu0 %v291
    %v6073 = vpop.f32.mrb[0].mxu0
    %v6074 = vadd.f32 0.0, %v6073
    %v6075 = vpop.f32.mrb[0].mxu0
    %v6076 = vpop.f32.mrb[0].mxu0
    %v6077 = vadd.f32 0.0, %v6076
    %v6078 = vpop.f32.mrb[0].mxu0
    %6079 = vmatprep.mubr.bf16.mxu0 0
    %6080 = vmatmul.mubr.bf16.gmra.mrb[0].mxu0 %v294
    %v6081 = vpop.f32.mrb[0].mxu0
    %v6082 = vadd.f32 0.0, %v6081
    %v6083 = vpop.f32.mrb[0].mxu0
    %v6084 = vpop.f32.mrb[0].mxu0
    %v6085 = vadd.f32 0.0, %v6084
    %v6086 = vpop.f32.mrb[0].mxu0
    %6087 = vmatprep.mubr.bf16.mxu0 0
    %6088 = vmatmul.mubr.bf16.gmra.mrb[0].mxu0 %v297
    %v6089 = vpop.f32.mrb[0].mxu0
    %v6090 = vadd.f32 0.0, %v6089
    %v6091 = vpop.f32.mrb[0].mxu0
    %v6092 = vpop.f32.mrb[0].mxu0
    %v6093 = vadd.f32 0.0, %v6092
    %v6094 = vpop.f32.mrb[0].mxu0
    %6095 = vmatprep.mubr.bf16.mxu0 0
    %6096 = vmatmul.mubr.bf16.gmra.mrb[0].mxu0 %v300
    %v6097 = vpop.f32.mrb[0].mxu0
    %v6098 = vadd.f32 0.0, %v6097
    %v6099 = vpop.f32.mrb[0].mxu0
    %v6100 = vpop.f32.mrb[0].mxu0
    %v6101 = vadd.f32 0.0, %v6100
    %v6102 = vpop.f32.mrb[0].mxu0
    %6103 = vmatprep.mubr.bf16.mxu0 0
    %6104 = vmatmul.mubr.bf16.gmra.mrb[0].mxu0 %v303
    %v6105 = vpop.f32.mrb[0].mxu0
    %v6106 = vadd.f32 0.0, %v6105
    %v6107 = vpop.f32.mrb[0].mxu0
    %v6108 = vpop.f32.mrb[0].mxu0
    %v6109 = vadd.f32 0.0, %v6108
    %v6110 = vpop.f32.mrb[0].mxu0
    %6111 = vmatprep.mubr.bf16.mxu0 0
    %6112 = vmatmul.mubr.bf16.gmra.mrb[0].mxu0 %v306
    %v6113 = vpop.f32.mrb[0].mxu0
    %v6114 = vadd.f32 0.0, %v6113
    %v6115 = vpop.f32.mrb[0].mxu0
    %v6116 = vpop.f32.mrb[0].mxu0
    %v6117 = vadd.f32 0.0, %v6116
    %v6118 = vpop.f32.mrb[0].mxu0
    %6119 = vmatprep.mubr.bf16.mxu0 0
    %6120 = vmatmul.mubr.bf16.gmra.mrb[0].mxu0 %v309
    %v6121 = vpop.f32.mrb[0].mxu0
    %v6122 = vadd.f32 0.0, %v6121
    %v6123 = vpop.f32.mrb[0].mxu0
    %v6124 = vpop.f32.mrb[0].mxu0
    %v6125 = vadd.f32 0.0, %v6124
    %v6126 = vpop.f32.mrb[0].mxu0
    %6127 = vmatprep.mubr.bf16.mxu0 0
    %6128 = vmatmul.mubr.bf16.gmra.mrb[0].mxu0 %v312
    %v6129 = vpop.f32.mrb[0].mxu0
    %v6130 = vadd.f32 0.0, %v6129
    %v6131 = vpop.f32.mrb[0].mxu0
    %v6132 = vpop.f32.mrb[0].mxu0
    %v6133 = vadd.f32 0.0, %v6132
    %v6134 = vpop.f32.mrb[0].mxu0
    %6135 = vmatprep.mubr.bf16.mxu0 0
    %6136 = vmatmul.mubr.bf16.gmra.mrb[0].mxu0 %v315
    %v6137 = vpop.f32.mrb[0].mxu0
    %v6138 = vadd.f32 0.0, %v6137
    %v6139 = vpop.f32.mrb[0].mxu0
    %v6140 = vpop.f32.mrb[0].mxu0
    %v6141 = vadd.f32 0.0, %v6140
    %v6142 = vpop.f32.mrb[0].mxu0
    %6143 = vmatprep.mubr.bf16.mxu0 0
    %6144 = vmatmul.mubr.bf16.gmra.mrb[0].mxu0 %v318
    %v6145 = vpop.f32.mrb[0].mxu0
    %v6146 = vadd.f32 0.0, %v6145
    %v6147 = vpop.f32.mrb[0].mxu0
    %v6148 = vpop.f32.mrb[0].mxu0
    %v6149 = vadd.f32 0.0, %v6148
    %v6150 = vpop.f32.mrb[0].mxu0
    %6151 = vmatprep.mubr.bf16.mxu0 0
    %6152 = vmatmul.mubr.bf16.gmra.mrb[0].mxu0 %v321
    %v6153 = vpop.f32.mrb[0].mxu0
    %v6154 = vadd.f32 0.0, %v6153
    %v6155 = vpop.f32.mrb[0].mxu0
    %v6156 = vpop.f32.mrb[0].mxu0
    %v6157 = vadd.f32 0.0, %v6156
    %v6158 = vpop.f32.mrb[0].mxu0
    %6159 = vmatprep.mubr.bf16.mxu0 0
    %6160 = vmatmul.mubr.bf16.gmra.mrb[0].mxu0 %v324
    %v6161 = vpop.f32.mrb[0].mxu0
    %v6162 = vadd.f32 0.0, %v6161
    %v6163 = vpop.f32.mrb[0].mxu0
    %v6164 = vpop.f32.mrb[0].mxu0
    %v6165 = vadd.f32 0.0, %v6164
    %v6166 = vpop.f32.mrb[0].mxu0
    %6167 = vmatprep.mubr.bf16.mxu0 0
    %6168 = vmatmul.mubr.bf16.gmra.mrb[0].mxu0 %v327
    %v6169 = vpop.f32.mrb[0].mxu0
    %v6170 = vadd.f32 0.0, %v6169
    %v6171 = vpop.f32.mrb[0].mxu0
    %v6172 = vpop.f32.mrb[0].mxu0
    %v6173 = vadd.f32 0.0, %v6172
    %v6174 = vpop.f32.mrb[0].mxu0
    %6175 = vmatprep.mubr.bf16.mxu0 0
    %6176 = vmatmul.mubr.bf16.gmra.mrb[0].mxu0 %v330
    %v6177 = vpop.f32.mrb[0].mxu0
    %v6178 = vadd.f32 0.0, %v6177
    %v6179 = vpop.f32.mrb[0].mxu0
    %v6180 = vpop.f32.mrb[0].mxu0
    %v6181 = vadd.f32 0.0, %v6180
    %v6182 = vpop.f32.mrb[0].mxu0
    %6183 = vmatprep.mubr.bf16.mxu0 0
    %6184 = vmatmul.mubr.bf16.gmra.mrb[0].mxu0 %v333
    %v6185 = vpop.f32.mrb[0].mxu0
    %v6186 = vadd.f32 0.0, %v6185
    %v6187 = vpop.f32.mrb[0].mxu0
    %v6188 = vpop.f32.mrb[0].mxu0
    %v6189 = vadd.f32 0.0, %v6188
    %v6190 = vpop.f32.mrb[0].mxu0
    %6191 = vmatprep.mubr.bf16.mxu0 0
    %6192 = vmatmul.mubr.bf16.gmra.mrb[0].mxu0 %v336
    %v6193 = vpop.f32.mrb[0].mxu0
    %v6194 = vadd.f32 0.0, %v6193
    %v6195 = vpop.f32.mrb[0].mxu0
    %v6196 = vpop.f32.mrb[0].mxu0
    %v6197 = vadd.f32 0.0, %v6196
    %v6198 = vpop.f32.mrb[0].mxu0
    %6199 = vmatprep.mubr.bf16.mxu0 0
    %6200 = vmatmul.mubr.bf16.gmra.mrb[0].mxu0 %v339
    %v6201 = vpop.f32.mrb[0].mxu0
    %v6202 = vadd.f32 0.0, %v6201
    %v6203 = vpop.f32.mrb[0].mxu0
    %v6204 = vpop.f32.mrb[0].mxu0
    %v6205 = vadd.f32 0.0, %v6204
    %v6206 = vpop.f32.mrb[0].mxu0
    %6207 = vmatprep.mubr.bf16.mxu0 0
    %6208 = vmatmul.mubr.bf16.gmra.mrb[0].mxu0 %v342
    %v6209 = vpop.f32.mrb[0].mxu0
    %v6210 = vadd.f32 0.0, %v6209
    %v6211 = vpop.f32.mrb[0].mxu0
    %v6212 = vpop.f32.mrb[0].mxu0
    %v6213 = vadd.f32 0.0, %v6212
    %v6214 = vpop.f32.mrb[0].mxu0
    %6215 = vmatprep.mubr.bf16.mxu0 0
    %6216 = vmatmul.mubr.bf16.gmra.mrb[0].mxu0 %v345
    %v6217 = vpop.f32.mrb[0].mxu0
    %v6218 = vadd.f32 0.0, %v6217
    %v6219 = vpop.f32.mrb[0].mxu0
    %v6220 = vpop.f32.mrb[0].mxu0
    %v6221 = vadd.f32 0.0, %v6220
    %v6222 = vpop.f32.mrb[0].mxu0
    %6223 = vmatprep.mubr.bf16.mxu0 0
    %6224 = vmatmul.mubr.bf16.gmra.mrb[0].mxu0 %v348
    %v6225 = vpop.f32.mrb[0].mxu0
    %v6226 = vadd.f32 0.0, %v6225
    %v6227 = vpop.f32.mrb[0].mxu0
    %v6228 = vpop.f32.mrb[0].mxu0
    %v6229 = vadd.f32 0.0, %v6228
    %v6230 = vpop.f32.mrb[0].mxu0
    %6231 = vmatprep.mubr.bf16.mxu0 0
    %6232 = vmatmul.mubr.bf16.gmra.mrb[0].mxu0 %v351
    %v6233 = vpop.f32.mrb[0].mxu0
    %v6234 = vadd.f32 0.0, %v6233
    %v6235 = vpop.f32.mrb[0].mxu0
    %v6236 = vpop.f32.mrb[0].mxu0
    %v6237 = vadd.f32 0.0, %v6236
    %v6238 = vpop.f32.mrb[0].mxu0
    %6239 = vdwg.mxu0
    %v6240 = vmul.f32 %v5986, %v5986
    %v6241 = vmul.f32 %v5989, %v5989
    %v6242 = vmul.f32 %v5994, %v5994
    %v6243 = vmul.f32 %v5997, %v5997
    %v6244 = vmul.f32 %v6002, %v6002
    %v6245 = vmul.f32 %v6005, %v6005
    %v6246 = vmul.f32 %v6010, %v6010
    %v6247 = vmul.f32 %v6013, %v6013
    %v6248 = vmul.f32 %v6018, %v6018
    %v6249 = vmul.f32 %v6021, %v6021
    %v6250 = vmul.f32 %v6026, %v6026
    %v6251 = vmul.f32 %v6029, %v6029
    %v6252 = vmul.f32 %v6034, %v6034
    %v6253 = vmul.f32 %v6037, %v6037
    %v6254 = vmul.f32 %v6042, %v6042
    %v6255 = vmul.f32 %v6045, %v6045
    %v6256 = vmul.f32 %v6050, %v6050
    %v6257 = vmul.f32 %v6053, %v6053
    %v6258 = vmul.f32 %v6058, %v6058
    %v6259 = vmul.f32 %v6061, %v6061
    %v6260 = vmul.f32 %v6066, %v6066
    %v6261 = vmul.f32 %v6069, %v6069
    %v6262 = vmul.f32 %v6074, %v6074
    %v6263 = vmul.f32 %v6077, %v6077
    %v6264 = vmul.f32 %v6082, %v6082
    %v6265 = vmul.f32 %v6085, %v6085
    %v6266 = vmul.f32 %v6090, %v6090
    %v6267 = vmul.f32 %v6093, %v6093
    %v6268 = vmul.f32 %v6098, %v6098
    %v6269 = vmul.f32 %v6101, %v6101
    %v6270 = vmul.f32 %v6106, %v6106
    %v6271 = vmul.f32 %v6109, %v6109
    %v6272 = vmul.f32 %v6114, %v6114
    %v6273 = vmul.f32 %v6117, %v6117
    %v6274 = vmul.f32 %v6122, %v6122
    %v6275 = vmul.f32 %v6125, %v6125
    %v6276 = vmul.f32 %v6130, %v6130
    %v6277 = vmul.f32 %v6133, %v6133
    %v6278 = vmul.f32 %v6138, %v6138
    %v6279 = vmul.f32 %v6141, %v6141
    %v6280 = vmul.f32 %v6146, %v6146
    %v6281 = vmul.f32 %v6149, %v6149
    %v6282 = vmul.f32 %v6154, %v6154
    %v6283 = vmul.f32 %v6157, %v6157
    %v6284 = vmul.f32 %v6162, %v6162
    %v6285 = vmul.f32 %v6165, %v6165
    %v6286 = vmul.f32 %v6170, %v6170
    %v6287 = vmul.f32 %v6173, %v6173
    %v6288 = vmul.f32 %v6178, %v6178
    %v6289 = vmul.f32 %v6181, %v6181
    %v6290 = vmul.f32 %v6186, %v6186
    %v6291 = vmul.f32 %v6189, %v6189
    %v6292 = vmul.f32 %v6194, %v6194
    %v6293 = vmul.f32 %v6197, %v6197
    %v6294 = vmul.f32 %v6202, %v6202
    %v6295 = vmul.f32 %v6205, %v6205
    %v6296 = vmul.f32 %v6210, %v6210
    %v6297 = vmul.f32 %v6213, %v6213
    %v6298 = vmul.f32 %v6218, %v6218
    %v6299 = vmul.f32 %v6221, %v6221
    %v6300 = vmul.f32 %v6226, %v6226
    %v6301 = vmul.f32 %v6229, %v6229
    %v6302 = vmul.f32 %v6234, %v6234
    %v6303 = vmul.f32 %v6237, %v6237
    %6368 = vrot.lane.b32.xlu0 %v6240, 16
    %v6369 = vpop.permute.xlu0 %6368
    %6370 = vrot.lane.b32.xlu0 %v6241, 16
    %v6371 = vpop.permute.xlu0 %6370
    %6372 = vrot.lane.b32.xlu0 %v6242, 16
    %v6373 = vpop.permute.xlu0 %6372
    %6374 = vrot.lane.b32.xlu0 %v6243, 16
    %v6375 = vpop.permute.xlu0 %6374
    %6376 = vrot.lane.b32.xlu0 %v6244, 16
    %v6377 = vpop.permute.xlu0 %6376
    %6378 = vrot.lane.b32.xlu0 %v6245, 16
    %v6379 = vpop.permute.xlu0 %6378
    %6380 = vrot.lane.b32.xlu0 %v6246, 16
    %v6381 = vpop.permute.xlu0 %6380
    %6382 = vrot.lane.b32.xlu0 %v6247, 16
    %v6383 = vpop.permute.xlu0 %6382
    %6384 = vrot.lane.b32.xlu0 %v6248, 16
    %v6385 = vpop.permute.xlu0 %6384
    %6386 = vrot.lane.b32.xlu0 %v6249, 16
    %v6387 = vpop.permute.xlu0 %6386
    %6388 = vrot.lane.b32.xlu0 %v6250, 16
    %v6389 = vpop.permute.xlu0 %6388
    %6390 = vrot.lane.b32.xlu0 %v6251, 16
    %v6391 = vpop.permute.xlu0 %6390
    %6392 = vrot.lane.b32.xlu0 %v6252, 16
    %v6393 = vpop.permute.xlu0 %6392
    %6394 = vrot.lane.b32.xlu0 %v6253, 16
    %v6395 = vpop.permute.xlu0 %6394
    %6396 = vrot.lane.b32.xlu0 %v6254, 16
    %v6397 = vpop.permute.xlu0 %6396
    %6398 = vrot.lane.b32.xlu0 %v6255, 16
    %v6399 = vpop.permute.xlu0 %6398
    %6400 = vrot.lane.b32.xlu0 %v6256, 16
    %v6401 = vpop.permute.xlu0 %6400
    %6402 = vrot.lane.b32.xlu0 %v6257, 16
    %v6403 = vpop.permute.xlu0 %6402
    %6404 = vrot.lane.b32.xlu0 %v6258, 16
    %v6405 = vpop.permute.xlu0 %6404
    %6406 = vrot.lane.b32.xlu0 %v6259, 16
    %v6407 = vpop.permute.xlu0 %6406
    %6408 = vrot.lane.b32.xlu0 %v6260, 16
    %v6409 = vpop.permute.xlu0 %6408
    %6410 = vrot.lane.b32.xlu0 %v6261, 16
    %v6411 = vpop.permute.xlu0 %6410
    %6412 = vrot.lane.b32.xlu0 %v6262, 16
    %v6413 = vpop.permute.xlu0 %6412
    %6414 = vrot.lane.b32.xlu0 %v6263, 16
    %v6415 = vpop.permute.xlu0 %6414
    %6416 = vrot.lane.b32.xlu0 %v6264, 16
    %v6417 = vpop.permute.xlu0 %6416
    %6418 = vrot.lane.b32.xlu0 %v6265, 16
    %v6419 = vpop.permute.xlu0 %6418
    %6420 = vrot.lane.b32.xlu0 %v6266, 16
    %v6421 = vpop.permute.xlu0 %6420
    %6422 = vrot.lane.b32.xlu0 %v6267, 16
    %v6423 = vpop.permute.xlu0 %6422
    %6424 = vrot.lane.b32.xlu0 %v6268, 16
    %v6425 = vpop.permute.xlu0 %6424
    %6426 = vrot.lane.b32.xlu0 %v6269, 16
    %v6427 = vpop.permute.xlu0 %6426
    %6428 = vrot.lane.b32.xlu0 %v6270, 16
    %v6429 = vpop.permute.xlu0 %6428
    %6430 = vrot.lane.b32.xlu0 %v6271, 16
    %v6431 = vpop.permute.xlu0 %6430
    %6432 = vrot.lane.b32.xlu0 %v6272, 16
    %v6433 = vpop.permute.xlu0 %6432
    %6434 = vrot.lane.b32.xlu0 %v6273, 16
    %v6435 = vpop.permute.xlu0 %6434
    %6436 = vrot.lane.b32.xlu0 %v6274, 16
    %v6437 = vpop.permute.xlu0 %6436
    %6438 = vrot.lane.b32.xlu0 %v6275, 16
    %v6439 = vpop.permute.xlu0 %6438
    %6440 = vrot.lane.b32.xlu0 %v6276, 16
    %v6441 = vpop.permute.xlu0 %6440
    %6442 = vrot.lane.b32.xlu0 %v6277, 16
    %v6443 = vpop.permute.xlu0 %6442
    %6444 = vrot.lane.b32.xlu0 %v6278, 16
    %v6445 = vpop.permute.xlu0 %6444
    %6446 = vrot.lane.b32.xlu0 %v6279, 16
    %v6447 = vpop.permute.xlu0 %6446
    %6448 = vrot.lane.b32.xlu0 %v6280, 16
    %v6449 = vpop.permute.xlu0 %6448
    %6450 = vrot.lane.b32.xlu0 %v6281, 16
    %v6451 = vpop.permute.xlu0 %6450
    %6452 = vrot.lane.b32.xlu0 %v6282, 16
    %v6453 = vpop.permute.xlu0 %6452
    %6454 = vrot.lane.b32.xlu0 %v6283, 16
    %v6455 = vpop.permute.xlu0 %6454
    %6456 = vrot.lane.b32.xlu0 %v6284, 16
    %v6457 = vpop.permute.xlu0 %6456
    %6458 = vrot.lane.b32.xlu0 %v6285, 16
    %v6459 = vpop.permute.xlu0 %6458
    %6460 = vrot.lane.b32.xlu0 %v6286, 16
    %v6461 = vpop.permute.xlu0 %6460
    %6462 = vrot.lane.b32.xlu0 %v6287, 16
    %v6463 = vpop.permute.xlu0 %6462
    %6464 = vrot.lane.b32.xlu0 %v6288, 16
    %v6465 = vpop.permute.xlu0 %6464
    %6466 = vrot.lane.b32.xlu0 %v6289, 16
    %v6467 = vpop.permute.xlu0 %6466
    %6468 = vrot.lane.b32.xlu0 %v6290, 16
    %v6469 = vpop.permute.xlu0 %6468
    %6470 = vrot.lane.b32.xlu0 %v6291, 16
    %v6471 = vpop.permute.xlu0 %6470
    %6472 = vrot.lane.b32.xlu0 %v6292, 16
    %v6473 = vpop.permute.xlu0 %6472
    %6474 = vrot.lane.b32.xlu0 %v6293, 16
    %v6475 = vpop.permute.xlu0 %6474
    %6476 = vrot.lane.b32.xlu0 %v6294, 16
    %v6477 = vpop.permute.xlu0 %6476
    %6478 = vrot.lane.b32.xlu0 %v6295, 16
    %v6479 = vpop.permute.xlu0 %6478
    %6480 = vrot.lane.b32.xlu0 %v6296, 16
    %v6481 = vpop.permute.xlu0 %6480
    %6482 = vrot.lane.b32.xlu0 %v6297, 16
    %v6483 = vpop.permute.xlu0 %6482
    %6484 = vrot.lane.b32.xlu0 %v6298, 16
    %v6485 = vpop.permute.xlu0 %6484
    %6486 = vrot.lane.b32.xlu0 %v6299, 16
    %v6487 = vpop.permute.xlu0 %6486
    %6488 = vrot.lane.b32.xlu0 %v6300, 16
    %v6489 = vpop.permute.xlu0 %6488
    %6490 = vrot.lane.b32.xlu0 %v6301, 16
    %v6491 = vpop.permute.xlu0 %6490
    %6492 = vrot.lane.b32.xlu0 %v6302, 16
    %v6493 = vpop.permute.xlu0 %6492
    %6494 = vrot.lane.b32.xlu0 %v6303, 16
    %v6495 = vpop.permute.xlu0 %6494
    %v6560 = vsel %vm3162, %v5986, %v6369
    %v6561 = vsel %vm3162, %v5989, %v6371
    %v6562 = vsel %vm3162, %v5994, %v6373
    %v6563 = vsel %vm3162, %v5997, %v6375
    %v6564 = vsel %vm3162, %v6002, %v6377
    %v6565 = vsel %vm3162, %v6005, %v6379
    %v6566 = vsel %vm3162, %v6010, %v6381
    %v6567 = vsel %vm3162, %v6013, %v6383
    %v6568 = vsel %vm3162, %v6018, %v6385
    %v6569 = vsel %vm3162, %v6021, %v6387
    %v6570 = vsel %vm3162, %v6026, %v6389
    %v6571 = vsel %vm3162, %v6029, %v6391
    %v6572 = vsel %vm3162, %v6034, %v6393
    %v6573 = vsel %vm3162, %v6037, %v6395
    %v6574 = vsel %vm3162, %v6042, %v6397
    %v6575 = vsel %vm3162, %v6045, %v6399
    %v6576 = vsel %vm3162, %v6050, %v6401
    %v6577 = vsel %vm3162, %v6053, %v6403
    %v6578 = vsel %vm3162, %v6058, %v6405
    %v6579 = vsel %vm3162, %v6061, %v6407
    %v6580 = vsel %vm3162, %v6066, %v6409
    %v6581 = vsel %vm3162, %v6069, %v6411
    %v6582 = vsel %vm3162, %v6074, %v6413
    %v6583 = vsel %vm3162, %v6077, %v6415
    %v6584 = vsel %vm3162, %v6082, %v6417
    %v6585 = vsel %vm3162, %v6085, %v6419
    %v6586 = vsel %vm3162, %v6090, %v6421
    %v6587 = vsel %vm3162, %v6093, %v6423
    %v6588 = vsel %vm3162, %v6098, %v6425
    %v6589 = vsel %vm3162, %v6101, %v6427
    %v6590 = vsel %vm3162, %v6106, %v6429
    %v6591 = vsel %vm3162, %v6109, %v6431
    %v6592 = vsel %vm3162, %v6114, %v6433
    %v6593 = vsel %vm3162, %v6117, %v6435
    %v6594 = vsel %vm3162, %v6122, %v6437
    %v6595 = vsel %vm3162, %v6125, %v6439
    %v6596 = vsel %vm3162, %v6130, %v6441
    %v6597 = vsel %vm3162, %v6133, %v6443
    %v6598 = vsel %vm3162, %v6138, %v6445
    %v6599 = vsel %vm3162, %v6141, %v6447
    %v6600 = vsel %vm3162, %v6146, %v6449
    %v6601 = vsel %vm3162, %v6149, %v6451
    %v6602 = vsel %vm3162, %v6154, %v6453
    %v6603 = vsel %vm3162, %v6157, %v6455
    %v6604 = vsel %vm3162, %v6162, %v6457
    %v6605 = vsel %vm3162, %v6165, %v6459
    %v6606 = vsel %vm3162, %v6170, %v6461
    %v6607 = vsel %vm3162, %v6173, %v6463
    %v6608 = vsel %vm3162, %v6178, %v6465
    %v6609 = vsel %vm3162, %v6181, %v6467
    %v6610 = vsel %vm3162, %v6186, %v6469
    %v6611 = vsel %vm3162, %v6189, %v6471
    %v6612 = vsel %vm3162, %v6194, %v6473
    %v6613 = vsel %vm3162, %v6197, %v6475
    %v6614 = vsel %vm3162, %v6202, %v6477
    %v6615 = vsel %vm3162, %v6205, %v6479
    %v6616 = vsel %vm3162, %v6210, %v6481
    %v6617 = vsel %vm3162, %v6213, %v6483
    %v6618 = vsel %vm3162, %v6218, %v6485
    %v6619 = vsel %vm3162, %v6221, %v6487
    %v6620 = vsel %vm3162, %v6226, %v6489
    %v6621 = vsel %vm3162, %v6229, %v6491
    %v6622 = vsel %vm3162, %v6234, %v6493
    %v6623 = vsel %vm3162, %v6237, %v6495
    %v6624 = vsel %vm3420, %v6560, 0.0
    %v6625 = vsel %vm3420, %v6561, 0.0
    %v6626 = vadd.f32 %v6624, %v6625
    %v6627 = vsel %vm3420, %v6562, 0.0
    %v6628 = vadd.f32 %v6626, %v6627
    %v6629 = vsel %vm3420, %v6563, 0.0
    %v6630 = vadd.f32 %v6628, %v6629
    %v6631 = vsel %vm3420, %v6564, 0.0
    %v6632 = vadd.f32 %v6630, %v6631
    %v6633 = vsel %vm3420, %v6565, 0.0
    %v6634 = vadd.f32 %v6632, %v6633
    %v6635 = vsel %vm3420, %v6566, 0.0
    %v6636 = vadd.f32 %v6634, %v6635
    %v6637 = vsel %vm3420, %v6567, 0.0
    %v6638 = vadd.f32 %v6636, %v6637
    %v6639 = vsel %vm3420, %v6568, 0.0
    %v6640 = vadd.f32 %v6638, %v6639
    %v6641 = vsel %vm3420, %v6569, 0.0
    %v6642 = vadd.f32 %v6640, %v6641
    %v6643 = vsel %vm3420, %v6570, 0.0
    %v6644 = vadd.f32 %v6642, %v6643
    %v6645 = vsel %vm3420, %v6571, 0.0
    %v6646 = vadd.f32 %v6644, %v6645
    %v6647 = vsel %vm3420, %v6572, 0.0
    %v6648 = vadd.f32 %v6646, %v6647
    %v6649 = vsel %vm3420, %v6573, 0.0
    %v6650 = vadd.f32 %v6648, %v6649
    %v6651 = vsel %vm3420, %v6574, 0.0
    %v6652 = vadd.f32 %v6650, %v6651
    %v6653 = vsel %vm3420, %v6575, 0.0
    %v6654 = vadd.f32 %v6652, %v6653
    %v6655 = vsel %vm3420, %v6576, 0.0
    %v6656 = vadd.f32 %v6654, %v6655
    %v6657 = vsel %vm3420, %v6577, 0.0
    %v6658 = vadd.f32 %v6656, %v6657
    %v6659 = vsel %vm3420, %v6578, 0.0
    %v6660 = vadd.f32 %v6658, %v6659
    %v6661 = vsel %vm3420, %v6579, 0.0
    %v6662 = vadd.f32 %v6660, %v6661
    %v6663 = vsel %vm3420, %v6580, 0.0
    %v6664 = vadd.f32 %v6662, %v6663
    %v6665 = vsel %vm3420, %v6581, 0.0
    %v6666 = vadd.f32 %v6664, %v6665
    %v6667 = vsel %vm3420, %v6582, 0.0
    %v6668 = vadd.f32 %v6666, %v6667
    %v6669 = vsel %vm3420, %v6583, 0.0
    %v6670 = vadd.f32 %v6668, %v6669
    %v6671 = vsel %vm3420, %v6584, 0.0
    %v6672 = vadd.f32 %v6670, %v6671
    %v6673 = vsel %vm3420, %v6585, 0.0
    %v6674 = vadd.f32 %v6672, %v6673
    %v6675 = vsel %vm3420, %v6586, 0.0
    %v6676 = vadd.f32 %v6674, %v6675
    %v6677 = vsel %vm3420, %v6587, 0.0
    %v6678 = vadd.f32 %v6676, %v6677
    %v6679 = vsel %vm3420, %v6588, 0.0
    %v6680 = vadd.f32 %v6678, %v6679
    %v6681 = vsel %vm3420, %v6589, 0.0
    %v6682 = vadd.f32 %v6680, %v6681
    %v6683 = vsel %vm3420, %v6590, 0.0
    %v6684 = vadd.f32 %v6682, %v6683
    %v6685 = vsel %vm3420, %v6591, 0.0
    %v6686 = vadd.f32 %v6684, %v6685
    %v6687 = vsel %vm3420, %v6592, 0.0
    %v6688 = vadd.f32 %v6686, %v6687
    %v6689 = vsel %vm3420, %v6593, 0.0
    %v6690 = vadd.f32 %v6688, %v6689
    %v6691 = vsel %vm3420, %v6594, 0.0
    %v6692 = vadd.f32 %v6690, %v6691
    %v6693 = vsel %vm3420, %v6595, 0.0
    %v6694 = vadd.f32 %v6692, %v6693
    %v6695 = vsel %vm3420, %v6596, 0.0
    %v6696 = vadd.f32 %v6694, %v6695
    %v6697 = vsel %vm3420, %v6597, 0.0
    %v6698 = vadd.f32 %v6696, %v6697
    %v6699 = vsel %vm3420, %v6598, 0.0
    %v6700 = vadd.f32 %v6698, %v6699
    %v6701 = vsel %vm3420, %v6599, 0.0
    %v6702 = vadd.f32 %v6700, %v6701
    %v6703 = vsel %vm3420, %v6600, 0.0
    %v6704 = vadd.f32 %v6702, %v6703
    %v6705 = vsel %vm3420, %v6601, 0.0
    %v6706 = vadd.f32 %v6704, %v6705
    %v6707 = vsel %vm3420, %v6602, 0.0
    %v6708 = vadd.f32 %v6706, %v6707
    %v6709 = vsel %vm3420, %v6603, 0.0
    %v6710 = vadd.f32 %v6708, %v6709
    %v6711 = vsel %vm3420, %v6604, 0.0
    %v6712 = vadd.f32 %v6710, %v6711
    %v6713 = vsel %vm3420, %v6605, 0.0
    %v6714 = vadd.f32 %v6712, %v6713
    %v6715 = vsel %vm3420, %v6606, 0.0
    %v6716 = vadd.f32 %v6714, %v6715
    %v6717 = vsel %vm3420, %v6607, 0.0
    %v6718 = vadd.f32 %v6716, %v6717
    %v6719 = vsel %vm3420, %v6608, 0.0
    %v6720 = vadd.f32 %v6718, %v6719
    %v6721 = vsel %vm3420, %v6609, 0.0
    %v6722 = vadd.f32 %v6720, %v6721
    %v6723 = vsel %vm3420, %v6610, 0.0
    %v6724 = vadd.f32 %v6722, %v6723
    %v6725 = vsel %vm3420, %v6611, 0.0
    %v6726 = vadd.f32 %v6724, %v6725
    %v6727 = vsel %vm3420, %v6612, 0.0
    %v6728 = vadd.f32 %v6726, %v6727
    %v6729 = vsel %vm3420, %v6613, 0.0
    %v6730 = vadd.f32 %v6728, %v6729
    %v6731 = vsel %vm3420, %v6614, 0.0
    %v6732 = vadd.f32 %v6730, %v6731
    %v6733 = vsel %vm3420, %v6615, 0.0
    %v6734 = vadd.f32 %v6732, %v6733
    %v6735 = vsel %vm3420, %v6616, 0.0
    %v6736 = vadd.f32 %v6734, %v6735
    %v6737 = vsel %vm3420, %v6617, 0.0
    %v6738 = vadd.f32 %v6736, %v6737
    %v6739 = vsel %vm3420, %v6618, 0.0
    %v6740 = vadd.f32 %v6738, %v6739
    %v6741 = vsel %vm3420, %v6619, 0.0
    %v6742 = vadd.f32 %v6740, %v6741
    %v6743 = vsel %vm3420, %v6620, 0.0
    %v6744 = vadd.f32 %v6742, %v6743
    %v6745 = vsel %vm3420, %v6621, 0.0
    %v6746 = vadd.f32 %v6744, %v6745
    %v6747 = vsel %vm3420, %v6622, 0.0
    %v6748 = vadd.f32 %v6746, %v6747
    %v6749 = vsel %vm3420, %v6623, 0.0
    %v6750 = vadd.f32 %v6748, %v6749
    %v6751 = vrot.slane %v6750, 4
    %v6752 = vadd.f32 %v6750, %v6751
    %v6753 = vrot.slane %v6752, 2
    %v6754 = vadd.f32 %v6752, %v6753
    %v6755 = vrot.slane %v6754, 1
    %v6756 = vadd.f32 %v6754, %v6755
    %v6757 = vmul.f32 %v6756, 0.001953125
    %v6758 = vmul.f32 %v6757, %v6757
    %6760 = vrot.lane.b32.xlu0 %v6758, 16
    %v6761 = vpop.permute.xlu0 %6760
    %v6763 = vsub.f32 %v6757, %v6761
    %v6764 = vmax.f32 %v6763, 0.0
    %v6765 = vsub.f32 %v5986, %v6757
    %v6766 = vsub.f32 %v5989, %v6757
    %v6767 = vsub.f32 %v5994, %v6757
    %v6768 = vsub.f32 %v5997, %v6757
    %v6769 = vsub.f32 %v6002, %v6757
    %v6770 = vsub.f32 %v6005, %v6757
    %v6771 = vsub.f32 %v6010, %v6757
    %v6772 = vsub.f32 %v6013, %v6757
    %v6773 = vsub.f32 %v6018, %v6757
    %v6774 = vsub.f32 %v6021, %v6757
    %v6775 = vsub.f32 %v6026, %v6757
    %v6776 = vsub.f32 %v6029, %v6757
    %v6777 = vsub.f32 %v6034, %v6757
    %v6778 = vsub.f32 %v6037, %v6757
    %v6779 = vsub.f32 %v6042, %v6757
    %v6780 = vsub.f32 %v6045, %v6757
    %v6781 = vsub.f32 %v6050, %v6757
    %v6782 = vsub.f32 %v6053, %v6757
    %v6783 = vsub.f32 %v6058, %v6757
    %v6784 = vsub.f32 %v6061, %v6757
    %v6785 = vsub.f32 %v6066, %v6757
    %v6786 = vsub.f32 %v6069, %v6757
    %v6787 = vsub.f32 %v6074, %v6757
    %v6788 = vsub.f32 %v6077, %v6757
    %v6789 = vsub.f32 %v6082, %v6757
    %v6790 = vsub.f32 %v6085, %v6757
    %v6791 = vsub.f32 %v6090, %v6757
    %v6792 = vsub.f32 %v6093, %v6757
    %v6793 = vsub.f32 %v6098, %v6757
    %v6794 = vsub.f32 %v6101, %v6757
    %v6795 = vsub.f32 %v6106, %v6757
    %v6796 = vsub.f32 %v6109, %v6757
    %v6797 = vsub.f32 %v6114, %v6757
    %v6798 = vsub.f32 %v6117, %v6757
    %v6799 = vsub.f32 %v6122, %v6757
    %v6800 = vsub.f32 %v6125, %v6757
    %v6801 = vsub.f32 %v6130, %v6757
    %v6802 = vsub.f32 %v6133, %v6757
    %v6803 = vsub.f32 %v6138, %v6757
    %v6804 = vsub.f32 %v6141, %v6757
    %v6805 = vsub.f32 %v6146, %v6757
    %v6806 = vsub.f32 %v6149, %v6757
    %v6807 = vsub.f32 %v6154, %v6757
    %v6808 = vsub.f32 %v6157, %v6757
    %v6809 = vsub.f32 %v6162, %v6757
    %v6810 = vsub.f32 %v6165, %v6757
    %v6811 = vsub.f32 %v6170, %v6757
    %v6812 = vsub.f32 %v6173, %v6757
    %v6813 = vsub.f32 %v6178, %v6757
    %v6814 = vsub.f32 %v6181, %v6757
    %v6815 = vsub.f32 %v6186, %v6757
    %v6816 = vsub.f32 %v6189, %v6757
    %v6817 = vsub.f32 %v6194, %v6757
    %v6818 = vsub.f32 %v6197, %v6757
    %v6819 = vsub.f32 %v6202, %v6757
    %v6820 = vsub.f32 %v6205, %v6757
    %v6821 = vsub.f32 %v6210, %v6757
    %v6822 = vsub.f32 %v6213, %v6757
    %v6823 = vsub.f32 %v6218, %v6757
    %v6824 = vsub.f32 %v6221, %v6757
    %v6825 = vsub.f32 %v6226, %v6757
    %v6826 = vsub.f32 %v6229, %v6757
    %v6827 = vsub.f32 %v6234, %v6757
    %v6828 = vsub.f32 %v6237, %v6757
    %v6829 = vadd.f32 %v6764, 1e-05
    %v6830 = vrsqrt.pop %v6829
    %v6831 = vlaneseq
    %v6832 = vshrl.u32 %v6831, 7
    %v6833 = vsub.s32 0, %v6832
    %v6834 = vrot.slane %v6830, %v6833
    %6836 = vrot.lane.b32.xlu0 %v6834, 112
    %v6837 = vpop.permute.xlu0 %6836
    %v6839 = vmul.f32 %v6765, %v6837
    %v6840 = vmul.f32 %v6766, %v6837
    %v6841 = vmul.f32 %v6767, %v6837
    %v6842 = vmul.f32 %v6768, %v6837
    %v6843 = vmul.f32 %v6769, %v6837
    %v6844 = vmul.f32 %v6770, %v6837
    %v6845 = vmul.f32 %v6771, %v6837
    %v6846 = vmul.f32 %v6772, %v6837
    %v6847 = vmul.f32 %v6773, %v6837
    %v6848 = vmul.f32 %v6774, %v6837
    %v6849 = vmul.f32 %v6775, %v6837
    %v6850 = vmul.f32 %v6776, %v6837
    %v6851 = vmul.f32 %v6777, %v6837
    %v6852 = vmul.f32 %v6778, %v6837
    %v6853 = vmul.f32 %v6779, %v6837
    %v6854 = vmul.f32 %v6780, %v6837
    %v6855 = vmul.f32 %v6781, %v6837
    %v6856 = vmul.f32 %v6782, %v6837
    %v6857 = vmul.f32 %v6783, %v6837
    %v6858 = vmul.f32 %v6784, %v6837
    %v6859 = vmul.f32 %v6785, %v6837
    %v6860 = vmul.f32 %v6786, %v6837
    %v6861 = vmul.f32 %v6787, %v6837
    %v6862 = vmul.f32 %v6788, %v6837
    %v6863 = vmul.f32 %v6789, %v6837
    %v6864 = vmul.f32 %v6790, %v6837
    %v6865 = vmul.f32 %v6791, %v6837
    %v6866 = vmul.f32 %v6792, %v6837
    %v6867 = vmul.f32 %v6793, %v6837
    %v6868 = vmul.f32 %v6794, %v6837
    %v6869 = vmul.f32 %v6795, %v6837
    %v6870 = vmul.f32 %v6796, %v6837
    %v6871 = vmul.f32 %v6797, %v6837
    %v6872 = vmul.f32 %v6798, %v6837
    %v6873 = vmul.f32 %v6799, %v6837
    %v6874 = vmul.f32 %v6800, %v6837
    %v6875 = vmul.f32 %v6801, %v6837
    %v6876 = vmul.f32 %v6802, %v6837
    %v6877 = vmul.f32 %v6803, %v6837
    %v6878 = vmul.f32 %v6804, %v6837
    %v6879 = vmul.f32 %v6805, %v6837
    %v6880 = vmul.f32 %v6806, %v6837
    %v6881 = vmul.f32 %v6807, %v6837
    %v6882 = vmul.f32 %v6808, %v6837
    %v6883 = vmul.f32 %v6809, %v6837
    %v6884 = vmul.f32 %v6810, %v6837
    %v6885 = vmul.f32 %v6811, %v6837
    %v6886 = vmul.f32 %v6812, %v6837
    %v6887 = vmul.f32 %v6813, %v6837
    %v6888 = vmul.f32 %v6814, %v6837
    %v6889 = vmul.f32 %v6815, %v6837
    %v6890 = vmul.f32 %v6816, %v6837
    %v6891 = vmul.f32 %v6817, %v6837
    %v6892 = vmul.f32 %v6818, %v6837
    %v6893 = vmul.f32 %v6819, %v6837
    %v6894 = vmul.f32 %v6820, %v6837
    %v6895 = vmul.f32 %v6821, %v6837
    %v6896 = vmul.f32 %v6822, %v6837
    %v6897 = vmul.f32 %v6823, %v6837
    %v6898 = vmul.f32 %v6824, %v6837
    %v6899 = vmul.f32 %v6825, %v6837
    %v6900 = vmul.f32 %v6826, %v6837
    %v6901 = vmul.f32 %v6827, %v6837
    %v6902 = vmul.f32 %v6828, %v6837
    %v6903 = vlaneseq
    %v6904 = vshrl.u32 %v6903, 7
    %v6905 = vsub.s32 0, %v6904
    %v6906 = vrot.slane %v5945, %v6905
    %v6907 = vmul.f32 %v6839, %v6906
    %v6908 = vmul.f32 %v6840, %v6906
    %v6909 = vmul.f32 %v6841, %v6906
    %v6910 = vmul.f32 %v6842, %v6906
    %v6911 = vmul.f32 %v6843, %v6906
    %v6912 = vmul.f32 %v6844, %v6906
    %v6913 = vmul.f32 %v6845, %v6906
    %v6914 = vmul.f32 %v6846, %v6906
    %v6915 = vmul.f32 %v6847, %v6906
    %v6916 = vmul.f32 %v6848, %v6906
    %v6917 = vmul.f32 %v6849, %v6906
    %v6918 = vmul.f32 %v6850, %v6906
    %v6919 = vmul.f32 %v6851, %v6906
    %v6920 = vmul.f32 %v6852, %v6906
    %v6921 = vmul.f32 %v6853, %v6906
    %v6922 = vmul.f32 %v6854, %v6906
    %v6923 = vmul.f32 %v6855, %v6906
    %v6924 = vmul.f32 %v6856, %v6906
    %v6925 = vmul.f32 %v6857, %v6906
    %v6926 = vmul.f32 %v6858, %v6906
    %v6927 = vmul.f32 %v6859, %v6906
    %v6928 = vmul.f32 %v6860, %v6906
    %v6929 = vmul.f32 %v6861, %v6906
    %v6930 = vmul.f32 %v6862, %v6906
    %v6931 = vmul.f32 %v6863, %v6906
    %v6932 = vmul.f32 %v6864, %v6906
    %v6933 = vmul.f32 %v6865, %v6906
    %v6934 = vmul.f32 %v6866, %v6906
    %v6935 = vmul.f32 %v6867, %v6906
    %v6936 = vmul.f32 %v6868, %v6906
    %v6937 = vmul.f32 %v6869, %v6906
    %v6938 = vmul.f32 %v6870, %v6906
    %v6939 = vmul.f32 %v6871, %v6906
    %v6940 = vmul.f32 %v6872, %v6906
    %v6941 = vmul.f32 %v6873, %v6906
    %v6942 = vmul.f32 %v6874, %v6906
    %v6943 = vmul.f32 %v6875, %v6906
    %v6944 = vmul.f32 %v6876, %v6906
    %v6945 = vmul.f32 %v6877, %v6906
    %v6946 = vmul.f32 %v6878, %v6906
    %v6947 = vmul.f32 %v6879, %v6906
    %v6948 = vmul.f32 %v6880, %v6906
    %v6949 = vmul.f32 %v6881, %v6906
    %v6950 = vmul.f32 %v6882, %v6906
    %v6951 = vmul.f32 %v6883, %v6906
    %v6952 = vmul.f32 %v6884, %v6906
    %v6953 = vmul.f32 %v6885, %v6906
    %v6954 = vmul.f32 %v6886, %v6906
    %v6955 = vmul.f32 %v6887, %v6906
    %v6956 = vmul.f32 %v6888, %v6906
    %v6957 = vmul.f32 %v6889, %v6906
    %v6958 = vmul.f32 %v6890, %v6906
    %v6959 = vmul.f32 %v6891, %v6906
    %v6960 = vmul.f32 %v6892, %v6906
    %v6961 = vmul.f32 %v6893, %v6906
    %v6962 = vmul.f32 %v6894, %v6906
    %v6963 = vmul.f32 %v6895, %v6906
    %v6964 = vmul.f32 %v6896, %v6906
    %v6965 = vmul.f32 %v6897, %v6906
    %v6966 = vmul.f32 %v6898, %v6906
    %v6967 = vmul.f32 %v6899, %v6906
    %v6968 = vmul.f32 %v6900, %v6906
    %v6969 = vmul.f32 %v6901, %v6906
    %v6970 = vmul.f32 %v6902, %v6906
    %v6971 = vlaneseq
    %v6972 = vshrl.u32 %v6971, 7
    %v6973 = vsub.s32 0, %v6972
    %v6974 = vrot.slane %v5946, %v6973
    %v6975 = vadd.f32 %v6907, %v6974
    %v6976 = vadd.f32 %v6908, %v6974
    %v6977 = vadd.f32 %v6909, %v6974
    %v6978 = vadd.f32 %v6910, %v6974
    %v6979 = vadd.f32 %v6911, %v6974
    %v6980 = vadd.f32 %v6912, %v6974
    %v6981 = vadd.f32 %v6913, %v6974
    %v6982 = vadd.f32 %v6914, %v6974
    %v6983 = vadd.f32 %v6915, %v6974
    %v6984 = vadd.f32 %v6916, %v6974
    %v6985 = vadd.f32 %v6917, %v6974
    %v6986 = vadd.f32 %v6918, %v6974
    %v6987 = vadd.f32 %v6919, %v6974
    %v6988 = vadd.f32 %v6920, %v6974
    %v6989 = vadd.f32 %v6921, %v6974
    %v6990 = vadd.f32 %v6922, %v6974
    %v6991 = vadd.f32 %v6923, %v6974
    %v6992 = vadd.f32 %v6924, %v6974
    %v6993 = vadd.f32 %v6925, %v6974
    %v6994 = vadd.f32 %v6926, %v6974
    %v6995 = vadd.f32 %v6927, %v6974
    %v6996 = vadd.f32 %v6928, %v6974
    %v6997 = vadd.f32 %v6929, %v6974
    %v6998 = vadd.f32 %v6930, %v6974
    %v6999 = vadd.f32 %v6931, %v6974
    %v7000 = vadd.f32 %v6932, %v6974
    %v7001 = vadd.f32 %v6933, %v6974
    %v7002 = vadd.f32 %v6934, %v6974
    %v7003 = vadd.f32 %v6935, %v6974
    %v7004 = vadd.f32 %v6936, %v6974
    %v7005 = vadd.f32 %v6937, %v6974
    %v7006 = vadd.f32 %v6938, %v6974
    %v7007 = vadd.f32 %v6939, %v6974
    %v7008 = vadd.f32 %v6940, %v6974
    %v7009 = vadd.f32 %v6941, %v6974
    %v7010 = vadd.f32 %v6942, %v6974
    %v7011 = vadd.f32 %v6943, %v6974
    %v7012 = vadd.f32 %v6944, %v6974
    %v7013 = vadd.f32 %v6945, %v6974
    %v7014 = vadd.f32 %v6946, %v6974
    %v7015 = vadd.f32 %v6947, %v6974
    %v7016 = vadd.f32 %v6948, %v6974
    %v7017 = vadd.f32 %v6949, %v6974
    %v7018 = vadd.f32 %v6950, %v6974
    %v7019 = vadd.f32 %v6951, %v6974
    %v7020 = vadd.f32 %v6952, %v6974
    %v7021 = vadd.f32 %v6953, %v6974
    %v7022 = vadd.f32 %v6954, %v6974
    %v7023 = vadd.f32 %v6955, %v6974
    %v7024 = vadd.f32 %v6956, %v6974
    %v7025 = vadd.f32 %v6957, %v6974
    %v7026 = vadd.f32 %v6958, %v6974
    %v7027 = vadd.f32 %v6959, %v6974
    %v7028 = vadd.f32 %v6960, %v6974
    %v7029 = vadd.f32 %v6961, %v6974
    %v7030 = vadd.f32 %v6962, %v6974
    %v7031 = vadd.f32 %v6963, %v6974
    %v7032 = vadd.f32 %v6964, %v6974
    %v7033 = vadd.f32 %v6965, %v6974
    %v7034 = vadd.f32 %v6966, %v6974
    %v7035 = vadd.f32 %v6967, %v6974
    %v7036 = vadd.f32 %v6968, %v6974
    %v7037 = vadd.f32 %v6969, %v6974
    %v7038 = vadd.f32 %v6970, %v6974
    %v7039 = vadd.f32 %v5881, %v6975
    %v7040 = vadd.f32 %v5882, %v6976
    %v7041 = vadd.f32 %v5883, %v6977
    %v7042 = vadd.f32 %v5884, %v6978
    %v7043 = vadd.f32 %v5885, %v6979
    %v7044 = vadd.f32 %v5886, %v6980
    %v7045 = vadd.f32 %v5887, %v6981
    %v7046 = vadd.f32 %v5888, %v6982
    %v7047 = vadd.f32 %v5889, %v6983
    %v7048 = vadd.f32 %v5890, %v6984
    %v7049 = vadd.f32 %v5891, %v6985
    %v7050 = vadd.f32 %v5892, %v6986
    %v7051 = vadd.f32 %v5893, %v6987
    %v7052 = vadd.f32 %v5894, %v6988
    %v7053 = vadd.f32 %v5895, %v6989
    %v7054 = vadd.f32 %v5896, %v6990
    %v7055 = vadd.f32 %v5897, %v6991
    %v7056 = vadd.f32 %v5898, %v6992
    %v7057 = vadd.f32 %v5899, %v6993
    %v7058 = vadd.f32 %v5900, %v6994
    %v7059 = vadd.f32 %v5901, %v6995
    %v7060 = vadd.f32 %v5902, %v6996
    %v7061 = vadd.f32 %v5903, %v6997
    %v7062 = vadd.f32 %v5904, %v6998
    %v7063 = vadd.f32 %v5905, %v6999
    %v7064 = vadd.f32 %v5906, %v7000
    %v7065 = vadd.f32 %v5907, %v7001
    %v7066 = vadd.f32 %v5908, %v7002
    %v7067 = vadd.f32 %v5909, %v7003
    %v7068 = vadd.f32 %v5910, %v7004
    %v7069 = vadd.f32 %v5911, %v7005
    %v7070 = vadd.f32 %v5912, %v7006
    %v7071 = vadd.f32 %v5913, %v7007
    %v7072 = vadd.f32 %v5914, %v7008
    %v7073 = vadd.f32 %v5915, %v7009
    %v7074 = vadd.f32 %v5916, %v7010
    %v7075 = vadd.f32 %v5917, %v7011
    %v7076 = vadd.f32 %v5918, %v7012
    %v7077 = vadd.f32 %v5919, %v7013
    %v7078 = vadd.f32 %v5920, %v7014
    %v7079 = vadd.f32 %v5921, %v7015
    %v7080 = vadd.f32 %v5922, %v7016
    %v7081 = vadd.f32 %v5923, %v7017
    %v7082 = vadd.f32 %v5924, %v7018
    %v7083 = vadd.f32 %v5925, %v7019
    %v7084 = vadd.f32 %v5926, %v7020
    %v7085 = vadd.f32 %v5927, %v7021
    %v7086 = vadd.f32 %v5928, %v7022
    %v7087 = vadd.f32 %v5929, %v7023
    %v7088 = vadd.f32 %v5930, %v7024
    %v7089 = vadd.f32 %v5931, %v7025
    %v7090 = vadd.f32 %v5932, %v7026
    %v7091 = vadd.f32 %v5933, %v7027
    %v7092 = vadd.f32 %v5934, %v7028
    %v7093 = vadd.f32 %v5935, %v7029
    %v7094 = vadd.f32 %v5936, %v7030
    %v7095 = vadd.f32 %v5937, %v7031
    %v7096 = vadd.f32 %v5938, %v7032
    %v7097 = vadd.f32 %v5939, %v7033
    %v7098 = vadd.f32 %v5940, %v7034
    %v7099 = vadd.f32 %v5941, %v7035
    %v7100 = vadd.f32 %v5942, %v7036
    %v7101 = vadd.f32 %v5943, %v7037
    %v7102 = vadd.f32 %v5944, %v7038
    %v7103 = vmax.f32 %v7039, 0.0
    %v7104 = vmax.f32 %v7040, 0.0
    %v7105 = vmax.f32 %v7041, 0.0
    %v7106 = vmax.f32 %v7042, 0.0
    %v7107 = vmax.f32 %v7043, 0.0
    %v7108 = vmax.f32 %v7044, 0.0
    %v7109 = vmax.f32 %v7045, 0.0
    %v7110 = vmax.f32 %v7046, 0.0
    %v7111 = vmax.f32 %v7047, 0.0
    %v7112 = vmax.f32 %v7048, 0.0
    %v7113 = vmax.f32 %v7049, 0.0
    %v7114 = vmax.f32 %v7050, 0.0
    %v7115 = vmax.f32 %v7051, 0.0
    %v7116 = vmax.f32 %v7052, 0.0
    %v7117 = vmax.f32 %v7053, 0.0
    %v7118 = vmax.f32 %v7054, 0.0
    %v7119 = vmax.f32 %v7055, 0.0
    %v7120 = vmax.f32 %v7056, 0.0
    %v7121 = vmax.f32 %v7057, 0.0
    %v7122 = vmax.f32 %v7058, 0.0
    %v7123 = vmax.f32 %v7059, 0.0
    %v7124 = vmax.f32 %v7060, 0.0
    %v7125 = vmax.f32 %v7061, 0.0
    %v7126 = vmax.f32 %v7062, 0.0
    %v7127 = vmax.f32 %v7063, 0.0
    %v7128 = vmax.f32 %v7064, 0.0
    %v7129 = vmax.f32 %v7065, 0.0
    %v7130 = vmax.f32 %v7066, 0.0
    %v7131 = vmax.f32 %v7067, 0.0
    %v7132 = vmax.f32 %v7068, 0.0
    %v7133 = vmax.f32 %v7069, 0.0
    %v7134 = vmax.f32 %v7070, 0.0
    %v7135 = vmax.f32 %v7071, 0.0
    %v7136 = vmax.f32 %v7072, 0.0
    %v7137 = vmax.f32 %v7073, 0.0
    %v7138 = vmax.f32 %v7074, 0.0
    %v7139 = vmax.f32 %v7075, 0.0
    %v7140 = vmax.f32 %v7076, 0.0
    %v7141 = vmax.f32 %v7077, 0.0
    %v7142 = vmax.f32 %v7078, 0.0
    %v7143 = vmax.f32 %v7079, 0.0
    %v7144 = vmax.f32 %v7080, 0.0
    %v7145 = vmax.f32 %v7081, 0.0
    %v7146 = vmax.f32 %v7082, 0.0
    %v7147 = vmax.f32 %v7083, 0.0
    %v7148 = vmax.f32 %v7084, 0.0
    %v7149 = vmax.f32 %v7085, 0.0
    %v7150 = vmax.f32 %v7086, 0.0
    %v7151 = vmax.f32 %v7087, 0.0
    %v7152 = vmax.f32 %v7088, 0.0
    %v7153 = vmax.f32 %v7089, 0.0
    %v7154 = vmax.f32 %v7090, 0.0
    %v7155 = vmax.f32 %v7091, 0.0
    %v7156 = vmax.f32 %v7092, 0.0
    %v7157 = vmax.f32 %v7093, 0.0
    %v7158 = vmax.f32 %v7094, 0.0
    %v7159 = vmax.f32 %v7095, 0.0
    %v7160 = vmax.f32 %v7096, 0.0
    %v7161 = vmax.f32 %v7097, 0.0
    %v7162 = vmax.f32 %v7098, 0.0
    %v7163 = vmax.f32 %v7099, 0.0
    %v7164 = vmax.f32 %v7100, 0.0
    %v7165 = vmax.f32 %v7101, 0.0
    %v7166 = vmax.f32 %v7102, 0.0
    %v7199 = vrot.slane %v7105, 7
    %vm7200 = vcmask 1041409
    %v7201 = vsel %vm7200, %v7199, %v7103
    %v7202 = vrot.slane %v7107, 6
    %vm7203 = vcmask 1042434
    %v7204 = vsel %vm7203, %v7202, %v7201
    %v7205 = vrot.slane %v7109, 5
    %vm7206 = vcmask 1043459
    %v7207 = vsel %vm7206, %v7205, %v7204
    %v7208 = vrot.slane %v7111, 4
    %vm7209 = vcmask 1044484
    %v7210 = vsel %vm7209, %v7208, %v7207
    %v7211 = vrot.slane %v7113, 3
    %vm7212 = vcmask 1045509
    %v7213 = vsel %vm7212, %v7211, %v7210
    %v7214 = vrot.slane %v7115, 2
    %vm7215 = vcmask 1046534
    %v7216 = vsel %vm7215, %v7214, %v7213
    %v7217 = vrot.slane %v7117, 1
    %vm7218 = vcmask 1047559
    %v7219 = vsel %vm7218, %v7217, %v7216
    %v7220 = vrot.slane %v7121, 7
    %v7221 = vsel %vm7200, %v7220, %v7119
    %v7222 = vrot.slane %v7123, 6
    %v7223 = vsel %vm7203, %v7222, %v7221
    %v7224 = vrot.slane %v7125, 5
    %v7225 = vsel %vm7206, %v7224, %v7223
    %v7226 = vrot.slane %v7127, 4
    %v7227 = vsel %vm7209, %v7226, %v7225
    %v7228 = vrot.slane %v7129, 3
    %v7229 = vsel %vm7212, %v7228, %v7227
    %v7230 = vrot.slane %v7131, 2
    %v7231 = vsel %vm7215, %v7230, %v7229
    %v7232 = vrot.slane %v7133, 1
    %v7233 = vsel %vm7218, %v7232, %v7231
    %v7234 = vrot.slane %v7137, 7
    %v7235 = vsel %vm7200, %v7234, %v7135
    %v7236 = vrot.slane %v7139, 6
    %v7237 = vsel %vm7203, %v7236, %v7235
    %v7238 = vrot.slane %v7141, 5
    %v7239 = vsel %vm7206, %v7238, %v7237
    %v7240 = vrot.slane %v7143, 4
    %v7241 = vsel %vm7209, %v7240, %v7239
    %v7242 = vrot.slane %v7145, 3
    %v7243 = vsel %vm7212, %v7242, %v7241
    %v7244 = vrot.slane %v7147, 2
    %v7245 = vsel %vm7215, %v7244, %v7243
    %v7246 = vrot.slane %v7149, 1
    %v7247 = vsel %vm7218, %v7246, %v7245
    %v7248 = vrot.slane %v7153, 7
    %v7249 = vsel %vm7200, %v7248, %v7151
    %v7250 = vrot.slane %v7155, 6
    %v7251 = vsel %vm7203, %v7250, %v7249
    %v7252 = vrot.slane %v7157, 5
    %v7253 = vsel %vm7206, %v7252, %v7251
    %v7254 = vrot.slane %v7159, 4
    %v7255 = vsel %vm7209, %v7254, %v7253
    %v7256 = vrot.slane %v7161, 3
    %v7257 = vsel %vm7212, %v7256, %v7255
    %v7258 = vrot.slane %v7163, 2
    %v7259 = vsel %vm7215, %v7258, %v7257
    %v7260 = vrot.slane %v7165, 1
    %v7261 = vsel %vm7218, %v7260, %v7259
    %v7266 = vrot.slane %v7103, 1
    %v7267 = vsel %vm7200, %v7105, %v7266
    %v7268 = vrot.slane %v7107, 7
    %v7269 = vsel %vm7203, %v7268, %v7267
    %v7270 = vrot.slane %v7109, 6
    %v7271 = vsel %vm7206, %v7270, %v7269
    %v7272 = vrot.slane %v7111, 5
    %v7273 = vsel %vm7209, %v7272, %v7271
    %v7274 = vrot.slane %v7113, 4
    %v7275 = vsel %vm7212, %v7274, %v7273
    %v7276 = vrot.slane %v7115, 3
    %v7277 = vsel %vm7215, %v7276, %v7275
    %v7278 = vrot.slane %v7117, 2
    %v7279 = vsel %vm7218, %v7278, %v7277
    %v7280 = vrot.slane %v7119, 1
    %v7281 = vsel %vm7200, %v7121, %v7280
    %v7282 = vrot.slane %v7123, 7
    %v7283 = vsel %vm7203, %v7282, %v7281
    %v7284 = vrot.slane %v7125, 6
    %v7285 = vsel %vm7206, %v7284, %v7283
    %v7286 = vrot.slane %v7127, 5
    %v7287 = vsel %vm7209, %v7286, %v7285
    %v7288 = vrot.slane %v7129, 4
    %v7289 = vsel %vm7212, %v7288, %v7287
    %v7290 = vrot.slane %v7131, 3
    %v7291 = vsel %vm7215, %v7290, %v7289
    %v7292 = vrot.slane %v7133, 2
    %v7293 = vsel %vm7218, %v7292, %v7291
    %v7294 = vrot.slane %v7135, 1
    %v7295 = vsel %vm7200, %v7137, %v7294
    %v7296 = vrot.slane %v7139, 7
    %v7297 = vsel %vm7203, %v7296, %v7295
    %v7298 = vrot.slane %v7141, 6
    %v7299 = vsel %vm7206, %v7298, %v7297
    %v7300 = vrot.slane %v7143, 5
    %v7301 = vsel %vm7209, %v7300, %v7299
    %v7302 = vrot.slane %v7145, 4
    %v7303 = vsel %vm7212, %v7302, %v7301
    %v7304 = vrot.slane %v7147, 3
    %v7305 = vsel %vm7215, %v7304, %v7303
    %v7306 = vrot.slane %v7149, 2
    %v7307 = vsel %vm7218, %v7306, %v7305
    %v7308 = vrot.slane %v7151, 1
    %v7309 = vsel %vm7200, %v7153, %v7308
    %v7310 = vrot.slane %v7155, 7
    %v7311 = vsel %vm7203, %v7310, %v7309
    %v7312 = vrot.slane %v7157, 6
    %v7313 = vsel %vm7206, %v7312, %v7311
    %v7314 = vrot.slane %v7159, 5
    %v7315 = vsel %vm7209, %v7314, %v7313
    %v7316 = vrot.slane %v7161, 4
    %v7317 = vsel %vm7212, %v7316, %v7315
    %v7318 = vrot.slane %v7163, 3
    %v7319 = vsel %vm7215, %v7318, %v7317
    %v7320 = vrot.slane %v7165, 2
    %v7321 = vsel %vm7218, %v7320, %v7319
    %7322 = vrot.lane.b32.xlu0 %v7279, 16
    %v7323 = vpop.permute.xlu0 %7322
    %7324 = vrot.lane.b32.xlu0 %v7293, 16
    %v7325 = vpop.permute.xlu0 %7324
    %7326 = vrot.lane.b32.xlu0 %v7307, 16
    %v7327 = vpop.permute.xlu0 %7326
    %7328 = vrot.lane.b32.xlu0 %v7321, 16
    %v7329 = vpop.permute.xlu0 %7328
    %v7334 = vrot.slane %v7103, 2
    %v7335 = vrot.slane %v7105, 1
    %v7336 = vsel %vm7200, %v7335, %v7334
    %v7337 = vsel %vm7203, %v7107, %v7336
    %v7338 = vrot.slane %v7109, 7
    %v7339 = vsel %vm7206, %v7338, %v7337
    %v7340 = vrot.slane %v7111, 6
    %v7341 = vsel %vm7209, %v7340, %v7339
    %v7342 = vrot.slane %v7113, 5
    %v7343 = vsel %vm7212, %v7342, %v7341
    %v7344 = vrot.slane %v7115, 4
    %v7345 = vsel %vm7215, %v7344, %v7343
    %v7346 = vrot.slane %v7117, 3
    %v7347 = vsel %vm7218, %v7346, %v7345
    %v7348 = vrot.slane %v7119, 2
    %v7349 = vrot.slane %v7121, 1
    %v7350 = vsel %vm7200, %v7349, %v7348
    %v7351 = vsel %vm7203, %v7123, %v7350
    %v7352 = vrot.slane %v7125, 7
    %v7353 = vsel %vm7206, %v7352, %v7351
    %v7354 = vrot.slane %v7127, 6
    %v7355 = vsel %vm7209, %v7354, %v7353
    %v7356 = vrot.slane %v7129, 5
    %v7357 = vsel %vm7212, %v7356, %v7355
    %v7358 = vrot.slane %v7131, 4
    %v7359 = vsel %vm7215, %v7358, %v7357
    %v7360 = vrot.slane %v7133, 3
    %v7361 = vsel %vm7218, %v7360, %v7359
    %v7362 = vrot.slane %v7135, 2
    %v7363 = vrot.slane %v7137, 1
    %v7364 = vsel %vm7200, %v7363, %v7362
    %v7365 = vsel %vm7203, %v7139, %v7364
    %v7366 = vrot.slane %v7141, 7
    %v7367 = vsel %vm7206, %v7366, %v7365
    %v7368 = vrot.slane %v7143, 6
    %v7369 = vsel %vm7209, %v7368, %v7367
    %v7370 = vrot.slane %v7145, 5
    %v7371 = vsel %vm7212, %v7370, %v7369
    %v7372 = vrot.slane %v7147, 4
    %v7373 = vsel %vm7215, %v7372, %v7371
    %v7374 = vrot.slane %v7149, 3
    %v7375 = vsel %vm7218, %v7374, %v7373
    %v7376 = vrot.slane %v7151, 2
    %v7377 = vrot.slane %v7153, 1
    %v7378 = vsel %vm7200, %v7377, %v7376
    %v7379 = vsel %vm7203, %v7155, %v7378
    %v7380 = vrot.slane %v7157, 7
    %v7381 = vsel %vm7206, %v7380, %v7379
    %v7382 = vrot.slane %v7159, 6
    %v7383 = vsel %vm7209, %v7382, %v7381
    %v7384 = vrot.slane %v7161, 5
    %v7385 = vsel %vm7212, %v7384, %v7383
    %v7386 = vrot.slane %v7163, 4
    %v7387 = vsel %vm7215, %v7386, %v7385
    %v7388 = vrot.slane %v7165, 3
    %v7389 = vsel %vm7218, %v7388, %v7387
    %7390 = vrot.lane.b32.xlu0 %v7347, 32
    %v7391 = vpop.permute.xlu0 %7390
    %7392 = vrot.lane.b32.xlu0 %v7361, 32
    %v7393 = vpop.permute.xlu0 %7392
    %7394 = vrot.lane.b32.xlu0 %v7375, 32
    %v7395 = vpop.permute.xlu0 %7394
    %7396 = vrot.lane.b32.xlu0 %v7389, 32
    %v7397 = vpop.permute.xlu0 %7396
    %v7402 = vrot.slane %v7103, 3
    %v7403 = vrot.slane %v7105, 2
    %v7404 = vsel %vm7200, %v7403, %v7402
    %v7405 = vrot.slane %v7107, 1
    %v7406 = vsel %vm7203, %v7405, %v7404
    %v7407 = vsel %vm7206, %v7109, %v7406
    %v7408 = vrot.slane %v7111, 7
    %v7409 = vsel %vm7209, %v7408, %v7407
    %v7410 = vrot.slane %v7113, 6
    %v7411 = vsel %vm7212, %v7410, %v7409
    %v7412 = vrot.slane %v7115, 5
    %v7413 = vsel %vm7215, %v7412, %v7411
    %v7414 = vrot.slane %v7117, 4
    %v7415 = vsel %vm7218, %v7414, %v7413
    %v7416 = vrot.slane %v7119, 3
    %v7417 = vrot.slane %v7121, 2
    %v7418 = vsel %vm7200, %v7417, %v7416
    %v7419 = vrot.slane %v7123, 1
    %v7420 = vsel %vm7203, %v7419, %v7418
    %v7421 = vsel %vm7206, %v7125, %v7420
    %v7422 = vrot.slane %v7127, 7
    %v7423 = vsel %vm7209, %v7422, %v7421
    %v7424 = vrot.slane %v7129, 6
    %v7425 = vsel %vm7212, %v7424, %v7423
    %v7426 = vrot.slane %v7131, 5
    %v7427 = vsel %vm7215, %v7426, %v7425
    %v7428 = vrot.slane %v7133, 4
    %v7429 = vsel %vm7218, %v7428, %v7427
    %v7430 = vrot.slane %v7135, 3
    %v7431 = vrot.slane %v7137, 2
    %v7432 = vsel %vm7200, %v7431, %v7430
    %v7433 = vrot.slane %v7139, 1
    %v7434 = vsel %vm7203, %v7433, %v7432
    %v7435 = vsel %vm7206, %v7141, %v7434
    %v7436 = vrot.slane %v7143, 7
    %v7437 = vsel %vm7209, %v7436, %v7435
    %v7438 = vrot.slane %v7145, 6
    %v7439 = vsel %vm7212, %v7438, %v7437
    %v7440 = vrot.slane %v7147, 5
    %v7441 = vsel %vm7215, %v7440, %v7439
    %v7442 = vrot.slane %v7149, 4
    %v7443 = vsel %vm7218, %v7442, %v7441
    %v7444 = vrot.slane %v7151, 3
    %v7445 = vrot.slane %v7153, 2
    %v7446 = vsel %vm7200, %v7445, %v7444
    %v7447 = vrot.slane %v7155, 1
    %v7448 = vsel %vm7203, %v7447, %v7446
    %v7449 = vsel %vm7206, %v7157, %v7448
    %v7450 = vrot.slane %v7159, 7
    %v7451 = vsel %vm7209, %v7450, %v7449
    %v7452 = vrot.slane %v7161, 6
    %v7453 = vsel %vm7212, %v7452, %v7451
    %v7454 = vrot.slane %v7163, 5
    %v7455 = vsel %vm7215, %v7454, %v7453
    %v7456 = vrot.slane %v7165, 4
    %v7457 = vsel %vm7218, %v7456, %v7455
    %7458 = vrot.lane.b32.xlu0 %v7415, 48
    %v7459 = vpop.permute.xlu0 %7458
    %7460 = vrot.lane.b32.xlu0 %v7429, 48
    %v7461 = vpop.permute.xlu0 %7460
    %7462 = vrot.lane.b32.xlu0 %v7443, 48
    %v7463 = vpop.permute.xlu0 %7462
    %7464 = vrot.lane.b32.xlu0 %v7457, 48
    %v7465 = vpop.permute.xlu0 %7464
    %v7470 = vrot.slane %v7103, 4
    %v7471 = vrot.slane %v7105, 3
    %v7472 = vsel %vm7200, %v7471, %v7470
    %v7473 = vrot.slane %v7107, 2
    %v7474 = vsel %vm7203, %v7473, %v7472
    %v7475 = vrot.slane %v7109, 1
    %v7476 = vsel %vm7206, %v7475, %v7474
    %v7477 = vsel %vm7209, %v7111, %v7476
    %v7478 = vrot.slane %v7113, 7
    %v7479 = vsel %vm7212, %v7478, %v7477
    %v7480 = vrot.slane %v7115, 6
    %v7481 = vsel %vm7215, %v7480, %v7479
    %v7482 = vrot.slane %v7117, 5
    %v7483 = vsel %vm7218, %v7482, %v7481
    %v7484 = vrot.slane %v7119, 4
    %v7485 = vrot.slane %v7121, 3
    %v7486 = vsel %vm7200, %v7485, %v7484
    %v7487 = vrot.slane %v7123, 2
    %v7488 = vsel %vm7203, %v7487, %v7486
    %v7489 = vrot.slane %v7125, 1
    %v7490 = vsel %vm7206, %v7489, %v7488
    %v7491 = vsel %vm7209, %v7127, %v7490
    %v7492 = vrot.slane %v7129, 7
    %v7493 = vsel %vm7212, %v7492, %v7491
    %v7494 = vrot.slane %v7131, 6
    %v7495 = vsel %vm7215, %v7494, %v7493
    %v7496 = vrot.slane %v7133, 5
    %v7497 = vsel %vm7218, %v7496, %v7495
    %v7498 = vrot.slane %v7135, 4
    %v7499 = vrot.slane %v7137, 3
    %v7500 = vsel %vm7200, %v7499, %v7498
    %v7501 = vrot.slane %v7139, 2
    %v7502 = vsel %vm7203, %v7501, %v7500
    %v7503 = vrot.slane %v7141, 1
    %v7504 = vsel %vm7206, %v7503, %v7502
    %v7505 = vsel %vm7209, %v7143, %v7504
    %v7506 = vrot.slane %v7145, 7
    %v7507 = vsel %vm7212, %v7506, %v7505
    %v7508 = vrot.slane %v7147, 6
    %v7509 = vsel %vm7215, %v7508, %v7507
    %v7510 = vrot.slane %v7149, 5
    %v7511 = vsel %vm7218, %v7510, %v7509
    %v7512 = vrot.slane %v7151, 4
    %v7513 = vrot.slane %v7153, 3
    %v7514 = vsel %vm7200, %v7513, %v7512
    %v7515 = vrot.slane %v7155, 2
    %v7516 = vsel %vm7203, %v7515, %v7514
    %v7517 = vrot.slane %v7157, 1
    %v7518 = vsel %vm7206, %v7517, %v7516
    %v7519 = vsel %vm7209, %v7159, %v7518
    %v7520 = vrot.slane %v7161, 7
    %v7521 = vsel %vm7212, %v7520, %v7519
    %v7522 = vrot.slane %v7163, 6
    %v7523 = vsel %vm7215, %v7522, %v7521
    %v7524 = vrot.slane %v7165, 5
    %v7525 = vsel %vm7218, %v7524, %v7523
    %7526 = vrot.lane.b32.xlu0 %v7483, 64
    %v7527 = vpop.permute.xlu0 %7526
    %7528 = vrot.lane.b32.xlu0 %v7497, 64
    %v7529 = vpop.permute.xlu0 %7528
    %7530 = vrot.lane.b32.xlu0 %v7511, 64
    %v7531 = vpop.permute.xlu0 %7530
    %7532 = vrot.lane.b32.xlu0 %v7525, 64
    %v7533 = vpop.permute.xlu0 %7532
    %v7538 = vrot.slane %v7103, 5
    %v7539 = vrot.slane %v7105, 4
    %v7540 = vsel %vm7200, %v7539, %v7538
    %v7541 = vrot.slane %v7107, 3
    %v7542 = vsel %vm7203, %v7541, %v7540
    %v7543 = vrot.slane %v7109, 2
    %v7544 = vsel %vm7206, %v7543, %v7542
    %v7545 = vrot.slane %v7111, 1
    %v7546 = vsel %vm7209, %v7545, %v7544
    %v7547 = vsel %vm7212, %v7113, %v7546
    %v7548 = vrot.slane %v7115, 7
    %v7549 = vsel %vm7215, %v7548, %v7547
    %v7550 = vrot.slane %v7117, 6
    %v7551 = vsel %vm7218, %v7550, %v7549
    %v7552 = vrot.slane %v7119, 5
    %v7553 = vrot.slane %v7121, 4
    %v7554 = vsel %vm7200, %v7553, %v7552
    %v7555 = vrot.slane %v7123, 3
    %v7556 = vsel %vm7203, %v7555, %v7554
    %v7557 = vrot.slane %v7125, 2
    %v7558 = vsel %vm7206, %v7557, %v7556
    %v7559 = vrot.slane %v7127, 1
    %v7560 = vsel %vm7209, %v7559, %v7558
    %v7561 = vsel %vm7212, %v7129, %v7560
    %v7562 = vrot.slane %v7131, 7
    %v7563 = vsel %vm7215, %v7562, %v7561
    %v7564 = vrot.slane %v7133, 6
    %v7565 = vsel %vm7218, %v7564, %v7563
    %v7566 = vrot.slane %v7135, 5
    %v7567 = vrot.slane %v7137, 4
    %v7568 = vsel %vm7200, %v7567, %v7566
    %v7569 = vrot.slane %v7139, 3
    %v7570 = vsel %vm7203, %v7569, %v7568
    %v7571 = vrot.slane %v7141, 2
    %v7572 = vsel %vm7206, %v7571, %v7570
    %v7573 = vrot.slane %v7143, 1
    %v7574 = vsel %vm7209, %v7573, %v7572
    %v7575 = vsel %vm7212, %v7145, %v7574
    %v7576 = vrot.slane %v7147, 7
    %v7577 = vsel %vm7215, %v7576, %v7575
    %v7578 = vrot.slane %v7149, 6
    %v7579 = vsel %vm7218, %v7578, %v7577
    %v7580 = vrot.slane %v7151, 5
    %v7581 = vrot.slane %v7153, 4
    %v7582 = vsel %vm7200, %v7581, %v7580
    %v7583 = vrot.slane %v7155, 3
    %v7584 = vsel %vm7203, %v7583, %v7582
    %v7585 = vrot.slane %v7157, 2
    %v7586 = vsel %vm7206, %v7585, %v7584
    %v7587 = vrot.slane %v7159, 1
    %v7588 = vsel %vm7209, %v7587, %v7586
    %v7589 = vsel %vm7212, %v7161, %v7588
    %v7590 = vrot.slane %v7163, 7
    %v7591 = vsel %vm7215, %v7590, %v7589
    %v7592 = vrot.slane %v7165, 6
    %v7593 = vsel %vm7218, %v7592, %v7591
    %7594 = vrot.lane.b32.xlu0 %v7551, 80
    %v7595 = vpop.permute.xlu0 %7594
    %7596 = vrot.lane.b32.xlu0 %v7565, 80
    %v7597 = vpop.permute.xlu0 %7596
    %7598 = vrot.lane.b32.xlu0 %v7579, 80
    %v7599 = vpop.permute.xlu0 %7598
    %7600 = vrot.lane.b32.xlu0 %v7593, 80
    %v7601 = vpop.permute.xlu0 %7600
    %v7606 = vrot.slane %v7103, 6
    %v7607 = vrot.slane %v7105, 5
    %v7608 = vsel %vm7200, %v7607, %v7606
    %v7609 = vrot.slane %v7107, 4
    %v7610 = vsel %vm7203, %v7609, %v7608
    %v7611 = vrot.slane %v7109, 3
    %v7612 = vsel %vm7206, %v7611, %v7610
    %v7613 = vrot.slane %v7111, 2
    %v7614 = vsel %vm7209, %v7613, %v7612
    %v7615 = vrot.slane %v7113, 1
    %v7616 = vsel %vm7212, %v7615, %v7614
    %v7617 = vsel %vm7215, %v7115, %v7616
    %v7618 = vrot.slane %v7117, 7
    %v7619 = vsel %vm7218, %v7618, %v7617
    %v7620 = vrot.slane %v7119, 6
    %v7621 = vrot.slane %v7121, 5
    %v7622 = vsel %vm7200, %v7621, %v7620
    %v7623 = vrot.slane %v7123, 4
    %v7624 = vsel %vm7203, %v7623, %v7622
    %v7625 = vrot.slane %v7125, 3
    %v7626 = vsel %vm7206, %v7625, %v7624
    %v7627 = vrot.slane %v7127, 2
    %v7628 = vsel %vm7209, %v7627, %v7626
    %v7629 = vrot.slane %v7129, 1
    %v7630 = vsel %vm7212, %v7629, %v7628
    %v7631 = vsel %vm7215, %v7131, %v7630
    %v7632 = vrot.slane %v7133, 7
    %v7633 = vsel %vm7218, %v7632, %v7631
    %v7634 = vrot.slane %v7135, 6
    %v7635 = vrot.slane %v7137, 5
    %v7636 = vsel %vm7200, %v7635, %v7634
    %v7637 = vrot.slane %v7139, 4
    %v7638 = vsel %vm7203, %v7637, %v7636
    %v7639 = vrot.slane %v7141, 3
    %v7640 = vsel %vm7206, %v7639, %v7638
    %v7641 = vrot.slane %v7143, 2
    %v7642 = vsel %vm7209, %v7641, %v7640
    %v7643 = vrot.slane %v7145, 1
    %v7644 = vsel %vm7212, %v7643, %v7642
    %v7645 = vsel %vm7215, %v7147, %v7644
    %v7646 = vrot.slane %v7149, 7
    %v7647 = vsel %vm7218, %v7646, %v7645
    %v7648 = vrot.slane %v7151, 6
    %v7649 = vrot.slane %v7153, 5
    %v7650 = vsel %vm7200, %v7649, %v7648
    %v7651 = vrot.slane %v7155, 4
    %v7652 = vsel %vm7203, %v7651, %v7650
    %v7653 = vrot.slane %v7157, 3
    %v7654 = vsel %vm7206, %v7653, %v7652
    %v7655 = vrot.slane %v7159, 2
    %v7656 = vsel %vm7209, %v7655, %v7654
    %v7657 = vrot.slane %v7161, 1
    %v7658 = vsel %vm7212, %v7657, %v7656
    %v7659 = vsel %vm7215, %v7163, %v7658
    %v7660 = vrot.slane %v7165, 7
    %v7661 = vsel %vm7218, %v7660, %v7659
    %7662 = vrot.lane.b32.xlu0 %v7619, 96
    %v7663 = vpop.permute.xlu0 %7662
    %7664 = vrot.lane.b32.xlu0 %v7633, 96
    %v7665 = vpop.permute.xlu0 %7664
    %7666 = vrot.lane.b32.xlu0 %v7647, 96
    %v7667 = vpop.permute.xlu0 %7666
    %7668 = vrot.lane.b32.xlu0 %v7661, 96
    %v7669 = vpop.permute.xlu0 %7668
    %v7674 = vrot.slane %v7103, 7
    %v7675 = vrot.slane %v7105, 6
    %v7676 = vsel %vm7200, %v7675, %v7674
    %v7677 = vrot.slane %v7107, 5
    %v7678 = vsel %vm7203, %v7677, %v7676
    %v7679 = vrot.slane %v7109, 4
    %v7680 = vsel %vm7206, %v7679, %v7678
    %v7681 = vrot.slane %v7111, 3
    %v7682 = vsel %vm7209, %v7681, %v7680
    %v7683 = vrot.slane %v7113, 2
    %v7684 = vsel %vm7212, %v7683, %v7682
    %v7685 = vrot.slane %v7115, 1
    %v7686 = vsel %vm7215, %v7685, %v7684
    %v7687 = vsel %vm7218, %v7117, %v7686
    %v7688 = vrot.slane %v7119, 7
    %v7689 = vrot.slane %v7121, 6
    %v7690 = vsel %vm7200, %v7689, %v7688
    %v7691 = vrot.slane %v7123, 5
    %v7692 = vsel %vm7203, %v7691, %v7690
    %v7693 = vrot.slane %v7125, 4
    %v7694 = vsel %vm7206, %v7693, %v7692
    %v7695 = vrot.slane %v7127, 3
    %v7696 = vsel %vm7209, %v7695, %v7694
    %v7697 = vrot.slane %v7129, 2
    %v7698 = vsel %vm7212, %v7697, %v7696
    %v7699 = vrot.slane %v7131, 1
    %v7700 = vsel %vm7215, %v7699, %v7698
    %v7701 = vsel %vm7218, %v7133, %v7700
    %v7702 = vrot.slane %v7135, 7
    %v7703 = vrot.slane %v7137, 6
    %v7704 = vsel %vm7200, %v7703, %v7702
    %v7705 = vrot.slane %v7139, 5
    %v7706 = vsel %vm7203, %v7705, %v7704
    %v7707 = vrot.slane %v7141, 4
    %v7708 = vsel %vm7206, %v7707, %v7706
    %v7709 = vrot.slane %v7143, 3
    %v7710 = vsel %vm7209, %v7709, %v7708
    %v7711 = vrot.slane %v7145, 2
    %v7712 = vsel %vm7212, %v7711, %v7710
    %v7713 = vrot.slane %v7147, 1
    %v7714 = vsel %vm7215, %v7713, %v7712
    %v7715 = vsel %vm7218, %v7149, %v7714
    %v7716 = vrot.slane %v7151, 7
    %v7717 = vrot.slane %v7153, 6
    %v7718 = vsel %vm7200, %v7717, %v7716
    %v7719 = vrot.slane %v7155, 5
    %v7720 = vsel %vm7203, %v7719, %v7718
    %v7721 = vrot.slane %v7157, 4
    %v7722 = vsel %vm7206, %v7721, %v7720
    %v7723 = vrot.slane %v7159, 3
    %v7724 = vsel %vm7209, %v7723, %v7722
    %v7725 = vrot.slane %v7161, 2
    %v7726 = vsel %vm7212, %v7725, %v7724
    %v7727 = vrot.slane %v7163, 1
    %v7728 = vsel %vm7215, %v7727, %v7726
    %v7729 = vsel %vm7218, %v7165, %v7728
    %7730 = vrot.lane.b32.xlu0 %v7687, 112
    %v7731 = vpop.permute.xlu0 %7730
    %7732 = vrot.lane.b32.xlu0 %v7701, 112
    %v7733 = vpop.permute.xlu0 %7732
    %7734 = vrot.lane.b32.xlu0 %v7715, 112
    %v7735 = vpop.permute.xlu0 %7734
    %7736 = vrot.lane.b32.xlu0 %v7729, 112
    %v7737 = vpop.permute.xlu0 %7736
    %v7774 = vrot.slane %v7106, 7
    %v7775 = vsel %vm7200, %v7774, %v7104
    %v7776 = vrot.slane %v7108, 6
    %v7777 = vsel %vm7203, %v7776, %v7775
    %v7778 = vrot.slane %v7110, 5
    %v7779 = vsel %vm7206, %v7778, %v7777
    %v7780 = vrot.slane %v7112, 4
    %v7781 = vsel %vm7209, %v7780, %v7779
    %v7782 = vrot.slane %v7114, 3
    %v7783 = vsel %vm7212, %v7782, %v7781
    %v7784 = vrot.slane %v7116, 2
    %v7785 = vsel %vm7215, %v7784, %v7783
    %v7786 = vrot.slane %v7118, 1
    %v7787 = vsel %vm7218, %v7786, %v7785
    %v7788 = vrot.slane %v7122, 7
    %v7789 = vsel %vm7200, %v7788, %v7120
    %v7790 = vrot.slane %v7124, 6
    %v7791 = vsel %vm7203, %v7790, %v7789
    %v7792 = vrot.slane %v7126, 5
    %v7793 = vsel %vm7206, %v7792, %v7791
    %v7794 = vrot.slane %v7128, 4
    %v7795 = vsel %vm7209, %v7794, %v7793
    %v7796 = vrot.slane %v7130, 3
    %v7797 = vsel %vm7212, %v7796, %v7795
    %v7798 = vrot.slane %v7132, 2
    %v7799 = vsel %vm7215, %v7798, %v7797
    %v7800 = vrot.slane %v7134, 1
    %v7801 = vsel %vm7218, %v7800, %v7799
    %v7802 = vrot.slane %v7138, 7
    %v7803 = vsel %vm7200, %v7802, %v7136
    %v7804 = vrot.slane %v7140, 6
    %v7805 = vsel %vm7203, %v7804, %v7803
    %v7806 = vrot.slane %v7142, 5
    %v7807 = vsel %vm7206, %v7806, %v7805
    %v7808 = vrot.slane %v7144, 4
    %v7809 = vsel %vm7209, %v7808, %v7807
    %v7810 = vrot.slane %v7146, 3
    %v7811 = vsel %vm7212, %v7810, %v7809
    %v7812 = vrot.slane %v7148, 2
    %v7813 = vsel %vm7215, %v7812, %v7811
    %v7814 = vrot.slane %v7150, 1
    %v7815 = vsel %vm7218, %v7814, %v7813
    %v7816 = vrot.slane %v7154, 7
    %v7817 = vsel %vm7200, %v7816, %v7152
    %v7818 = vrot.slane %v7156, 6
    %v7819 = vsel %vm7203, %v7818, %v7817
    %v7820 = vrot.slane %v7158, 5
    %v7821 = vsel %vm7206, %v7820, %v7819
    %v7822 = vrot.slane %v7160, 4
    %v7823 = vsel %vm7209, %v7822, %v7821
    %v7824 = vrot.slane %v7162, 3
    %v7825 = vsel %vm7212, %v7824, %v7823
    %v7826 = vrot.slane %v7164, 2
    %v7827 = vsel %vm7215, %v7826, %v7825
    %v7828 = vrot.slane %v7166, 1
    %v7829 = vsel %vm7218, %v7828, %v7827
    %v7834 = vrot.slane %v7104, 1
    %v7835 = vsel %vm7200, %v7106, %v7834
    %v7836 = vrot.slane %v7108, 7
    %v7837 = vsel %vm7203, %v7836, %v7835
    %v7838 = vrot.slane %v7110, 6
    %v7839 = vsel %vm7206, %v7838, %v7837
    %v7840 = vrot.slane %v7112, 5
    %v7841 = vsel %vm7209, %v7840, %v7839
    %v7842 = vrot.slane %v7114, 4
    %v7843 = vsel %vm7212, %v7842, %v7841
    %v7844 = vrot.slane %v7116, 3
    %v7845 = vsel %vm7215, %v7844, %v7843
    %v7846 = vrot.slane %v7118, 2
    %v7847 = vsel %vm7218, %v7846, %v7845
    %v7848 = vrot.slane %v7120, 1
    %v7849 = vsel %vm7200, %v7122, %v7848
    %v7850 = vrot.slane %v7124, 7
    %v7851 = vsel %vm7203, %v7850, %v7849
    %v7852 = vrot.slane %v7126, 6
    %v7853 = vsel %vm7206, %v7852, %v7851
    %v7854 = vrot.slane %v7128, 5
    %v7855 = vsel %vm7209, %v7854, %v7853
    %v7856 = vrot.slane %v7130, 4
    %v7857 = vsel %vm7212, %v7856, %v7855
    %v7858 = vrot.slane %v7132, 3
    %v7859 = vsel %vm7215, %v7858, %v7857
    %v7860 = vrot.slane %v7134, 2
    %v7861 = vsel %vm7218, %v7860, %v7859
    %v7862 = vrot.slane %v7136, 1
    %v7863 = vsel %vm7200, %v7138, %v7862
    %v7864 = vrot.slane %v7140, 7
    %v7865 = vsel %vm7203, %v7864, %v7863
    %v7866 = vrot.slane %v7142, 6
    %v7867 = vsel %vm7206, %v7866, %v7865
    %v7868 = vrot.slane %v7144, 5
    %v7869 = vsel %vm7209, %v7868, %v7867
    %v7870 = vrot.slane %v7146, 4
    %v7871 = vsel %vm7212, %v7870, %v7869
    %v7872 = vrot.slane %v7148, 3
    %v7873 = vsel %vm7215, %v7872, %v7871
    %v7874 = vrot.slane %v7150, 2
    %v7875 = vsel %vm7218, %v7874, %v7873
    %v7876 = vrot.slane %v7152, 1
    %v7877 = vsel %vm7200, %v7154, %v7876
    %v7878 = vrot.slane %v7156, 7
    %v7879 = vsel %vm7203, %v7878, %v7877
    %v7880 = vrot.slane %v7158, 6
    %v7881 = vsel %vm7206, %v7880, %v7879
    %v7882 = vrot.slane %v7160, 5
    %v7883 = vsel %vm7209, %v7882, %v7881
    %v7884 = vrot.slane %v7162, 4
    %v7885 = vsel %vm7212, %v7884, %v7883
    %v7886 = vrot.slane %v7164, 3
    %v7887 = vsel %vm7215, %v7886, %v7885
    %v7888 = vrot.slane %v7166, 2
    %v7889 = vsel %vm7218, %v7888, %v7887
    %7890 = vrot.lane.b32.xlu0 %v7847, 16
    %v7891 = vpop.permute.xlu0 %7890
    %7892 = vrot.lane.b32.xlu0 %v7861, 16
    %v7893 = vpop.permute.xlu0 %7892
    %7894 = vrot.lane.b32.xlu0 %v7875, 16
    %v7895 = vpop.permute.xlu0 %7894
    %7896 = vrot.lane.b32.xlu0 %v7889, 16
    %v7897 = vpop.permute.xlu0 %7896
    %v7902 = vrot.slane %v7104, 2
    %v7903 = vrot.slane %v7106, 1
    %v7904 = vsel %vm7200, %v7903, %v7902
    %v7905 = vsel %vm7203, %v7108, %v7904
    %v7906 = vrot.slane %v7110, 7
    %v7907 = vsel %vm7206, %v7906, %v7905
    %v7908 = vrot.slane %v7112, 6
    %v7909 = vsel %vm7209, %v7908, %v7907
    %v7910 = vrot.slane %v7114, 5
    %v7911 = vsel %vm7212, %v7910, %v7909
    %v7912 = vrot.slane %v7116, 4
    %v7913 = vsel %vm7215, %v7912, %v7911
    %v7914 = vrot.slane %v7118, 3
    %v7915 = vsel %vm7218, %v7914, %v7913
    %v7916 = vrot.slane %v7120, 2
    %v7917 = vrot.slane %v7122, 1
    %v7918 = vsel %vm7200, %v7917, %v7916
    %v7919 = vsel %vm7203, %v7124, %v7918
    %v7920 = vrot.slane %v7126, 7
    %v7921 = vsel %vm7206, %v7920, %v7919
    %v7922 = vrot.slane %v7128, 6
    %v7923 = vsel %vm7209, %v7922, %v7921
    %v7924 = vrot.slane %v7130, 5
    %v7925 = vsel %vm7212, %v7924, %v7923
    %v7926 = vrot.slane %v7132, 4
    %v7927 = vsel %vm7215, %v7926, %v7925
    %v7928 = vrot.slane %v7134, 3
    %v7929 = vsel %vm7218, %v7928, %v7927
    %v7930 = vrot.slane %v7136, 2
    %v7931 = vrot.slane %v7138, 1
    %v7932 = vsel %vm7200, %v7931, %v7930
    %v7933 = vsel %vm7203, %v7140, %v7932
    %v7934 = vrot.slane %v7142, 7
    %v7935 = vsel %vm7206, %v7934, %v7933
    %v7936 = vrot.slane %v7144, 6
    %v7937 = vsel %vm7209, %v7936, %v7935
    %v7938 = vrot.slane %v7146, 5
    %v7939 = vsel %vm7212, %v7938, %v7937
    %v7940 = vrot.slane %v7148, 4
    %v7941 = vsel %vm7215, %v7940, %v7939
    %v7942 = vrot.slane %v7150, 3
    %v7943 = vsel %vm7218, %v7942, %v7941
    %v7944 = vrot.slane %v7152, 2
    %v7945 = vrot.slane %v7154, 1
    %v7946 = vsel %vm7200, %v7945, %v7944
    %v7947 = vsel %vm7203, %v7156, %v7946
    %v7948 = vrot.slane %v7158, 7
    %v7949 = vsel %vm7206, %v7948, %v7947
    %v7950 = vrot.slane %v7160, 6
    %v7951 = vsel %vm7209, %v7950, %v7949
    %v7952 = vrot.slane %v7162, 5
    %v7953 = vsel %vm7212, %v7952, %v7951
    %v7954 = vrot.slane %v7164, 4
    %v7955 = vsel %vm7215, %v7954, %v7953
    %v7956 = vrot.slane %v7166, 3
    %v7957 = vsel %vm7218, %v7956, %v7955
    %7958 = vrot.lane.b32.xlu0 %v7915, 32
    %v7959 = vpop.permute.xlu0 %7958
    %7960 = vrot.lane.b32.xlu0 %v7929, 32
    %v7961 = vpop.permute.xlu0 %7960
    %7962 = vrot.lane.b32.xlu0 %v7943, 32
    %v7963 = vpop.permute.xlu0 %7962
    %7964 = vrot.lane.b32.xlu0 %v7957, 32
    %v7965 = vpop.permute.xlu0 %7964
    %v7970 = vrot.slane %v7104, 3
    %v7971 = vrot.slane %v7106, 2
    %v7972 = vsel %vm7200, %v7971, %v7970
    %v7973 = vrot.slane %v7108, 1
    %v7974 = vsel %vm7203, %v7973, %v7972
    %v7975 = vsel %vm7206, %v7110, %v7974
    %v7976 = vrot.slane %v7112, 7
    %v7977 = vsel %vm7209, %v7976, %v7975
    %v7978 = vrot.slane %v7114, 6
    %v7979 = vsel %vm7212, %v7978, %v7977
    %v7980 = vrot.slane %v7116, 5
    %v7981 = vsel %vm7215, %v7980, %v7979
    %v7982 = vrot.slane %v7118, 4
    %v7983 = vsel %vm7218, %v7982, %v7981
    %v7984 = vrot.slane %v7120, 3
    %v7985 = vrot.slane %v7122, 2
    %v7986 = vsel %vm7200, %v7985, %v7984
    %v7987 = vrot.slane %v7124, 1
    %v7988 = vsel %vm7203, %v7987, %v7986
    %v7989 = vsel %vm7206, %v7126, %v7988
    %v7990 = vrot.slane %v7128, 7
    %v7991 = vsel %vm7209, %v7990, %v7989
    %v7992 = vrot.slane %v7130, 6
    %v7993 = vsel %vm7212, %v7992, %v7991
    %v7994 = vrot.slane %v7132, 5
    %v7995 = vsel %vm7215, %v7994, %v7993
    %v7996 = vrot.slane %v7134, 4
    %v7997 = vsel %vm7218, %v7996, %v7995
    %v7998 = vrot.slane %v7136, 3
    %v7999 = vrot.slane %v7138, 2
    %v8000 = vsel %vm7200, %v7999, %v7998
    %v8001 = vrot.slane %v7140, 1
    %v8002 = vsel %vm7203, %v8001, %v8000
    %v8003 = vsel %vm7206, %v7142, %v8002
    %v8004 = vrot.slane %v7144, 7
    %v8005 = vsel %vm7209, %v8004, %v8003
    %v8006 = vrot.slane %v7146, 6
    %v8007 = vsel %vm7212, %v8006, %v8005
    %v8008 = vrot.slane %v7148, 5
    %v8009 = vsel %vm7215, %v8008, %v8007
    %v8010 = vrot.slane %v7150, 4
    %v8011 = vsel %vm7218, %v8010, %v8009
    %v8012 = vrot.slane %v7152, 3
    %v8013 = vrot.slane %v7154, 2
    %v8014 = vsel %vm7200, %v8013, %v8012
    %v8015 = vrot.slane %v7156, 1
    %v8016 = vsel %vm7203, %v8015, %v8014
    %v8017 = vsel %vm7206, %v7158, %v8016
    %v8018 = vrot.slane %v7160, 7
    %v8019 = vsel %vm7209, %v8018, %v8017
    %v8020 = vrot.slane %v7162, 6
    %v8021 = vsel %vm7212, %v8020, %v8019
    %v8022 = vrot.slane %v7164, 5
    %v8023 = vsel %vm7215, %v8022, %v8021
    %v8024 = vrot.slane %v7166, 4
    %v8025 = vsel %vm7218, %v8024, %v8023
    %8026 = vrot.lane.b32.xlu0 %v7983, 48
    %v8027 = vpop.permute.xlu0 %8026
    %8028 = vrot.lane.b32.xlu0 %v7997, 48
    %v8029 = vpop.permute.xlu0 %8028
    %8030 = vrot.lane.b32.xlu0 %v8011, 48
    %v8031 = vpop.permute.xlu0 %8030
    %8032 = vrot.lane.b32.xlu0 %v8025, 48
    %v8033 = vpop.permute.xlu0 %8032
    %v8038 = vrot.slane %v7104, 4
    %v8039 = vrot.slane %v7106, 3
    %v8040 = vsel %vm7200, %v8039, %v8038
    %v8041 = vrot.slane %v7108, 2
    %v8042 = vsel %vm7203, %v8041, %v8040
    %v8043 = vrot.slane %v7110, 1
    %v8044 = vsel %vm7206, %v8043, %v8042
    %v8045 = vsel %vm7209, %v7112, %v8044
    %v8046 = vrot.slane %v7114, 7
    %v8047 = vsel %vm7212, %v8046, %v8045
    %v8048 = vrot.slane %v7116, 6
    %v8049 = vsel %vm7215, %v8048, %v8047
    %v8050 = vrot.slane %v7118, 5
    %v8051 = vsel %vm7218, %v8050, %v8049
    %v8052 = vrot.slane %v7120, 4
    %v8053 = vrot.slane %v7122, 3
    %v8054 = vsel %vm7200, %v8053, %v8052
    %v8055 = vrot.slane %v7124, 2
    %v8056 = vsel %vm7203, %v8055, %v8054
    %v8057 = vrot.slane %v7126, 1
    %v8058 = vsel %vm7206, %v8057, %v8056
    %v8059 = vsel %vm7209, %v7128, %v8058
    %v8060 = vrot.slane %v7130, 7
    %v8061 = vsel %vm7212, %v8060, %v8059
    %v8062 = vrot.slane %v7132, 6
    %v8063 = vsel %vm7215, %v8062, %v8061
    %v8064 = vrot.slane %v7134, 5
    %v8065 = vsel %vm7218, %v8064, %v8063
    %v8066 = vrot.slane %v7136, 4
    %v8067 = vrot.slane %v7138, 3
    %v8068 = vsel %vm7200, %v8067, %v8066
    %v8069 = vrot.slane %v7140, 2
    %v8070 = vsel %vm7203, %v8069, %v8068
    %v8071 = vrot.slane %v7142, 1
    %v8072 = vsel %vm7206, %v8071, %v8070
    %v8073 = vsel %vm7209, %v7144, %v8072
    %v8074 = vrot.slane %v7146, 7
    %v8075 = vsel %vm7212, %v8074, %v8073
    %v8076 = vrot.slane %v7148, 6
    %v8077 = vsel %vm7215, %v8076, %v8075
    %v8078 = vrot.slane %v7150, 5
    %v8079 = vsel %vm7218, %v8078, %v8077
    %v8080 = vrot.slane %v7152, 4
    %v8081 = vrot.slane %v7154, 3
    %v8082 = vsel %vm7200, %v8081, %v8080
    %v8083 = vrot.slane %v7156, 2
    %v8084 = vsel %vm7203, %v8083, %v8082
    %v8085 = vrot.slane %v7158, 1
    %v8086 = vsel %vm7206, %v8085, %v8084
    %v8087 = vsel %vm7209, %v7160, %v8086
    %v8088 = vrot.slane %v7162, 7
    %v8089 = vsel %vm7212, %v8088, %v8087
    %v8090 = vrot.slane %v7164, 6
    %v8091 = vsel %vm7215, %v8090, %v8089
    %v8092 = vrot.slane %v7166, 5
    %v8093 = vsel %vm7218, %v8092, %v8091
    %8094 = vrot.lane.b32.xlu0 %v8051, 64
    %v8095 = vpop.permute.xlu0 %8094
    %8096 = vrot.lane.b32.xlu0 %v8065, 64
    %v8097 = vpop.permute.xlu0 %8096
    %8098 = vrot.lane.b32.xlu0 %v8079, 64
    %v8099 = vpop.permute.xlu0 %8098
    %8100 = vrot.lane.b32.xlu0 %v8093, 64
    %v8101 = vpop.permute.xlu0 %8100
    %v8106 = vrot.slane %v7104, 5
    %v8107 = vrot.slane %v7106, 4
    %v8108 = vsel %vm7200, %v8107, %v8106
    %v8109 = vrot.slane %v7108, 3
    %v8110 = vsel %vm7203, %v8109, %v8108
    %v8111 = vrot.slane %v7110, 2
    %v8112 = vsel %vm7206, %v8111, %v8110
    %v8113 = vrot.slane %v7112, 1
    %v8114 = vsel %vm7209, %v8113, %v8112
    %v8115 = vsel %vm7212, %v7114, %v8114
    %v8116 = vrot.slane %v7116, 7
    %v8117 = vsel %vm7215, %v8116, %v8115
    %v8118 = vrot.slane %v7118, 6
    %v8119 = vsel %vm7218, %v8118, %v8117
    %v8120 = vrot.slane %v7120, 5
    %v8121 = vrot.slane %v7122, 4
    %v8122 = vsel %vm7200, %v8121, %v8120
    %v8123 = vrot.slane %v7124, 3
    %v8124 = vsel %vm7203, %v8123, %v8122
    %v8125 = vrot.slane %v7126, 2
    %v8126 = vsel %vm7206, %v8125, %v8124
    %v8127 = vrot.slane %v7128, 1
    %v8128 = vsel %vm7209, %v8127, %v8126
    %v8129 = vsel %vm7212, %v7130, %v8128
    %v8130 = vrot.slane %v7132, 7
    %v8131 = vsel %vm7215, %v8130, %v8129
    %v8132 = vrot.slane %v7134, 6
    %v8133 = vsel %vm7218, %v8132, %v8131
    %v8134 = vrot.slane %v7136, 5
    %v8135 = vrot.slane %v7138, 4
    %v8136 = vsel %vm7200, %v8135, %v8134
    %v8137 = vrot.slane %v7140, 3
    %v8138 = vsel %vm7203, %v8137, %v8136
    %v8139 = vrot.slane %v7142, 2
    %v8140 = vsel %vm7206, %v8139, %v8138
    %v8141 = vrot.slane %v7144, 1
    %v8142 = vsel %vm7209, %v8141, %v8140
    %v8143 = vsel %vm7212, %v7146, %v8142
    %v8144 = vrot.slane %v7148, 7
    %v8145 = vsel %vm7215, %v8144, %v8143
    %v8146 = vrot.slane %v7150, 6
    %v8147 = vsel %vm7218, %v8146, %v8145
    %v8148 = vrot.slane %v7152, 5
    %v8149 = vrot.slane %v7154, 4
    %v8150 = vsel %vm7200, %v8149, %v8148
    %v8151 = vrot.slane %v7156, 3
    %v8152 = vsel %vm7203, %v8151, %v8150
    %v8153 = vrot.slane %v7158, 2
    %v8154 = vsel %vm7206, %v8153, %v8152
    %v8155 = vrot.slane %v7160, 1
    %v8156 = vsel %vm7209, %v8155, %v8154
    %v8157 = vsel %vm7212, %v7162, %v8156
    %v8158 = vrot.slane %v7164, 7
    %v8159 = vsel %vm7215, %v8158, %v8157
    %v8160 = vrot.slane %v7166, 6
    %v8161 = vsel %vm7218, %v8160, %v8159
    %8162 = vrot.lane.b32.xlu0 %v8119, 80
    %v8163 = vpop.permute.xlu0 %8162
    %8164 = vrot.lane.b32.xlu0 %v8133, 80
    %v8165 = vpop.permute.xlu0 %8164
    %8166 = vrot.lane.b32.xlu0 %v8147, 80
    %v8167 = vpop.permute.xlu0 %8166
    %8168 = vrot.lane.b32.xlu0 %v8161, 80
    %v8169 = vpop.permute.xlu0 %8168
    %v8174 = vrot.slane %v7104, 6
    %v8175 = vrot.slane %v7106, 5
    %v8176 = vsel %vm7200, %v8175, %v8174
    %v8177 = vrot.slane %v7108, 4
    %v8178 = vsel %vm7203, %v8177, %v8176
    %v8179 = vrot.slane %v7110, 3
    %v8180 = vsel %vm7206, %v8179, %v8178
    %v8181 = vrot.slane %v7112, 2
    %v8182 = vsel %vm7209, %v8181, %v8180
    %v8183 = vrot.slane %v7114, 1
    %v8184 = vsel %vm7212, %v8183, %v8182
    %v8185 = vsel %vm7215, %v7116, %v8184
    %v8186 = vrot.slane %v7118, 7
    %v8187 = vsel %vm7218, %v8186, %v8185
    %v8188 = vrot.slane %v7120, 6
    %v8189 = vrot.slane %v7122, 5
    %v8190 = vsel %vm7200, %v8189, %v8188
    %v8191 = vrot.slane %v7124, 4
    %v8192 = vsel %vm7203, %v8191, %v8190
    %v8193 = vrot.slane %v7126, 3
    %v8194 = vsel %vm7206, %v8193, %v8192
    %v8195 = vrot.slane %v7128, 2
    %v8196 = vsel %vm7209, %v8195, %v8194
    %v8197 = vrot.slane %v7130, 1
    %v8198 = vsel %vm7212, %v8197, %v8196
    %v8199 = vsel %vm7215, %v7132, %v8198
    %v8200 = vrot.slane %v7134, 7
    %v8201 = vsel %vm7218, %v8200, %v8199
    %v8202 = vrot.slane %v7136, 6
    %v8203 = vrot.slane %v7138, 5
    %v8204 = vsel %vm7200, %v8203, %v8202
    %v8205 = vrot.slane %v7140, 4
    %v8206 = vsel %vm7203, %v8205, %v8204
    %v8207 = vrot.slane %v7142, 3
    %v8208 = vsel %vm7206, %v8207, %v8206
    %v8209 = vrot.slane %v7144, 2
    %v8210 = vsel %vm7209, %v8209, %v8208
    %v8211 = vrot.slane %v7146, 1
    %v8212 = vsel %vm7212, %v8211, %v8210
    %v8213 = vsel %vm7215, %v7148, %v8212
    %v8214 = vrot.slane %v7150, 7
    %v8215 = vsel %vm7218, %v8214, %v8213
    %v8216 = vrot.slane %v7152, 6
    %v8217 = vrot.slane %v7154, 5
    %v8218 = vsel %vm7200, %v8217, %v8216
    %v8219 = vrot.slane %v7156, 4
    %v8220 = vsel %vm7203, %v8219, %v8218
    %v8221 = vrot.slane %v7158, 3
    %v8222 = vsel %vm7206, %v8221, %v8220
    %v8223 = vrot.slane %v7160, 2
    %v8224 = vsel %vm7209, %v8223, %v8222
    %v8225 = vrot.slane %v7162, 1
    %v8226 = vsel %vm7212, %v8225, %v8224
    %v8227 = vsel %vm7215, %v7164, %v8226
    %v8228 = vrot.slane %v7166, 7
    %v8229 = vsel %vm7218, %v8228, %v8227
    %8230 = vrot.lane.b32.xlu0 %v8187, 96
    %v8231 = vpop.permute.xlu0 %8230
    %8232 = vrot.lane.b32.xlu0 %v8201, 96
    %v8233 = vpop.permute.xlu0 %8232
    %8234 = vrot.lane.b32.xlu0 %v8215, 96
    %v8235 = vpop.permute.xlu0 %8234
    %8236 = vrot.lane.b32.xlu0 %v8229, 96
    %v8237 = vpop.permute.xlu0 %8236
    %v8242 = vrot.slane %v7104, 7
    %v8243 = vrot.slane %v7106, 6
    %v8244 = vsel %vm7200, %v8243, %v8242
    %v8245 = vrot.slane %v7108, 5
    %v8246 = vsel %vm7203, %v8245, %v8244
    %v8247 = vrot.slane %v7110, 4
    %v8248 = vsel %vm7206, %v8247, %v8246
    %v8249 = vrot.slane %v7112, 3
    %v8250 = vsel %vm7209, %v8249, %v8248
    %v8251 = vrot.slane %v7114, 2
    %v8252 = vsel %vm7212, %v8251, %v8250
    %v8253 = vrot.slane %v7116, 1
    %v8254 = vsel %vm7215, %v8253, %v8252
    %v8255 = vsel %vm7218, %v7118, %v8254
    %v8256 = vrot.slane %v7120, 7
    %v8257 = vrot.slane %v7122, 6
    %v8258 = vsel %vm7200, %v8257, %v8256
    %v8259 = vrot.slane %v7124, 5
    %v8260 = vsel %vm7203, %v8259, %v8258
    %v8261 = vrot.slane %v7126, 4
    %v8262 = vsel %vm7206, %v8261, %v8260
    %v8263 = vrot.slane %v7128, 3
    %v8264 = vsel %vm7209, %v8263, %v8262
    %v8265 = vrot.slane %v7130, 2
    %v8266 = vsel %vm7212, %v8265, %v8264
    %v8267 = vrot.slane %v7132, 1
    %v8268 = vsel %vm7215, %v8267, %v8266
    %v8269 = vsel %vm7218, %v7134, %v8268
    %v8270 = vrot.slane %v7136, 7
    %v8271 = vrot.slane %v7138, 6
    %v8272 = vsel %vm7200, %v8271, %v8270
    %v8273 = vrot.slane %v7140, 5
    %v8274 = vsel %vm7203, %v8273, %v8272
    %v8275 = vrot.slane %v7142, 4
    %v8276 = vsel %vm7206, %v8275, %v8274
    %v8277 = vrot.slane %v7144, 3
    %v8278 = vsel %vm7209, %v8277, %v8276
    %v8279 = vrot.slane %v7146, 2
    %v8280 = vsel %vm7212, %v8279, %v8278
    %v8281 = vrot.slane %v7148, 1
    %v8282 = vsel %vm7215, %v8281, %v8280
    %v8283 = vsel %vm7218, %v7150, %v8282
    %v8284 = vrot.slane %v7152, 7
    %v8285 = vrot.slane %v7154, 6
    %v8286 = vsel %vm7200, %v8285, %v8284
    %v8287 = vrot.slane %v7156, 5
    %v8288 = vsel %vm7203, %v8287, %v8286
    %v8289 = vrot.slane %v7158, 4
    %v8290 = vsel %vm7206, %v8289, %v8288
    %v8291 = vrot.slane %v7160, 3
    %v8292 = vsel %vm7209, %v8291, %v8290
    %v8293 = vrot.slane %v7162, 2
    %v8294 = vsel %vm7212, %v8293, %v8292
    %v8295 = vrot.slane %v7164, 1
    %v8296 = vsel %vm7215, %v8295, %v8294
    %v8297 = vsel %vm7218, %v7166, %v8296
    %8298 = vrot.lane.b32.xlu0 %v8255, 112
    %v8299 = vpop.permute.xlu0 %8298
    %8300 = vrot.lane.b32.xlu0 %v8269, 112
    %v8301 = vpop.permute.xlu0 %8300
    %8302 = vrot.lane.b32.xlu0 %v8283, 112
    %v8303 = vpop.permute.xlu0 %8302
    %8304 = vrot.lane.b32.xlu0 %v8297, 112
    %v8305 = vpop.permute.xlu0 %8304
    %v8310 = vsel %vm3162, %v7219, %v7323
    %v8311 = vsel %vm3162, %v7233, %v7325
    %v8312 = vsel %vm3162, %v7247, %v7327
    %v8313 = vsel %vm3162, %v7261, %v7329
    %v8314 = vsel %vm3420, %v8310, %v7391
    %v8315 = vsel %vm3420, %v8311, %v7393
    %v8316 = vsel %vm3420, %v8312, %v7395
    %v8317 = vsel %vm3420, %v8313, %v7397
    %vm8318 = vcmask 392192
    %v8319 = vsel %vm8318, %v8314, %v7459
    %v8320 = vsel %vm8318, %v8315, %v7461
    %v8321 = vsel %vm8318, %v8316, %v7463
    %v8322 = vsel %vm8318, %v8317, %v7465
    %vm8323 = vcmask 523264
    %v8324 = vsel %vm8323, %v8319, %v7527
    %v8325 = vsel %vm8323, %v8320, %v7529
    %v8326 = vsel %vm8323, %v8321, %v7531
    %v8327 = vsel %vm8323, %v8322, %v7533
    %vm8328 = vcmask 654336
    %v8329 = vsel %vm8328, %v8324, %v7595
    %v8330 = vsel %vm8328, %v8325, %v7597
    %v8331 = vsel %vm8328, %v8326, %v7599
    %v8332 = vsel %vm8328, %v8327, %v7601
    %vm8333 = vcmask 785408
    %v8334 = vsel %vm8333, %v8329, %v7663
    %v8335 = vsel %vm8333, %v8330, %v7665
    %v8336 = vsel %vm8333, %v8331, %v7667
    %v8337 = vsel %vm8333, %v8332, %v7669
    %vm8338 = vcmask 916480
    %v8339 = vsel %vm8338, %v8334, %v7731
    %v8340 = vsel %vm8338, %v8335, %v7733
    %v8341 = vsel %vm8338, %v8336, %v7735
    %v8342 = vsel %vm8338, %v8337, %v7737
    %v8343 = vsel %vm3162, %v7787, %v7891
    %v8344 = vsel %vm3162, %v7801, %v7893
    %v8345 = vsel %vm3162, %v7815, %v7895
    %v8346 = vsel %vm3162, %v7829, %v7897
    %v8347 = vsel %vm3420, %v8343, %v7959
    %v8348 = vsel %vm3420, %v8344, %v7961
    %v8349 = vsel %vm3420, %v8345, %v7963
    %v8350 = vsel %vm3420, %v8346, %v7965
    %v8351 = vsel %vm8318, %v8347, %v8027
    %v8352 = vsel %vm8318, %v8348, %v8029
    %v8353 = vsel %vm8318, %v8349, %v8031
    %v8354 = vsel %vm8318, %v8350, %v8033
    %v8355 = vsel %vm8323, %v8351, %v8095
    %v8356 = vsel %vm8323, %v8352, %v8097
    %v8357 = vsel %vm8323, %v8353, %v8099
    %v8358 = vsel %vm8323, %v8354, %v8101
    %v8359 = vsel %vm8328, %v8355, %v8163
    %v8360 = vsel %vm8328, %v8356, %v8165
    %v8361 = vsel %vm8328, %v8357, %v8167
    %v8362 = vsel %vm8328, %v8358, %v8169
    %v8363 = vsel %vm8333, %v8359, %v8231
    %v8364 = vsel %vm8333, %v8360, %v8233
    %v8365 = vsel %vm8333, %v8361, %v8235
    %v8366 = vsel %vm8333, %v8362, %v8237
    %v8367 = vsel %vm8338, %v8363, %v8299
    %v8368 = vsel %vm8338, %v8364, %v8301
    %v8369 = vsel %vm8338, %v8365, %v8303
    %v8370 = vsel %vm8338, %v8366, %v8305
    %8371 = vst [vmem:[#allocation2] sm:$0xff] %v8339
    %8372 = vst [vmem:[#allocation2 + $0x8] sm:$0xff] %v8367
    %8373 = vst [vmem:[#allocation2 + $0x10] sm:$0xff] %v8340
    %8374 = vst [vmem:[#allocation2 + $0x18] sm:$0xff] %v8368
    %8375 = vst [vmem:[#allocation2 + $0x20] sm:$0xff] %v8341
    %8376 = vst [vmem:[#allocation2 + $0x28] sm:$0xff] %v8369
    %8377 = vst [vmem:[#allocation2 + $0x30] sm:$0xff] %v8342
    %8378 = vst [vmem:[#allocation2 + $0x38] sm:$0xff] %v8370
    // Predicated region
    $region26: #{tpu_custom_call.1} parent=1 // pred_check
      _
    $region27: #{tpu_custom_call.1} parent=1 // pred_check_branch
      %8380 = sbr.rel (0) target = $region29
    $region28: #{tpu_custom_call.1} parent=1 // pred_region
      %s8382 = ssub.s32 1024, 1024
      %8383 = vsyncadd [#allocation3], %s8382
      %s8384 = sshll.u32 [#allocation2], 4
      %s8385 = int_to_ptr.vmem [resolvable:$true] %s8384
      %8390 = dma.vmem_to_hbm [thread:$0]  %s8385, 1024, %s6, [#allocation3], 256, 256, 16
    $region29: #{tpu_custom_call.1} parent=1 // pred_fallthru
      _
    // Predicated region
    $region30: #{tpu_custom_call.1} parent=1 // pred_check
      _
    $region31: #{tpu_custom_call.1} parent=1 // pred_check_branch
      %8392 = sbr.rel (0) target = $region33
    $region32: #{tpu_custom_call.1} parent=1 // pred_region
      %8393 = dma.done [#allocation3], 1024
    $region33: #{tpu_custom_call.1} parent=1 // pred_fallthru
      _
    %8394 = vsyncpa [#allocation3], 1

</llo_original>
